<compile_context>
chip_gen: v7x
topology: tpu7x:2x2x1
jax: 0.10.0
libtpu: 0.0.40
codegen_flags: <defaults>
</compile_context>

<pallas_src>
import functools

import jax
import jax.numpy as jnp
from jax.experimental import pallas as pl
from jax.experimental.pallas import tpu as pltpu


def lstm_kernel(x_ref, w_ih0_ref, w_hh0_ref, b0_ref,
                w_l1_ref, b1_ref, w_lin_ref, b_lin_ref,
                out_ref, xg0_ref, hcat_ref, *, seq_len, hidden):
    """Whole 2-layer LSTM recurrence + final Linear, all VMEM-resident.

    Kernel-side weight layout (produced by `prepare_params`):
      * gate columns permuted to [i, f, o, g]  (one sigmoid over 3H lanes)
      * layer-1 W_ih / W_hh row-stacked into w_l1 (2H, 4H): one K=2H matmul
      * w_hh0 / w_l1 are bf16; states, gates, accumulation are f32.
    """
    H = hidden
    f32 = jnp.float32
    bf16 = jnp.bfloat16

    # Hoisted layer-0 input projection for ALL time steps (off the serial
    # critical path):  xg0[t] = x[t] @ W_ih0 + (b_ih0 + b_hh0).
    xg0_ref[...] = (jnp.dot(x_ref[...], w_ih0_ref[...],
                            preferred_element_type=f32) + b0_ref[...])

    def gates_to_hc(gates, c):
        # gate layout [i | f | o | g]: one EUP sigmoid over 3H lanes, one tanh.
        sig = jax.nn.sigmoid(gates[:, :3 * H])
        i = sig[:, 0 * H:1 * H]
        f = sig[:, 1 * H:2 * H]
        o = sig[:, 2 * H:3 * H]
        g = jnp.tanh(gates[:, 3 * H:4 * H])
        c_new = f * c + i * g
        h_new = o * jnp.tanh(c_new)
        return h_new, c_new

    zeros = jnp.zeros((1, H), f32)
    h1, c1, h2, c2 = zeros, zeros, zeros, zeros
    # Persistent [h1_t | h2_{t-1}] row (bf16) feeding the fused layer-1 matmul.
    hcat_ref[...] = jnp.zeros_like(hcat_ref)

    # seq_len is a trace-time constant -> this Python loop is a FULL UNROLL
    # with static indices (cross-step scheduling is fully visible).
    for t in range(seq_len):
        # ---- layer 0: recurrent part only (input part was hoisted) ---------
        g0 = xg0_ref[t:t + 1, :] + jnp.dot(h1.astype(bf16), w_hh0_ref[...],
                                           preferred_element_type=f32)
        h1, c1 = gates_to_hc(g0, c1)
        hcat_ref[:, :H] = h1.astype(bf16)
        # ---- layer 1: single fused K=2H matmul on [h1_t | h2_{t-1}] ---------
        g1 = (jnp.dot(hcat_ref[...], w_l1_ref[...],
                      preferred_element_type=f32) + b1_ref[...])
        h2, c2 = gates_to_hc(g1, c2)
        hcat_ref[:, H:] = h2.astype(bf16)

    # Final Linear on the last step's top-layer hidden state (f32).
    out_ref[...] = (jnp.dot(h2, w_lin_ref[...], preferred_element_type=f32)
                    + b_lin_ref[...])


def prepare_params(p):
    """One-time wrapper-side re-layout of the PyTorch-style parameters.

      * permute gate columns from PyTorch order [i, f, g, o] to [i, f, o, g]
      * row-stack layer-1's W_ih / W_hh into a single (2H, 4H) matrix
      * cast the two large recurrent weight matrices to bf16.
    """
    H = p["w_hh0"].shape[0]
    perm = jnp.concatenate([jnp.arange(0, 2 * H),        # i, f
                            jnp.arange(3 * H, 4 * H),    # o
                            jnp.arange(2 * H, 3 * H)])   # g
    pc = lambda a: a[..., perm]
    return {
        "w_ih0": pc(p["w_ih0"]),                                    # (in, 4H) f32
        "w_hh0": pc(p["w_hh0"]).astype(jnp.bfloat16),               # (H, 4H) bf16
        "b0":    pc(p["b0"]),                                       # (1, 4H) f32
        "w_l1":  jnp.concatenate([pc(p["w_ih1"]), pc(p["w_hh1"])],
                                 axis=0).astype(jnp.bfloat16),      # (2H, 4H) bf16
        "b1":    pc(p["b1"]),                                       # (1, 4H) f32
        "w_lin": p["w_lin"],                                        # (H, out) f32
        "b_lin": p["b_lin"],                                        # (1, out) f32
    }


def lstm_forward(x, kp):
    """x: (seq_len, input_size) f32; kp: prepare_params(...) output.
    Returns (output_size,) f32 == predictions[-1] of the PyTorch module."""
    seq_len, _ = x.shape
    hidden = kp["w_hh0"].shape[0]
    out_size = kp["w_lin"].shape[1]
    kernel = functools.partial(lstm_kernel, seq_len=seq_len, hidden=hidden)
    vmem = pl.BlockSpec(memory_space=pltpu.MemorySpace.VMEM)
    out = pl.pallas_call(
        kernel,
        out_shape=jax.ShapeDtypeStruct((1, out_size), jnp.float32),
        in_specs=[vmem] * 8,
        out_specs=vmem,
        scratch_shapes=[
            pltpu.VMEM((seq_len, 4 * hidden), jnp.float32),   # hoisted x-proj
            pltpu.VMEM((1, 2 * hidden), jnp.bfloat16),        # [h1 | h2] row
        ],
        # ~0.5 MB resident at H=128 — far below every generation's VMEM
        # (incl. v7x's 64 MiB physical).
        # TODO(synk): if hidden is scaled (>=1024), stream W_hh0/W_l1 in
        # K-tiles with pltpu.emit_pipeline instead of keeping them resident.
        compiler_params=pltpu.CompilerParams(vmem_limit_bytes=32 * 1024 * 1024),
    )(x, kp["w_ih0"], kp["w_hh0"], kp["b0"],
      kp["w_l1"], kp["b1"], kp["w_lin"], kp["b_lin"])
    return out[0]                                             # (output_size,)


def init_params(key, input_size=1, hidden=128, output_size=1):
    """PyTorch-style U(-1/sqrt(H), 1/sqrt(H)) init; biases pre-summed (b_ih+b_hh).
    Gate order along the 4H axis is PyTorch's [i, f, g, o]."""
    k = 1.0 / jnp.sqrt(jnp.float32(hidden))
    keys = jax.random.split(key, 10)
    u = lambda kk, shape: jax.random.uniform(kk, shape, jnp.float32, -k, k)
    return {
        # layer 0: input_size -> hidden
        "w_ih0": u(keys[0], (input_size, 4 * hidden)),
        "w_hh0": u(keys[1], (hidden, 4 * hidden)),
        "b0":    u(keys[2], (1, 4 * hidden)) + u(keys[3], (1, 4 * hidden)),
        # layer 1: hidden -> hidden
        "w_ih1": u(keys[4], (hidden, 4 * hidden)),
        "w_hh1": u(keys[5], (hidden, 4 * hidden)),
        "b1":    u(keys[6], (1, 4 * hidden)) + u(keys[7], (1, 4 * hidden)),
        # final linear: hidden -> output_size
        "w_lin": u(keys[8], (hidden, output_size)),
        "b_lin": u(keys[9], (1, output_size)),
    }


def lstm_ref(x, p):
    """Pure-JAX f32 reference of the same forward pass (PyTorch gate layout)."""
    H = p["w_hh0"].shape[0]
    h1 = c1 = h2 = c2 = jnp.zeros((1, H), jnp.float32)

    def cell(xr, h, c, w_ih, w_hh, b):
        g = xr @ w_ih + h @ w_hh + b
        i = jax.nn.sigmoid(g[:, :H])
        f = jax.nn.sigmoid(g[:, H:2 * H])
        gg = jnp.tanh(g[:, 2 * H:3 * H])
        o = jax.nn.sigmoid(g[:, 3 * H:])
        c = f * c + i * gg
        return o * jnp.tanh(c), c

    for t in range(x.shape[0]):
        h1, c1 = cell(x[t:t + 1], h1, c1, p["w_ih0"], p["w_hh0"], p["b0"])
        h2, c2 = cell(h1, h2, c2, p["w_ih1"], p["w_hh1"], p["b1"])
    return (h2 @ p["w_lin"] + p["b_lin"])[0]


if __name__ == "__main__":
    key = jax.random.PRNGKey(0)
    k_param, k_x = jax.random.split(key)

    SEQ_LEN, INPUT_SIZE, HIDDEN, OUTPUT_SIZE = 8, 1, 128, 1
    params = init_params(k_param, INPUT_SIZE, HIDDEN, OUTPUT_SIZE)
    x = jax.random.normal(k_x, (SEQ_LEN, INPUT_SIZE), jnp.float32)

    kparams = prepare_params(params)          # one-time wrapper-side re-layout
    out = jax.block_until_ready(lstm_forward(x, kparams))

    ref = jax.block_until_ready(lstm_ref(x, params))
    assert out.shape == (OUTPUT_SIZE,)
    # bf16 recurrent weights in the kernel -> allow a few e-3 of drift vs the
    # all-f32 reference (observed drift is ~1e-3; tolerance leaves margin).
    assert jnp.allclose(out, ref, rtol=2e-2, atol=2e-2), (out, ref)

    print("KERNEL_OK")
</pallas_src>

<mosaic_0001>
module attributes {stable_mosaic.version = 11 : i64} {
  func.func @lstm_kernel(%arg0: memref<8x1xf32, #tpu.memory_space<vmem>>, %arg1: memref<1x512xf32, #tpu.memory_space<vmem>>, %arg2: memref<128x512xbf16, #tpu.memory_space<vmem>>, %arg3: memref<1x512xf32, #tpu.memory_space<vmem>>, %arg4: memref<256x512xbf16, #tpu.memory_space<vmem>>, %arg5: memref<1x512xf32, #tpu.memory_space<vmem>>, %arg6: memref<128x1xf32, #tpu.memory_space<vmem>>, %arg7: memref<1x1xf32, #tpu.memory_space<vmem>>, %arg8: memref<1x1xf32, #tpu.memory_space<vmem>>, %arg9: memref<8x512xf32, #tpu.memory_space<vmem>>, %arg10: memref<1x256xbf16, #tpu.memory_space<vmem>>) attributes {dimension_semantics = [], scalar_prefetch = 0 : i64, scratch_operands = 2 : i64, tpu.core_type = #tpu.core_type<tc>} {
    %c0 = arith.constant 0 : index
    %c0_0 = arith.constant 0 : index
    %0 = vector.load %arg0[%c0, %c0_0] : memref<8x1xf32, #tpu.memory_space<vmem>>, vector<8x1xf32>
    %c0_1 = arith.constant 0 : index
    %c0_2 = arith.constant 0 : index
    %1 = vector.load %arg1[%c0_1, %c0_2] : memref<1x512xf32, #tpu.memory_space<vmem>>, vector<1x512xf32>
    %cst = arith.constant dense<0.000000e+00> : vector<8x512xf32>
    %2 = tpu.matmul %0, %1, %cst {dimension_numbers = #tpu.dot_dimension_numbers<[1], [0], [0], [1], [0, 0, 1, 1], [], []>} : vector<8x1xf32>, vector<1x512xf32>, vector<8x512xf32> -> vector<8x512xf32>
    %c0_3 = arith.constant 0 : index
    %c0_4 = arith.constant 0 : index
    %3 = vector.load %arg3[%c0_3, %c0_4] : memref<1x512xf32, #tpu.memory_space<vmem>>, vector<1x512xf32>
    %4 = vector.broadcast %3 : vector<1x512xf32> to vector<8x512xf32>
    %5 = arith.addf %2, %4 : vector<8x512xf32>
    %c0_5 = arith.constant 0 : index
    %c0_6 = arith.constant 0 : index
    %6 = vector.load %arg9[%c0_5, %c0_6] : memref<8x512xf32, #tpu.memory_space<vmem>>, vector<8x512xf32>
    tpu.vector_store %arg9[%c0_5, %c0_6], %5 {strides = array<i32>} : memref<8x512xf32, #tpu.memory_space<vmem>>, vector<8x512xf32>,
    %cst_7 = arith.constant 0.000000e+00 : f32
    %7 = vector.broadcast %cst_7 : f32 to vector<1x128xf32>
    %cst_8 = arith.constant 0.000000e+00 : bf16
    %8 = vector.broadcast %cst_8 : bf16 to vector<1x256xbf16>
    %c0_9 = arith.constant 0 : index
    %c0_10 = arith.constant 0 : index
    %9 = vector.load %arg10[%c0_9, %c0_10] : memref<1x256xbf16, #tpu.memory_space<vmem>>, vector<1x256xbf16>
    tpu.vector_store %arg10[%c0_9, %c0_10], %8 {strides = array<i32>} : memref<1x256xbf16, #tpu.memory_space<vmem>>, vector<1x256xbf16>,
    %c0_11 = arith.constant 0 : index
    %c0_12 = arith.constant 0 : index
    %10 = vector.load %arg9[%c0_11, %c0_12] : memref<8x512xf32, #tpu.memory_space<vmem>>, vector<1x512xf32>
    %11 = arith.truncf %7 : vector<1x128xf32> to vector<1x128xbf16>
    %c0_13 = arith.constant 0 : index
    %c0_14 = arith.constant 0 : index
    %12 = vector.load %arg2[%c0_13, %c0_14] : memref<128x512xbf16, #tpu.memory_space<vmem>>, vector<128x512xbf16>
    %cst_15 = arith.constant dense<0.000000e+00> : vector<1x512xf32>
    %13 = tpu.matmul %11, %12, %cst_15 {dimension_numbers = #tpu.dot_dimension_numbers<[1], [0], [0], [1], [0, 0, 1, 1], [], []>} : vector<1x128xbf16>, vector<128x512xbf16>, vector<1x512xf32> -> vector<1x512xf32>
    %14 = arith.addf %10, %13 : vector<1x512xf32>
    %15 = vector.extract_strided_slice %14 {offsets = [0, 0], sizes = [1, 384], strides = [1, 1]} : vector<1x512xf32> to vector<1x384xf32>
    %16 = arith.negf %15 : vector<1x384xf32>
    %17 = math.exp %16 : vector<1x384xf32>
    %cst_16 = arith.constant 1.000000e+00 : f32
    %18 = vector.broadcast %cst_16 : f32 to vector<1x384xf32>
    %19 = arith.addf %18, %17 : vector<1x384xf32>
    %20 = arith.divf %18, %19 : vector<1x384xf32>
    %21 = vector.extract_strided_slice %20 {offsets = [0, 0], sizes = [1, 128], strides = [1, 1]} : vector<1x384xf32> to vector<1x128xf32>
    %22 = vector.extract_strided_slice %20 {offsets = [0, 128], sizes = [1, 128], strides = [1, 1]} : vector<1x384xf32> to vector<1x128xf32>
    %23 = vector.extract_strided_slice %20 {offsets = [0, 256], sizes = [1, 128], strides = [1, 1]} : vector<1x384xf32> to vector<1x128xf32>
    %24 = vector.extract_strided_slice %14 {offsets = [0, 384], sizes = [1, 128], strides = [1, 1]} : vector<1x512xf32> to vector<1x128xf32>
    %25 = math.tanh %24 : vector<1x128xf32>
    %26 = arith.mulf %22, %7 : vector<1x128xf32>
    %27 = arith.mulf %21, %25 : vector<1x128xf32>
    %28 = arith.addf %26, %27 : vector<1x128xf32>
    %29 = math.tanh %28 : vector<1x128xf32>
    %30 = arith.mulf %23, %29 : vector<1x128xf32>
    %31 = arith.truncf %30 : vector<1x128xf32> to vector<1x128xbf16>
    %c0_17 = arith.constant 0 : index
    %c0_18 = arith.constant 0 : index
    %32 = vector.load %arg10[%c0_17, %c0_18] : memref<1x256xbf16, #tpu.memory_space<vmem>>, vector<1x128xbf16>
    tpu.vector_store %arg10[%c0_17, %c0_18], %31 {strides = array<i32>} : memref<1x256xbf16, #tpu.memory_space<vmem>>, vector<1x128xbf16>,
    %c0_19 = arith.constant 0 : index
    %c0_20 = arith.constant 0 : index
    %33 = vector.load %arg10[%c0_19, %c0_20] : memref<1x256xbf16, #tpu.memory_space<vmem>>, vector<1x256xbf16>
    %c0_21 = arith.constant 0 : index
    %c0_22 = arith.constant 0 : index
    %34 = vector.load %arg4[%c0_21, %c0_22] : memref<256x512xbf16, #tpu.memory_space<vmem>>, vector<256x512xbf16>
    %cst_23 = arith.constant dense<0.000000e+00> : vector<1x512xf32>
    %35 = tpu.matmul %33, %34, %cst_23 {dimension_numbers = #tpu.dot_dimension_numbers<[1], [0], [0], [1], [0, 0, 1, 1], [], []>} : vector<1x256xbf16>, vector<256x512xbf16>, vector<1x512xf32> -> vector<1x512xf32>
    %c0_24 = arith.constant 0 : index
    %c0_25 = arith.constant 0 : index
    %36 = vector.load %arg5[%c0_24, %c0_25] : memref<1x512xf32, #tpu.memory_space<vmem>>, vector<1x512xf32>
    %37 = arith.addf %35, %36 : vector<1x512xf32>
    %38 = vector.extract_strided_slice %37 {offsets = [0, 0], sizes = [1, 384], strides = [1, 1]} : vector<1x512xf32> to vector<1x384xf32>
    %39 = arith.negf %38 : vector<1x384xf32>
    %40 = math.exp %39 : vector<1x384xf32>
    %cst_26 = arith.constant 1.000000e+00 : f32
    %41 = vector.broadcast %cst_26 : f32 to vector<1x384xf32>
    %42 = arith.addf %41, %40 : vector<1x384xf32>
    %43 = arith.divf %41, %42 : vector<1x384xf32>
    %44 = vector.extract_strided_slice %43 {offsets = [0, 0], sizes = [1, 128], strides = [1, 1]} : vector<1x384xf32> to vector<1x128xf32>
    %45 = vector.extract_strided_slice %43 {offsets = [0, 128], sizes = [1, 128], strides = [1, 1]} : vector<1x384xf32> to vector<1x128xf32>
    %46 = vector.extract_strided_slice %43 {offsets = [0, 256], sizes = [1, 128], strides = [1, 1]} : vector<1x384xf32> to vector<1x128xf32>
    %47 = vector.extract_strided_slice %37 {offsets = [0, 384], sizes = [1, 128], strides = [1, 1]} : vector<1x512xf32> to vector<1x128xf32>
    %48 = math.tanh %47 : vector<1x128xf32>
    %49 = arith.mulf %45, %7 : vector<1x128xf32>
    %50 = arith.mulf %44, %48 : vector<1x128xf32>
    %51 = arith.addf %49, %50 : vector<1x128xf32>
    %52 = math.tanh %51 : vector<1x128xf32>
    %53 = arith.mulf %46, %52 : vector<1x128xf32>
    %54 = arith.truncf %53 : vector<1x128xf32> to vector<1x128xbf16>
    %c0_27 = arith.constant 0 : index
    %c128 = arith.constant 128 : index
    %55 = vector.load %arg10[%c0_27, %c128] : memref<1x256xbf16, #tpu.memory_space<vmem>>, vector<1x128xbf16>
    tpu.vector_store %arg10[%c0_27, %c128], %54 {strides = array<i32>} : memref<1x256xbf16, #tpu.memory_space<vmem>>, vector<1x128xbf16>,
    %c1 = arith.constant 1 : index
    %c0_28 = arith.constant 0 : index
    %56 = vector.load %arg9[%c1, %c0_28] : memref<8x512xf32, #tpu.memory_space<vmem>>, vector<1x512xf32>
    %57 = arith.truncf %30 : vector<1x128xf32> to vector<1x128xbf16>
    %c0_29 = arith.constant 0 : index
    %c0_30 = arith.constant 0 : index
    %58 = vector.load %arg2[%c0_29, %c0_30] : memref<128x512xbf16, #tpu.memory_space<vmem>>, vector<128x512xbf16>
    %cst_31 = arith.constant dense<0.000000e+00> : vector<1x512xf32>
    %59 = tpu.matmul %57, %58, %cst_31 {dimension_numbers = #tpu.dot_dimension_numbers<[1], [0], [0], [1], [0, 0, 1, 1], [], []>} : vector<1x128xbf16>, vector<128x512xbf16>, vector<1x512xf32> -> vector<1x512xf32>
    %60 = arith.addf %56, %59 : vector<1x512xf32>
    %61 = vector.extract_strided_slice %60 {offsets = [0, 0], sizes = [1, 384], strides = [1, 1]} : vector<1x512xf32> to vector<1x384xf32>
    %62 = arith.negf %61 : vector<1x384xf32>
    %63 = math.exp %62 : vector<1x384xf32>
    %cst_32 = arith.constant 1.000000e+00 : f32
    %64 = vector.broadcast %cst_32 : f32 to vector<1x384xf32>
    %65 = arith.addf %64, %63 : vector<1x384xf32>
    %66 = arith.divf %64, %65 : vector<1x384xf32>
    %67 = vector.extract_strided_slice %66 {offsets = [0, 0], sizes = [1, 128], strides = [1, 1]} : vector<1x384xf32> to vector<1x128xf32>
    %68 = vector.extract_strided_slice %66 {offsets = [0, 128], sizes = [1, 128], strides = [1, 1]} : vector<1x384xf32> to vector<1x128xf32>
    %69 = vector.extract_strided_slice %66 {offsets = [0, 256], sizes = [1, 128], strides = [1, 1]} : vector<1x384xf32> to vector<1x128xf32>
    %70 = vector.extract_strided_slice %60 {offsets = [0, 384], sizes = [1, 128], strides = [1, 1]} : vector<1x512xf32> to vector<1x128xf32>
    %71 = math.tanh %70 : vector<1x128xf32>
    %72 = arith.mulf %68, %28 : vector<1x128xf32>
    %73 = arith.mulf %67, %71 : vector<1x128xf32>
    %74 = arith.addf %72, %73 : vector<1x128xf32>
    %75 = math.tanh %74 : vector<1x128xf32>
    %76 = arith.mulf %69, %75 : vector<1x128xf32>
    %77 = arith.truncf %76 : vector<1x128xf32> to vector<1x128xbf16>
    %c0_33 = arith.constant 0 : index
    %c0_34 = arith.constant 0 : index
    %78 = vector.load %arg10[%c0_33, %c0_34] : memref<1x256xbf16, #tpu.memory_space<vmem>>, vector<1x128xbf16>
    tpu.vector_store %arg10[%c0_33, %c0_34], %77 {strides = array<i32>} : memref<1x256xbf16, #tpu.memory_space<vmem>>, vector<1x128xbf16>,
    %c0_35 = arith.constant 0 : index
    %c0_36 = arith.constant 0 : index
    %79 = vector.load %arg10[%c0_35, %c0_36] : memref<1x256xbf16, #tpu.memory_space<vmem>>, vector<1x256xbf16>
    %c0_37 = arith.constant 0 : index
    %c0_38 = arith.constant 0 : index
    %80 = vector.load %arg4[%c0_37, %c0_38] : memref<256x512xbf16, #tpu.memory_space<vmem>>, vector<256x512xbf16>
    %cst_39 = arith.constant dense<0.000000e+00> : vector<1x512xf32>
    %81 = tpu.matmul %79, %80, %cst_39 {dimension_numbers = #tpu.dot_dimension_numbers<[1], [0], [0], [1], [0, 0, 1, 1], [], []>} : vector<1x256xbf16>, vector<256x512xbf16>, vector<1x512xf32> -> vector<1x512xf32>
    %c0_40 = arith.constant 0 : index
    %c0_41 = arith.constant 0 : index
    %82 = vector.load %arg5[%c0_40, %c0_41] : memref<1x512xf32, #tpu.memory_space<vmem>>, vector<1x512xf32>
    %83 = arith.addf %81, %82 : vector<1x512xf32>
    %84 = vector.extract_strided_slice %83 {offsets = [0, 0], sizes = [1, 384], strides = [1, 1]} : vector<1x512xf32> to vector<1x384xf32>
    %85 = arith.negf %84 : vector<1x384xf32>
    %86 = math.exp %85 : vector<1x384xf32>
    %cst_42 = arith.constant 1.000000e+00 : f32
    %87 = vector.broadcast %cst_42 : f32 to vector<1x384xf32>
    %88 = arith.addf %87, %86 : vector<1x384xf32>
    %89 = arith.divf %87, %88 : vector<1x384xf32>
    %90 = vector.extract_strided_slice %89 {offsets = [0, 0], sizes = [1, 128], strides = [1, 1]} : vector<1x384xf32> to vector<1x128xf32>
    %91 = vector.extract_strided_slice %89 {offsets = [0, 128], sizes = [1, 128], strides = [1, 1]} : vector<1x384xf32> to vector<1x128xf32>
    %92 = vector.extract_strided_slice %89 {offsets = [0, 256], sizes = [1, 128], strides = [1, 1]} : vector<1x384xf32> to vector<1x128xf32>
    %93 = vector.extract_strided_slice %83 {offsets = [0, 384], sizes = [1, 128], strides = [1, 1]} : vector<1x512xf32> to vector<1x128xf32>
    %94 = math.tanh %93 : vector<1x128xf32>
    %95 = arith.mulf %91, %51 : vector<1x128xf32>
    %96 = arith.mulf %90, %94 : vector<1x128xf32>
    %97 = arith.addf %95, %96 : vector<1x128xf32>
    %98 = math.tanh %97 : vector<1x128xf32>
    %99 = arith.mulf %92, %98 : vector<1x128xf32>
    %100 = arith.truncf %99 : vector<1x128xf32> to vector<1x128xbf16>
    %c0_43 = arith.constant 0 : index
    %c128_44 = arith.constant 128 : index
    %101 = vector.load %arg10[%c0_43, %c128_44] : memref<1x256xbf16, #tpu.memory_space<vmem>>, vector<1x128xbf16>
    tpu.vector_store %arg10[%c0_43, %c128_44], %100 {strides = array<i32>} : memref<1x256xbf16, #tpu.memory_space<vmem>>, vector<1x128xbf16>,
    %c2 = arith.constant 2 : index
    %c0_45 = arith.constant 0 : index
    %102 = vector.load %arg9[%c2, %c0_45] : memref<8x512xf32, #tpu.memory_space<vmem>>, vector<1x512xf32>
    %103 = arith.truncf %76 : vector<1x128xf32> to vector<1x128xbf16>
    %c0_46 = arith.constant 0 : index
    %c0_47 = arith.constant 0 : index
    %104 = vector.load %arg2[%c0_46, %c0_47] : memref<128x512xbf16, #tpu.memory_space<vmem>>, vector<128x512xbf16>
    %cst_48 = arith.constant dense<0.000000e+00> : vector<1x512xf32>
    %105 = tpu.matmul %103, %104, %cst_48 {dimension_numbers = #tpu.dot_dimension_numbers<[1], [0], [0], [1], [0, 0, 1, 1], [], []>} : vector<1x128xbf16>, vector<128x512xbf16>, vector<1x512xf32> -> vector<1x512xf32>
    %106 = arith.addf %102, %105 : vector<1x512xf32>
    %107 = vector.extract_strided_slice %106 {offsets = [0, 0], sizes = [1, 384], strides = [1, 1]} : vector<1x512xf32> to vector<1x384xf32>
    %108 = arith.negf %107 : vector<1x384xf32>
    %109 = math.exp %108 : vector<1x384xf32>
    %cst_49 = arith.constant 1.000000e+00 : f32
    %110 = vector.broadcast %cst_49 : f32 to vector<1x384xf32>
    %111 = arith.addf %110, %109 : vector<1x384xf32>
    %112 = arith.divf %110, %111 : vector<1x384xf32>
    %113 = vector.extract_strided_slice %112 {offsets = [0, 0], sizes = [1, 128], strides = [1, 1]} : vector<1x384xf32> to vector<1x128xf32>
    %114 = vector.extract_strided_slice %112 {offsets = [0, 128], sizes = [1, 128], strides = [1, 1]} : vector<1x384xf32> to vector<1x128xf32>
    %115 = vector.extract_strided_slice %112 {offsets = [0, 256], sizes = [1, 128], strides = [1, 1]} : vector<1x384xf32> to vector<1x128xf32>
    %116 = vector.extract_strided_slice %106 {offsets = [0, 384], sizes = [1, 128], strides = [1, 1]} : vector<1x512xf32> to vector<1x128xf32>
    %117 = math.tanh %116 : vector<1x128xf32>
    %118 = arith.mulf %114, %74 : vector<1x128xf32>
    %119 = arith.mulf %113, %117 : vector<1x128xf32>
    %120 = arith.addf %118, %119 : vector<1x128xf32>
    %121 = math.tanh %120 : vector<1x128xf32>
    %122 = arith.mulf %115, %121 : vector<1x128xf32>
    %123 = arith.truncf %122 : vector<1x128xf32> to vector<1x128xbf16>
    %c0_50 = arith.constant 0 : index
    %c0_51 = arith.constant 0 : index
    %124 = vector.load %arg10[%c0_50, %c0_51] : memref<1x256xbf16, #tpu.memory_space<vmem>>, vector<1x128xbf16>
    tpu.vector_store %arg10[%c0_50, %c0_51], %123 {strides = array<i32>} : memref<1x256xbf16, #tpu.memory_space<vmem>>, vector<1x128xbf16>,
    %c0_52 = arith.constant 0 : index
    %c0_53 = arith.constant 0 : index
    %125 = vector.load %arg10[%c0_52, %c0_53] : memref<1x256xbf16, #tpu.memory_space<vmem>>, vector<1x256xbf16>
    %c0_54 = arith.constant 0 : index
    %c0_55 = arith.constant 0 : index
    %126 = vector.load %arg4[%c0_54, %c0_55] : memref<256x512xbf16, #tpu.memory_space<vmem>>, vector<256x512xbf16>
    %cst_56 = arith.constant dense<0.000000e+00> : vector<1x512xf32>
    %127 = tpu.matmul %125, %126, %cst_56 {dimension_numbers = #tpu.dot_dimension_numbers<[1], [0], [0], [1], [0, 0, 1, 1], [], []>} : vector<1x256xbf16>, vector<256x512xbf16>, vector<1x512xf32> -> vector<1x512xf32>
    %c0_57 = arith.constant 0 : index
    %c0_58 = arith.constant 0 : index
    %128 = vector.load %arg5[%c0_57, %c0_58] : memref<1x512xf32, #tpu.memory_space<vmem>>, vector<1x512xf32>
    %129 = arith.addf %127, %128 : vector<1x512xf32>
    %130 = vector.extract_strided_slice %129 {offsets = [0, 0], sizes = [1, 384], strides = [1, 1]} : vector<1x512xf32> to vector<1x384xf32>
    %131 = arith.negf %130 : vector<1x384xf32>
    %132 = math.exp %131 : vector<1x384xf32>
    %cst_59 = arith.constant 1.000000e+00 : f32
    %133 = vector.broadcast %cst_59 : f32 to vector<1x384xf32>
    %134 = arith.addf %133, %132 : vector<1x384xf32>
    %135 = arith.divf %133, %134 : vector<1x384xf32>
    %136 = vector.extract_strided_slice %135 {offsets = [0, 0], sizes = [1, 128], strides = [1, 1]} : vector<1x384xf32> to vector<1x128xf32>
    %137 = vector.extract_strided_slice %135 {offsets = [0, 128], sizes = [1, 128], strides = [1, 1]} : vector<1x384xf32> to vector<1x128xf32>
    %138 = vector.extract_strided_slice %135 {offsets = [0, 256], sizes = [1, 128], strides = [1, 1]} : vector<1x384xf32> to vector<1x128xf32>
    %139 = vector.extract_strided_slice %129 {offsets = [0, 384], sizes = [1, 128], strides = [1, 1]} : vector<1x512xf32> to vector<1x128xf32>
    %140 = math.tanh %139 : vector<1x128xf32>
    %141 = arith.mulf %137, %97 : vector<1x128xf32>
    %142 = arith.mulf %136, %140 : vector<1x128xf32>
    %143 = arith.addf %141, %142 : vector<1x128xf32>
    %144 = math.tanh %143 : vector<1x128xf32>
    %145 = arith.mulf %138, %144 : vector<1x128xf32>
    %146 = arith.truncf %145 : vector<1x128xf32> to vector<1x128xbf16>
    %c0_60 = arith.constant 0 : index
    %c128_61 = arith.constant 128 : index
    %147 = vector.load %arg10[%c0_60, %c128_61] : memref<1x256xbf16, #tpu.memory_space<vmem>>, vector<1x128xbf16>
    tpu.vector_store %arg10[%c0_60, %c128_61], %146 {strides = array<i32>} : memref<1x256xbf16, #tpu.memory_space<vmem>>, vector<1x128xbf16>,
    %c3 = arith.constant 3 : index
    %c0_62 = arith.constant 0 : index
    %148 = vector.load %arg9[%c3, %c0_62] : memref<8x512xf32, #tpu.memory_space<vmem>>, vector<1x512xf32>
    %149 = arith.truncf %122 : vector<1x128xf32> to vector<1x128xbf16>
    %c0_63 = arith.constant 0 : index
    %c0_64 = arith.constant 0 : index
    %150 = vector.load %arg2[%c0_63, %c0_64] : memref<128x512xbf16, #tpu.memory_space<vmem>>, vector<128x512xbf16>
    %cst_65 = arith.constant dense<0.000000e+00> : vector<1x512xf32>
    %151 = tpu.matmul %149, %150, %cst_65 {dimension_numbers = #tpu.dot_dimension_numbers<[1], [0], [0], [1], [0, 0, 1, 1], [], []>} : vector<1x128xbf16>, vector<128x512xbf16>, vector<1x512xf32> -> vector<1x512xf32>
    %152 = arith.addf %148, %151 : vector<1x512xf32>
    %153 = vector.extract_strided_slice %152 {offsets = [0, 0], sizes = [1, 384], strides = [1, 1]} : vector<1x512xf32> to vector<1x384xf32>
    %154 = arith.negf %153 : vector<1x384xf32>
    %155 = math.exp %154 : vector<1x384xf32>
    %cst_66 = arith.constant 1.000000e+00 : f32
    %156 = vector.broadcast %cst_66 : f32 to vector<1x384xf32>
    %157 = arith.addf %156, %155 : vector<1x384xf32>
    %158 = arith.divf %156, %157 : vector<1x384xf32>
    %159 = vector.extract_strided_slice %158 {offsets = [0, 0], sizes = [1, 128], strides = [1, 1]} : vector<1x384xf32> to vector<1x128xf32>
    %160 = vector.extract_strided_slice %158 {offsets = [0, 128], sizes = [1, 128], strides = [1, 1]} : vector<1x384xf32> to vector<1x128xf32>
    %161 = vector.extract_strided_slice %158 {offsets = [0, 256], sizes = [1, 128], strides = [1, 1]} : vector<1x384xf32> to vector<1x128xf32>
    %162 = vector.extract_strided_slice %152 {offsets = [0, 384], sizes = [1, 128], strides = [1, 1]} : vector<1x512xf32> to vector<1x128xf32>
    %163 = math.tanh %162 : vector<1x128xf32>
    %164 = arith.mulf %160, %120 : vector<1x128xf32>
    %165 = arith.mulf %159, %163 : vector<1x128xf32>
    %166 = arith.addf %164, %165 : vector<1x128xf32>
    %167 = math.tanh %166 : vector<1x128xf32>
    %168 = arith.mulf %161, %167 : vector<1x128xf32>
    %169 = arith.truncf %168 : vector<1x128xf32> to vector<1x128xbf16>
    %c0_67 = arith.constant 0 : index
    %c0_68 = arith.constant 0 : index
    %170 = vector.load %arg10[%c0_67, %c0_68] : memref<1x256xbf16, #tpu.memory_space<vmem>>, vector<1x128xbf16>
    tpu.vector_store %arg10[%c0_67, %c0_68], %169 {strides = array<i32>} : memref<1x256xbf16, #tpu.memory_space<vmem>>, vector<1x128xbf16>,
    %c0_69 = arith.constant 0 : index
    %c0_70 = arith.constant 0 : index
    %171 = vector.load %arg10[%c0_69, %c0_70] : memref<1x256xbf16, #tpu.memory_space<vmem>>, vector<1x256xbf16>
    %c0_71 = arith.constant 0 : index
    %c0_72 = arith.constant 0 : index
    %172 = vector.load %arg4[%c0_71, %c0_72] : memref<256x512xbf16, #tpu.memory_space<vmem>>, vector<256x512xbf16>
    %cst_73 = arith.constant dense<0.000000e+00> : vector<1x512xf32>
    %173 = tpu.matmul %171, %172, %cst_73 {dimension_numbers = #tpu.dot_dimension_numbers<[1], [0], [0], [1], [0, 0, 1, 1], [], []>} : vector<1x256xbf16>, vector<256x512xbf16>, vector<1x512xf32> -> vector<1x512xf32>
    %c0_74 = arith.constant 0 : index
    %c0_75 = arith.constant 0 : index
    %174 = vector.load %arg5[%c0_74, %c0_75] : memref<1x512xf32, #tpu.memory_space<vmem>>, vector<1x512xf32>
    %175 = arith.addf %173, %174 : vector<1x512xf32>
    %176 = vector.extract_strided_slice %175 {offsets = [0, 0], sizes = [1, 384], strides = [1, 1]} : vector<1x512xf32> to vector<1x384xf32>
    %177 = arith.negf %176 : vector<1x384xf32>
    %178 = math.exp %177 : vector<1x384xf32>
    %cst_76 = arith.constant 1.000000e+00 : f32
    %179 = vector.broadcast %cst_76 : f32 to vector<1x384xf32>
    %180 = arith.addf %179, %178 : vector<1x384xf32>
    %181 = arith.divf %179, %180 : vector<1x384xf32>
    %182 = vector.extract_strided_slice %181 {offsets = [0, 0], sizes = [1, 128], strides = [1, 1]} : vector<1x384xf32> to vector<1x128xf32>
    %183 = vector.extract_strided_slice %181 {offsets = [0, 128], sizes = [1, 128], strides = [1, 1]} : vector<1x384xf32> to vector<1x128xf32>
    %184 = vector.extract_strided_slice %181 {offsets = [0, 256], sizes = [1, 128], strides = [1, 1]} : vector<1x384xf32> to vector<1x128xf32>
    %185 = vector.extract_strided_slice %175 {offsets = [0, 384], sizes = [1, 128], strides = [1, 1]} : vector<1x512xf32> to vector<1x128xf32>
    %186 = math.tanh %185 : vector<1x128xf32>
    %187 = arith.mulf %183, %143 : vector<1x128xf32>
    %188 = arith.mulf %182, %186 : vector<1x128xf32>
    %189 = arith.addf %187, %188 : vector<1x128xf32>
    %190 = math.tanh %189 : vector<1x128xf32>
    %191 = arith.mulf %184, %190 : vector<1x128xf32>
    %192 = arith.truncf %191 : vector<1x128xf32> to vector<1x128xbf16>
    %c0_77 = arith.constant 0 : index
    %c128_78 = arith.constant 128 : index
    %193 = vector.load %arg10[%c0_77, %c128_78] : memref<1x256xbf16, #tpu.memory_space<vmem>>, vector<1x128xbf16>
    tpu.vector_store %arg10[%c0_77, %c128_78], %192 {strides = array<i32>} : memref<1x256xbf16, #tpu.memory_space<vmem>>, vector<1x128xbf16>,
    %c4 = arith.constant 4 : index
    %c0_79 = arith.constant 0 : index
    %194 = vector.load %arg9[%c4, %c0_79] : memref<8x512xf32, #tpu.memory_space<vmem>>, vector<1x512xf32>
    %195 = arith.truncf %168 : vector<1x128xf32> to vector<1x128xbf16>
    %c0_80 = arith.constant 0 : index
    %c0_81 = arith.constant 0 : index
    %196 = vector.load %arg2[%c0_80, %c0_81] : memref<128x512xbf16, #tpu.memory_space<vmem>>, vector<128x512xbf16>
    %cst_82 = arith.constant dense<0.000000e+00> : vector<1x512xf32>
    %197 = tpu.matmul %195, %196, %cst_82 {dimension_numbers = #tpu.dot_dimension_numbers<[1], [0], [0], [1], [0, 0, 1, 1], [], []>} : vector<1x128xbf16>, vector<128x512xbf16>, vector<1x512xf32> -> vector<1x512xf32>
    %198 = arith.addf %194, %197 : vector<1x512xf32>
    %199 = vector.extract_strided_slice %198 {offsets = [0, 0], sizes = [1, 384], strides = [1, 1]} : vector<1x512xf32> to vector<1x384xf32>
    %200 = arith.negf %199 : vector<1x384xf32>
    %201 = math.exp %200 : vector<1x384xf32>
    %cst_83 = arith.constant 1.000000e+00 : f32
    %202 = vector.broadcast %cst_83 : f32 to vector<1x384xf32>
    %203 = arith.addf %202, %201 : vector<1x384xf32>
    %204 = arith.divf %202, %203 : vector<1x384xf32>
    %205 = vector.extract_strided_slice %204 {offsets = [0, 0], sizes = [1, 128], strides = [1, 1]} : vector<1x384xf32> to vector<1x128xf32>
    %206 = vector.extract_strided_slice %204 {offsets = [0, 128], sizes = [1, 128], strides = [1, 1]} : vector<1x384xf32> to vector<1x128xf32>
    %207 = vector.extract_strided_slice %204 {offsets = [0, 256], sizes = [1, 128], strides = [1, 1]} : vector<1x384xf32> to vector<1x128xf32>
    %208 = vector.extract_strided_slice %198 {offsets = [0, 384], sizes = [1, 128], strides = [1, 1]} : vector<1x512xf32> to vector<1x128xf32>
    %209 = math.tanh %208 : vector<1x128xf32>
    %210 = arith.mulf %206, %166 : vector<1x128xf32>
    %211 = arith.mulf %205, %209 : vector<1x128xf32>
    %212 = arith.addf %210, %211 : vector<1x128xf32>
    %213 = math.tanh %212 : vector<1x128xf32>
    %214 = arith.mulf %207, %213 : vector<1x128xf32>
    %215 = arith.truncf %214 : vector<1x128xf32> to vector<1x128xbf16>
    %c0_84 = arith.constant 0 : index
    %c0_85 = arith.constant 0 : index
    %216 = vector.load %arg10[%c0_84, %c0_85] : memref<1x256xbf16, #tpu.memory_space<vmem>>, vector<1x128xbf16>
    tpu.vector_store %arg10[%c0_84, %c0_85], %215 {strides = array<i32>} : memref<1x256xbf16, #tpu.memory_space<vmem>>, vector<1x128xbf16>,
    %c0_86 = arith.constant 0 : index
    %c0_87 = arith.constant 0 : index
    %217 = vector.load %arg10[%c0_86, %c0_87] : memref<1x256xbf16, #tpu.memory_space<vmem>>, vector<1x256xbf16>
    %c0_88 = arith.constant 0 : index
    %c0_89 = arith.constant 0 : index
    %218 = vector.load %arg4[%c0_88, %c0_89] : memref<256x512xbf16, #tpu.memory_space<vmem>>, vector<256x512xbf16>
    %cst_90 = arith.constant dense<0.000000e+00> : vector<1x512xf32>
    %219 = tpu.matmul %217, %218, %cst_90 {dimension_numbers = #tpu.dot_dimension_numbers<[1], [0], [0], [1], [0, 0, 1, 1], [], []>} : vector<1x256xbf16>, vector<256x512xbf16>, vector<1x512xf32> -> vector<1x512xf32>
    %c0_91 = arith.constant 0 : index
    %c0_92 = arith.constant 0 : index
    %220 = vector.load %arg5[%c0_91, %c0_92] : memref<1x512xf32, #tpu.memory_space<vmem>>, vector<1x512xf32>
    %221 = arith.addf %219, %220 : vector<1x512xf32>
    %222 = vector.extract_strided_slice %221 {offsets = [0, 0], sizes = [1, 384], strides = [1, 1]} : vector<1x512xf32> to vector<1x384xf32>
    %223 = arith.negf %222 : vector<1x384xf32>
    %224 = math.exp %223 : vector<1x384xf32>
    %cst_93 = arith.constant 1.000000e+00 : f32
    %225 = vector.broadcast %cst_93 : f32 to vector<1x384xf32>
    %226 = arith.addf %225, %224 : vector<1x384xf32>
    %227 = arith.divf %225, %226 : vector<1x384xf32>
    %228 = vector.extract_strided_slice %227 {offsets = [0, 0], sizes = [1, 128], strides = [1, 1]} : vector<1x384xf32> to vector<1x128xf32>
    %229 = vector.extract_strided_slice %227 {offsets = [0, 128], sizes = [1, 128], strides = [1, 1]} : vector<1x384xf32> to vector<1x128xf32>
    %230 = vector.extract_strided_slice %227 {offsets = [0, 256], sizes = [1, 128], strides = [1, 1]} : vector<1x384xf32> to vector<1x128xf32>
    %231 = vector.extract_strided_slice %221 {offsets = [0, 384], sizes = [1, 128], strides = [1, 1]} : vector<1x512xf32> to vector<1x128xf32>
    %232 = math.tanh %231 : vector<1x128xf32>
    %233 = arith.mulf %229, %189 : vector<1x128xf32>
    %234 = arith.mulf %228, %232 : vector<1x128xf32>
    %235 = arith.addf %233, %234 : vector<1x128xf32>
    %236 = math.tanh %235 : vector<1x128xf32>
    %237 = arith.mulf %230, %236 : vector<1x128xf32>
    %238 = arith.truncf %237 : vector<1x128xf32> to vector<1x128xbf16>
    %c0_94 = arith.constant 0 : index
    %c128_95 = arith.constant 128 : index
    %239 = vector.load %arg10[%c0_94, %c128_95] : memref<1x256xbf16, #tpu.memory_space<vmem>>, vector<1x128xbf16>
    tpu.vector_store %arg10[%c0_94, %c128_95], %238 {strides = array<i32>} : memref<1x256xbf16, #tpu.memory_space<vmem>>, vector<1x128xbf16>,
    %c5 = arith.constant 5 : index
    %c0_96 = arith.constant 0 : index
    %240 = vector.load %arg9[%c5, %c0_96] : memref<8x512xf32, #tpu.memory_space<vmem>>, vector<1x512xf32>
    %241 = arith.truncf %214 : vector<1x128xf32> to vector<1x128xbf16>
    %c0_97 = arith.constant 0 : index
    %c0_98 = arith.constant 0 : index
    %242 = vector.load %arg2[%c0_97, %c0_98] : memref<128x512xbf16, #tpu.memory_space<vmem>>, vector<128x512xbf16>
    %cst_99 = arith.constant dense<0.000000e+00> : vector<1x512xf32>
    %243 = tpu.matmul %241, %242, %cst_99 {dimension_numbers = #tpu.dot_dimension_numbers<[1], [0], [0], [1], [0, 0, 1, 1], [], []>} : vector<1x128xbf16>, vector<128x512xbf16>, vector<1x512xf32> -> vector<1x512xf32>
    %244 = arith.addf %240, %243 : vector<1x512xf32>
    %245 = vector.extract_strided_slice %244 {offsets = [0, 0], sizes = [1, 384], strides = [1, 1]} : vector<1x512xf32> to vector<1x384xf32>
    %246 = arith.negf %245 : vector<1x384xf32>
    %247 = math.exp %246 : vector<1x384xf32>
    %cst_100 = arith.constant 1.000000e+00 : f32
    %248 = vector.broadcast %cst_100 : f32 to vector<1x384xf32>
    %249 = arith.addf %248, %247 : vector<1x384xf32>
    %250 = arith.divf %248, %249 : vector<1x384xf32>
    %251 = vector.extract_strided_slice %250 {offsets = [0, 0], sizes = [1, 128], strides = [1, 1]} : vector<1x384xf32> to vector<1x128xf32>
    %252 = vector.extract_strided_slice %250 {offsets = [0, 128], sizes = [1, 128], strides = [1, 1]} : vector<1x384xf32> to vector<1x128xf32>
    %253 = vector.extract_strided_slice %250 {offsets = [0, 256], sizes = [1, 128], strides = [1, 1]} : vector<1x384xf32> to vector<1x128xf32>
    %254 = vector.extract_strided_slice %244 {offsets = [0, 384], sizes = [1, 128], strides = [1, 1]} : vector<1x512xf32> to vector<1x128xf32>
    %255 = math.tanh %254 : vector<1x128xf32>
    %256 = arith.mulf %252, %212 : vector<1x128xf32>
    %257 = arith.mulf %251, %255 : vector<1x128xf32>
    %258 = arith.addf %256, %257 : vector<1x128xf32>
    %259 = math.tanh %258 : vector<1x128xf32>
    %260 = arith.mulf %253, %259 : vector<1x128xf32>
    %261 = arith.truncf %260 : vector<1x128xf32> to vector<1x128xbf16>
    %c0_101 = arith.constant 0 : index
    %c0_102 = arith.constant 0 : index
    %262 = vector.load %arg10[%c0_101, %c0_102] : memref<1x256xbf16, #tpu.memory_space<vmem>>, vector<1x128xbf16>
    tpu.vector_store %arg10[%c0_101, %c0_102], %261 {strides = array<i32>} : memref<1x256xbf16, #tpu.memory_space<vmem>>, vector<1x128xbf16>,
    %c0_103 = arith.constant 0 : index
    %c0_104 = arith.constant 0 : index
    %263 = vector.load %arg10[%c0_103, %c0_104] : memref<1x256xbf16, #tpu.memory_space<vmem>>, vector<1x256xbf16>
    %c0_105 = arith.constant 0 : index
    %c0_106 = arith.constant 0 : index
    %264 = vector.load %arg4[%c0_105, %c0_106] : memref<256x512xbf16, #tpu.memory_space<vmem>>, vector<256x512xbf16>
    %cst_107 = arith.constant dense<0.000000e+00> : vector<1x512xf32>
    %265 = tpu.matmul %263, %264, %cst_107 {dimension_numbers = #tpu.dot_dimension_numbers<[1], [0], [0], [1], [0, 0, 1, 1], [], []>} : vector<1x256xbf16>, vector<256x512xbf16>, vector<1x512xf32> -> vector<1x512xf32>
    %c0_108 = arith.constant 0 : index
    %c0_109 = arith.constant 0 : index
    %266 = vector.load %arg5[%c0_108, %c0_109] : memref<1x512xf32, #tpu.memory_space<vmem>>, vector<1x512xf32>
    %267 = arith.addf %265, %266 : vector<1x512xf32>
    %268 = vector.extract_strided_slice %267 {offsets = [0, 0], sizes = [1, 384], strides = [1, 1]} : vector<1x512xf32> to vector<1x384xf32>
    %269 = arith.negf %268 : vector<1x384xf32>
    %270 = math.exp %269 : vector<1x384xf32>
    %cst_110 = arith.constant 1.000000e+00 : f32
    %271 = vector.broadcast %cst_110 : f32 to vector<1x384xf32>
    %272 = arith.addf %271, %270 : vector<1x384xf32>
    %273 = arith.divf %271, %272 : vector<1x384xf32>
    %274 = vector.extract_strided_slice %273 {offsets = [0, 0], sizes = [1, 128], strides = [1, 1]} : vector<1x384xf32> to vector<1x128xf32>
    %275 = vector.extract_strided_slice %273 {offsets = [0, 128], sizes = [1, 128], strides = [1, 1]} : vector<1x384xf32> to vector<1x128xf32>
    %276 = vector.extract_strided_slice %273 {offsets = [0, 256], sizes = [1, 128], strides = [1, 1]} : vector<1x384xf32> to vector<1x128xf32>
    %277 = vector.extract_strided_slice %267 {offsets = [0, 384], sizes = [1, 128], strides = [1, 1]} : vector<1x512xf32> to vector<1x128xf32>
    %278 = math.tanh %277 : vector<1x128xf32>
    %279 = arith.mulf %275, %235 : vector<1x128xf32>
    %280 = arith.mulf %274, %278 : vector<1x128xf32>
    %281 = arith.addf %279, %280 : vector<1x128xf32>
    %282 = math.tanh %281 : vector<1x128xf32>
    %283 = arith.mulf %276, %282 : vector<1x128xf32>
    %284 = arith.truncf %283 : vector<1x128xf32> to vector<1x128xbf16>
    %c0_111 = arith.constant 0 : index
    %c128_112 = arith.constant 128 : index
    %285 = vector.load %arg10[%c0_111, %c128_112] : memref<1x256xbf16, #tpu.memory_space<vmem>>, vector<1x128xbf16>
    tpu.vector_store %arg10[%c0_111, %c128_112], %284 {strides = array<i32>} : memref<1x256xbf16, #tpu.memory_space<vmem>>, vector<1x128xbf16>,
    %c6 = arith.constant 6 : index
    %c0_113 = arith.constant 0 : index
    %286 = vector.load %arg9[%c6, %c0_113] : memref<8x512xf32, #tpu.memory_space<vmem>>, vector<1x512xf32>
    %287 = arith.truncf %260 : vector<1x128xf32> to vector<1x128xbf16>
    %c0_114 = arith.constant 0 : index
    %c0_115 = arith.constant 0 : index
    %288 = vector.load %arg2[%c0_114, %c0_115] : memref<128x512xbf16, #tpu.memory_space<vmem>>, vector<128x512xbf16>
    %cst_116 = arith.constant dense<0.000000e+00> : vector<1x512xf32>
    %289 = tpu.matmul %287, %288, %cst_116 {dimension_numbers = #tpu.dot_dimension_numbers<[1], [0], [0], [1], [0, 0, 1, 1], [], []>} : vector<1x128xbf16>, vector<128x512xbf16>, vector<1x512xf32> -> vector<1x512xf32>
    %290 = arith.addf %286, %289 : vector<1x512xf32>
    %291 = vector.extract_strided_slice %290 {offsets = [0, 0], sizes = [1, 384], strides = [1, 1]} : vector<1x512xf32> to vector<1x384xf32>
    %292 = arith.negf %291 : vector<1x384xf32>
    %293 = math.exp %292 : vector<1x384xf32>
    %cst_117 = arith.constant 1.000000e+00 : f32
    %294 = vector.broadcast %cst_117 : f32 to vector<1x384xf32>
    %295 = arith.addf %294, %293 : vector<1x384xf32>
    %296 = arith.divf %294, %295 : vector<1x384xf32>
    %297 = vector.extract_strided_slice %296 {offsets = [0, 0], sizes = [1, 128], strides = [1, 1]} : vector<1x384xf32> to vector<1x128xf32>
    %298 = vector.extract_strided_slice %296 {offsets = [0, 128], sizes = [1, 128], strides = [1, 1]} : vector<1x384xf32> to vector<1x128xf32>
    %299 = vector.extract_strided_slice %296 {offsets = [0, 256], sizes = [1, 128], strides = [1, 1]} : vector<1x384xf32> to vector<1x128xf32>
    %300 = vector.extract_strided_slice %290 {offsets = [0, 384], sizes = [1, 128], strides = [1, 1]} : vector<1x512xf32> to vector<1x128xf32>
    %301 = math.tanh %300 : vector<1x128xf32>
    %302 = arith.mulf %298, %258 : vector<1x128xf32>
    %303 = arith.mulf %297, %301 : vector<1x128xf32>
    %304 = arith.addf %302, %303 : vector<1x128xf32>
    %305 = math.tanh %304 : vector<1x128xf32>
    %306 = arith.mulf %299, %305 : vector<1x128xf32>
    %307 = arith.truncf %306 : vector<1x128xf32> to vector<1x128xbf16>
    %c0_118 = arith.constant 0 : index
    %c0_119 = arith.constant 0 : index
    %308 = vector.load %arg10[%c0_118, %c0_119] : memref<1x256xbf16, #tpu.memory_space<vmem>>, vector<1x128xbf16>
    tpu.vector_store %arg10[%c0_118, %c0_119], %307 {strides = array<i32>} : memref<1x256xbf16, #tpu.memory_space<vmem>>, vector<1x128xbf16>,
    %c0_120 = arith.constant 0 : index
    %c0_121 = arith.constant 0 : index
    %309 = vector.load %arg10[%c0_120, %c0_121] : memref<1x256xbf16, #tpu.memory_space<vmem>>, vector<1x256xbf16>
    %c0_122 = arith.constant 0 : index
    %c0_123 = arith.constant 0 : index
    %310 = vector.load %arg4[%c0_122, %c0_123] : memref<256x512xbf16, #tpu.memory_space<vmem>>, vector<256x512xbf16>
    %cst_124 = arith.constant dense<0.000000e+00> : vector<1x512xf32>
    %311 = tpu.matmul %309, %310, %cst_124 {dimension_numbers = #tpu.dot_dimension_numbers<[1], [0], [0], [1], [0, 0, 1, 1], [], []>} : vector<1x256xbf16>, vector<256x512xbf16>, vector<1x512xf32> -> vector<1x512xf32>
    %c0_125 = arith.constant 0 : index
    %c0_126 = arith.constant 0 : index
    %312 = vector.load %arg5[%c0_125, %c0_126] : memref<1x512xf32, #tpu.memory_space<vmem>>, vector<1x512xf32>
    %313 = arith.addf %311, %312 : vector<1x512xf32>
    %314 = vector.extract_strided_slice %313 {offsets = [0, 0], sizes = [1, 384], strides = [1, 1]} : vector<1x512xf32> to vector<1x384xf32>
    %315 = arith.negf %314 : vector<1x384xf32>
    %316 = math.exp %315 : vector<1x384xf32>
    %cst_127 = arith.constant 1.000000e+00 : f32
    %317 = vector.broadcast %cst_127 : f32 to vector<1x384xf32>
    %318 = arith.addf %317, %316 : vector<1x384xf32>
    %319 = arith.divf %317, %318 : vector<1x384xf32>
    %320 = vector.extract_strided_slice %319 {offsets = [0, 0], sizes = [1, 128], strides = [1, 1]} : vector<1x384xf32> to vector<1x128xf32>
    %321 = vector.extract_strided_slice %319 {offsets = [0, 128], sizes = [1, 128], strides = [1, 1]} : vector<1x384xf32> to vector<1x128xf32>
    %322 = vector.extract_strided_slice %319 {offsets = [0, 256], sizes = [1, 128], strides = [1, 1]} : vector<1x384xf32> to vector<1x128xf32>
    %323 = vector.extract_strided_slice %313 {offsets = [0, 384], sizes = [1, 128], strides = [1, 1]} : vector<1x512xf32> to vector<1x128xf32>
    %324 = math.tanh %323 : vector<1x128xf32>
    %325 = arith.mulf %321, %281 : vector<1x128xf32>
    %326 = arith.mulf %320, %324 : vector<1x128xf32>
    %327 = arith.addf %325, %326 : vector<1x128xf32>
    %328 = math.tanh %327 : vector<1x128xf32>
    %329 = arith.mulf %322, %328 : vector<1x128xf32>
    %330 = arith.truncf %329 : vector<1x128xf32> to vector<1x128xbf16>
    %c0_128 = arith.constant 0 : index
    %c128_129 = arith.constant 128 : index
    %331 = vector.load %arg10[%c0_128, %c128_129] : memref<1x256xbf16, #tpu.memory_space<vmem>>, vector<1x128xbf16>
    tpu.vector_store %arg10[%c0_128, %c128_129], %330 {strides = array<i32>} : memref<1x256xbf16, #tpu.memory_space<vmem>>, vector<1x128xbf16>,
    %c7 = arith.constant 7 : index
    %c0_130 = arith.constant 0 : index
    %332 = vector.load %arg9[%c7, %c0_130] : memref<8x512xf32, #tpu.memory_space<vmem>>, vector<1x512xf32>
    %333 = arith.truncf %306 : vector<1x128xf32> to vector<1x128xbf16>
    %c0_131 = arith.constant 0 : index
    %c0_132 = arith.constant 0 : index
    %334 = vector.load %arg2[%c0_131, %c0_132] : memref<128x512xbf16, #tpu.memory_space<vmem>>, vector<128x512xbf16>
    %cst_133 = arith.constant dense<0.000000e+00> : vector<1x512xf32>
    %335 = tpu.matmul %333, %334, %cst_133 {dimension_numbers = #tpu.dot_dimension_numbers<[1], [0], [0], [1], [0, 0, 1, 1], [], []>} : vector<1x128xbf16>, vector<128x512xbf16>, vector<1x512xf32> -> vector<1x512xf32>
    %336 = arith.addf %332, %335 : vector<1x512xf32>
    %337 = vector.extract_strided_slice %336 {offsets = [0, 0], sizes = [1, 384], strides = [1, 1]} : vector<1x512xf32> to vector<1x384xf32>
    %338 = arith.negf %337 : vector<1x384xf32>
    %339 = math.exp %338 : vector<1x384xf32>
    %cst_134 = arith.constant 1.000000e+00 : f32
    %340 = vector.broadcast %cst_134 : f32 to vector<1x384xf32>
    %341 = arith.addf %340, %339 : vector<1x384xf32>
    %342 = arith.divf %340, %341 : vector<1x384xf32>
    %343 = vector.extract_strided_slice %342 {offsets = [0, 0], sizes = [1, 128], strides = [1, 1]} : vector<1x384xf32> to vector<1x128xf32>
    %344 = vector.extract_strided_slice %342 {offsets = [0, 128], sizes = [1, 128], strides = [1, 1]} : vector<1x384xf32> to vector<1x128xf32>
    %345 = vector.extract_strided_slice %342 {offsets = [0, 256], sizes = [1, 128], strides = [1, 1]} : vector<1x384xf32> to vector<1x128xf32>
    %346 = vector.extract_strided_slice %336 {offsets = [0, 384], sizes = [1, 128], strides = [1, 1]} : vector<1x512xf32> to vector<1x128xf32>
    %347 = math.tanh %346 : vector<1x128xf32>
    %348 = arith.mulf %344, %304 : vector<1x128xf32>
    %349 = arith.mulf %343, %347 : vector<1x128xf32>
    %350 = arith.addf %348, %349 : vector<1x128xf32>
    %351 = math.tanh %350 : vector<1x128xf32>
    %352 = arith.mulf %345, %351 : vector<1x128xf32>
    %353 = arith.truncf %352 : vector<1x128xf32> to vector<1x128xbf16>
    %c0_135 = arith.constant 0 : index
    %c0_136 = arith.constant 0 : index
    %354 = vector.load %arg10[%c0_135, %c0_136] : memref<1x256xbf16, #tpu.memory_space<vmem>>, vector<1x128xbf16>
    tpu.vector_store %arg10[%c0_135, %c0_136], %353 {strides = array<i32>} : memref<1x256xbf16, #tpu.memory_space<vmem>>, vector<1x128xbf16>,
    %c0_137 = arith.constant 0 : index
    %c0_138 = arith.constant 0 : index
    %355 = vector.load %arg10[%c0_137, %c0_138] : memref<1x256xbf16, #tpu.memory_space<vmem>>, vector<1x256xbf16>
    %c0_139 = arith.constant 0 : index
    %c0_140 = arith.constant 0 : index
    %356 = vector.load %arg4[%c0_139, %c0_140] : memref<256x512xbf16, #tpu.memory_space<vmem>>, vector<256x512xbf16>
    %cst_141 = arith.constant dense<0.000000e+00> : vector<1x512xf32>
    %357 = tpu.matmul %355, %356, %cst_141 {dimension_numbers = #tpu.dot_dimension_numbers<[1], [0], [0], [1], [0, 0, 1, 1], [], []>} : vector<1x256xbf16>, vector<256x512xbf16>, vector<1x512xf32> -> vector<1x512xf32>
    %c0_142 = arith.constant 0 : index
    %c0_143 = arith.constant 0 : index
    %358 = vector.load %arg5[%c0_142, %c0_143] : memref<1x512xf32, #tpu.memory_space<vmem>>, vector<1x512xf32>
    %359 = arith.addf %357, %358 : vector<1x512xf32>
    %360 = vector.extract_strided_slice %359 {offsets = [0, 0], sizes = [1, 384], strides = [1, 1]} : vector<1x512xf32> to vector<1x384xf32>
    %361 = arith.negf %360 : vector<1x384xf32>
    %362 = math.exp %361 : vector<1x384xf32>
    %cst_144 = arith.constant 1.000000e+00 : f32
    %363 = vector.broadcast %cst_144 : f32 to vector<1x384xf32>
    %364 = arith.addf %363, %362 : vector<1x384xf32>
    %365 = arith.divf %363, %364 : vector<1x384xf32>
    %366 = vector.extract_strided_slice %365 {offsets = [0, 0], sizes = [1, 128], strides = [1, 1]} : vector<1x384xf32> to vector<1x128xf32>
    %367 = vector.extract_strided_slice %365 {offsets = [0, 128], sizes = [1, 128], strides = [1, 1]} : vector<1x384xf32> to vector<1x128xf32>
    %368 = vector.extract_strided_slice %365 {offsets = [0, 256], sizes = [1, 128], strides = [1, 1]} : vector<1x384xf32> to vector<1x128xf32>
    %369 = vector.extract_strided_slice %359 {offsets = [0, 384], sizes = [1, 128], strides = [1, 1]} : vector<1x512xf32> to vector<1x128xf32>
    %370 = math.tanh %369 : vector<1x128xf32>
    %371 = arith.mulf %367, %327 : vector<1x128xf32>
    %372 = arith.mulf %366, %370 : vector<1x128xf32>
    %373 = arith.addf %371, %372 : vector<1x128xf32>
    %374 = math.tanh %373 : vector<1x128xf32>
    %375 = arith.mulf %368, %374 : vector<1x128xf32>
    %376 = arith.truncf %375 : vector<1x128xf32> to vector<1x128xbf16>
    %c0_145 = arith.constant 0 : index
    %c128_146 = arith.constant 128 : index
    %377 = vector.load %arg10[%c0_145, %c128_146] : memref<1x256xbf16, #tpu.memory_space<vmem>>, vector<1x128xbf16>
    tpu.vector_store %arg10[%c0_145, %c128_146], %376 {strides = array<i32>} : memref<1x256xbf16, #tpu.memory_space<vmem>>, vector<1x128xbf16>,
    %c0_147 = arith.constant 0 : index
    %c0_148 = arith.constant 0 : index
    %378 = vector.load %arg6[%c0_147, %c0_148] : memref<128x1xf32, #tpu.memory_space<vmem>>, vector<128x1xf32>
    %cst_149 = arith.constant dense<0.000000e+00> : vector<1x1xf32>
    %379 = tpu.matmul %375, %378, %cst_149 {dimension_numbers = #tpu.dot_dimension_numbers<[1], [0], [0], [1], [0, 0, 1, 1], [], []>} : vector<1x128xf32>, vector<128x1xf32>, vector<1x1xf32> -> vector<1x1xf32>
    %c0_150 = arith.constant 0 : index
    %c0_151 = arith.constant 0 : index
    %380 = vector.load %arg7[%c0_150, %c0_151] : memref<1x1xf32, #tpu.memory_space<vmem>>, vector<1x1xf32>
    %381 = arith.addf %379, %380 : vector<1x1xf32>
    %c0_152 = arith.constant 0 : index
    %c0_153 = arith.constant 0 : index
    %382 = vector.load %arg8[%c0_152, %c0_153] : memref<1x1xf32, #tpu.memory_space<vmem>>, vector<1x1xf32>
    tpu.vector_store %arg8[%c0_152, %c0_153], %381 {strides = array<i32>} : memref<1x1xf32, #tpu.memory_space<vmem>>, vector<1x1xf32>,
    return
  }
}

</mosaic_0001>

<llo_original>
// kernel: tpu_custom_call.1
$region0: #{tpu_custom_call.1}
  #allocation0 [shape = 'u32[]', space=smem, size = 0x4, offset = 0x4, fixed_abs, tag = 'smem constant byte address 0x4 - core index']
  #allocation1 [shape = 'u32[144,128]{1,0:T(1,128)}', space=vmem, size = 0x12000, scoped, tag = 'internal scratch']
  #allocation2 [shape = 'f32[8,512]{1,0:T(8,128)}', space=vmem, size = 0x4000, scoped, tag = 'scratch operand']
  #allocation3 [shape = 'bf16[1,256]{1,0:T(2,128)(2,1)}', space=vmem, size = 0x400, scoped, tag = 'scratch operand']
  #allocation4 [shape = 'f32[1,1]{1,0:T(1,128)S(1)}', space=vmem, size = 0x200, scoped, tag = 'scoped memory for tpu_custom_call.1']
  %s0 = inlined_call_operand.vmem [shape: f32[8,1], index: 0, kind: input, shape index: {}]
  %s1 = inlined_call_operand.vmem [shape: f32[1,512], index: 1, kind: input, shape index: {}]
  %s2 = inlined_call_operand.hbm [shape: bf16[128,512], index: 2, kind: input, shape index: {}]
  %s3 = inlined_call_operand.vmem [shape: f32[1,512], index: 3, kind: input, shape index: {}]
  %s4 = inlined_call_operand.hbm [shape: bf16[256,512], index: 4, kind: input, shape index: {}]
  %s5 = inlined_call_operand.vmem [shape: f32[1,512], index: 5, kind: input, shape index: {}]
  %s6 = inlined_call_operand.vmem [shape: f32[128,1], index: 6, kind: input, shape index: {}]
  %s7 = inlined_call_operand.<no memory space> [shape: f32[1,1], index: 7, kind: input, shape index: {}]
  %s8 = inlined_call_operand.hbm [shape: f32[1,1], index: 8, kind: output, shape index: {}]
  %s9 = sld [smem:[#allocation0]]
  $region50: #{tpu_custom_call.1} parent=0
    _
  %s11 = ssub.s32 1, %s9
  %s12 = scalar_select 0, %s11, %s9
  %v13 = vstv %s7
  %14 = vst [vmem:[#allocation4] sm:$0x1] %v13
  $region1: #{tpu_custom_call.1} parent=0
    #allocation5 [shape = 'u8[131072]{0}', space=vmem, size = 0x20000, scoped, tag = 'input window, operand 2, single buffered']
    #allocation6 [shape = 's32[1]{0}', space=sflag, size = 0x4, scoped, tag = 'scoped memory for tpu_custom_call.1']
    #allocation7 [shape = 's32[1]{0}', space=sflag, size = 0x4, scoped, tag = 'scoped memory for tpu_custom_call.1']
    #allocation8 [shape = 'u8[262144]{0}', space=vmem, size = 0x40000, scoped, tag = 'input window, operand 4, single buffered']
    #allocation9 [shape = 's32[1]{0}', space=sflag, size = 0x4, scoped, tag = 'scoped memory for tpu_custom_call.1']
    #allocation10 [shape = 'u8[512]{0}', space=vmem, size = 0x400, scoped, tag = 'output window, operand 0, single buffered']
    %15 = vsyncpa [#allocation6], 0
    %16 = vsyncpa [#allocation9], 0
    %17 = vsyncpa [#allocation7], 0
    // Predicated region
    $region2: #{tpu_custom_call.1} parent=1 // pred_check
      _
    $region3: #{tpu_custom_call.1} parent=1 // pred_check_branch
      %19 = sbr.rel (0) target = $region5
    $region4: #{tpu_custom_call.1} parent=1 // pred_region
      _
    $region5: #{tpu_custom_call.1} parent=1 // pred_fallthru
      _
    // Predicated region
    $region6: #{tpu_custom_call.1} parent=1 // pred_check
      _
    $region7: #{tpu_custom_call.1} parent=1 // pred_check_branch
      %21 = sbr.rel (0) target = $region9
    $region8: #{tpu_custom_call.1} parent=1 // pred_region
      _
    $region9: #{tpu_custom_call.1} parent=1 // pred_fallthru
      _
    // Predicated region
    $region10: #{tpu_custom_call.1} parent=1 // pred_check
      _
    $region11: #{tpu_custom_call.1} parent=1 // pred_check_branch
      %23 = sbr.rel (0) target = $region13
    $region12: #{tpu_custom_call.1} parent=1 // pred_region
      %s25 = ssub.s32 4096, 4096
      %26 = vsyncadd [#allocation6], %s25
      %s27 = sshll.u32 [#allocation5], 4
      %s28 = int_to_ptr.vmem [resolvable:$true] %s27
      %33 = dma.hbm_to_vmem [thread:$0]  %s2, 4096, %s28, [#allocation6], 256, 256, 16
    $region13: #{tpu_custom_call.1} parent=1 // pred_fallthru
      _
    // Predicated region
    $region14: #{tpu_custom_call.1} parent=1 // pred_check
      _
    $region15: #{tpu_custom_call.1} parent=1 // pred_check_branch
      %35 = sbr.rel (0) target = $region17
    $region16: #{tpu_custom_call.1} parent=1 // pred_region
      _
    $region17: #{tpu_custom_call.1} parent=1 // pred_fallthru
      _
    // Predicated region
    $region18: #{tpu_custom_call.1} parent=1 // pred_check
      _
    $region19: #{tpu_custom_call.1} parent=1 // pred_check_branch
      %37 = sbr.rel (0) target = $region21
    $region20: #{tpu_custom_call.1} parent=1 // pred_region
      %s39 = ssub.s32 8192, 8192
      %40 = vsyncadd [#allocation9], %s39
      %s41 = sshll.u32 [#allocation8], 4
      %s42 = int_to_ptr.vmem [resolvable:$true] %s41
      %47 = dma.hbm_to_vmem [thread:$0]  %s4, 8192, %s42, [#allocation9], 256, 256, 16
    $region21: #{tpu_custom_call.1} parent=1 // pred_fallthru
      _
    // Predicated region
    $region22: #{tpu_custom_call.1} parent=1 // pred_check
      _
    $region23: #{tpu_custom_call.1} parent=1 // pred_check_branch
      %49 = sbr.rel (0) target = $region25
    $region24: #{tpu_custom_call.1} parent=1 // pred_region
      _
    $region25: #{tpu_custom_call.1} parent=1 // pred_fallthru
      _
    // Predicated region
    $region26: #{tpu_custom_call.1} parent=1 // pred_check
      _
    $region27: #{tpu_custom_call.1} parent=1 // pred_check_branch
      %51 = sbr.rel (0) target = $region29
    $region28: #{tpu_custom_call.1} parent=1 // pred_region
      _
    $region29: #{tpu_custom_call.1} parent=1 // pred_fallthru
      _
    // Predicated region
    $region30: #{tpu_custom_call.1} parent=1 // pred_check
      _
    $region31: #{tpu_custom_call.1} parent=1 // pred_check_branch
      %53 = sbr.rel (0) target = $region33
    $region32: #{tpu_custom_call.1} parent=1 // pred_region
      _
    $region33: #{tpu_custom_call.1} parent=1 // pred_fallthru
      _
    // Predicated region
    $region34: #{tpu_custom_call.1} parent=1 // pred_check
      _
    $region35: #{tpu_custom_call.1} parent=1 // pred_check_branch
      %55 = sbr.rel (0) target = $region37
    $region36: #{tpu_custom_call.1} parent=1 // pred_region
      %56 = dma.done [#allocation6], 4096
    $region37: #{tpu_custom_call.1} parent=1 // pred_fallthru
      _
    // Predicated region
    $region38: #{tpu_custom_call.1} parent=1 // pred_check
      _
    $region39: #{tpu_custom_call.1} parent=1 // pred_check_branch
      %58 = sbr.rel (0) target = $region41
    $region40: #{tpu_custom_call.1} parent=1 // pred_region
      %59 = dma.done [#allocation9], 8192
    $region41: #{tpu_custom_call.1} parent=1 // pred_fallthru
      _
    %v61 = vld [vmem:[%s0] sm:$0xff]
    %v62 = vld [vmem:[%s1] sm:$0xf]
    %v63 = vld [vmem:[%s3] sm:$0xf]
    %v65 = vlaneseq
    %v66 = vshrl.u32 %v65, 7
    %v67 = vsub.s32 0, %v66
    %v68 = vrot.slane %v63, %v67
    %v69 = vlaneseq
    %v70 = vshrl.u32 %v69, 7
    %v71 = vsub.s32 1, %v70
    %v72 = vrot.slane %v63, %v71
    %v73 = vlaneseq
    %v74 = vshrl.u32 %v73, 7
    %v75 = vsub.s32 2, %v74
    %v76 = vrot.slane %v63, %v75
    %v77 = vlaneseq
    %v78 = vshrl.u32 %v77, 7
    %v79 = vsub.s32 3, %v78
    %v80 = vrot.slane %v63, %v79
    %v86 = vlaneseq
    %v87 = vshrl.u32 %v86, 7
    %v88 = vsub.s32 0, %v87
    %v89 = vrot.slane %v62, %v88
    %v90 = vlaneseq
    %v91 = vshrl.u32 %v90, 7
    %v92 = vsub.s32 1, %v91
    %v93 = vrot.slane %v62, %v92
    %v94 = vlaneseq
    %v95 = vshrl.u32 %v94, 7
    %v96 = vsub.s32 2, %v95
    %v97 = vrot.slane %v62, %v96
    %v98 = vlaneseq
    %v99 = vshrl.u32 %v98, 7
    %v100 = vsub.s32 3, %v99
    %v101 = vrot.slane %v62, %v100
    %vm102 = vcmask 7168
    %v104 = vsel %vm102, %v61, 0
    %vm106 = vcmask 1040384
    %v107 = vsel %vm106, %v89, 0
    %v109 = vsel %vm106, %v93, 0
    %v111 = vsel %vm106, %v97, 0
    %v113 = vsel %vm106, %v101, 0
    %115 = vmatprep.subr.mxu0 %v109
    %116 = vmatpush1.msra.mxu0 %v107
    %117 = vmatprep.subr.mxu0 0.0
    %118 = vmatpush1.msra.mxu0 0.0
    %119 = vmatprep.subr.mxu0 0.0
    %120 = vmatpush1.msra.mxu0 0.0
    %121 = vmatprep.subr.mxu0 0.0
    %122 = vmatpush1.msra.mxu0 0.0
    %123 = vmatprep.subr.mxu0 0.0
    %124 = vmatpush1.msra.mxu0 0.0
    %125 = vmatprep.subr.mxu0 0.0
    %126 = vmatpush1.msra.mxu0 0.0
    %127 = vmatprep.subr.mxu0 0.0
    %128 = vmatpush1.msra.mxu0 0.0
    %129 = vmatprep.subr.mxu0 0.0
    %130 = vmatpush1.msra.mxu0 0.0
    %131 = vmatprep.subr.mxu0 0.0
    %132 = vmatpush1.msra.mxu0 0.0
    %133 = vmatprep.subr.mxu0 0.0
    %134 = vmatpush1.msra.mxu0 0.0
    %135 = vmatprep.subr.mxu0 0.0
    %136 = vmatpush1.msra.mxu0 0.0
    %137 = vmatprep.subr.mxu0 0.0
    %138 = vmatpush1.msra.mxu0 0.0
    %139 = vmatprep.subr.mxu0 0.0
    %140 = vmatpush1.msra.mxu0 0.0
    %141 = vmatprep.subr.mxu0 0.0
    %142 = vmatpush1.msra.mxu0 0.0
    %143 = vmatprep.subr.mxu0 0.0
    %144 = vmatpush1.msra.mxu0 0.0
    %145 = vmatprep.subr.mxu0 0.0
    %146 = vmatpush1.msra.mxu0 0.0
    %147 = vmatprep.subr.mxu0 0.0
    %148 = vmatpush1.msra.mxu0 0.0
    %149 = vmatprep.subr.mxu0 0.0
    %150 = vmatpush1.msra.mxu0 0.0
    %151 = vmatprep.subr.mxu0 0.0
    %152 = vmatpush1.msra.mxu0 0.0
    %153 = vmatprep.subr.mxu0 0.0
    %154 = vmatpush1.msra.mxu0 0.0
    %155 = vmatprep.subr.mxu0 0.0
    %156 = vmatpush1.msra.mxu0 0.0
    %157 = vmatprep.subr.mxu0 0.0
    %158 = vmatpush1.msra.mxu0 0.0
    %159 = vmatprep.subr.mxu0 0.0
    %160 = vmatpush1.msra.mxu0 0.0
    %161 = vmatprep.subr.mxu0 0.0
    %162 = vmatpush1.msra.mxu0 0.0
    %163 = vmatprep.subr.mxu0 0.0
    %164 = vmatpush1.msra.mxu0 0.0
    %165 = vmatprep.subr.mxu0 0.0
    %166 = vmatpush1.msra.mxu0 0.0
    %167 = vmatprep.subr.mxu0 0.0
    %168 = vmatpush1.msra.mxu0 0.0
    %169 = vmatprep.subr.mxu0 0.0
    %170 = vmatpush1.msra.mxu0 0.0
    %171 = vmatprep.subr.mxu0 0.0
    %172 = vmatpush1.msra.mxu0 0.0
    %173 = vmatprep.subr.mxu0 0.0
    %174 = vmatpush1.msra.mxu0 0.0
    %175 = vmatprep.subr.mxu0 0.0
    %176 = vmatpush1.msra.mxu0 0.0
    %177 = vmatprep.subr.mxu0 0.0
    %178 = vmatpush1.msra.mxu0 0.0
    %179 = vmatprep.mubr.f32.mxu0 0.0
    %180 = vmatmul.mubr.f32.gmra.mrb[0].mxu0 %v104
    %v181 = vpop.f32.mrb[0].mxu0
    %v182 = vadd.f32 %v68, %v181
    %v183 = vpop.f32.mrb[0].mxu0
    %v184 = vadd.f32 %v72, %v183
    %185 = vdwg.mxu0
    %186 = vmatprep.subr.mxu0 %v113
    %187 = vmatpush1.msra.mxu0 %v111
    %188 = vmatprep.subr.mxu0 0.0
    %189 = vmatpush1.msra.mxu0 0.0
    %190 = vmatprep.subr.mxu0 0.0
    %191 = vmatpush1.msra.mxu0 0.0
    %192 = vmatprep.subr.mxu0 0.0
    %193 = vmatpush1.msra.mxu0 0.0
    %194 = vmatprep.subr.mxu0 0.0
    %195 = vmatpush1.msra.mxu0 0.0
    %196 = vmatprep.subr.mxu0 0.0
    %197 = vmatpush1.msra.mxu0 0.0
    %198 = vmatprep.subr.mxu0 0.0
    %199 = vmatpush1.msra.mxu0 0.0
    %200 = vmatprep.subr.mxu0 0.0
    %201 = vmatpush1.msra.mxu0 0.0
    %202 = vmatprep.subr.mxu0 0.0
    %203 = vmatpush1.msra.mxu0 0.0
    %204 = vmatprep.subr.mxu0 0.0
    %205 = vmatpush1.msra.mxu0 0.0
    %206 = vmatprep.subr.mxu0 0.0
    %207 = vmatpush1.msra.mxu0 0.0
    %208 = vmatprep.subr.mxu0 0.0
    %209 = vmatpush1.msra.mxu0 0.0
    %210 = vmatprep.subr.mxu0 0.0
    %211 = vmatpush1.msra.mxu0 0.0
    %212 = vmatprep.subr.mxu0 0.0
    %213 = vmatpush1.msra.mxu0 0.0
    %214 = vmatprep.subr.mxu0 0.0
    %215 = vmatpush1.msra.mxu0 0.0
    %216 = vmatprep.subr.mxu0 0.0
    %217 = vmatpush1.msra.mxu0 0.0
    %218 = vmatprep.subr.mxu0 0.0
    %219 = vmatpush1.msra.mxu0 0.0
    %220 = vmatprep.subr.mxu0 0.0
    %221 = vmatpush1.msra.mxu0 0.0
    %222 = vmatprep.subr.mxu0 0.0
    %223 = vmatpush1.msra.mxu0 0.0
    %224 = vmatprep.subr.mxu0 0.0
    %225 = vmatpush1.msra.mxu0 0.0
    %226 = vmatprep.subr.mxu0 0.0
    %227 = vmatpush1.msra.mxu0 0.0
    %228 = vmatprep.subr.mxu0 0.0
    %229 = vmatpush1.msra.mxu0 0.0
    %230 = vmatprep.subr.mxu0 0.0
    %231 = vmatpush1.msra.mxu0 0.0
    %232 = vmatprep.subr.mxu0 0.0
    %233 = vmatpush1.msra.mxu0 0.0
    %234 = vmatprep.subr.mxu0 0.0
    %235 = vmatpush1.msra.mxu0 0.0
    %236 = vmatprep.subr.mxu0 0.0
    %237 = vmatpush1.msra.mxu0 0.0
    %238 = vmatprep.subr.mxu0 0.0
    %239 = vmatpush1.msra.mxu0 0.0
    %240 = vmatprep.subr.mxu0 0.0
    %241 = vmatpush1.msra.mxu0 0.0
    %242 = vmatprep.subr.mxu0 0.0
    %243 = vmatpush1.msra.mxu0 0.0
    %244 = vmatprep.subr.mxu0 0.0
    %245 = vmatpush1.msra.mxu0 0.0
    %246 = vmatprep.subr.mxu0 0.0
    %247 = vmatpush1.msra.mxu0 0.0
    %248 = vmatprep.subr.mxu0 0.0
    %249 = vmatpush1.msra.mxu0 0.0
    %250 = vmatprep.mubr.f32.mxu0 0.0
    %251 = vmatmul.mubr.f32.gmra.mrb[0].mxu0 %v104
    %v252 = vpop.f32.mrb[0].mxu0
    %v253 = vadd.f32 %v76, %v252
    %v254 = vpop.f32.mrb[0].mxu0
    %v255 = vadd.f32 %v80, %v254
    %256 = vdwg.mxu0
    %257 = vst [vmem:[#allocation2] sm:$0xff] %v182
    %258 = vst [vmem:[#allocation2 + $0x8] sm:$0xff] %v184
    %259 = vst [vmem:[#allocation2 + $0x10] sm:$0xff] %v253
    %260 = vst [vmem:[#allocation2 + $0x18] sm:$0xff] %v255
    %vm261 = vcmask 1040384
    %vm262 = vsmask.f32 256
    %vm263 = vmand %vm261, %vm262
    %vm264 = vcmask 1041409
    %vm265 = vsmask.f32 1280
    %vm266 = vmand %vm264, %vm265
    %vm267 = vmor %vm266, %vm263
    %v268 = vld [vmem:[#allocation3] sm:$0x3]
    %v269 = vsel %vm267, 0, %v268
    %270 = vst [vmem:[#allocation3] sm:$0x3] %v269
    %v271 = vld [vmem:[#allocation2] ss:$8 sm:$0xf]
    %v272 = vld [vmem:[#allocation5] sm:$0xff]
    %v273 = vld [vmem:[#allocation5 + $0x8] sm:$0xff]
    %v274 = vld [vmem:[#allocation5 + $0x10] sm:$0xff]
    %v275 = vld [vmem:[#allocation5 + $0x18] sm:$0xff]
    %v276 = vld [vmem:[#allocation5 + $0x20] sm:$0xff]
    %v277 = vld [vmem:[#allocation5 + $0x28] sm:$0xff]
    %v278 = vld [vmem:[#allocation5 + $0x30] sm:$0xff]
    %v279 = vld [vmem:[#allocation5 + $0x38] sm:$0xff]
    %v280 = vld [vmem:[#allocation5 + $0x40] sm:$0xff]
    %v281 = vld [vmem:[#allocation5 + $0x48] sm:$0xff]
    %v282 = vld [vmem:[#allocation5 + $0x50] sm:$0xff]
    %v283 = vld [vmem:[#allocation5 + $0x58] sm:$0xff]
    %v284 = vld [vmem:[#allocation5 + $0x60] sm:$0xff]
    %v285 = vld [vmem:[#allocation5 + $0x68] sm:$0xff]
    %v286 = vld [vmem:[#allocation5 + $0x70] sm:$0xff]
    %v287 = vld [vmem:[#allocation5 + $0x78] sm:$0xff]
    %v288 = vld [vmem:[#allocation5 + $0x80] sm:$0xff]
    %v289 = vld [vmem:[#allocation5 + $0x88] sm:$0xff]
    %v290 = vld [vmem:[#allocation5 + $0x90] sm:$0xff]
    %v291 = vld [vmem:[#allocation5 + $0x98] sm:$0xff]
    %v292 = vld [vmem:[#allocation5 + $0xa0] sm:$0xff]
    %v293 = vld [vmem:[#allocation5 + $0xa8] sm:$0xff]
    %v294 = vld [vmem:[#allocation5 + $0xb0] sm:$0xff]
    %v295 = vld [vmem:[#allocation5 + $0xb8] sm:$0xff]
    %v296 = vld [vmem:[#allocation5 + $0xc0] sm:$0xff]
    %v297 = vld [vmem:[#allocation5 + $0xc8] sm:$0xff]
    %v298 = vld [vmem:[#allocation5 + $0xd0] sm:$0xff]
    %v299 = vld [vmem:[#allocation5 + $0xd8] sm:$0xff]
    %v300 = vld [vmem:[#allocation5 + $0xe0] sm:$0xff]
    %v301 = vld [vmem:[#allocation5 + $0xe8] sm:$0xff]
    %v302 = vld [vmem:[#allocation5 + $0xf0] sm:$0xff]
    %v303 = vld [vmem:[#allocation5 + $0xf8] sm:$0xff]
    %v336 = vunpack.c.l.b16 %v272
    %v337 = vunpack.c.h.b16 %v272
    %v338 = vunpack.c.l.b16 %v273
    %v339 = vunpack.c.h.b16 %v273
    %v340 = vunpack.c.l.b16 %v274
    %v341 = vunpack.c.h.b16 %v274
    %v342 = vunpack.c.l.b16 %v275
    %v343 = vunpack.c.h.b16 %v275
    %v344 = vunpack.c.l.b16 %v276
    %v345 = vunpack.c.h.b16 %v276
    %v346 = vunpack.c.l.b16 %v277
    %v347 = vunpack.c.h.b16 %v277
    %v348 = vunpack.c.l.b16 %v278
    %v349 = vunpack.c.h.b16 %v278
    %v350 = vunpack.c.l.b16 %v279
    %v351 = vunpack.c.h.b16 %v279
    %v352 = vunpack.c.l.b16 %v280
    %v353 = vunpack.c.h.b16 %v280
    %v354 = vunpack.c.l.b16 %v281
    %v355 = vunpack.c.h.b16 %v281
    %v356 = vunpack.c.l.b16 %v282
    %v357 = vunpack.c.h.b16 %v282
    %v358 = vunpack.c.l.b16 %v283
    %v359 = vunpack.c.h.b16 %v283
    %v360 = vunpack.c.l.b16 %v284
    %v361 = vunpack.c.h.b16 %v284
    %v362 = vunpack.c.l.b16 %v285
    %v363 = vunpack.c.h.b16 %v285
    %v364 = vunpack.c.l.b16 %v286
    %v365 = vunpack.c.h.b16 %v286
    %v366 = vunpack.c.l.b16 %v287
    %v367 = vunpack.c.h.b16 %v287
    %v368 = vunpack.c.l.b16 %v288
    %v369 = vunpack.c.h.b16 %v288
    %v370 = vunpack.c.l.b16 %v289
    %v371 = vunpack.c.h.b16 %v289
    %v372 = vunpack.c.l.b16 %v290
    %v373 = vunpack.c.h.b16 %v290
    %v374 = vunpack.c.l.b16 %v291
    %v375 = vunpack.c.h.b16 %v291
    %v376 = vunpack.c.l.b16 %v292
    %v377 = vunpack.c.h.b16 %v292
    %v378 = vunpack.c.l.b16 %v293
    %v379 = vunpack.c.h.b16 %v293
    %v380 = vunpack.c.l.b16 %v294
    %v381 = vunpack.c.h.b16 %v294
    %v382 = vunpack.c.l.b16 %v295
    %v383 = vunpack.c.h.b16 %v295
    %v384 = vunpack.c.l.b16 %v296
    %v385 = vunpack.c.h.b16 %v296
    %v386 = vunpack.c.l.b16 %v297
    %v387 = vunpack.c.h.b16 %v297
    %v388 = vunpack.c.l.b16 %v298
    %v389 = vunpack.c.h.b16 %v298
    %v390 = vunpack.c.l.b16 %v299
    %v391 = vunpack.c.h.b16 %v299
    %v392 = vunpack.c.l.b16 %v300
    %v393 = vunpack.c.h.b16 %v300
    %v394 = vunpack.c.l.b16 %v301
    %v395 = vunpack.c.h.b16 %v301
    %v396 = vunpack.c.l.b16 %v302
    %v397 = vunpack.c.h.b16 %v302
    %v398 = vunpack.c.l.b16 %v303
    %v399 = vunpack.c.h.b16 %v303
    %v400 = vpack.c.b16 %v340, %v336
    %v401 = vpack.c.b16 %v341, %v337
    %v402 = vpack.c.b16 %v342, %v338
    %v403 = vpack.c.b16 %v343, %v339
    %v404 = vpack.c.b16 %v348, %v344
    %v405 = vpack.c.b16 %v349, %v345
    %v406 = vpack.c.b16 %v350, %v346
    %v407 = vpack.c.b16 %v351, %v347
    %v408 = vpack.c.b16 %v356, %v352
    %v409 = vpack.c.b16 %v357, %v353
    %v410 = vpack.c.b16 %v358, %v354
    %v411 = vpack.c.b16 %v359, %v355
    %v412 = vpack.c.b16 %v364, %v360
    %v413 = vpack.c.b16 %v365, %v361
    %v414 = vpack.c.b16 %v366, %v362
    %v415 = vpack.c.b16 %v367, %v363
    %v416 = vpack.c.b16 %v372, %v368
    %v417 = vpack.c.b16 %v373, %v369
    %v418 = vpack.c.b16 %v374, %v370
    %v419 = vpack.c.b16 %v375, %v371
    %v420 = vpack.c.b16 %v380, %v376
    %v421 = vpack.c.b16 %v381, %v377
    %v422 = vpack.c.b16 %v382, %v378
    %v423 = vpack.c.b16 %v383, %v379
    %v424 = vpack.c.b16 %v388, %v384
    %v425 = vpack.c.b16 %v389, %v385
    %v426 = vpack.c.b16 %v390, %v386
    %v427 = vpack.c.b16 %v391, %v387
    %v428 = vpack.c.b16 %v396, %v392
    %v429 = vpack.c.b16 %v397, %v393
    %v430 = vpack.c.b16 %v398, %v394
    %v431 = vpack.c.b16 %v399, %v395
    %464 = vmatprep.subr.bf16.mxu0 %v401
    %465 = vmatpush1.bf16.msra.mxu0 %v400
    %466 = vmatprep.subr.bf16.mxu0 %v405
    %467 = vmatpush1.bf16.msra.mxu0 %v404
    %468 = vmatprep.subr.bf16.mxu0 %v409
    %469 = vmatpush1.bf16.msra.mxu0 %v408
    %470 = vmatprep.subr.bf16.mxu0 %v413
    %471 = vmatpush1.bf16.msra.mxu0 %v412
    %472 = vmatprep.subr.bf16.mxu0 %v417
    %473 = vmatpush1.bf16.msra.mxu0 %v416
    %474 = vmatprep.subr.bf16.mxu0 %v421
    %475 = vmatpush1.bf16.msra.mxu0 %v420
    %476 = vmatprep.subr.bf16.mxu0 %v425
    %477 = vmatpush1.bf16.msra.mxu0 %v424
    %478 = vmatprep.subr.bf16.mxu0 %v429
    %479 = vmatpush1.bf16.msra.mxu0 %v428
    %480 = vmatprep.subr.bf16.mxu0 0
    %481 = vmatpush1.bf16.msra.mxu0 0
    %482 = vmatprep.subr.bf16.mxu0 0
    %483 = vmatpush1.bf16.msra.mxu0 0
    %484 = vmatprep.subr.bf16.mxu0 0
    %485 = vmatpush1.bf16.msra.mxu0 0
    %486 = vmatprep.subr.bf16.mxu0 0
    %487 = vmatpush1.bf16.msra.mxu0 0
    %488 = vmatprep.subr.bf16.mxu0 0
    %489 = vmatpush1.bf16.msra.mxu0 0
    %490 = vmatprep.subr.bf16.mxu0 0
    %491 = vmatpush1.bf16.msra.mxu0 0
    %492 = vmatprep.subr.bf16.mxu0 0
    %493 = vmatpush1.bf16.msra.mxu0 0
    %494 = vmatprep.subr.bf16.mxu0 0
    %495 = vmatpush1.bf16.msra.mxu0 0
    %496 = vmatprep.mubr.bf16.mxu0 0
    %497 = vmatmul.mubr.bf16.gmra.mrb[0].mxu0 0
    %v498 = vpop.f32.mrb[0].mxu0
    %v499 = vadd.f32 0.0, %v498
    %v500 = vpop.f32.mrb[0].mxu0
    %v501 = vadd.f32 0.0, %v500
    %v502 = vpop.f32.mrb[0].mxu0
    %v503 = vpop.f32.mrb[0].mxu0
    %504 = vdwg.mxu0
    %505 = vmatprep.subr.bf16.mxu0 %v403
    %506 = vmatpush1.bf16.msra.mxu0 %v402
    %507 = vmatprep.subr.bf16.mxu0 %v407
    %508 = vmatpush1.bf16.msra.mxu0 %v406
    %509 = vmatprep.subr.bf16.mxu0 %v411
    %510 = vmatpush1.bf16.msra.mxu0 %v410
    %511 = vmatprep.subr.bf16.mxu0 %v415
    %512 = vmatpush1.bf16.msra.mxu0 %v414
    %513 = vmatprep.subr.bf16.mxu0 %v419
    %514 = vmatpush1.bf16.msra.mxu0 %v418
    %515 = vmatprep.subr.bf16.mxu0 %v423
    %516 = vmatpush1.bf16.msra.mxu0 %v422
    %517 = vmatprep.subr.bf16.mxu0 %v427
    %518 = vmatpush1.bf16.msra.mxu0 %v426
    %519 = vmatprep.subr.bf16.mxu0 %v431
    %520 = vmatpush1.bf16.msra.mxu0 %v430
    %521 = vmatprep.subr.bf16.mxu0 0
    %522 = vmatpush1.bf16.msra.mxu0 0
    %523 = vmatprep.subr.bf16.mxu0 0
    %524 = vmatpush1.bf16.msra.mxu0 0
    %525 = vmatprep.subr.bf16.mxu0 0
    %526 = vmatpush1.bf16.msra.mxu0 0
    %527 = vmatprep.subr.bf16.mxu0 0
    %528 = vmatpush1.bf16.msra.mxu0 0
    %529 = vmatprep.subr.bf16.mxu0 0
    %530 = vmatpush1.bf16.msra.mxu0 0
    %531 = vmatprep.subr.bf16.mxu0 0
    %532 = vmatpush1.bf16.msra.mxu0 0
    %533 = vmatprep.subr.bf16.mxu0 0
    %534 = vmatpush1.bf16.msra.mxu0 0
    %535 = vmatprep.subr.bf16.mxu0 0
    %536 = vmatpush1.bf16.msra.mxu0 0
    %537 = vmatprep.mubr.bf16.mxu0 0
    %538 = vmatmul.mubr.bf16.gmra.mrb[0].mxu0 0
    %v539 = vpop.f32.mrb[0].mxu0
    %v540 = vadd.f32 0.0, %v539
    %v541 = vpop.f32.mrb[0].mxu0
    %v542 = vadd.f32 0.0, %v541
    %v543 = vpop.f32.mrb[0].mxu0
    %v544 = vpop.f32.mrb[0].mxu0
    %545 = vdwg.mxu0
    %v550 = vcombine.low %v499, %v501
    %v551 = vcombine.low %v540, %v542
    %v553 = vunpack.c.l.s4 1966171168
    %v554 = vunpack.c.0.s8 %v553
    %v555 = vlaneseq
    %v556 = vshrl.u32 %v555, 7
    %v557 = vsub.s32 %v554, %v556
    %v558 = vrot.slane %v550, %v557
    %v560 = vunpack.c.l.s4 1966171168
    %v561 = vunpack.c.0.s8 %v560
    %v562 = vlaneseq
    %v563 = vshrl.u32 %v562, 7
    %v564 = vsub.s32 %v561, %v563
    %v565 = vrot.slane %v551, %v564
    %v566 = vcombine.low %v558, %v565
    %v568 = vunpack.c.l.s4 1966171168
    %v569 = vunpack.c.0.s8 %v568
    %v570 = vlaneseq
    %v571 = vshrl.u32 %v570, 7
    %v572 = vsub.s32 %v569, %v571
    %v573 = vrot.slane %v566, %v572
    %v575 = vadd.f32 %v271, %v573
    %v576 = vxor.u32 %v575, 2147483648
    %v577 = vmul.f32 %v576, 1.442695
    %v578 = vpow.pop %v577
    %v579 = vadd.f32 %v578, 1.0
    %v580 = vrcp.pop %v579
    %v581 = vmul.f32 1.0, %v580
    %v583 = vrot.slane %v575, 3
    %v585 = vtanh.pop %v583
    %v587 = vrot.slane %v581, 1
    %v589 = vmul.f32 %v587, 0.0
    %v590 = vmul.f32 %v581, %v585
    %v591 = vadd.f32 %v589, %v590
    %v592 = vtanh.pop %v591
    %v593 = vrot.slane %v581, 2
    %v595 = vmul.f32 %v593, %v592
    %v596 = vpack.c.bf16 %v595, %v595
    %v597 = vld [vmem:[#allocation3] sm:$0x1]
    %v598 = vsel %vm263, %v596, %v597
    %599 = vst [vmem:[#allocation3] sm:$0x1] %v598
    %v600 = vld [vmem:[#allocation3] sm:$0x3]
    %v601 = vld [vmem:[#allocation8] sm:$0xff]
    %v602 = vld [vmem:[#allocation8 + $0x8] sm:$0xff]
    %v603 = vld [vmem:[#allocation8 + $0x10] sm:$0xff]
    %v604 = vld [vmem:[#allocation8 + $0x18] sm:$0xff]
    %v605 = vld [vmem:[#allocation8 + $0x20] sm:$0xff]
    %v606 = vld [vmem:[#allocation8 + $0x28] sm:$0xff]
    %v607 = vld [vmem:[#allocation8 + $0x30] sm:$0xff]
    %v608 = vld [vmem:[#allocation8 + $0x38] sm:$0xff]
    %v609 = vld [vmem:[#allocation8 + $0x40] sm:$0xff]
    %v610 = vld [vmem:[#allocation8 + $0x48] sm:$0xff]
    %v611 = vld [vmem:[#allocation8 + $0x50] sm:$0xff]
    %v612 = vld [vmem:[#allocation8 + $0x58] sm:$0xff]
    %v613 = vld [vmem:[#allocation8 + $0x60] sm:$0xff]
    %v614 = vld [vmem:[#allocation8 + $0x68] sm:$0xff]
    %v615 = vld [vmem:[#allocation8 + $0x70] sm:$0xff]
    %v616 = vld [vmem:[#allocation8 + $0x78] sm:$0xff]
    %v617 = vld [vmem:[#allocation8 + $0x80] sm:$0xff]
    %v618 = vld [vmem:[#allocation8 + $0x88] sm:$0xff]
    %v619 = vld [vmem:[#allocation8 + $0x90] sm:$0xff]
    %v620 = vld [vmem:[#allocation8 + $0x98] sm:$0xff]
    %v621 = vld [vmem:[#allocation8 + $0xa0] sm:$0xff]
    %v622 = vld [vmem:[#allocation8 + $0xa8] sm:$0xff]
    %v623 = vld [vmem:[#allocation8 + $0xb0] sm:$0xff]
    %v624 = vld [vmem:[#allocation8 + $0xb8] sm:$0xff]
    %v625 = vld [vmem:[#allocation8 + $0xc0] sm:$0xff]
    %v626 = vld [vmem:[#allocation8 + $0xc8] sm:$0xff]
    %v627 = vld [vmem:[#allocation8 + $0xd0] sm:$0xff]
    %v628 = vld [vmem:[#allocation8 + $0xd8] sm:$0xff]
    %v629 = vld [vmem:[#allocation8 + $0xe0] sm:$0xff]
    %v630 = vld [vmem:[#allocation8 + $0xe8] sm:$0xff]
    %v631 = vld [vmem:[#allocation8 + $0xf0] sm:$0xff]
    %v632 = vld [vmem:[#allocation8 + $0xf8] sm:$0xff]
    %v633 = vld [vmem:[#allocation8 + $0x100] sm:$0xff]
    %v634 = vld [vmem:[#allocation8 + $0x108] sm:$0xff]
    %v635 = vld [vmem:[#allocation8 + $0x110] sm:$0xff]
    %v636 = vld [vmem:[#allocation8 + $0x118] sm:$0xff]
    %v637 = vld [vmem:[#allocation8 + $0x120] sm:$0xff]
    %v638 = vld [vmem:[#allocation8 + $0x128] sm:$0xff]
    %v639 = vld [vmem:[#allocation8 + $0x130] sm:$0xff]
    %v640 = vld [vmem:[#allocation8 + $0x138] sm:$0xff]
    %v641 = vld [vmem:[#allocation8 + $0x140] sm:$0xff]
    %v642 = vld [vmem:[#allocation8 + $0x148] sm:$0xff]
    %v643 = vld [vmem:[#allocation8 + $0x150] sm:$0xff]
    %v644 = vld [vmem:[#allocation8 + $0x158] sm:$0xff]
    %v645 = vld [vmem:[#allocation8 + $0x160] sm:$0xff]
    %v646 = vld [vmem:[#allocation8 + $0x168] sm:$0xff]
    %v647 = vld [vmem:[#allocation8 + $0x170] sm:$0xff]
    %v648 = vld [vmem:[#allocation8 + $0x178] sm:$0xff]
    %v649 = vld [vmem:[#allocation8 + $0x180] sm:$0xff]
    %v650 = vld [vmem:[#allocation8 + $0x188] sm:$0xff]
    %v651 = vld [vmem:[#allocation8 + $0x190] sm:$0xff]
    %v652 = vld [vmem:[#allocation8 + $0x198] sm:$0xff]
    %v653 = vld [vmem:[#allocation8 + $0x1a0] sm:$0xff]
    %v654 = vld [vmem:[#allocation8 + $0x1a8] sm:$0xff]
    %v655 = vld [vmem:[#allocation8 + $0x1b0] sm:$0xff]
    %v656 = vld [vmem:[#allocation8 + $0x1b8] sm:$0xff]
    %v657 = vld [vmem:[#allocation8 + $0x1c0] sm:$0xff]
    %v658 = vld [vmem:[#allocation8 + $0x1c8] sm:$0xff]
    %v659 = vld [vmem:[#allocation8 + $0x1d0] sm:$0xff]
    %v660 = vld [vmem:[#allocation8 + $0x1d8] sm:$0xff]
    %v661 = vld [vmem:[#allocation8 + $0x1e0] sm:$0xff]
    %v662 = vld [vmem:[#allocation8 + $0x1e8] sm:$0xff]
    %v663 = vld [vmem:[#allocation8 + $0x1f0] sm:$0xff]
    %v664 = vld [vmem:[#allocation8 + $0x1f8] sm:$0xff]
    %v665 = vld [vmem:[%s5] sm:$0xf]
    %v668 = vunpack.c.l.s4 1966171168
    %v669 = vunpack.c.0.s8 %v668
    %v670 = vlaneseq
    %v671 = vshrl.u32 %v670, 7
    %v672 = vsub.s32 %v669, %v671
    %v673 = vrot.slane %v600, %v672
    %v674 = vcombine.high %v673, %v673
    %v676 = vunpack.c.l.s4 1966171168
    %v677 = vunpack.c.0.s8 %v676
    %v678 = vlaneseq
    %v679 = vshrl.u32 %v678, 7
    %v680 = vsub.s32 %v677, %v679
    %v681 = vrot.slane %v673, %v680
    %v683 = vunpack.c.l.s4 1966171168
    %v684 = vunpack.c.0.s8 %v683
    %v685 = vlaneseq
    %v686 = vshrl.u32 %v685, 7
    %v687 = vsub.s32 %v684, %v686
    %v688 = vrot.slane %v674, %v687
    %v755 = vunpack.c.l.b16 %v601
    %v756 = vunpack.c.h.b16 %v601
    %v757 = vunpack.c.l.b16 %v602
    %v758 = vunpack.c.h.b16 %v602
    %v759 = vunpack.c.l.b16 %v603
    %v760 = vunpack.c.h.b16 %v603
    %v761 = vunpack.c.l.b16 %v604
    %v762 = vunpack.c.h.b16 %v604
    %v763 = vunpack.c.l.b16 %v605
    %v764 = vunpack.c.h.b16 %v605
    %v765 = vunpack.c.l.b16 %v606
    %v766 = vunpack.c.h.b16 %v606
    %v767 = vunpack.c.l.b16 %v607
    %v768 = vunpack.c.h.b16 %v607
    %v769 = vunpack.c.l.b16 %v608
    %v770 = vunpack.c.h.b16 %v608
    %v771 = vunpack.c.l.b16 %v609
    %v772 = vunpack.c.h.b16 %v609
    %v773 = vunpack.c.l.b16 %v610
    %v774 = vunpack.c.h.b16 %v610
    %v775 = vunpack.c.l.b16 %v611
    %v776 = vunpack.c.h.b16 %v611
    %v777 = vunpack.c.l.b16 %v612
    %v778 = vunpack.c.h.b16 %v612
    %v779 = vunpack.c.l.b16 %v613
    %v780 = vunpack.c.h.b16 %v613
    %v781 = vunpack.c.l.b16 %v614
    %v782 = vunpack.c.h.b16 %v614
    %v783 = vunpack.c.l.b16 %v615
    %v784 = vunpack.c.h.b16 %v615
    %v785 = vunpack.c.l.b16 %v616
    %v786 = vunpack.c.h.b16 %v616
    %v787 = vunpack.c.l.b16 %v617
    %v788 = vunpack.c.h.b16 %v617
    %v789 = vunpack.c.l.b16 %v618
    %v790 = vunpack.c.h.b16 %v618
    %v791 = vunpack.c.l.b16 %v619
    %v792 = vunpack.c.h.b16 %v619
    %v793 = vunpack.c.l.b16 %v620
    %v794 = vunpack.c.h.b16 %v620
    %v795 = vunpack.c.l.b16 %v621
    %v796 = vunpack.c.h.b16 %v621
    %v797 = vunpack.c.l.b16 %v622
    %v798 = vunpack.c.h.b16 %v622
    %v799 = vunpack.c.l.b16 %v623
    %v800 = vunpack.c.h.b16 %v623
    %v801 = vunpack.c.l.b16 %v624
    %v802 = vunpack.c.h.b16 %v624
    %v803 = vunpack.c.l.b16 %v625
    %v804 = vunpack.c.h.b16 %v625
    %v805 = vunpack.c.l.b16 %v626
    %v806 = vunpack.c.h.b16 %v626
    %v807 = vunpack.c.l.b16 %v627
    %v808 = vunpack.c.h.b16 %v627
    %v809 = vunpack.c.l.b16 %v628
    %v810 = vunpack.c.h.b16 %v628
    %v811 = vunpack.c.l.b16 %v629
    %v812 = vunpack.c.h.b16 %v629
    %v813 = vunpack.c.l.b16 %v630
    %v814 = vunpack.c.h.b16 %v630
    %v815 = vunpack.c.l.b16 %v631
    %v816 = vunpack.c.h.b16 %v631
    %v817 = vunpack.c.l.b16 %v632
    %v818 = vunpack.c.h.b16 %v632
    %v819 = vunpack.c.l.b16 %v633
    %v820 = vunpack.c.h.b16 %v633
    %v821 = vunpack.c.l.b16 %v634
    %v822 = vunpack.c.h.b16 %v634
    %v823 = vunpack.c.l.b16 %v635
    %v824 = vunpack.c.h.b16 %v635
    %v825 = vunpack.c.l.b16 %v636
    %v826 = vunpack.c.h.b16 %v636
    %v827 = vunpack.c.l.b16 %v637
    %v828 = vunpack.c.h.b16 %v637
    %v829 = vunpack.c.l.b16 %v638
    %v830 = vunpack.c.h.b16 %v638
    %v831 = vunpack.c.l.b16 %v639
    %v832 = vunpack.c.h.b16 %v639
    %v833 = vunpack.c.l.b16 %v640
    %v834 = vunpack.c.h.b16 %v640
    %v835 = vunpack.c.l.b16 %v641
    %v836 = vunpack.c.h.b16 %v641
    %v837 = vunpack.c.l.b16 %v642
    %v838 = vunpack.c.h.b16 %v642
    %v839 = vunpack.c.l.b16 %v643
    %v840 = vunpack.c.h.b16 %v643
    %v841 = vunpack.c.l.b16 %v644
    %v842 = vunpack.c.h.b16 %v644
    %v843 = vunpack.c.l.b16 %v645
    %v844 = vunpack.c.h.b16 %v645
    %v845 = vunpack.c.l.b16 %v646
    %v846 = vunpack.c.h.b16 %v646
    %v847 = vunpack.c.l.b16 %v647
    %v848 = vunpack.c.h.b16 %v647
    %v849 = vunpack.c.l.b16 %v648
    %v850 = vunpack.c.h.b16 %v648
    %v851 = vunpack.c.l.b16 %v649
    %v852 = vunpack.c.h.b16 %v649
    %v853 = vunpack.c.l.b16 %v650
    %v854 = vunpack.c.h.b16 %v650
    %v855 = vunpack.c.l.b16 %v651
    %v856 = vunpack.c.h.b16 %v651
    %v857 = vunpack.c.l.b16 %v652
    %v858 = vunpack.c.h.b16 %v652
    %v859 = vunpack.c.l.b16 %v653
    %v860 = vunpack.c.h.b16 %v653
    %v861 = vunpack.c.l.b16 %v654
    %v862 = vunpack.c.h.b16 %v654
    %v863 = vunpack.c.l.b16 %v655
    %v864 = vunpack.c.h.b16 %v655
    %v865 = vunpack.c.l.b16 %v656
    %v866 = vunpack.c.h.b16 %v656
    %v867 = vunpack.c.l.b16 %v657
    %v868 = vunpack.c.h.b16 %v657
    %v869 = vunpack.c.l.b16 %v658
    %v870 = vunpack.c.h.b16 %v658
    %v871 = vunpack.c.l.b16 %v659
    %v872 = vunpack.c.h.b16 %v659
    %v873 = vunpack.c.l.b16 %v660
    %v874 = vunpack.c.h.b16 %v660
    %v875 = vunpack.c.l.b16 %v661
    %v876 = vunpack.c.h.b16 %v661
    %v877 = vunpack.c.l.b16 %v662
    %v878 = vunpack.c.h.b16 %v662
    %v879 = vunpack.c.l.b16 %v663
    %v880 = vunpack.c.h.b16 %v663
    %v881 = vunpack.c.l.b16 %v664
    %v882 = vunpack.c.h.b16 %v664
    %v883 = vpack.c.b16 %v759, %v755
    %v884 = vpack.c.b16 %v760, %v756
    %v885 = vpack.c.b16 %v761, %v757
    %v886 = vpack.c.b16 %v762, %v758
    %v887 = vpack.c.b16 %v767, %v763
    %v888 = vpack.c.b16 %v768, %v764
    %v889 = vpack.c.b16 %v769, %v765
    %v890 = vpack.c.b16 %v770, %v766
    %v891 = vpack.c.b16 %v775, %v771
    %v892 = vpack.c.b16 %v776, %v772
    %v893 = vpack.c.b16 %v777, %v773
    %v894 = vpack.c.b16 %v778, %v774
    %v895 = vpack.c.b16 %v783, %v779
    %v896 = vpack.c.b16 %v784, %v780
    %v897 = vpack.c.b16 %v785, %v781
    %v898 = vpack.c.b16 %v786, %v782
    %v899 = vpack.c.b16 %v791, %v787
    %v900 = vpack.c.b16 %v792, %v788
    %v901 = vpack.c.b16 %v793, %v789
    %v902 = vpack.c.b16 %v794, %v790
    %v903 = vpack.c.b16 %v799, %v795
    %v904 = vpack.c.b16 %v800, %v796
    %v905 = vpack.c.b16 %v801, %v797
    %v906 = vpack.c.b16 %v802, %v798
    %v907 = vpack.c.b16 %v807, %v803
    %v908 = vpack.c.b16 %v808, %v804
    %v909 = vpack.c.b16 %v809, %v805
    %v910 = vpack.c.b16 %v810, %v806
    %v911 = vpack.c.b16 %v815, %v811
    %v912 = vpack.c.b16 %v816, %v812
    %v913 = vpack.c.b16 %v817, %v813
    %v914 = vpack.c.b16 %v818, %v814
    %v915 = vpack.c.b16 %v823, %v819
    %v916 = vpack.c.b16 %v824, %v820
    %v917 = vpack.c.b16 %v825, %v821
    %v918 = vpack.c.b16 %v826, %v822
    %v919 = vpack.c.b16 %v831, %v827
    %v920 = vpack.c.b16 %v832, %v828
    %v921 = vpack.c.b16 %v833, %v829
    %v922 = vpack.c.b16 %v834, %v830
    %v923 = vpack.c.b16 %v839, %v835
    %v924 = vpack.c.b16 %v840, %v836
    %v925 = vpack.c.b16 %v841, %v837
    %v926 = vpack.c.b16 %v842, %v838
    %v927 = vpack.c.b16 %v847, %v843
    %v928 = vpack.c.b16 %v848, %v844
    %v929 = vpack.c.b16 %v849, %v845
    %v930 = vpack.c.b16 %v850, %v846
    %v931 = vpack.c.b16 %v855, %v851
    %v932 = vpack.c.b16 %v856, %v852
    %v933 = vpack.c.b16 %v857, %v853
    %v934 = vpack.c.b16 %v858, %v854
    %v935 = vpack.c.b16 %v863, %v859
    %v936 = vpack.c.b16 %v864, %v860
    %v937 = vpack.c.b16 %v865, %v861
    %v938 = vpack.c.b16 %v866, %v862
    %v939 = vpack.c.b16 %v871, %v867
    %v940 = vpack.c.b16 %v872, %v868
    %v941 = vpack.c.b16 %v873, %v869
    %v942 = vpack.c.b16 %v874, %v870
    %v943 = vpack.c.b16 %v879, %v875
    %v944 = vpack.c.b16 %v880, %v876
    %v945 = vpack.c.b16 %v881, %v877
    %v946 = vpack.c.b16 %v882, %v878
    %v1012 = vlaneseq
    %v1013 = vshrl.u32 %v1012, 7
    %v1014 = vsub.s32 0, %v1013
    %v1015 = vrot.slane %v665, %v1014
    %v1016 = vlaneseq
    %v1017 = vshrl.u32 %v1016, 7
    %v1018 = vsub.s32 1, %v1017
    %v1019 = vrot.slane %v665, %v1018
    %v1020 = vlaneseq
    %v1021 = vshrl.u32 %v1020, 7
    %v1022 = vsub.s32 2, %v1021
    %v1023 = vrot.slane %v665, %v1022
    %v1024 = vlaneseq
    %v1025 = vshrl.u32 %v1024, 7
    %v1026 = vsub.s32 3, %v1025
    %v1027 = vrot.slane %v665, %v1026
    %1032 = vmatprep.subr.bf16.mxu0 %v884
    %1033 = vmatpush1.bf16.msra.mxu0 %v883
    %1034 = vmatprep.subr.bf16.mxu0 %v888
    %1035 = vmatpush1.bf16.msra.mxu0 %v887
    %1036 = vmatprep.subr.bf16.mxu0 %v892
    %1037 = vmatpush1.bf16.msra.mxu0 %v891
    %1038 = vmatprep.subr.bf16.mxu0 %v896
    %1039 = vmatpush1.bf16.msra.mxu0 %v895
    %1040 = vmatprep.subr.bf16.mxu0 %v900
    %1041 = vmatpush1.bf16.msra.mxu0 %v899
    %1042 = vmatprep.subr.bf16.mxu0 %v904
    %1043 = vmatpush1.bf16.msra.mxu0 %v903
    %1044 = vmatprep.subr.bf16.mxu0 %v908
    %1045 = vmatpush1.bf16.msra.mxu0 %v907
    %1046 = vmatprep.subr.bf16.mxu0 %v912
    %1047 = vmatpush1.bf16.msra.mxu0 %v911
    %1048 = vmatprep.subr.bf16.mxu0 %v916
    %1049 = vmatpush1.bf16.msra.mxu0 %v915
    %1050 = vmatprep.subr.bf16.mxu0 %v920
    %1051 = vmatpush1.bf16.msra.mxu0 %v919
    %1052 = vmatprep.subr.bf16.mxu0 %v924
    %1053 = vmatpush1.bf16.msra.mxu0 %v923
    %1054 = vmatprep.subr.bf16.mxu0 %v928
    %1055 = vmatpush1.bf16.msra.mxu0 %v927
    %1056 = vmatprep.subr.bf16.mxu0 %v932
    %1057 = vmatpush1.bf16.msra.mxu0 %v931
    %1058 = vmatprep.subr.bf16.mxu0 %v936
    %1059 = vmatpush1.bf16.msra.mxu0 %v935
    %1060 = vmatprep.subr.bf16.mxu0 %v940
    %1061 = vmatpush1.bf16.msra.mxu0 %v939
    %1062 = vmatprep.subr.bf16.mxu0 %v944
    %1063 = vmatpush1.bf16.msra.mxu0 %v943
    %1064 = vmatprep.mubr.bf16.mxu0 %v688
    %1065 = vmatmul.mubr.bf16.gmra.mrb[0].mxu0 %v681
    %v1066 = vpop.f32.mrb[0].mxu0
    %v1067 = vadd.f32 %v1015, %v1066
    %v1068 = vpop.f32.mrb[0].mxu0
    %v1069 = vadd.f32 %v1019, %v1068
    %v1070 = vpop.f32.mrb[0].mxu0
    %v1071 = vpop.f32.mrb[0].mxu0
    %1072 = vdwg.mxu0
    %1073 = vmatprep.subr.bf16.mxu0 %v886
    %1074 = vmatpush1.bf16.msra.mxu0 %v885
    %1075 = vmatprep.subr.bf16.mxu0 %v890
    %1076 = vmatpush1.bf16.msra.mxu0 %v889
    %1077 = vmatprep.subr.bf16.mxu0 %v894
    %1078 = vmatpush1.bf16.msra.mxu0 %v893
    %1079 = vmatprep.subr.bf16.mxu0 %v898
    %1080 = vmatpush1.bf16.msra.mxu0 %v897
    %1081 = vmatprep.subr.bf16.mxu0 %v902
    %1082 = vmatpush1.bf16.msra.mxu0 %v901
    %1083 = vmatprep.subr.bf16.mxu0 %v906
    %1084 = vmatpush1.bf16.msra.mxu0 %v905
    %1085 = vmatprep.subr.bf16.mxu0 %v910
    %1086 = vmatpush1.bf16.msra.mxu0 %v909
    %1087 = vmatprep.subr.bf16.mxu0 %v914
    %1088 = vmatpush1.bf16.msra.mxu0 %v913
    %1089 = vmatprep.subr.bf16.mxu0 %v918
    %1090 = vmatpush1.bf16.msra.mxu0 %v917
    %1091 = vmatprep.subr.bf16.mxu0 %v922
    %1092 = vmatpush1.bf16.msra.mxu0 %v921
    %1093 = vmatprep.subr.bf16.mxu0 %v926
    %1094 = vmatpush1.bf16.msra.mxu0 %v925
    %1095 = vmatprep.subr.bf16.mxu0 %v930
    %1096 = vmatpush1.bf16.msra.mxu0 %v929
    %1097 = vmatprep.subr.bf16.mxu0 %v934
    %1098 = vmatpush1.bf16.msra.mxu0 %v933
    %1099 = vmatprep.subr.bf16.mxu0 %v938
    %1100 = vmatpush1.bf16.msra.mxu0 %v937
    %1101 = vmatprep.subr.bf16.mxu0 %v942
    %1102 = vmatpush1.bf16.msra.mxu0 %v941
    %1103 = vmatprep.subr.bf16.mxu0 %v946
    %1104 = vmatpush1.bf16.msra.mxu0 %v945
    %1105 = vmatprep.mubr.bf16.mxu0 %v688
    %1106 = vmatmul.mubr.bf16.gmra.mrb[0].mxu0 %v681
    %v1107 = vpop.f32.mrb[0].mxu0
    %v1108 = vadd.f32 %v1023, %v1107
    %v1109 = vpop.f32.mrb[0].mxu0
    %v1110 = vadd.f32 %v1027, %v1109
    %v1111 = vpop.f32.mrb[0].mxu0
    %v1112 = vpop.f32.mrb[0].mxu0
    %1113 = vdwg.mxu0
    %v1114 = vxor.u32 %v1067, 2147483648
    %v1115 = vxor.u32 %v1069, 2147483648
    %v1116 = vxor.u32 %v1108, 2147483648
    %v1117 = vmul.f32 %v1114, 1.442695
    %v1118 = vpow.pop %v1117
    %v1119 = vmul.f32 %v1115, 1.442695
    %v1120 = vpow.pop %v1119
    %v1121 = vmul.f32 %v1116, 1.442695
    %v1122 = vpow.pop %v1121
    %v1123 = vadd.f32 %v1118, 1.0
    %v1124 = vadd.f32 %v1120, 1.0
    %v1125 = vadd.f32 %v1122, 1.0
    %v1126 = vrcp.pop %v1123
    %v1127 = vmul.f32 1.0, %v1126
    %v1128 = vrcp.pop %v1124
    %v1129 = vmul.f32 1.0, %v1128
    %v1130 = vrcp.pop %v1125
    %v1131 = vmul.f32 1.0, %v1130
    %v1132 = vtanh.pop %v1110
    %v1133 = vmul.f32 %v1129, 0.0
    %v1134 = vmul.f32 %v1127, %v1132
    %v1135 = vadd.f32 %v1133, %v1134
    %v1136 = vtanh.pop %v1135
    %v1137 = vmul.f32 %v1131, %v1136
    %v1138 = vpack.c.bf16 %v1137, %v1137
    %v1139 = vld [vmem:[#allocation3 + $0x1] sm:$0x1]
    %v1140 = vsel %vm263, %v1138, %v1139
    %1141 = vst [vmem:[#allocation3 + $0x1] sm:$0x1] %v1140
    %s1142 = scalar_lea.vmem [#allocation2], 1
    %v1143 = vld [vmem:[%s1142] ss:$8 sm:$0xf]
    %v1144 = vld [vmem:[#allocation5] sm:$0xff]
    %v1145 = vld [vmem:[#allocation5 + $0x8] sm:$0xff]
    %v1146 = vld [vmem:[#allocation5 + $0x10] sm:$0xff]
    %v1147 = vld [vmem:[#allocation5 + $0x18] sm:$0xff]
    %v1148 = vld [vmem:[#allocation5 + $0x20] sm:$0xff]
    %v1149 = vld [vmem:[#allocation5 + $0x28] sm:$0xff]
    %v1150 = vld [vmem:[#allocation5 + $0x30] sm:$0xff]
    %v1151 = vld [vmem:[#allocation5 + $0x38] sm:$0xff]
    %v1152 = vld [vmem:[#allocation5 + $0x40] sm:$0xff]
    %v1153 = vld [vmem:[#allocation5 + $0x48] sm:$0xff]
    %v1154 = vld [vmem:[#allocation5 + $0x50] sm:$0xff]
    %v1155 = vld [vmem:[#allocation5 + $0x58] sm:$0xff]
    %v1156 = vld [vmem:[#allocation5 + $0x60] sm:$0xff]
    %v1157 = vld [vmem:[#allocation5 + $0x68] sm:$0xff]
    %v1158 = vld [vmem:[#allocation5 + $0x70] sm:$0xff]
    %v1159 = vld [vmem:[#allocation5 + $0x78] sm:$0xff]
    %v1160 = vld [vmem:[#allocation5 + $0x80] sm:$0xff]
    %v1161 = vld [vmem:[#allocation5 + $0x88] sm:$0xff]
    %v1162 = vld [vmem:[#allocation5 + $0x90] sm:$0xff]
    %v1163 = vld [vmem:[#allocation5 + $0x98] sm:$0xff]
    %v1164 = vld [vmem:[#allocation5 + $0xa0] sm:$0xff]
    %v1165 = vld [vmem:[#allocation5 + $0xa8] sm:$0xff]
    %v1166 = vld [vmem:[#allocation5 + $0xb0] sm:$0xff]
    %v1167 = vld [vmem:[#allocation5 + $0xb8] sm:$0xff]
    %v1168 = vld [vmem:[#allocation5 + $0xc0] sm:$0xff]
    %v1169 = vld [vmem:[#allocation5 + $0xc8] sm:$0xff]
    %v1170 = vld [vmem:[#allocation5 + $0xd0] sm:$0xff]
    %v1171 = vld [vmem:[#allocation5 + $0xd8] sm:$0xff]
    %v1172 = vld [vmem:[#allocation5 + $0xe0] sm:$0xff]
    %v1173 = vld [vmem:[#allocation5 + $0xe8] sm:$0xff]
    %v1174 = vld [vmem:[#allocation5 + $0xf0] sm:$0xff]
    %v1175 = vld [vmem:[#allocation5 + $0xf8] sm:$0xff]
    %v1208 = vunpack.c.l.b16 %v1144
    %v1209 = vunpack.c.h.b16 %v1144
    %v1210 = vunpack.c.l.b16 %v1145
    %v1211 = vunpack.c.h.b16 %v1145
    %v1212 = vunpack.c.l.b16 %v1146
    %v1213 = vunpack.c.h.b16 %v1146
    %v1214 = vunpack.c.l.b16 %v1147
    %v1215 = vunpack.c.h.b16 %v1147
    %v1216 = vunpack.c.l.b16 %v1148
    %v1217 = vunpack.c.h.b16 %v1148
    %v1218 = vunpack.c.l.b16 %v1149
    %v1219 = vunpack.c.h.b16 %v1149
    %v1220 = vunpack.c.l.b16 %v1150
    %v1221 = vunpack.c.h.b16 %v1150
    %v1222 = vunpack.c.l.b16 %v1151
    %v1223 = vunpack.c.h.b16 %v1151
    %v1224 = vunpack.c.l.b16 %v1152
    %v1225 = vunpack.c.h.b16 %v1152
    %v1226 = vunpack.c.l.b16 %v1153
    %v1227 = vunpack.c.h.b16 %v1153
    %v1228 = vunpack.c.l.b16 %v1154
    %v1229 = vunpack.c.h.b16 %v1154
    %v1230 = vunpack.c.l.b16 %v1155
    %v1231 = vunpack.c.h.b16 %v1155
    %v1232 = vunpack.c.l.b16 %v1156
    %v1233 = vunpack.c.h.b16 %v1156
    %v1234 = vunpack.c.l.b16 %v1157
    %v1235 = vunpack.c.h.b16 %v1157
    %v1236 = vunpack.c.l.b16 %v1158
    %v1237 = vunpack.c.h.b16 %v1158
    %v1238 = vunpack.c.l.b16 %v1159
    %v1239 = vunpack.c.h.b16 %v1159
    %v1240 = vunpack.c.l.b16 %v1160
    %v1241 = vunpack.c.h.b16 %v1160
    %v1242 = vunpack.c.l.b16 %v1161
    %v1243 = vunpack.c.h.b16 %v1161
    %v1244 = vunpack.c.l.b16 %v1162
    %v1245 = vunpack.c.h.b16 %v1162
    %v1246 = vunpack.c.l.b16 %v1163
    %v1247 = vunpack.c.h.b16 %v1163
    %v1248 = vunpack.c.l.b16 %v1164
    %v1249 = vunpack.c.h.b16 %v1164
    %v1250 = vunpack.c.l.b16 %v1165
    %v1251 = vunpack.c.h.b16 %v1165
    %v1252 = vunpack.c.l.b16 %v1166
    %v1253 = vunpack.c.h.b16 %v1166
    %v1254 = vunpack.c.l.b16 %v1167
    %v1255 = vunpack.c.h.b16 %v1167
    %v1256 = vunpack.c.l.b16 %v1168
    %v1257 = vunpack.c.h.b16 %v1168
    %v1258 = vunpack.c.l.b16 %v1169
    %v1259 = vunpack.c.h.b16 %v1169
    %v1260 = vunpack.c.l.b16 %v1170
    %v1261 = vunpack.c.h.b16 %v1170
    %v1262 = vunpack.c.l.b16 %v1171
    %v1263 = vunpack.c.h.b16 %v1171
    %v1264 = vunpack.c.l.b16 %v1172
    %v1265 = vunpack.c.h.b16 %v1172
    %v1266 = vunpack.c.l.b16 %v1173
    %v1267 = vunpack.c.h.b16 %v1173
    %v1268 = vunpack.c.l.b16 %v1174
    %v1269 = vunpack.c.h.b16 %v1174
    %v1270 = vunpack.c.l.b16 %v1175
    %v1271 = vunpack.c.h.b16 %v1175
    %v1272 = vpack.c.b16 %v1212, %v1208
    %v1273 = vpack.c.b16 %v1213, %v1209
    %v1274 = vpack.c.b16 %v1214, %v1210
    %v1275 = vpack.c.b16 %v1215, %v1211
    %v1276 = vpack.c.b16 %v1220, %v1216
    %v1277 = vpack.c.b16 %v1221, %v1217
    %v1278 = vpack.c.b16 %v1222, %v1218
    %v1279 = vpack.c.b16 %v1223, %v1219
    %v1280 = vpack.c.b16 %v1228, %v1224
    %v1281 = vpack.c.b16 %v1229, %v1225
    %v1282 = vpack.c.b16 %v1230, %v1226
    %v1283 = vpack.c.b16 %v1231, %v1227
    %v1284 = vpack.c.b16 %v1236, %v1232
    %v1285 = vpack.c.b16 %v1237, %v1233
    %v1286 = vpack.c.b16 %v1238, %v1234
    %v1287 = vpack.c.b16 %v1239, %v1235
    %v1288 = vpack.c.b16 %v1244, %v1240
    %v1289 = vpack.c.b16 %v1245, %v1241
    %v1290 = vpack.c.b16 %v1246, %v1242
    %v1291 = vpack.c.b16 %v1247, %v1243
    %v1292 = vpack.c.b16 %v1252, %v1248
    %v1293 = vpack.c.b16 %v1253, %v1249
    %v1294 = vpack.c.b16 %v1254, %v1250
    %v1295 = vpack.c.b16 %v1255, %v1251
    %v1296 = vpack.c.b16 %v1260, %v1256
    %v1297 = vpack.c.b16 %v1261, %v1257
    %v1298 = vpack.c.b16 %v1262, %v1258
    %v1299 = vpack.c.b16 %v1263, %v1259
    %v1300 = vpack.c.b16 %v1268, %v1264
    %v1301 = vpack.c.b16 %v1269, %v1265
    %v1302 = vpack.c.b16 %v1270, %v1266
    %v1303 = vpack.c.b16 %v1271, %v1267
    %1336 = vmatprep.subr.bf16.mxu0 %v1273
    %1337 = vmatpush1.bf16.msra.mxu0 %v1272
    %1338 = vmatprep.subr.bf16.mxu0 %v1277
    %1339 = vmatpush1.bf16.msra.mxu0 %v1276
    %1340 = vmatprep.subr.bf16.mxu0 %v1281
    %1341 = vmatpush1.bf16.msra.mxu0 %v1280
    %1342 = vmatprep.subr.bf16.mxu0 %v1285
    %1343 = vmatpush1.bf16.msra.mxu0 %v1284
    %1344 = vmatprep.subr.bf16.mxu0 %v1289
    %1345 = vmatpush1.bf16.msra.mxu0 %v1288
    %1346 = vmatprep.subr.bf16.mxu0 %v1293
    %1347 = vmatpush1.bf16.msra.mxu0 %v1292
    %1348 = vmatprep.subr.bf16.mxu0 %v1297
    %1349 = vmatpush1.bf16.msra.mxu0 %v1296
    %1350 = vmatprep.subr.bf16.mxu0 %v1301
    %1351 = vmatpush1.bf16.msra.mxu0 %v1300
    %1352 = vmatprep.subr.bf16.mxu0 0
    %1353 = vmatpush1.bf16.msra.mxu0 0
    %1354 = vmatprep.subr.bf16.mxu0 0
    %1355 = vmatpush1.bf16.msra.mxu0 0
    %1356 = vmatprep.subr.bf16.mxu0 0
    %1357 = vmatpush1.bf16.msra.mxu0 0
    %1358 = vmatprep.subr.bf16.mxu0 0
    %1359 = vmatpush1.bf16.msra.mxu0 0
    %1360 = vmatprep.subr.bf16.mxu0 0
    %1361 = vmatpush1.bf16.msra.mxu0 0
    %1362 = vmatprep.subr.bf16.mxu0 0
    %1363 = vmatpush1.bf16.msra.mxu0 0
    %1364 = vmatprep.subr.bf16.mxu0 0
    %1365 = vmatpush1.bf16.msra.mxu0 0
    %1366 = vmatprep.subr.bf16.mxu0 0
    %1367 = vmatpush1.bf16.msra.mxu0 0
    %1368 = vmatprep.mubr.bf16.mxu0 0
    %1369 = vmatmul.mubr.bf16.gmra.mrb[0].mxu0 %v596
    %v1370 = vpop.f32.mrb[0].mxu0
    %v1371 = vadd.f32 0.0, %v1370
    %v1372 = vpop.f32.mrb[0].mxu0
    %v1373 = vadd.f32 0.0, %v1372
    %v1374 = vpop.f32.mrb[0].mxu0
    %v1375 = vpop.f32.mrb[0].mxu0
    %1376 = vdwg.mxu0
    %1377 = vmatprep.subr.bf16.mxu0 %v1275
    %1378 = vmatpush1.bf16.msra.mxu0 %v1274
    %1379 = vmatprep.subr.bf16.mxu0 %v1279
    %1380 = vmatpush1.bf16.msra.mxu0 %v1278
    %1381 = vmatprep.subr.bf16.mxu0 %v1283
    %1382 = vmatpush1.bf16.msra.mxu0 %v1282
    %1383 = vmatprep.subr.bf16.mxu0 %v1287
    %1384 = vmatpush1.bf16.msra.mxu0 %v1286
    %1385 = vmatprep.subr.bf16.mxu0 %v1291
    %1386 = vmatpush1.bf16.msra.mxu0 %v1290
    %1387 = vmatprep.subr.bf16.mxu0 %v1295
    %1388 = vmatpush1.bf16.msra.mxu0 %v1294
    %1389 = vmatprep.subr.bf16.mxu0 %v1299
    %1390 = vmatpush1.bf16.msra.mxu0 %v1298
    %1391 = vmatprep.subr.bf16.mxu0 %v1303
    %1392 = vmatpush1.bf16.msra.mxu0 %v1302
    %1393 = vmatprep.subr.bf16.mxu0 0
    %1394 = vmatpush1.bf16.msra.mxu0 0
    %1395 = vmatprep.subr.bf16.mxu0 0
    %1396 = vmatpush1.bf16.msra.mxu0 0
    %1397 = vmatprep.subr.bf16.mxu0 0
    %1398 = vmatpush1.bf16.msra.mxu0 0
    %1399 = vmatprep.subr.bf16.mxu0 0
    %1400 = vmatpush1.bf16.msra.mxu0 0
    %1401 = vmatprep.subr.bf16.mxu0 0
    %1402 = vmatpush1.bf16.msra.mxu0 0
    %1403 = vmatprep.subr.bf16.mxu0 0
    %1404 = vmatpush1.bf16.msra.mxu0 0
    %1405 = vmatprep.subr.bf16.mxu0 0
    %1406 = vmatpush1.bf16.msra.mxu0 0
    %1407 = vmatprep.subr.bf16.mxu0 0
    %1408 = vmatpush1.bf16.msra.mxu0 0
    %1409 = vmatprep.mubr.bf16.mxu0 0
    %1410 = vmatmul.mubr.bf16.gmra.mrb[0].mxu0 %v596
    %v1411 = vpop.f32.mrb[0].mxu0
    %v1412 = vadd.f32 0.0, %v1411
    %v1413 = vpop.f32.mrb[0].mxu0
    %v1414 = vadd.f32 0.0, %v1413
    %v1415 = vpop.f32.mrb[0].mxu0
    %v1416 = vpop.f32.mrb[0].mxu0
    %1417 = vdwg.mxu0
    %v1422 = vcombine.low %v1371, %v1373
    %v1423 = vcombine.low %v1412, %v1414
    %v1425 = vunpack.c.l.s4 1966171168
    %v1426 = vunpack.c.0.s8 %v1425
    %v1427 = vlaneseq
    %v1428 = vshrl.u32 %v1427, 7
    %v1429 = vsub.s32 %v1426, %v1428
    %v1430 = vrot.slane %v1422, %v1429
    %v1432 = vunpack.c.l.s4 1966171168
    %v1433 = vunpack.c.0.s8 %v1432
    %v1434 = vlaneseq
    %v1435 = vshrl.u32 %v1434, 7
    %v1436 = vsub.s32 %v1433, %v1435
    %v1437 = vrot.slane %v1423, %v1436
    %v1438 = vcombine.low %v1430, %v1437
    %v1440 = vunpack.c.l.s4 1966171168
    %v1441 = vunpack.c.0.s8 %v1440
    %v1442 = vlaneseq
    %v1443 = vshrl.u32 %v1442, 7
    %v1444 = vsub.s32 %v1441, %v1443
    %v1445 = vrot.slane %v1438, %v1444
    %v1447 = vadd.f32 %v1143, %v1445
    %v1448 = vxor.u32 %v1447, 2147483648
    %v1449 = vmul.f32 %v1448, 1.442695
    %v1450 = vpow.pop %v1449
    %v1451 = vadd.f32 %v1450, 1.0
    %v1452 = vrcp.pop %v1451
    %v1453 = vmul.f32 1.0, %v1452
    %v1455 = vrot.slane %v1447, 3
    %v1457 = vtanh.pop %v1455
    %v1459 = vrot.slane %v1453, 1
    %v1461 = vmul.f32 %v1459, %v591
    %v1462 = vmul.f32 %v1453, %v1457
    %v1463 = vadd.f32 %v1461, %v1462
    %v1464 = vtanh.pop %v1463
    %v1465 = vrot.slane %v1453, 2
    %v1467 = vmul.f32 %v1465, %v1464
    %v1468 = vpack.c.bf16 %v1467, %v1467
    %v1469 = vld [vmem:[#allocation3] sm:$0x1]
    %v1470 = vsel %vm263, %v1468, %v1469
    %1471 = vst [vmem:[#allocation3] sm:$0x1] %v1470
    %v1472 = vld [vmem:[#allocation3] sm:$0x3]
    %v1473 = vld [vmem:[#allocation8] sm:$0xff]
    %v1474 = vld [vmem:[#allocation8 + $0x8] sm:$0xff]
    %v1475 = vld [vmem:[#allocation8 + $0x10] sm:$0xff]
    %v1476 = vld [vmem:[#allocation8 + $0x18] sm:$0xff]
    %v1477 = vld [vmem:[#allocation8 + $0x20] sm:$0xff]
    %v1478 = vld [vmem:[#allocation8 + $0x28] sm:$0xff]
    %v1479 = vld [vmem:[#allocation8 + $0x30] sm:$0xff]
    %v1480 = vld [vmem:[#allocation8 + $0x38] sm:$0xff]
    %v1481 = vld [vmem:[#allocation8 + $0x40] sm:$0xff]
    %v1482 = vld [vmem:[#allocation8 + $0x48] sm:$0xff]
    %v1483 = vld [vmem:[#allocation8 + $0x50] sm:$0xff]
    %v1484 = vld [vmem:[#allocation8 + $0x58] sm:$0xff]
    %v1485 = vld [vmem:[#allocation8 + $0x60] sm:$0xff]
    %v1486 = vld [vmem:[#allocation8 + $0x68] sm:$0xff]
    %v1487 = vld [vmem:[#allocation8 + $0x70] sm:$0xff]
    %v1488 = vld [vmem:[#allocation8 + $0x78] sm:$0xff]
    %v1489 = vld [vmem:[#allocation8 + $0x80] sm:$0xff]
    %v1490 = vld [vmem:[#allocation8 + $0x88] sm:$0xff]
    %v1491 = vld [vmem:[#allocation8 + $0x90] sm:$0xff]
    %v1492 = vld [vmem:[#allocation8 + $0x98] sm:$0xff]
    %v1493 = vld [vmem:[#allocation8 + $0xa0] sm:$0xff]
    %v1494 = vld [vmem:[#allocation8 + $0xa8] sm:$0xff]
    %v1495 = vld [vmem:[#allocation8 + $0xb0] sm:$0xff]
    %v1496 = vld [vmem:[#allocation8 + $0xb8] sm:$0xff]
    %v1497 = vld [vmem:[#allocation8 + $0xc0] sm:$0xff]
    %v1498 = vld [vmem:[#allocation8 + $0xc8] sm:$0xff]
    %v1499 = vld [vmem:[#allocation8 + $0xd0] sm:$0xff]
    %v1500 = vld [vmem:[#allocation8 + $0xd8] sm:$0xff]
    %v1501 = vld [vmem:[#allocation8 + $0xe0] sm:$0xff]
    %v1502 = vld [vmem:[#allocation8 + $0xe8] sm:$0xff]
    %v1503 = vld [vmem:[#allocation8 + $0xf0] sm:$0xff]
    %v1504 = vld [vmem:[#allocation8 + $0xf8] sm:$0xff]
    %v1505 = vld [vmem:[#allocation8 + $0x100] sm:$0xff]
    %v1506 = vld [vmem:[#allocation8 + $0x108] sm:$0xff]
    %v1507 = vld [vmem:[#allocation8 + $0x110] sm:$0xff]
    %v1508 = vld [vmem:[#allocation8 + $0x118] sm:$0xff]
    %v1509 = vld [vmem:[#allocation8 + $0x120] sm:$0xff]
    %v1510 = vld [vmem:[#allocation8 + $0x128] sm:$0xff]
    %v1511 = vld [vmem:[#allocation8 + $0x130] sm:$0xff]
    %v1512 = vld [vmem:[#allocation8 + $0x138] sm:$0xff]
    %v1513 = vld [vmem:[#allocation8 + $0x140] sm:$0xff]
    %v1514 = vld [vmem:[#allocation8 + $0x148] sm:$0xff]
    %v1515 = vld [vmem:[#allocation8 + $0x150] sm:$0xff]
    %v1516 = vld [vmem:[#allocation8 + $0x158] sm:$0xff]
    %v1517 = vld [vmem:[#allocation8 + $0x160] sm:$0xff]
    %v1518 = vld [vmem:[#allocation8 + $0x168] sm:$0xff]
    %v1519 = vld [vmem:[#allocation8 + $0x170] sm:$0xff]
    %v1520 = vld [vmem:[#allocation8 + $0x178] sm:$0xff]
    %v1521 = vld [vmem:[#allocation8 + $0x180] sm:$0xff]
    %v1522 = vld [vmem:[#allocation8 + $0x188] sm:$0xff]
    %v1523 = vld [vmem:[#allocation8 + $0x190] sm:$0xff]
    %v1524 = vld [vmem:[#allocation8 + $0x198] sm:$0xff]
    %v1525 = vld [vmem:[#allocation8 + $0x1a0] sm:$0xff]
    %v1526 = vld [vmem:[#allocation8 + $0x1a8] sm:$0xff]
    %v1527 = vld [vmem:[#allocation8 + $0x1b0] sm:$0xff]
    %v1528 = vld [vmem:[#allocation8 + $0x1b8] sm:$0xff]
    %v1529 = vld [vmem:[#allocation8 + $0x1c0] sm:$0xff]
    %v1530 = vld [vmem:[#allocation8 + $0x1c8] sm:$0xff]
    %v1531 = vld [vmem:[#allocation8 + $0x1d0] sm:$0xff]
    %v1532 = vld [vmem:[#allocation8 + $0x1d8] sm:$0xff]
    %v1533 = vld [vmem:[#allocation8 + $0x1e0] sm:$0xff]
    %v1534 = vld [vmem:[#allocation8 + $0x1e8] sm:$0xff]
    %v1535 = vld [vmem:[#allocation8 + $0x1f0] sm:$0xff]
    %v1536 = vld [vmem:[#allocation8 + $0x1f8] sm:$0xff]
    %v1537 = vld [vmem:[%s5] sm:$0xf]
    %v1540 = vunpack.c.l.s4 1966171168
    %v1541 = vunpack.c.0.s8 %v1540
    %v1542 = vlaneseq
    %v1543 = vshrl.u32 %v1542, 7
    %v1544 = vsub.s32 %v1541, %v1543
    %v1545 = vrot.slane %v1472, %v1544
    %v1546 = vcombine.high %v1545, %v1545
    %v1548 = vunpack.c.l.s4 1966171168
    %v1549 = vunpack.c.0.s8 %v1548
    %v1550 = vlaneseq
    %v1551 = vshrl.u32 %v1550, 7
    %v1552 = vsub.s32 %v1549, %v1551
    %v1553 = vrot.slane %v1545, %v1552
    %v1555 = vunpack.c.l.s4 1966171168
    %v1556 = vunpack.c.0.s8 %v1555
    %v1557 = vlaneseq
    %v1558 = vshrl.u32 %v1557, 7
    %v1559 = vsub.s32 %v1556, %v1558
    %v1560 = vrot.slane %v1546, %v1559
    %v1627 = vunpack.c.l.b16 %v1473
    %v1628 = vunpack.c.h.b16 %v1473
    %v1629 = vunpack.c.l.b16 %v1474
    %v1630 = vunpack.c.h.b16 %v1474
    %v1631 = vunpack.c.l.b16 %v1475
    %v1632 = vunpack.c.h.b16 %v1475
    %v1633 = vunpack.c.l.b16 %v1476
    %v1634 = vunpack.c.h.b16 %v1476
    %v1635 = vunpack.c.l.b16 %v1477
    %v1636 = vunpack.c.h.b16 %v1477
    %v1637 = vunpack.c.l.b16 %v1478
    %v1638 = vunpack.c.h.b16 %v1478
    %v1639 = vunpack.c.l.b16 %v1479
    %v1640 = vunpack.c.h.b16 %v1479
    %v1641 = vunpack.c.l.b16 %v1480
    %v1642 = vunpack.c.h.b16 %v1480
    %v1643 = vunpack.c.l.b16 %v1481
    %v1644 = vunpack.c.h.b16 %v1481
    %v1645 = vunpack.c.l.b16 %v1482
    %v1646 = vunpack.c.h.b16 %v1482
    %v1647 = vunpack.c.l.b16 %v1483
    %v1648 = vunpack.c.h.b16 %v1483
    %v1649 = vunpack.c.l.b16 %v1484
    %v1650 = vunpack.c.h.b16 %v1484
    %v1651 = vunpack.c.l.b16 %v1485
    %v1652 = vunpack.c.h.b16 %v1485
    %v1653 = vunpack.c.l.b16 %v1486
    %v1654 = vunpack.c.h.b16 %v1486
    %v1655 = vunpack.c.l.b16 %v1487
    %v1656 = vunpack.c.h.b16 %v1487
    %v1657 = vunpack.c.l.b16 %v1488
    %v1658 = vunpack.c.h.b16 %v1488
    %v1659 = vunpack.c.l.b16 %v1489
    %v1660 = vunpack.c.h.b16 %v1489
    %v1661 = vunpack.c.l.b16 %v1490
    %v1662 = vunpack.c.h.b16 %v1490
    %v1663 = vunpack.c.l.b16 %v1491
    %v1664 = vunpack.c.h.b16 %v1491
    %v1665 = vunpack.c.l.b16 %v1492
    %v1666 = vunpack.c.h.b16 %v1492
    %v1667 = vunpack.c.l.b16 %v1493
    %v1668 = vunpack.c.h.b16 %v1493
    %v1669 = vunpack.c.l.b16 %v1494
    %v1670 = vunpack.c.h.b16 %v1494
    %v1671 = vunpack.c.l.b16 %v1495
    %v1672 = vunpack.c.h.b16 %v1495
    %v1673 = vunpack.c.l.b16 %v1496
    %v1674 = vunpack.c.h.b16 %v1496
    %v1675 = vunpack.c.l.b16 %v1497
    %v1676 = vunpack.c.h.b16 %v1497
    %v1677 = vunpack.c.l.b16 %v1498
    %v1678 = vunpack.c.h.b16 %v1498
    %v1679 = vunpack.c.l.b16 %v1499
    %v1680 = vunpack.c.h.b16 %v1499
    %v1681 = vunpack.c.l.b16 %v1500
    %v1682 = vunpack.c.h.b16 %v1500
    %v1683 = vunpack.c.l.b16 %v1501
    %v1684 = vunpack.c.h.b16 %v1501
    %v1685 = vunpack.c.l.b16 %v1502
    %v1686 = vunpack.c.h.b16 %v1502
    %v1687 = vunpack.c.l.b16 %v1503
    %v1688 = vunpack.c.h.b16 %v1503
    %v1689 = vunpack.c.l.b16 %v1504
    %v1690 = vunpack.c.h.b16 %v1504
    %v1691 = vunpack.c.l.b16 %v1505
    %v1692 = vunpack.c.h.b16 %v1505
    %v1693 = vunpack.c.l.b16 %v1506
    %v1694 = vunpack.c.h.b16 %v1506
    %v1695 = vunpack.c.l.b16 %v1507
    %v1696 = vunpack.c.h.b16 %v1507
    %v1697 = vunpack.c.l.b16 %v1508
    %v1698 = vunpack.c.h.b16 %v1508
    %v1699 = vunpack.c.l.b16 %v1509
    %v1700 = vunpack.c.h.b16 %v1509
    %v1701 = vunpack.c.l.b16 %v1510
    %v1702 = vunpack.c.h.b16 %v1510
    %v1703 = vunpack.c.l.b16 %v1511
    %v1704 = vunpack.c.h.b16 %v1511
    %v1705 = vunpack.c.l.b16 %v1512
    %v1706 = vunpack.c.h.b16 %v1512
    %v1707 = vunpack.c.l.b16 %v1513
    %v1708 = vunpack.c.h.b16 %v1513
    %v1709 = vunpack.c.l.b16 %v1514
    %v1710 = vunpack.c.h.b16 %v1514
    %v1711 = vunpack.c.l.b16 %v1515
    %v1712 = vunpack.c.h.b16 %v1515
    %v1713 = vunpack.c.l.b16 %v1516
    %v1714 = vunpack.c.h.b16 %v1516
    %v1715 = vunpack.c.l.b16 %v1517
    %v1716 = vunpack.c.h.b16 %v1517
    %v1717 = vunpack.c.l.b16 %v1518
    %v1718 = vunpack.c.h.b16 %v1518
    %v1719 = vunpack.c.l.b16 %v1519
    %v1720 = vunpack.c.h.b16 %v1519
    %v1721 = vunpack.c.l.b16 %v1520
    %v1722 = vunpack.c.h.b16 %v1520
    %v1723 = vunpack.c.l.b16 %v1521
    %v1724 = vunpack.c.h.b16 %v1521
    %v1725 = vunpack.c.l.b16 %v1522
    %v1726 = vunpack.c.h.b16 %v1522
    %v1727 = vunpack.c.l.b16 %v1523
    %v1728 = vunpack.c.h.b16 %v1523
    %v1729 = vunpack.c.l.b16 %v1524
    %v1730 = vunpack.c.h.b16 %v1524
    %v1731 = vunpack.c.l.b16 %v1525
    %v1732 = vunpack.c.h.b16 %v1525
    %v1733 = vunpack.c.l.b16 %v1526
    %v1734 = vunpack.c.h.b16 %v1526
    %v1735 = vunpack.c.l.b16 %v1527
    %v1736 = vunpack.c.h.b16 %v1527
    %v1737 = vunpack.c.l.b16 %v1528
    %v1738 = vunpack.c.h.b16 %v1528
    %v1739 = vunpack.c.l.b16 %v1529
    %v1740 = vunpack.c.h.b16 %v1529
    %v1741 = vunpack.c.l.b16 %v1530
    %v1742 = vunpack.c.h.b16 %v1530
    %v1743 = vunpack.c.l.b16 %v1531
    %v1744 = vunpack.c.h.b16 %v1531
    %v1745 = vunpack.c.l.b16 %v1532
    %v1746 = vunpack.c.h.b16 %v1532
    %v1747 = vunpack.c.l.b16 %v1533
    %v1748 = vunpack.c.h.b16 %v1533
    %v1749 = vunpack.c.l.b16 %v1534
    %v1750 = vunpack.c.h.b16 %v1534
    %v1751 = vunpack.c.l.b16 %v1535
    %v1752 = vunpack.c.h.b16 %v1535
    %v1753 = vunpack.c.l.b16 %v1536
    %v1754 = vunpack.c.h.b16 %v1536
    %v1755 = vpack.c.b16 %v1631, %v1627
    %v1756 = vpack.c.b16 %v1632, %v1628
    %v1757 = vpack.c.b16 %v1633, %v1629
    %v1758 = vpack.c.b16 %v1634, %v1630
    %v1759 = vpack.c.b16 %v1639, %v1635
    %v1760 = vpack.c.b16 %v1640, %v1636
    %v1761 = vpack.c.b16 %v1641, %v1637
    %v1762 = vpack.c.b16 %v1642, %v1638
    %v1763 = vpack.c.b16 %v1647, %v1643
    %v1764 = vpack.c.b16 %v1648, %v1644
    %v1765 = vpack.c.b16 %v1649, %v1645
    %v1766 = vpack.c.b16 %v1650, %v1646
    %v1767 = vpack.c.b16 %v1655, %v1651
    %v1768 = vpack.c.b16 %v1656, %v1652
    %v1769 = vpack.c.b16 %v1657, %v1653
    %v1770 = vpack.c.b16 %v1658, %v1654
    %v1771 = vpack.c.b16 %v1663, %v1659
    %v1772 = vpack.c.b16 %v1664, %v1660
    %v1773 = vpack.c.b16 %v1665, %v1661
    %v1774 = vpack.c.b16 %v1666, %v1662
    %v1775 = vpack.c.b16 %v1671, %v1667
    %v1776 = vpack.c.b16 %v1672, %v1668
    %v1777 = vpack.c.b16 %v1673, %v1669
    %v1778 = vpack.c.b16 %v1674, %v1670
    %v1779 = vpack.c.b16 %v1679, %v1675
    %v1780 = vpack.c.b16 %v1680, %v1676
    %v1781 = vpack.c.b16 %v1681, %v1677
    %v1782 = vpack.c.b16 %v1682, %v1678
    %v1783 = vpack.c.b16 %v1687, %v1683
    %v1784 = vpack.c.b16 %v1688, %v1684
    %v1785 = vpack.c.b16 %v1689, %v1685
    %v1786 = vpack.c.b16 %v1690, %v1686
    %v1787 = vpack.c.b16 %v1695, %v1691
    %v1788 = vpack.c.b16 %v1696, %v1692
    %v1789 = vpack.c.b16 %v1697, %v1693
    %v1790 = vpack.c.b16 %v1698, %v1694
    %v1791 = vpack.c.b16 %v1703, %v1699
    %v1792 = vpack.c.b16 %v1704, %v1700
    %v1793 = vpack.c.b16 %v1705, %v1701
    %v1794 = vpack.c.b16 %v1706, %v1702
    %v1795 = vpack.c.b16 %v1711, %v1707
    %v1796 = vpack.c.b16 %v1712, %v1708
    %v1797 = vpack.c.b16 %v1713, %v1709
    %v1798 = vpack.c.b16 %v1714, %v1710
    %v1799 = vpack.c.b16 %v1719, %v1715
    %v1800 = vpack.c.b16 %v1720, %v1716
    %v1801 = vpack.c.b16 %v1721, %v1717
    %v1802 = vpack.c.b16 %v1722, %v1718
    %v1803 = vpack.c.b16 %v1727, %v1723
    %v1804 = vpack.c.b16 %v1728, %v1724
    %v1805 = vpack.c.b16 %v1729, %v1725
    %v1806 = vpack.c.b16 %v1730, %v1726
    %v1807 = vpack.c.b16 %v1735, %v1731
    %v1808 = vpack.c.b16 %v1736, %v1732
    %v1809 = vpack.c.b16 %v1737, %v1733
    %v1810 = vpack.c.b16 %v1738, %v1734
    %v1811 = vpack.c.b16 %v1743, %v1739
    %v1812 = vpack.c.b16 %v1744, %v1740
    %v1813 = vpack.c.b16 %v1745, %v1741
    %v1814 = vpack.c.b16 %v1746, %v1742
    %v1815 = vpack.c.b16 %v1751, %v1747
    %v1816 = vpack.c.b16 %v1752, %v1748
    %v1817 = vpack.c.b16 %v1753, %v1749
    %v1818 = vpack.c.b16 %v1754, %v1750
    %v1884 = vlaneseq
    %v1885 = vshrl.u32 %v1884, 7
    %v1886 = vsub.s32 0, %v1885
    %v1887 = vrot.slane %v1537, %v1886
    %v1888 = vlaneseq
    %v1889 = vshrl.u32 %v1888, 7
    %v1890 = vsub.s32 1, %v1889
    %v1891 = vrot.slane %v1537, %v1890
    %v1892 = vlaneseq
    %v1893 = vshrl.u32 %v1892, 7
    %v1894 = vsub.s32 2, %v1893
    %v1895 = vrot.slane %v1537, %v1894
    %v1896 = vlaneseq
    %v1897 = vshrl.u32 %v1896, 7
    %v1898 = vsub.s32 3, %v1897
    %v1899 = vrot.slane %v1537, %v1898
    %1904 = vmatprep.subr.bf16.mxu0 %v1756
    %1905 = vmatpush1.bf16.msra.mxu0 %v1755
    %1906 = vmatprep.subr.bf16.mxu0 %v1760
    %1907 = vmatpush1.bf16.msra.mxu0 %v1759
    %1908 = vmatprep.subr.bf16.mxu0 %v1764
    %1909 = vmatpush1.bf16.msra.mxu0 %v1763
    %1910 = vmatprep.subr.bf16.mxu0 %v1768
    %1911 = vmatpush1.bf16.msra.mxu0 %v1767
    %1912 = vmatprep.subr.bf16.mxu0 %v1772
    %1913 = vmatpush1.bf16.msra.mxu0 %v1771
    %1914 = vmatprep.subr.bf16.mxu0 %v1776
    %1915 = vmatpush1.bf16.msra.mxu0 %v1775
    %1916 = vmatprep.subr.bf16.mxu0 %v1780
    %1917 = vmatpush1.bf16.msra.mxu0 %v1779
    %1918 = vmatprep.subr.bf16.mxu0 %v1784
    %1919 = vmatpush1.bf16.msra.mxu0 %v1783
    %1920 = vmatprep.subr.bf16.mxu0 %v1788
    %1921 = vmatpush1.bf16.msra.mxu0 %v1787
    %1922 = vmatprep.subr.bf16.mxu0 %v1792
    %1923 = vmatpush1.bf16.msra.mxu0 %v1791
    %1924 = vmatprep.subr.bf16.mxu0 %v1796
    %1925 = vmatpush1.bf16.msra.mxu0 %v1795
    %1926 = vmatprep.subr.bf16.mxu0 %v1800
    %1927 = vmatpush1.bf16.msra.mxu0 %v1799
    %1928 = vmatprep.subr.bf16.mxu0 %v1804
    %1929 = vmatpush1.bf16.msra.mxu0 %v1803
    %1930 = vmatprep.subr.bf16.mxu0 %v1808
    %1931 = vmatpush1.bf16.msra.mxu0 %v1807
    %1932 = vmatprep.subr.bf16.mxu0 %v1812
    %1933 = vmatpush1.bf16.msra.mxu0 %v1811
    %1934 = vmatprep.subr.bf16.mxu0 %v1816
    %1935 = vmatpush1.bf16.msra.mxu0 %v1815
    %1936 = vmatprep.mubr.bf16.mxu0 %v1560
    %1937 = vmatmul.mubr.bf16.gmra.mrb[0].mxu0 %v1553
    %v1938 = vpop.f32.mrb[0].mxu0
    %v1939 = vadd.f32 %v1887, %v1938
    %v1940 = vpop.f32.mrb[0].mxu0
    %v1941 = vadd.f32 %v1891, %v1940
    %v1942 = vpop.f32.mrb[0].mxu0
    %v1943 = vpop.f32.mrb[0].mxu0
    %1944 = vdwg.mxu0
    %1945 = vmatprep.subr.bf16.mxu0 %v1758
    %1946 = vmatpush1.bf16.msra.mxu0 %v1757
    %1947 = vmatprep.subr.bf16.mxu0 %v1762
    %1948 = vmatpush1.bf16.msra.mxu0 %v1761
    %1949 = vmatprep.subr.bf16.mxu0 %v1766
    %1950 = vmatpush1.bf16.msra.mxu0 %v1765
    %1951 = vmatprep.subr.bf16.mxu0 %v1770
    %1952 = vmatpush1.bf16.msra.mxu0 %v1769
    %1953 = vmatprep.subr.bf16.mxu0 %v1774
    %1954 = vmatpush1.bf16.msra.mxu0 %v1773
    %1955 = vmatprep.subr.bf16.mxu0 %v1778
    %1956 = vmatpush1.bf16.msra.mxu0 %v1777
    %1957 = vmatprep.subr.bf16.mxu0 %v1782
    %1958 = vmatpush1.bf16.msra.mxu0 %v1781
    %1959 = vmatprep.subr.bf16.mxu0 %v1786
    %1960 = vmatpush1.bf16.msra.mxu0 %v1785
    %1961 = vmatprep.subr.bf16.mxu0 %v1790
    %1962 = vmatpush1.bf16.msra.mxu0 %v1789
    %1963 = vmatprep.subr.bf16.mxu0 %v1794
    %1964 = vmatpush1.bf16.msra.mxu0 %v1793
    %1965 = vmatprep.subr.bf16.mxu0 %v1798
    %1966 = vmatpush1.bf16.msra.mxu0 %v1797
    %1967 = vmatprep.subr.bf16.mxu0 %v1802
    %1968 = vmatpush1.bf16.msra.mxu0 %v1801
    %1969 = vmatprep.subr.bf16.mxu0 %v1806
    %1970 = vmatpush1.bf16.msra.mxu0 %v1805
    %1971 = vmatprep.subr.bf16.mxu0 %v1810
    %1972 = vmatpush1.bf16.msra.mxu0 %v1809
    %1973 = vmatprep.subr.bf16.mxu0 %v1814
    %1974 = vmatpush1.bf16.msra.mxu0 %v1813
    %1975 = vmatprep.subr.bf16.mxu0 %v1818
    %1976 = vmatpush1.bf16.msra.mxu0 %v1817
    %1977 = vmatprep.mubr.bf16.mxu0 %v1560
    %1978 = vmatmul.mubr.bf16.gmra.mrb[0].mxu0 %v1553
    %v1979 = vpop.f32.mrb[0].mxu0
    %v1980 = vadd.f32 %v1895, %v1979
    %v1981 = vpop.f32.mrb[0].mxu0
    %v1982 = vadd.f32 %v1899, %v1981
    %v1983 = vpop.f32.mrb[0].mxu0
    %v1984 = vpop.f32.mrb[0].mxu0
    %1985 = vdwg.mxu0
    %v1986 = vxor.u32 %v1939, 2147483648
    %v1987 = vxor.u32 %v1941, 2147483648
    %v1988 = vxor.u32 %v1980, 2147483648
    %v1989 = vmul.f32 %v1986, 1.442695
    %v1990 = vpow.pop %v1989
    %v1991 = vmul.f32 %v1987, 1.442695
    %v1992 = vpow.pop %v1991
    %v1993 = vmul.f32 %v1988, 1.442695
    %v1994 = vpow.pop %v1993
    %v1995 = vadd.f32 %v1990, 1.0
    %v1996 = vadd.f32 %v1992, 1.0
    %v1997 = vadd.f32 %v1994, 1.0
    %v1998 = vrcp.pop %v1995
    %v1999 = vmul.f32 1.0, %v1998
    %v2000 = vrcp.pop %v1996
    %v2001 = vmul.f32 1.0, %v2000
    %v2002 = vrcp.pop %v1997
    %v2003 = vmul.f32 1.0, %v2002
    %v2004 = vtanh.pop %v1982
    %v2005 = vmul.f32 %v2001, %v1135
    %v2006 = vmul.f32 %v1999, %v2004
    %v2007 = vadd.f32 %v2005, %v2006
    %v2008 = vtanh.pop %v2007
    %v2009 = vmul.f32 %v2003, %v2008
    %v2010 = vpack.c.bf16 %v2009, %v2009
    %v2011 = vld [vmem:[#allocation3 + $0x1] sm:$0x1]
    %v2012 = vsel %vm263, %v2010, %v2011
    %2013 = vst [vmem:[#allocation3 + $0x1] sm:$0x1] %v2012
    %s2014 = scalar_lea.vmem [#allocation2], 2
    %v2015 = vld [vmem:[%s2014] ss:$8 sm:$0xf]
    %v2016 = vld [vmem:[#allocation5] sm:$0xff]
    %v2017 = vld [vmem:[#allocation5 + $0x8] sm:$0xff]
    %v2018 = vld [vmem:[#allocation5 + $0x10] sm:$0xff]
    %v2019 = vld [vmem:[#allocation5 + $0x18] sm:$0xff]
    %v2020 = vld [vmem:[#allocation5 + $0x20] sm:$0xff]
    %v2021 = vld [vmem:[#allocation5 + $0x28] sm:$0xff]
    %v2022 = vld [vmem:[#allocation5 + $0x30] sm:$0xff]
    %v2023 = vld [vmem:[#allocation5 + $0x38] sm:$0xff]
    %v2024 = vld [vmem:[#allocation5 + $0x40] sm:$0xff]
    %v2025 = vld [vmem:[#allocation5 + $0x48] sm:$0xff]
    %v2026 = vld [vmem:[#allocation5 + $0x50] sm:$0xff]
    %v2027 = vld [vmem:[#allocation5 + $0x58] sm:$0xff]
    %v2028 = vld [vmem:[#allocation5 + $0x60] sm:$0xff]
    %v2029 = vld [vmem:[#allocation5 + $0x68] sm:$0xff]
    %v2030 = vld [vmem:[#allocation5 + $0x70] sm:$0xff]
    %v2031 = vld [vmem:[#allocation5 + $0x78] sm:$0xff]
    %v2032 = vld [vmem:[#allocation5 + $0x80] sm:$0xff]
    %v2033 = vld [vmem:[#allocation5 + $0x88] sm:$0xff]
    %v2034 = vld [vmem:[#allocation5 + $0x90] sm:$0xff]
    %v2035 = vld [vmem:[#allocation5 + $0x98] sm:$0xff]
    %v2036 = vld [vmem:[#allocation5 + $0xa0] sm:$0xff]
    %v2037 = vld [vmem:[#allocation5 + $0xa8] sm:$0xff]
    %v2038 = vld [vmem:[#allocation5 + $0xb0] sm:$0xff]
    %v2039 = vld [vmem:[#allocation5 + $0xb8] sm:$0xff]
    %v2040 = vld [vmem:[#allocation5 + $0xc0] sm:$0xff]
    %v2041 = vld [vmem:[#allocation5 + $0xc8] sm:$0xff]
    %v2042 = vld [vmem:[#allocation5 + $0xd0] sm:$0xff]
    %v2043 = vld [vmem:[#allocation5 + $0xd8] sm:$0xff]
    %v2044 = vld [vmem:[#allocation5 + $0xe0] sm:$0xff]
    %v2045 = vld [vmem:[#allocation5 + $0xe8] sm:$0xff]
    %v2046 = vld [vmem:[#allocation5 + $0xf0] sm:$0xff]
    %v2047 = vld [vmem:[#allocation5 + $0xf8] sm:$0xff]
    %v2080 = vunpack.c.l.b16 %v2016
    %v2081 = vunpack.c.h.b16 %v2016
    %v2082 = vunpack.c.l.b16 %v2017
    %v2083 = vunpack.c.h.b16 %v2017
    %v2084 = vunpack.c.l.b16 %v2018
    %v2085 = vunpack.c.h.b16 %v2018
    %v2086 = vunpack.c.l.b16 %v2019
    %v2087 = vunpack.c.h.b16 %v2019
    %v2088 = vunpack.c.l.b16 %v2020
    %v2089 = vunpack.c.h.b16 %v2020
    %v2090 = vunpack.c.l.b16 %v2021
    %v2091 = vunpack.c.h.b16 %v2021
    %v2092 = vunpack.c.l.b16 %v2022
    %v2093 = vunpack.c.h.b16 %v2022
    %v2094 = vunpack.c.l.b16 %v2023
    %v2095 = vunpack.c.h.b16 %v2023
    %v2096 = vunpack.c.l.b16 %v2024
    %v2097 = vunpack.c.h.b16 %v2024
    %v2098 = vunpack.c.l.b16 %v2025
    %v2099 = vunpack.c.h.b16 %v2025
    %v2100 = vunpack.c.l.b16 %v2026
    %v2101 = vunpack.c.h.b16 %v2026
    %v2102 = vunpack.c.l.b16 %v2027
    %v2103 = vunpack.c.h.b16 %v2027
    %v2104 = vunpack.c.l.b16 %v2028
    %v2105 = vunpack.c.h.b16 %v2028
    %v2106 = vunpack.c.l.b16 %v2029
    %v2107 = vunpack.c.h.b16 %v2029
    %v2108 = vunpack.c.l.b16 %v2030
    %v2109 = vunpack.c.h.b16 %v2030
    %v2110 = vunpack.c.l.b16 %v2031
    %v2111 = vunpack.c.h.b16 %v2031
    %v2112 = vunpack.c.l.b16 %v2032
    %v2113 = vunpack.c.h.b16 %v2032
    %v2114 = vunpack.c.l.b16 %v2033
    %v2115 = vunpack.c.h.b16 %v2033
    %v2116 = vunpack.c.l.b16 %v2034
    %v2117 = vunpack.c.h.b16 %v2034
    %v2118 = vunpack.c.l.b16 %v2035
    %v2119 = vunpack.c.h.b16 %v2035
    %v2120 = vunpack.c.l.b16 %v2036
    %v2121 = vunpack.c.h.b16 %v2036
    %v2122 = vunpack.c.l.b16 %v2037
    %v2123 = vunpack.c.h.b16 %v2037
    %v2124 = vunpack.c.l.b16 %v2038
    %v2125 = vunpack.c.h.b16 %v2038
    %v2126 = vunpack.c.l.b16 %v2039
    %v2127 = vunpack.c.h.b16 %v2039
    %v2128 = vunpack.c.l.b16 %v2040
    %v2129 = vunpack.c.h.b16 %v2040
    %v2130 = vunpack.c.l.b16 %v2041
    %v2131 = vunpack.c.h.b16 %v2041
    %v2132 = vunpack.c.l.b16 %v2042
    %v2133 = vunpack.c.h.b16 %v2042
    %v2134 = vunpack.c.l.b16 %v2043
    %v2135 = vunpack.c.h.b16 %v2043
    %v2136 = vunpack.c.l.b16 %v2044
    %v2137 = vunpack.c.h.b16 %v2044
    %v2138 = vunpack.c.l.b16 %v2045
    %v2139 = vunpack.c.h.b16 %v2045
    %v2140 = vunpack.c.l.b16 %v2046
    %v2141 = vunpack.c.h.b16 %v2046
    %v2142 = vunpack.c.l.b16 %v2047
    %v2143 = vunpack.c.h.b16 %v2047
    %v2144 = vpack.c.b16 %v2084, %v2080
    %v2145 = vpack.c.b16 %v2085, %v2081
    %v2146 = vpack.c.b16 %v2086, %v2082
    %v2147 = vpack.c.b16 %v2087, %v2083
    %v2148 = vpack.c.b16 %v2092, %v2088
    %v2149 = vpack.c.b16 %v2093, %v2089
    %v2150 = vpack.c.b16 %v2094, %v2090
    %v2151 = vpack.c.b16 %v2095, %v2091
    %v2152 = vpack.c.b16 %v2100, %v2096
    %v2153 = vpack.c.b16 %v2101, %v2097
    %v2154 = vpack.c.b16 %v2102, %v2098
    %v2155 = vpack.c.b16 %v2103, %v2099
    %v2156 = vpack.c.b16 %v2108, %v2104
    %v2157 = vpack.c.b16 %v2109, %v2105
    %v2158 = vpack.c.b16 %v2110, %v2106
    %v2159 = vpack.c.b16 %v2111, %v2107
    %v2160 = vpack.c.b16 %v2116, %v2112
    %v2161 = vpack.c.b16 %v2117, %v2113
    %v2162 = vpack.c.b16 %v2118, %v2114
    %v2163 = vpack.c.b16 %v2119, %v2115
    %v2164 = vpack.c.b16 %v2124, %v2120
    %v2165 = vpack.c.b16 %v2125, %v2121
    %v2166 = vpack.c.b16 %v2126, %v2122
    %v2167 = vpack.c.b16 %v2127, %v2123
    %v2168 = vpack.c.b16 %v2132, %v2128
    %v2169 = vpack.c.b16 %v2133, %v2129
    %v2170 = vpack.c.b16 %v2134, %v2130
    %v2171 = vpack.c.b16 %v2135, %v2131
    %v2172 = vpack.c.b16 %v2140, %v2136
    %v2173 = vpack.c.b16 %v2141, %v2137
    %v2174 = vpack.c.b16 %v2142, %v2138
    %v2175 = vpack.c.b16 %v2143, %v2139
    %2208 = vmatprep.subr.bf16.mxu0 %v2145
    %2209 = vmatpush1.bf16.msra.mxu0 %v2144
    %2210 = vmatprep.subr.bf16.mxu0 %v2149
    %2211 = vmatpush1.bf16.msra.mxu0 %v2148
    %2212 = vmatprep.subr.bf16.mxu0 %v2153
    %2213 = vmatpush1.bf16.msra.mxu0 %v2152
    %2214 = vmatprep.subr.bf16.mxu0 %v2157
    %2215 = vmatpush1.bf16.msra.mxu0 %v2156
    %2216 = vmatprep.subr.bf16.mxu0 %v2161
    %2217 = vmatpush1.bf16.msra.mxu0 %v2160
    %2218 = vmatprep.subr.bf16.mxu0 %v2165
    %2219 = vmatpush1.bf16.msra.mxu0 %v2164
    %2220 = vmatprep.subr.bf16.mxu0 %v2169
    %2221 = vmatpush1.bf16.msra.mxu0 %v2168
    %2222 = vmatprep.subr.bf16.mxu0 %v2173
    %2223 = vmatpush1.bf16.msra.mxu0 %v2172
    %2224 = vmatprep.subr.bf16.mxu0 0
    %2225 = vmatpush1.bf16.msra.mxu0 0
    %2226 = vmatprep.subr.bf16.mxu0 0
    %2227 = vmatpush1.bf16.msra.mxu0 0
    %2228 = vmatprep.subr.bf16.mxu0 0
    %2229 = vmatpush1.bf16.msra.mxu0 0
    %2230 = vmatprep.subr.bf16.mxu0 0
    %2231 = vmatpush1.bf16.msra.mxu0 0
    %2232 = vmatprep.subr.bf16.mxu0 0
    %2233 = vmatpush1.bf16.msra.mxu0 0
    %2234 = vmatprep.subr.bf16.mxu0 0
    %2235 = vmatpush1.bf16.msra.mxu0 0
    %2236 = vmatprep.subr.bf16.mxu0 0
    %2237 = vmatpush1.bf16.msra.mxu0 0
    %2238 = vmatprep.subr.bf16.mxu0 0
    %2239 = vmatpush1.bf16.msra.mxu0 0
    %2240 = vmatprep.mubr.bf16.mxu0 0
    %2241 = vmatmul.mubr.bf16.gmra.mrb[0].mxu0 %v1468
    %v2242 = vpop.f32.mrb[0].mxu0
    %v2243 = vadd.f32 0.0, %v2242
    %v2244 = vpop.f32.mrb[0].mxu0
    %v2245 = vadd.f32 0.0, %v2244
    %v2246 = vpop.f32.mrb[0].mxu0
    %v2247 = vpop.f32.mrb[0].mxu0
    %2248 = vdwg.mxu0
    %2249 = vmatprep.subr.bf16.mxu0 %v2147
    %2250 = vmatpush1.bf16.msra.mxu0 %v2146
    %2251 = vmatprep.subr.bf16.mxu0 %v2151
    %2252 = vmatpush1.bf16.msra.mxu0 %v2150
    %2253 = vmatprep.subr.bf16.mxu0 %v2155
    %2254 = vmatpush1.bf16.msra.mxu0 %v2154
    %2255 = vmatprep.subr.bf16.mxu0 %v2159
    %2256 = vmatpush1.bf16.msra.mxu0 %v2158
    %2257 = vmatprep.subr.bf16.mxu0 %v2163
    %2258 = vmatpush1.bf16.msra.mxu0 %v2162
    %2259 = vmatprep.subr.bf16.mxu0 %v2167
    %2260 = vmatpush1.bf16.msra.mxu0 %v2166
    %2261 = vmatprep.subr.bf16.mxu0 %v2171
    %2262 = vmatpush1.bf16.msra.mxu0 %v2170
    %2263 = vmatprep.subr.bf16.mxu0 %v2175
    %2264 = vmatpush1.bf16.msra.mxu0 %v2174
    %2265 = vmatprep.subr.bf16.mxu0 0
    %2266 = vmatpush1.bf16.msra.mxu0 0
    %2267 = vmatprep.subr.bf16.mxu0 0
    %2268 = vmatpush1.bf16.msra.mxu0 0
    %2269 = vmatprep.subr.bf16.mxu0 0
    %2270 = vmatpush1.bf16.msra.mxu0 0
    %2271 = vmatprep.subr.bf16.mxu0 0
    %2272 = vmatpush1.bf16.msra.mxu0 0
    %2273 = vmatprep.subr.bf16.mxu0 0
    %2274 = vmatpush1.bf16.msra.mxu0 0
    %2275 = vmatprep.subr.bf16.mxu0 0
    %2276 = vmatpush1.bf16.msra.mxu0 0
    %2277 = vmatprep.subr.bf16.mxu0 0
    %2278 = vmatpush1.bf16.msra.mxu0 0
    %2279 = vmatprep.subr.bf16.mxu0 0
    %2280 = vmatpush1.bf16.msra.mxu0 0
    %2281 = vmatprep.mubr.bf16.mxu0 0
    %2282 = vmatmul.mubr.bf16.gmra.mrb[0].mxu0 %v1468
    %v2283 = vpop.f32.mrb[0].mxu0
    %v2284 = vadd.f32 0.0, %v2283
    %v2285 = vpop.f32.mrb[0].mxu0
    %v2286 = vadd.f32 0.0, %v2285
    %v2287 = vpop.f32.mrb[0].mxu0
    %v2288 = vpop.f32.mrb[0].mxu0
    %2289 = vdwg.mxu0
    %v2294 = vcombine.low %v2243, %v2245
    %v2295 = vcombine.low %v2284, %v2286
    %v2297 = vunpack.c.l.s4 1966171168
    %v2298 = vunpack.c.0.s8 %v2297
    %v2299 = vlaneseq
    %v2300 = vshrl.u32 %v2299, 7
    %v2301 = vsub.s32 %v2298, %v2300
    %v2302 = vrot.slane %v2294, %v2301
    %v2304 = vunpack.c.l.s4 1966171168
    %v2305 = vunpack.c.0.s8 %v2304
    %v2306 = vlaneseq
    %v2307 = vshrl.u32 %v2306, 7
    %v2308 = vsub.s32 %v2305, %v2307
    %v2309 = vrot.slane %v2295, %v2308
    %v2310 = vcombine.low %v2302, %v2309
    %v2312 = vunpack.c.l.s4 1966171168
    %v2313 = vunpack.c.0.s8 %v2312
    %v2314 = vlaneseq
    %v2315 = vshrl.u32 %v2314, 7
    %v2316 = vsub.s32 %v2313, %v2315
    %v2317 = vrot.slane %v2310, %v2316
    %v2319 = vadd.f32 %v2015, %v2317
    %v2320 = vxor.u32 %v2319, 2147483648
    %v2321 = vmul.f32 %v2320, 1.442695
    %v2322 = vpow.pop %v2321
    %v2323 = vadd.f32 %v2322, 1.0
    %v2324 = vrcp.pop %v2323
    %v2325 = vmul.f32 1.0, %v2324
    %v2327 = vrot.slane %v2319, 3
    %v2329 = vtanh.pop %v2327
    %v2331 = vrot.slane %v2325, 1
    %v2333 = vmul.f32 %v2331, %v1463
    %v2334 = vmul.f32 %v2325, %v2329
    %v2335 = vadd.f32 %v2333, %v2334
    %v2336 = vtanh.pop %v2335
    %v2337 = vrot.slane %v2325, 2
    %v2339 = vmul.f32 %v2337, %v2336
    %v2340 = vpack.c.bf16 %v2339, %v2339
    %v2341 = vld [vmem:[#allocation3] sm:$0x1]
    %v2342 = vsel %vm263, %v2340, %v2341
    %2343 = vst [vmem:[#allocation3] sm:$0x1] %v2342
    %v2344 = vld [vmem:[#allocation3] sm:$0x3]
    %v2345 = vld [vmem:[#allocation8] sm:$0xff]
    %v2346 = vld [vmem:[#allocation8 + $0x8] sm:$0xff]
    %v2347 = vld [vmem:[#allocation8 + $0x10] sm:$0xff]
    %v2348 = vld [vmem:[#allocation8 + $0x18] sm:$0xff]
    %v2349 = vld [vmem:[#allocation8 + $0x20] sm:$0xff]
    %v2350 = vld [vmem:[#allocation8 + $0x28] sm:$0xff]
    %v2351 = vld [vmem:[#allocation8 + $0x30] sm:$0xff]
    %v2352 = vld [vmem:[#allocation8 + $0x38] sm:$0xff]
    %v2353 = vld [vmem:[#allocation8 + $0x40] sm:$0xff]
    %v2354 = vld [vmem:[#allocation8 + $0x48] sm:$0xff]
    %v2355 = vld [vmem:[#allocation8 + $0x50] sm:$0xff]
    %v2356 = vld [vmem:[#allocation8 + $0x58] sm:$0xff]
    %v2357 = vld [vmem:[#allocation8 + $0x60] sm:$0xff]
    %v2358 = vld [vmem:[#allocation8 + $0x68] sm:$0xff]
    %v2359 = vld [vmem:[#allocation8 + $0x70] sm:$0xff]
    %v2360 = vld [vmem:[#allocation8 + $0x78] sm:$0xff]
    %v2361 = vld [vmem:[#allocation8 + $0x80] sm:$0xff]
    %v2362 = vld [vmem:[#allocation8 + $0x88] sm:$0xff]
    %v2363 = vld [vmem:[#allocation8 + $0x90] sm:$0xff]
    %v2364 = vld [vmem:[#allocation8 + $0x98] sm:$0xff]
    %v2365 = vld [vmem:[#allocation8 + $0xa0] sm:$0xff]
    %v2366 = vld [vmem:[#allocation8 + $0xa8] sm:$0xff]
    %v2367 = vld [vmem:[#allocation8 + $0xb0] sm:$0xff]
    %v2368 = vld [vmem:[#allocation8 + $0xb8] sm:$0xff]
    %v2369 = vld [vmem:[#allocation8 + $0xc0] sm:$0xff]
    %v2370 = vld [vmem:[#allocation8 + $0xc8] sm:$0xff]
    %v2371 = vld [vmem:[#allocation8 + $0xd0] sm:$0xff]
    %v2372 = vld [vmem:[#allocation8 + $0xd8] sm:$0xff]
    %v2373 = vld [vmem:[#allocation8 + $0xe0] sm:$0xff]
    %v2374 = vld [vmem:[#allocation8 + $0xe8] sm:$0xff]
    %v2375 = vld [vmem:[#allocation8 + $0xf0] sm:$0xff]
    %v2376 = vld [vmem:[#allocation8 + $0xf8] sm:$0xff]
    %v2377 = vld [vmem:[#allocation8 + $0x100] sm:$0xff]
    %v2378 = vld [vmem:[#allocation8 + $0x108] sm:$0xff]
    %v2379 = vld [vmem:[#allocation8 + $0x110] sm:$0xff]
    %v2380 = vld [vmem:[#allocation8 + $0x118] sm:$0xff]
    %v2381 = vld [vmem:[#allocation8 + $0x120] sm:$0xff]
    %v2382 = vld [vmem:[#allocation8 + $0x128] sm:$0xff]
    %v2383 = vld [vmem:[#allocation8 + $0x130] sm:$0xff]
    %v2384 = vld [vmem:[#allocation8 + $0x138] sm:$0xff]
    %v2385 = vld [vmem:[#allocation8 + $0x140] sm:$0xff]
    %v2386 = vld [vmem:[#allocation8 + $0x148] sm:$0xff]
    %v2387 = vld [vmem:[#allocation8 + $0x150] sm:$0xff]
    %v2388 = vld [vmem:[#allocation8 + $0x158] sm:$0xff]
    %v2389 = vld [vmem:[#allocation8 + $0x160] sm:$0xff]
    %v2390 = vld [vmem:[#allocation8 + $0x168] sm:$0xff]
    %v2391 = vld [vmem:[#allocation8 + $0x170] sm:$0xff]
    %v2392 = vld [vmem:[#allocation8 + $0x178] sm:$0xff]
    %v2393 = vld [vmem:[#allocation8 + $0x180] sm:$0xff]
    %v2394 = vld [vmem:[#allocation8 + $0x188] sm:$0xff]
    %v2395 = vld [vmem:[#allocation8 + $0x190] sm:$0xff]
    %v2396 = vld [vmem:[#allocation8 + $0x198] sm:$0xff]
    %v2397 = vld [vmem:[#allocation8 + $0x1a0] sm:$0xff]
    %v2398 = vld [vmem:[#allocation8 + $0x1a8] sm:$0xff]
    %v2399 = vld [vmem:[#allocation8 + $0x1b0] sm:$0xff]
    %v2400 = vld [vmem:[#allocation8 + $0x1b8] sm:$0xff]
    %v2401 = vld [vmem:[#allocation8 + $0x1c0] sm:$0xff]
    %v2402 = vld [vmem:[#allocation8 + $0x1c8] sm:$0xff]
    %v2403 = vld [vmem:[#allocation8 + $0x1d0] sm:$0xff]
    %v2404 = vld [vmem:[#allocation8 + $0x1d8] sm:$0xff]
    %v2405 = vld [vmem:[#allocation8 + $0x1e0] sm:$0xff]
    %v2406 = vld [vmem:[#allocation8 + $0x1e8] sm:$0xff]
    %v2407 = vld [vmem:[#allocation8 + $0x1f0] sm:$0xff]
    %v2408 = vld [vmem:[#allocation8 + $0x1f8] sm:$0xff]
    %v2409 = vld [vmem:[%s5] sm:$0xf]
    %v2412 = vunpack.c.l.s4 1966171168
    %v2413 = vunpack.c.0.s8 %v2412
    %v2414 = vlaneseq
    %v2415 = vshrl.u32 %v2414, 7
    %v2416 = vsub.s32 %v2413, %v2415
    %v2417 = vrot.slane %v2344, %v2416
    %v2418 = vcombine.high %v2417, %v2417
    %v2420 = vunpack.c.l.s4 1966171168
    %v2421 = vunpack.c.0.s8 %v2420
    %v2422 = vlaneseq
    %v2423 = vshrl.u32 %v2422, 7
    %v2424 = vsub.s32 %v2421, %v2423
    %v2425 = vrot.slane %v2417, %v2424
    %v2427 = vunpack.c.l.s4 1966171168
    %v2428 = vunpack.c.0.s8 %v2427
    %v2429 = vlaneseq
    %v2430 = vshrl.u32 %v2429, 7
    %v2431 = vsub.s32 %v2428, %v2430
    %v2432 = vrot.slane %v2418, %v2431
    %v2499 = vunpack.c.l.b16 %v2345
    %v2500 = vunpack.c.h.b16 %v2345
    %v2501 = vunpack.c.l.b16 %v2346
    %v2502 = vunpack.c.h.b16 %v2346
    %v2503 = vunpack.c.l.b16 %v2347
    %v2504 = vunpack.c.h.b16 %v2347
    %v2505 = vunpack.c.l.b16 %v2348
    %v2506 = vunpack.c.h.b16 %v2348
    %v2507 = vunpack.c.l.b16 %v2349
    %v2508 = vunpack.c.h.b16 %v2349
    %v2509 = vunpack.c.l.b16 %v2350
    %v2510 = vunpack.c.h.b16 %v2350
    %v2511 = vunpack.c.l.b16 %v2351
    %v2512 = vunpack.c.h.b16 %v2351
    %v2513 = vunpack.c.l.b16 %v2352
    %v2514 = vunpack.c.h.b16 %v2352
    %v2515 = vunpack.c.l.b16 %v2353
    %v2516 = vunpack.c.h.b16 %v2353
    %v2517 = vunpack.c.l.b16 %v2354
    %v2518 = vunpack.c.h.b16 %v2354
    %v2519 = vunpack.c.l.b16 %v2355
    %v2520 = vunpack.c.h.b16 %v2355
    %v2521 = vunpack.c.l.b16 %v2356
    %v2522 = vunpack.c.h.b16 %v2356
    %v2523 = vunpack.c.l.b16 %v2357
    %v2524 = vunpack.c.h.b16 %v2357
    %v2525 = vunpack.c.l.b16 %v2358
    %v2526 = vunpack.c.h.b16 %v2358
    %v2527 = vunpack.c.l.b16 %v2359
    %v2528 = vunpack.c.h.b16 %v2359
    %v2529 = vunpack.c.l.b16 %v2360
    %v2530 = vunpack.c.h.b16 %v2360
    %v2531 = vunpack.c.l.b16 %v2361
    %v2532 = vunpack.c.h.b16 %v2361
    %v2533 = vunpack.c.l.b16 %v2362
    %v2534 = vunpack.c.h.b16 %v2362
    %v2535 = vunpack.c.l.b16 %v2363
    %v2536 = vunpack.c.h.b16 %v2363
    %v2537 = vunpack.c.l.b16 %v2364
    %v2538 = vunpack.c.h.b16 %v2364
    %v2539 = vunpack.c.l.b16 %v2365
    %v2540 = vunpack.c.h.b16 %v2365
    %v2541 = vunpack.c.l.b16 %v2366
    %v2542 = vunpack.c.h.b16 %v2366
    %v2543 = vunpack.c.l.b16 %v2367
    %v2544 = vunpack.c.h.b16 %v2367
    %v2545 = vunpack.c.l.b16 %v2368
    %v2546 = vunpack.c.h.b16 %v2368
    %v2547 = vunpack.c.l.b16 %v2369
    %v2548 = vunpack.c.h.b16 %v2369
    %v2549 = vunpack.c.l.b16 %v2370
    %v2550 = vunpack.c.h.b16 %v2370
    %v2551 = vunpack.c.l.b16 %v2371
    %v2552 = vunpack.c.h.b16 %v2371
    %v2553 = vunpack.c.l.b16 %v2372
    %v2554 = vunpack.c.h.b16 %v2372
    %v2555 = vunpack.c.l.b16 %v2373
    %v2556 = vunpack.c.h.b16 %v2373
    %v2557 = vunpack.c.l.b16 %v2374
    %v2558 = vunpack.c.h.b16 %v2374
    %v2559 = vunpack.c.l.b16 %v2375
    %v2560 = vunpack.c.h.b16 %v2375
    %v2561 = vunpack.c.l.b16 %v2376
    %v2562 = vunpack.c.h.b16 %v2376
    %v2563 = vunpack.c.l.b16 %v2377
    %v2564 = vunpack.c.h.b16 %v2377
    %v2565 = vunpack.c.l.b16 %v2378
    %v2566 = vunpack.c.h.b16 %v2378
    %v2567 = vunpack.c.l.b16 %v2379
    %v2568 = vunpack.c.h.b16 %v2379
    %v2569 = vunpack.c.l.b16 %v2380
    %v2570 = vunpack.c.h.b16 %v2380
    %v2571 = vunpack.c.l.b16 %v2381
    %v2572 = vunpack.c.h.b16 %v2381
    %v2573 = vunpack.c.l.b16 %v2382
    %v2574 = vunpack.c.h.b16 %v2382
    %v2575 = vunpack.c.l.b16 %v2383
    %v2576 = vunpack.c.h.b16 %v2383
    %v2577 = vunpack.c.l.b16 %v2384
    %v2578 = vunpack.c.h.b16 %v2384
    %v2579 = vunpack.c.l.b16 %v2385
    %v2580 = vunpack.c.h.b16 %v2385
    %v2581 = vunpack.c.l.b16 %v2386
    %v2582 = vunpack.c.h.b16 %v2386
    %v2583 = vunpack.c.l.b16 %v2387
    %v2584 = vunpack.c.h.b16 %v2387
    %v2585 = vunpack.c.l.b16 %v2388
    %v2586 = vunpack.c.h.b16 %v2388
    %v2587 = vunpack.c.l.b16 %v2389
    %v2588 = vunpack.c.h.b16 %v2389
    %v2589 = vunpack.c.l.b16 %v2390
    %v2590 = vunpack.c.h.b16 %v2390
    %v2591 = vunpack.c.l.b16 %v2391
    %v2592 = vunpack.c.h.b16 %v2391
    %v2593 = vunpack.c.l.b16 %v2392
    %v2594 = vunpack.c.h.b16 %v2392
    %v2595 = vunpack.c.l.b16 %v2393
    %v2596 = vunpack.c.h.b16 %v2393
    %v2597 = vunpack.c.l.b16 %v2394
    %v2598 = vunpack.c.h.b16 %v2394
    %v2599 = vunpack.c.l.b16 %v2395
    %v2600 = vunpack.c.h.b16 %v2395
    %v2601 = vunpack.c.l.b16 %v2396
    %v2602 = vunpack.c.h.b16 %v2396
    %v2603 = vunpack.c.l.b16 %v2397
    %v2604 = vunpack.c.h.b16 %v2397
    %v2605 = vunpack.c.l.b16 %v2398
    %v2606 = vunpack.c.h.b16 %v2398
    %v2607 = vunpack.c.l.b16 %v2399
    %v2608 = vunpack.c.h.b16 %v2399
    %v2609 = vunpack.c.l.b16 %v2400
    %v2610 = vunpack.c.h.b16 %v2400
    %v2611 = vunpack.c.l.b16 %v2401
    %v2612 = vunpack.c.h.b16 %v2401
    %v2613 = vunpack.c.l.b16 %v2402
    %v2614 = vunpack.c.h.b16 %v2402
    %v2615 = vunpack.c.l.b16 %v2403
    %v2616 = vunpack.c.h.b16 %v2403
    %v2617 = vunpack.c.l.b16 %v2404
    %v2618 = vunpack.c.h.b16 %v2404
    %v2619 = vunpack.c.l.b16 %v2405
    %v2620 = vunpack.c.h.b16 %v2405
    %v2621 = vunpack.c.l.b16 %v2406
    %v2622 = vunpack.c.h.b16 %v2406
    %v2623 = vunpack.c.l.b16 %v2407
    %v2624 = vunpack.c.h.b16 %v2407
    %v2625 = vunpack.c.l.b16 %v2408
    %v2626 = vunpack.c.h.b16 %v2408
    %v2627 = vpack.c.b16 %v2503, %v2499
    %v2628 = vpack.c.b16 %v2504, %v2500
    %v2629 = vpack.c.b16 %v2505, %v2501
    %v2630 = vpack.c.b16 %v2506, %v2502
    %v2631 = vpack.c.b16 %v2511, %v2507
    %v2632 = vpack.c.b16 %v2512, %v2508
    %v2633 = vpack.c.b16 %v2513, %v2509
    %v2634 = vpack.c.b16 %v2514, %v2510
    %v2635 = vpack.c.b16 %v2519, %v2515
    %v2636 = vpack.c.b16 %v2520, %v2516
    %v2637 = vpack.c.b16 %v2521, %v2517
    %v2638 = vpack.c.b16 %v2522, %v2518
    %v2639 = vpack.c.b16 %v2527, %v2523
    %v2640 = vpack.c.b16 %v2528, %v2524
    %v2641 = vpack.c.b16 %v2529, %v2525
    %v2642 = vpack.c.b16 %v2530, %v2526
    %v2643 = vpack.c.b16 %v2535, %v2531
    %v2644 = vpack.c.b16 %v2536, %v2532
    %v2645 = vpack.c.b16 %v2537, %v2533
    %v2646 = vpack.c.b16 %v2538, %v2534
    %v2647 = vpack.c.b16 %v2543, %v2539
    %v2648 = vpack.c.b16 %v2544, %v2540
    %v2649 = vpack.c.b16 %v2545, %v2541
    %v2650 = vpack.c.b16 %v2546, %v2542
    %v2651 = vpack.c.b16 %v2551, %v2547
    %v2652 = vpack.c.b16 %v2552, %v2548
    %v2653 = vpack.c.b16 %v2553, %v2549
    %v2654 = vpack.c.b16 %v2554, %v2550
    %v2655 = vpack.c.b16 %v2559, %v2555
    %v2656 = vpack.c.b16 %v2560, %v2556
    %v2657 = vpack.c.b16 %v2561, %v2557
    %v2658 = vpack.c.b16 %v2562, %v2558
    %v2659 = vpack.c.b16 %v2567, %v2563
    %v2660 = vpack.c.b16 %v2568, %v2564
    %v2661 = vpack.c.b16 %v2569, %v2565
    %v2662 = vpack.c.b16 %v2570, %v2566
    %v2663 = vpack.c.b16 %v2575, %v2571
    %v2664 = vpack.c.b16 %v2576, %v2572
    %v2665 = vpack.c.b16 %v2577, %v2573
    %v2666 = vpack.c.b16 %v2578, %v2574
    %v2667 = vpack.c.b16 %v2583, %v2579
    %v2668 = vpack.c.b16 %v2584, %v2580
    %v2669 = vpack.c.b16 %v2585, %v2581
    %v2670 = vpack.c.b16 %v2586, %v2582
    %v2671 = vpack.c.b16 %v2591, %v2587
    %v2672 = vpack.c.b16 %v2592, %v2588
    %v2673 = vpack.c.b16 %v2593, %v2589
    %v2674 = vpack.c.b16 %v2594, %v2590
    %v2675 = vpack.c.b16 %v2599, %v2595
    %v2676 = vpack.c.b16 %v2600, %v2596
    %v2677 = vpack.c.b16 %v2601, %v2597
    %v2678 = vpack.c.b16 %v2602, %v2598
    %v2679 = vpack.c.b16 %v2607, %v2603
    %v2680 = vpack.c.b16 %v2608, %v2604
    %v2681 = vpack.c.b16 %v2609, %v2605
    %v2682 = vpack.c.b16 %v2610, %v2606
    %v2683 = vpack.c.b16 %v2615, %v2611
    %v2684 = vpack.c.b16 %v2616, %v2612
    %v2685 = vpack.c.b16 %v2617, %v2613
    %v2686 = vpack.c.b16 %v2618, %v2614
    %v2687 = vpack.c.b16 %v2623, %v2619
    %v2688 = vpack.c.b16 %v2624, %v2620
    %v2689 = vpack.c.b16 %v2625, %v2621
    %v2690 = vpack.c.b16 %v2626, %v2622
    %v2756 = vlaneseq
    %v2757 = vshrl.u32 %v2756, 7
    %v2758 = vsub.s32 0, %v2757
    %v2759 = vrot.slane %v2409, %v2758
    %v2760 = vlaneseq
    %v2761 = vshrl.u32 %v2760, 7
    %v2762 = vsub.s32 1, %v2761
    %v2763 = vrot.slane %v2409, %v2762
    %v2764 = vlaneseq
    %v2765 = vshrl.u32 %v2764, 7
    %v2766 = vsub.s32 2, %v2765
    %v2767 = vrot.slane %v2409, %v2766
    %v2768 = vlaneseq
    %v2769 = vshrl.u32 %v2768, 7
    %v2770 = vsub.s32 3, %v2769
    %v2771 = vrot.slane %v2409, %v2770
    %2776 = vmatprep.subr.bf16.mxu0 %v2628
    %2777 = vmatpush1.bf16.msra.mxu0 %v2627
    %2778 = vmatprep.subr.bf16.mxu0 %v2632
    %2779 = vmatpush1.bf16.msra.mxu0 %v2631
    %2780 = vmatprep.subr.bf16.mxu0 %v2636
    %2781 = vmatpush1.bf16.msra.mxu0 %v2635
    %2782 = vmatprep.subr.bf16.mxu0 %v2640
    %2783 = vmatpush1.bf16.msra.mxu0 %v2639
    %2784 = vmatprep.subr.bf16.mxu0 %v2644
    %2785 = vmatpush1.bf16.msra.mxu0 %v2643
    %2786 = vmatprep.subr.bf16.mxu0 %v2648
    %2787 = vmatpush1.bf16.msra.mxu0 %v2647
    %2788 = vmatprep.subr.bf16.mxu0 %v2652
    %2789 = vmatpush1.bf16.msra.mxu0 %v2651
    %2790 = vmatprep.subr.bf16.mxu0 %v2656
    %2791 = vmatpush1.bf16.msra.mxu0 %v2655
    %2792 = vmatprep.subr.bf16.mxu0 %v2660
    %2793 = vmatpush1.bf16.msra.mxu0 %v2659
    %2794 = vmatprep.subr.bf16.mxu0 %v2664
    %2795 = vmatpush1.bf16.msra.mxu0 %v2663
    %2796 = vmatprep.subr.bf16.mxu0 %v2668
    %2797 = vmatpush1.bf16.msra.mxu0 %v2667
    %2798 = vmatprep.subr.bf16.mxu0 %v2672
    %2799 = vmatpush1.bf16.msra.mxu0 %v2671
    %2800 = vmatprep.subr.bf16.mxu0 %v2676
    %2801 = vmatpush1.bf16.msra.mxu0 %v2675
    %2802 = vmatprep.subr.bf16.mxu0 %v2680
    %2803 = vmatpush1.bf16.msra.mxu0 %v2679
    %2804 = vmatprep.subr.bf16.mxu0 %v2684
    %2805 = vmatpush1.bf16.msra.mxu0 %v2683
    %2806 = vmatprep.subr.bf16.mxu0 %v2688
    %2807 = vmatpush1.bf16.msra.mxu0 %v2687
    %2808 = vmatprep.mubr.bf16.mxu0 %v2432
    %2809 = vmatmul.mubr.bf16.gmra.mrb[0].mxu0 %v2425
    %v2810 = vpop.f32.mrb[0].mxu0
    %v2811 = vadd.f32 %v2759, %v2810
    %v2812 = vpop.f32.mrb[0].mxu0
    %v2813 = vadd.f32 %v2763, %v2812
    %v2814 = vpop.f32.mrb[0].mxu0
    %v2815 = vpop.f32.mrb[0].mxu0
    %2816 = vdwg.mxu0
    %2817 = vmatprep.subr.bf16.mxu0 %v2630
    %2818 = vmatpush1.bf16.msra.mxu0 %v2629
    %2819 = vmatprep.subr.bf16.mxu0 %v2634
    %2820 = vmatpush1.bf16.msra.mxu0 %v2633
    %2821 = vmatprep.subr.bf16.mxu0 %v2638
    %2822 = vmatpush1.bf16.msra.mxu0 %v2637
    %2823 = vmatprep.subr.bf16.mxu0 %v2642
    %2824 = vmatpush1.bf16.msra.mxu0 %v2641
    %2825 = vmatprep.subr.bf16.mxu0 %v2646
    %2826 = vmatpush1.bf16.msra.mxu0 %v2645
    %2827 = vmatprep.subr.bf16.mxu0 %v2650
    %2828 = vmatpush1.bf16.msra.mxu0 %v2649
    %2829 = vmatprep.subr.bf16.mxu0 %v2654
    %2830 = vmatpush1.bf16.msra.mxu0 %v2653
    %2831 = vmatprep.subr.bf16.mxu0 %v2658
    %2832 = vmatpush1.bf16.msra.mxu0 %v2657
    %2833 = vmatprep.subr.bf16.mxu0 %v2662
    %2834 = vmatpush1.bf16.msra.mxu0 %v2661
    %2835 = vmatprep.subr.bf16.mxu0 %v2666
    %2836 = vmatpush1.bf16.msra.mxu0 %v2665
    %2837 = vmatprep.subr.bf16.mxu0 %v2670
    %2838 = vmatpush1.bf16.msra.mxu0 %v2669
    %2839 = vmatprep.subr.bf16.mxu0 %v2674
    %2840 = vmatpush1.bf16.msra.mxu0 %v2673
    %2841 = vmatprep.subr.bf16.mxu0 %v2678
    %2842 = vmatpush1.bf16.msra.mxu0 %v2677
    %2843 = vmatprep.subr.bf16.mxu0 %v2682
    %2844 = vmatpush1.bf16.msra.mxu0 %v2681
    %2845 = vmatprep.subr.bf16.mxu0 %v2686
    %2846 = vmatpush1.bf16.msra.mxu0 %v2685
    %2847 = vmatprep.subr.bf16.mxu0 %v2690
    %2848 = vmatpush1.bf16.msra.mxu0 %v2689
    %2849 = vmatprep.mubr.bf16.mxu0 %v2432
    %2850 = vmatmul.mubr.bf16.gmra.mrb[0].mxu0 %v2425
    %v2851 = vpop.f32.mrb[0].mxu0
    %v2852 = vadd.f32 %v2767, %v2851
    %v2853 = vpop.f32.mrb[0].mxu0
    %v2854 = vadd.f32 %v2771, %v2853
    %v2855 = vpop.f32.mrb[0].mxu0
    %v2856 = vpop.f32.mrb[0].mxu0
    %2857 = vdwg.mxu0
    %v2858 = vxor.u32 %v2811, 2147483648
    %v2859 = vxor.u32 %v2813, 2147483648
    %v2860 = vxor.u32 %v2852, 2147483648
    %v2861 = vmul.f32 %v2858, 1.442695
    %v2862 = vpow.pop %v2861
    %v2863 = vmul.f32 %v2859, 1.442695
    %v2864 = vpow.pop %v2863
    %v2865 = vmul.f32 %v2860, 1.442695
    %v2866 = vpow.pop %v2865
    %v2867 = vadd.f32 %v2862, 1.0
    %v2868 = vadd.f32 %v2864, 1.0
    %v2869 = vadd.f32 %v2866, 1.0
    %v2870 = vrcp.pop %v2867
    %v2871 = vmul.f32 1.0, %v2870
    %v2872 = vrcp.pop %v2868
    %v2873 = vmul.f32 1.0, %v2872
    %v2874 = vrcp.pop %v2869
    %v2875 = vmul.f32 1.0, %v2874
    %v2876 = vtanh.pop %v2854
    %v2877 = vmul.f32 %v2873, %v2007
    %v2878 = vmul.f32 %v2871, %v2876
    %v2879 = vadd.f32 %v2877, %v2878
    %v2880 = vtanh.pop %v2879
    %v2881 = vmul.f32 %v2875, %v2880
    %v2882 = vpack.c.bf16 %v2881, %v2881
    %v2883 = vld [vmem:[#allocation3 + $0x1] sm:$0x1]
    %v2884 = vsel %vm263, %v2882, %v2883
    %2885 = vst [vmem:[#allocation3 + $0x1] sm:$0x1] %v2884
    %s2886 = scalar_lea.vmem [#allocation2], 3
    %v2887 = vld [vmem:[%s2886] ss:$8 sm:$0xf]
    %v2888 = vld [vmem:[#allocation5] sm:$0xff]
    %v2889 = vld [vmem:[#allocation5 + $0x8] sm:$0xff]
    %v2890 = vld [vmem:[#allocation5 + $0x10] sm:$0xff]
    %v2891 = vld [vmem:[#allocation5 + $0x18] sm:$0xff]
    %v2892 = vld [vmem:[#allocation5 + $0x20] sm:$0xff]
    %v2893 = vld [vmem:[#allocation5 + $0x28] sm:$0xff]
    %v2894 = vld [vmem:[#allocation5 + $0x30] sm:$0xff]
    %v2895 = vld [vmem:[#allocation5 + $0x38] sm:$0xff]
    %v2896 = vld [vmem:[#allocation5 + $0x40] sm:$0xff]
    %v2897 = vld [vmem:[#allocation5 + $0x48] sm:$0xff]
    %v2898 = vld [vmem:[#allocation5 + $0x50] sm:$0xff]
    %v2899 = vld [vmem:[#allocation5 + $0x58] sm:$0xff]
    %v2900 = vld [vmem:[#allocation5 + $0x60] sm:$0xff]
    %v2901 = vld [vmem:[#allocation5 + $0x68] sm:$0xff]
    %v2902 = vld [vmem:[#allocation5 + $0x70] sm:$0xff]
    %v2903 = vld [vmem:[#allocation5 + $0x78] sm:$0xff]
    %v2904 = vld [vmem:[#allocation5 + $0x80] sm:$0xff]
    %v2905 = vld [vmem:[#allocation5 + $0x88] sm:$0xff]
    %v2906 = vld [vmem:[#allocation5 + $0x90] sm:$0xff]
    %v2907 = vld [vmem:[#allocation5 + $0x98] sm:$0xff]
    %v2908 = vld [vmem:[#allocation5 + $0xa0] sm:$0xff]
    %v2909 = vld [vmem:[#allocation5 + $0xa8] sm:$0xff]
    %v2910 = vld [vmem:[#allocation5 + $0xb0] sm:$0xff]
    %v2911 = vld [vmem:[#allocation5 + $0xb8] sm:$0xff]
    %v2912 = vld [vmem:[#allocation5 + $0xc0] sm:$0xff]
    %v2913 = vld [vmem:[#allocation5 + $0xc8] sm:$0xff]
    %v2914 = vld [vmem:[#allocation5 + $0xd0] sm:$0xff]
    %v2915 = vld [vmem:[#allocation5 + $0xd8] sm:$0xff]
    %v2916 = vld [vmem:[#allocation5 + $0xe0] sm:$0xff]
    %v2917 = vld [vmem:[#allocation5 + $0xe8] sm:$0xff]
    %v2918 = vld [vmem:[#allocation5 + $0xf0] sm:$0xff]
    %v2919 = vld [vmem:[#allocation5 + $0xf8] sm:$0xff]
    %v2952 = vunpack.c.l.b16 %v2888
    %v2953 = vunpack.c.h.b16 %v2888
    %v2954 = vunpack.c.l.b16 %v2889
    %v2955 = vunpack.c.h.b16 %v2889
    %v2956 = vunpack.c.l.b16 %v2890
    %v2957 = vunpack.c.h.b16 %v2890
    %v2958 = vunpack.c.l.b16 %v2891
    %v2959 = vunpack.c.h.b16 %v2891
    %v2960 = vunpack.c.l.b16 %v2892
    %v2961 = vunpack.c.h.b16 %v2892
    %v2962 = vunpack.c.l.b16 %v2893
    %v2963 = vunpack.c.h.b16 %v2893
    %v2964 = vunpack.c.l.b16 %v2894
    %v2965 = vunpack.c.h.b16 %v2894
    %v2966 = vunpack.c.l.b16 %v2895
    %v2967 = vunpack.c.h.b16 %v2895
    %v2968 = vunpack.c.l.b16 %v2896
    %v2969 = vunpack.c.h.b16 %v2896
    %v2970 = vunpack.c.l.b16 %v2897
    %v2971 = vunpack.c.h.b16 %v2897
    %v2972 = vunpack.c.l.b16 %v2898
    %v2973 = vunpack.c.h.b16 %v2898
    %v2974 = vunpack.c.l.b16 %v2899
    %v2975 = vunpack.c.h.b16 %v2899
    %v2976 = vunpack.c.l.b16 %v2900
    %v2977 = vunpack.c.h.b16 %v2900
    %v2978 = vunpack.c.l.b16 %v2901
    %v2979 = vunpack.c.h.b16 %v2901
    %v2980 = vunpack.c.l.b16 %v2902
    %v2981 = vunpack.c.h.b16 %v2902
    %v2982 = vunpack.c.l.b16 %v2903
    %v2983 = vunpack.c.h.b16 %v2903
    %v2984 = vunpack.c.l.b16 %v2904
    %v2985 = vunpack.c.h.b16 %v2904
    %v2986 = vunpack.c.l.b16 %v2905
    %v2987 = vunpack.c.h.b16 %v2905
    %v2988 = vunpack.c.l.b16 %v2906
    %v2989 = vunpack.c.h.b16 %v2906
    %v2990 = vunpack.c.l.b16 %v2907
    %v2991 = vunpack.c.h.b16 %v2907
    %v2992 = vunpack.c.l.b16 %v2908
    %v2993 = vunpack.c.h.b16 %v2908
    %v2994 = vunpack.c.l.b16 %v2909
    %v2995 = vunpack.c.h.b16 %v2909
    %v2996 = vunpack.c.l.b16 %v2910
    %v2997 = vunpack.c.h.b16 %v2910
    %v2998 = vunpack.c.l.b16 %v2911
    %v2999 = vunpack.c.h.b16 %v2911
    %v3000 = vunpack.c.l.b16 %v2912
    %v3001 = vunpack.c.h.b16 %v2912
    %v3002 = vunpack.c.l.b16 %v2913
    %v3003 = vunpack.c.h.b16 %v2913
    %v3004 = vunpack.c.l.b16 %v2914
    %v3005 = vunpack.c.h.b16 %v2914
    %v3006 = vunpack.c.l.b16 %v2915
    %v3007 = vunpack.c.h.b16 %v2915
    %v3008 = vunpack.c.l.b16 %v2916
    %v3009 = vunpack.c.h.b16 %v2916
    %v3010 = vunpack.c.l.b16 %v2917
    %v3011 = vunpack.c.h.b16 %v2917
    %v3012 = vunpack.c.l.b16 %v2918
    %v3013 = vunpack.c.h.b16 %v2918
    %v3014 = vunpack.c.l.b16 %v2919
    %v3015 = vunpack.c.h.b16 %v2919
    %v3016 = vpack.c.b16 %v2956, %v2952
    %v3017 = vpack.c.b16 %v2957, %v2953
    %v3018 = vpack.c.b16 %v2958, %v2954
    %v3019 = vpack.c.b16 %v2959, %v2955
    %v3020 = vpack.c.b16 %v2964, %v2960
    %v3021 = vpack.c.b16 %v2965, %v2961
    %v3022 = vpack.c.b16 %v2966, %v2962
    %v3023 = vpack.c.b16 %v2967, %v2963
    %v3024 = vpack.c.b16 %v2972, %v2968
    %v3025 = vpack.c.b16 %v2973, %v2969
    %v3026 = vpack.c.b16 %v2974, %v2970
    %v3027 = vpack.c.b16 %v2975, %v2971
    %v3028 = vpack.c.b16 %v2980, %v2976
    %v3029 = vpack.c.b16 %v2981, %v2977
    %v3030 = vpack.c.b16 %v2982, %v2978
    %v3031 = vpack.c.b16 %v2983, %v2979
    %v3032 = vpack.c.b16 %v2988, %v2984
    %v3033 = vpack.c.b16 %v2989, %v2985
    %v3034 = vpack.c.b16 %v2990, %v2986
    %v3035 = vpack.c.b16 %v2991, %v2987
    %v3036 = vpack.c.b16 %v2996, %v2992
    %v3037 = vpack.c.b16 %v2997, %v2993
    %v3038 = vpack.c.b16 %v2998, %v2994
    %v3039 = vpack.c.b16 %v2999, %v2995
    %v3040 = vpack.c.b16 %v3004, %v3000
    %v3041 = vpack.c.b16 %v3005, %v3001
    %v3042 = vpack.c.b16 %v3006, %v3002
    %v3043 = vpack.c.b16 %v3007, %v3003
    %v3044 = vpack.c.b16 %v3012, %v3008
    %v3045 = vpack.c.b16 %v3013, %v3009
    %v3046 = vpack.c.b16 %v3014, %v3010
    %v3047 = vpack.c.b16 %v3015, %v3011
    %3080 = vmatprep.subr.bf16.mxu0 %v3017
    %3081 = vmatpush1.bf16.msra.mxu0 %v3016
    %3082 = vmatprep.subr.bf16.mxu0 %v3021
    %3083 = vmatpush1.bf16.msra.mxu0 %v3020
    %3084 = vmatprep.subr.bf16.mxu0 %v3025
    %3085 = vmatpush1.bf16.msra.mxu0 %v3024
    %3086 = vmatprep.subr.bf16.mxu0 %v3029
    %3087 = vmatpush1.bf16.msra.mxu0 %v3028
    %3088 = vmatprep.subr.bf16.mxu0 %v3033
    %3089 = vmatpush1.bf16.msra.mxu0 %v3032
    %3090 = vmatprep.subr.bf16.mxu0 %v3037
    %3091 = vmatpush1.bf16.msra.mxu0 %v3036
    %3092 = vmatprep.subr.bf16.mxu0 %v3041
    %3093 = vmatpush1.bf16.msra.mxu0 %v3040
    %3094 = vmatprep.subr.bf16.mxu0 %v3045
    %3095 = vmatpush1.bf16.msra.mxu0 %v3044
    %3096 = vmatprep.subr.bf16.mxu0 0
    %3097 = vmatpush1.bf16.msra.mxu0 0
    %3098 = vmatprep.subr.bf16.mxu0 0
    %3099 = vmatpush1.bf16.msra.mxu0 0
    %3100 = vmatprep.subr.bf16.mxu0 0
    %3101 = vmatpush1.bf16.msra.mxu0 0
    %3102 = vmatprep.subr.bf16.mxu0 0
    %3103 = vmatpush1.bf16.msra.mxu0 0
    %3104 = vmatprep.subr.bf16.mxu0 0
    %3105 = vmatpush1.bf16.msra.mxu0 0
    %3106 = vmatprep.subr.bf16.mxu0 0
    %3107 = vmatpush1.bf16.msra.mxu0 0
    %3108 = vmatprep.subr.bf16.mxu0 0
    %3109 = vmatpush1.bf16.msra.mxu0 0
    %3110 = vmatprep.subr.bf16.mxu0 0
    %3111 = vmatpush1.bf16.msra.mxu0 0
    %3112 = vmatprep.mubr.bf16.mxu0 0
    %3113 = vmatmul.mubr.bf16.gmra.mrb[0].mxu0 %v2340
    %v3114 = vpop.f32.mrb[0].mxu0
    %v3115 = vadd.f32 0.0, %v3114
    %v3116 = vpop.f32.mrb[0].mxu0
    %v3117 = vadd.f32 0.0, %v3116
    %v3118 = vpop.f32.mrb[0].mxu0
    %v3119 = vpop.f32.mrb[0].mxu0
    %3120 = vdwg.mxu0
    %3121 = vmatprep.subr.bf16.mxu0 %v3019
    %3122 = vmatpush1.bf16.msra.mxu0 %v3018
    %3123 = vmatprep.subr.bf16.mxu0 %v3023
    %3124 = vmatpush1.bf16.msra.mxu0 %v3022
    %3125 = vmatprep.subr.bf16.mxu0 %v3027
    %3126 = vmatpush1.bf16.msra.mxu0 %v3026
    %3127 = vmatprep.subr.bf16.mxu0 %v3031
    %3128 = vmatpush1.bf16.msra.mxu0 %v3030
    %3129 = vmatprep.subr.bf16.mxu0 %v3035
    %3130 = vmatpush1.bf16.msra.mxu0 %v3034
    %3131 = vmatprep.subr.bf16.mxu0 %v3039
    %3132 = vmatpush1.bf16.msra.mxu0 %v3038
    %3133 = vmatprep.subr.bf16.mxu0 %v3043
    %3134 = vmatpush1.bf16.msra.mxu0 %v3042
    %3135 = vmatprep.subr.bf16.mxu0 %v3047
    %3136 = vmatpush1.bf16.msra.mxu0 %v3046
    %3137 = vmatprep.subr.bf16.mxu0 0
    %3138 = vmatpush1.bf16.msra.mxu0 0
    %3139 = vmatprep.subr.bf16.mxu0 0
    %3140 = vmatpush1.bf16.msra.mxu0 0
    %3141 = vmatprep.subr.bf16.mxu0 0
    %3142 = vmatpush1.bf16.msra.mxu0 0
    %3143 = vmatprep.subr.bf16.mxu0 0
    %3144 = vmatpush1.bf16.msra.mxu0 0
    %3145 = vmatprep.subr.bf16.mxu0 0
    %3146 = vmatpush1.bf16.msra.mxu0 0
    %3147 = vmatprep.subr.bf16.mxu0 0
    %3148 = vmatpush1.bf16.msra.mxu0 0
    %3149 = vmatprep.subr.bf16.mxu0 0
    %3150 = vmatpush1.bf16.msra.mxu0 0
    %3151 = vmatprep.subr.bf16.mxu0 0
    %3152 = vmatpush1.bf16.msra.mxu0 0
    %3153 = vmatprep.mubr.bf16.mxu0 0
    %3154 = vmatmul.mubr.bf16.gmra.mrb[0].mxu0 %v2340
    %v3155 = vpop.f32.mrb[0].mxu0
    %v3156 = vadd.f32 0.0, %v3155
    %v3157 = vpop.f32.mrb[0].mxu0
    %v3158 = vadd.f32 0.0, %v3157
    %v3159 = vpop.f32.mrb[0].mxu0
    %v3160 = vpop.f32.mrb[0].mxu0
    %3161 = vdwg.mxu0
    %v3166 = vcombine.low %v3115, %v3117
    %v3167 = vcombine.low %v3156, %v3158
    %v3169 = vunpack.c.l.s4 1966171168
    %v3170 = vunpack.c.0.s8 %v3169
    %v3171 = vlaneseq
    %v3172 = vshrl.u32 %v3171, 7
    %v3173 = vsub.s32 %v3170, %v3172
    %v3174 = vrot.slane %v3166, %v3173
    %v3176 = vunpack.c.l.s4 1966171168
    %v3177 = vunpack.c.0.s8 %v3176
    %v3178 = vlaneseq
    %v3179 = vshrl.u32 %v3178, 7
    %v3180 = vsub.s32 %v3177, %v3179
    %v3181 = vrot.slane %v3167, %v3180
    %v3182 = vcombine.low %v3174, %v3181
    %v3184 = vunpack.c.l.s4 1966171168
    %v3185 = vunpack.c.0.s8 %v3184
    %v3186 = vlaneseq
    %v3187 = vshrl.u32 %v3186, 7
    %v3188 = vsub.s32 %v3185, %v3187
    %v3189 = vrot.slane %v3182, %v3188
    %v3191 = vadd.f32 %v2887, %v3189
    %v3192 = vxor.u32 %v3191, 2147483648
    %v3193 = vmul.f32 %v3192, 1.442695
    %v3194 = vpow.pop %v3193
    %v3195 = vadd.f32 %v3194, 1.0
    %v3196 = vrcp.pop %v3195
    %v3197 = vmul.f32 1.0, %v3196
    %v3199 = vrot.slane %v3191, 3
    %v3201 = vtanh.pop %v3199
    %v3203 = vrot.slane %v3197, 1
    %v3205 = vmul.f32 %v3203, %v2335
    %v3206 = vmul.f32 %v3197, %v3201
    %v3207 = vadd.f32 %v3205, %v3206
    %v3208 = vtanh.pop %v3207
    %v3209 = vrot.slane %v3197, 2
    %v3211 = vmul.f32 %v3209, %v3208
    %v3212 = vpack.c.bf16 %v3211, %v3211
    %v3213 = vld [vmem:[#allocation3] sm:$0x1]
    %v3214 = vsel %vm263, %v3212, %v3213
    %3215 = vst [vmem:[#allocation3] sm:$0x1] %v3214
    %v3216 = vld [vmem:[#allocation3] sm:$0x3]
    %v3217 = vld [vmem:[#allocation8] sm:$0xff]
    %v3218 = vld [vmem:[#allocation8 + $0x8] sm:$0xff]
    %v3219 = vld [vmem:[#allocation8 + $0x10] sm:$0xff]
    %v3220 = vld [vmem:[#allocation8 + $0x18] sm:$0xff]
    %v3221 = vld [vmem:[#allocation8 + $0x20] sm:$0xff]
    %v3222 = vld [vmem:[#allocation8 + $0x28] sm:$0xff]
    %v3223 = vld [vmem:[#allocation8 + $0x30] sm:$0xff]
    %v3224 = vld [vmem:[#allocation8 + $0x38] sm:$0xff]
    %v3225 = vld [vmem:[#allocation8 + $0x40] sm:$0xff]
    %v3226 = vld [vmem:[#allocation8 + $0x48] sm:$0xff]
    %v3227 = vld [vmem:[#allocation8 + $0x50] sm:$0xff]
    %v3228 = vld [vmem:[#allocation8 + $0x58] sm:$0xff]
    %v3229 = vld [vmem:[#allocation8 + $0x60] sm:$0xff]
    %v3230 = vld [vmem:[#allocation8 + $0x68] sm:$0xff]
    %v3231 = vld [vmem:[#allocation8 + $0x70] sm:$0xff]
    %v3232 = vld [vmem:[#allocation8 + $0x78] sm:$0xff]
    %v3233 = vld [vmem:[#allocation8 + $0x80] sm:$0xff]
    %v3234 = vld [vmem:[#allocation8 + $0x88] sm:$0xff]
    %v3235 = vld [vmem:[#allocation8 + $0x90] sm:$0xff]
    %v3236 = vld [vmem:[#allocation8 + $0x98] sm:$0xff]
    %v3237 = vld [vmem:[#allocation8 + $0xa0] sm:$0xff]
    %v3238 = vld [vmem:[#allocation8 + $0xa8] sm:$0xff]
    %v3239 = vld [vmem:[#allocation8 + $0xb0] sm:$0xff]
    %v3240 = vld [vmem:[#allocation8 + $0xb8] sm:$0xff]
    %v3241 = vld [vmem:[#allocation8 + $0xc0] sm:$0xff]
    %v3242 = vld [vmem:[#allocation8 + $0xc8] sm:$0xff]
    %v3243 = vld [vmem:[#allocation8 + $0xd0] sm:$0xff]
    %v3244 = vld [vmem:[#allocation8 + $0xd8] sm:$0xff]
    %v3245 = vld [vmem:[#allocation8 + $0xe0] sm:$0xff]
    %v3246 = vld [vmem:[#allocation8 + $0xe8] sm:$0xff]
    %v3247 = vld [vmem:[#allocation8 + $0xf0] sm:$0xff]
    %v3248 = vld [vmem:[#allocation8 + $0xf8] sm:$0xff]
    %v3249 = vld [vmem:[#allocation8 + $0x100] sm:$0xff]
    %v3250 = vld [vmem:[#allocation8 + $0x108] sm:$0xff]
    %v3251 = vld [vmem:[#allocation8 + $0x110] sm:$0xff]
    %v3252 = vld [vmem:[#allocation8 + $0x118] sm:$0xff]
    %v3253 = vld [vmem:[#allocation8 + $0x120] sm:$0xff]
    %v3254 = vld [vmem:[#allocation8 + $0x128] sm:$0xff]
    %v3255 = vld [vmem:[#allocation8 + $0x130] sm:$0xff]
    %v3256 = vld [vmem:[#allocation8 + $0x138] sm:$0xff]
    %v3257 = vld [vmem:[#allocation8 + $0x140] sm:$0xff]
    %v3258 = vld [vmem:[#allocation8 + $0x148] sm:$0xff]
    %v3259 = vld [vmem:[#allocation8 + $0x150] sm:$0xff]
    %v3260 = vld [vmem:[#allocation8 + $0x158] sm:$0xff]
    %v3261 = vld [vmem:[#allocation8 + $0x160] sm:$0xff]
    %v3262 = vld [vmem:[#allocation8 + $0x168] sm:$0xff]
    %v3263 = vld [vmem:[#allocation8 + $0x170] sm:$0xff]
    %v3264 = vld [vmem:[#allocation8 + $0x178] sm:$0xff]
    %v3265 = vld [vmem:[#allocation8 + $0x180] sm:$0xff]
    %v3266 = vld [vmem:[#allocation8 + $0x188] sm:$0xff]
    %v3267 = vld [vmem:[#allocation8 + $0x190] sm:$0xff]
    %v3268 = vld [vmem:[#allocation8 + $0x198] sm:$0xff]
    %v3269 = vld [vmem:[#allocation8 + $0x1a0] sm:$0xff]
    %v3270 = vld [vmem:[#allocation8 + $0x1a8] sm:$0xff]
    %v3271 = vld [vmem:[#allocation8 + $0x1b0] sm:$0xff]
    %v3272 = vld [vmem:[#allocation8 + $0x1b8] sm:$0xff]
    %v3273 = vld [vmem:[#allocation8 + $0x1c0] sm:$0xff]
    %v3274 = vld [vmem:[#allocation8 + $0x1c8] sm:$0xff]
    %v3275 = vld [vmem:[#allocation8 + $0x1d0] sm:$0xff]
    %v3276 = vld [vmem:[#allocation8 + $0x1d8] sm:$0xff]
    %v3277 = vld [vmem:[#allocation8 + $0x1e0] sm:$0xff]
    %v3278 = vld [vmem:[#allocation8 + $0x1e8] sm:$0xff]
    %v3279 = vld [vmem:[#allocation8 + $0x1f0] sm:$0xff]
    %v3280 = vld [vmem:[#allocation8 + $0x1f8] sm:$0xff]
    %v3281 = vld [vmem:[%s5] sm:$0xf]
    %v3284 = vunpack.c.l.s4 1966171168
    %v3285 = vunpack.c.0.s8 %v3284
    %v3286 = vlaneseq
    %v3287 = vshrl.u32 %v3286, 7
    %v3288 = vsub.s32 %v3285, %v3287
    %v3289 = vrot.slane %v3216, %v3288
    %v3290 = vcombine.high %v3289, %v3289
    %v3292 = vunpack.c.l.s4 1966171168
    %v3293 = vunpack.c.0.s8 %v3292
    %v3294 = vlaneseq
    %v3295 = vshrl.u32 %v3294, 7
    %v3296 = vsub.s32 %v3293, %v3295
    %v3297 = vrot.slane %v3289, %v3296
    %v3299 = vunpack.c.l.s4 1966171168
    %v3300 = vunpack.c.0.s8 %v3299
    %v3301 = vlaneseq
    %v3302 = vshrl.u32 %v3301, 7
    %v3303 = vsub.s32 %v3300, %v3302
    %v3304 = vrot.slane %v3290, %v3303
    %v3371 = vunpack.c.l.b16 %v3217
    %v3372 = vunpack.c.h.b16 %v3217
    %v3373 = vunpack.c.l.b16 %v3218
    %v3374 = vunpack.c.h.b16 %v3218
    %v3375 = vunpack.c.l.b16 %v3219
    %v3376 = vunpack.c.h.b16 %v3219
    %v3377 = vunpack.c.l.b16 %v3220
    %v3378 = vunpack.c.h.b16 %v3220
    %v3379 = vunpack.c.l.b16 %v3221
    %v3380 = vunpack.c.h.b16 %v3221
    %v3381 = vunpack.c.l.b16 %v3222
    %v3382 = vunpack.c.h.b16 %v3222
    %v3383 = vunpack.c.l.b16 %v3223
    %v3384 = vunpack.c.h.b16 %v3223
    %v3385 = vunpack.c.l.b16 %v3224
    %v3386 = vunpack.c.h.b16 %v3224
    %v3387 = vunpack.c.l.b16 %v3225
    %v3388 = vunpack.c.h.b16 %v3225
    %v3389 = vunpack.c.l.b16 %v3226
    %v3390 = vunpack.c.h.b16 %v3226
    %v3391 = vunpack.c.l.b16 %v3227
    %v3392 = vunpack.c.h.b16 %v3227
    %v3393 = vunpack.c.l.b16 %v3228
    %v3394 = vunpack.c.h.b16 %v3228
    %v3395 = vunpack.c.l.b16 %v3229
    %v3396 = vunpack.c.h.b16 %v3229
    %v3397 = vunpack.c.l.b16 %v3230
    %v3398 = vunpack.c.h.b16 %v3230
    %v3399 = vunpack.c.l.b16 %v3231
    %v3400 = vunpack.c.h.b16 %v3231
    %v3401 = vunpack.c.l.b16 %v3232
    %v3402 = vunpack.c.h.b16 %v3232
    %v3403 = vunpack.c.l.b16 %v3233
    %v3404 = vunpack.c.h.b16 %v3233
    %v3405 = vunpack.c.l.b16 %v3234
    %v3406 = vunpack.c.h.b16 %v3234
    %v3407 = vunpack.c.l.b16 %v3235
    %v3408 = vunpack.c.h.b16 %v3235
    %v3409 = vunpack.c.l.b16 %v3236
    %v3410 = vunpack.c.h.b16 %v3236
    %v3411 = vunpack.c.l.b16 %v3237
    %v3412 = vunpack.c.h.b16 %v3237
    %v3413 = vunpack.c.l.b16 %v3238
    %v3414 = vunpack.c.h.b16 %v3238
    %v3415 = vunpack.c.l.b16 %v3239
    %v3416 = vunpack.c.h.b16 %v3239
    %v3417 = vunpack.c.l.b16 %v3240
    %v3418 = vunpack.c.h.b16 %v3240
    %v3419 = vunpack.c.l.b16 %v3241
    %v3420 = vunpack.c.h.b16 %v3241
    %v3421 = vunpack.c.l.b16 %v3242
    %v3422 = vunpack.c.h.b16 %v3242
    %v3423 = vunpack.c.l.b16 %v3243
    %v3424 = vunpack.c.h.b16 %v3243
    %v3425 = vunpack.c.l.b16 %v3244
    %v3426 = vunpack.c.h.b16 %v3244
    %v3427 = vunpack.c.l.b16 %v3245
    %v3428 = vunpack.c.h.b16 %v3245
    %v3429 = vunpack.c.l.b16 %v3246
    %v3430 = vunpack.c.h.b16 %v3246
    %v3431 = vunpack.c.l.b16 %v3247
    %v3432 = vunpack.c.h.b16 %v3247
    %v3433 = vunpack.c.l.b16 %v3248
    %v3434 = vunpack.c.h.b16 %v3248
    %v3435 = vunpack.c.l.b16 %v3249
    %v3436 = vunpack.c.h.b16 %v3249
    %v3437 = vunpack.c.l.b16 %v3250
    %v3438 = vunpack.c.h.b16 %v3250
    %v3439 = vunpack.c.l.b16 %v3251
    %v3440 = vunpack.c.h.b16 %v3251
    %v3441 = vunpack.c.l.b16 %v3252
    %v3442 = vunpack.c.h.b16 %v3252
    %v3443 = vunpack.c.l.b16 %v3253
    %v3444 = vunpack.c.h.b16 %v3253
    %v3445 = vunpack.c.l.b16 %v3254
    %v3446 = vunpack.c.h.b16 %v3254
    %v3447 = vunpack.c.l.b16 %v3255
    %v3448 = vunpack.c.h.b16 %v3255
    %v3449 = vunpack.c.l.b16 %v3256
    %v3450 = vunpack.c.h.b16 %v3256
    %v3451 = vunpack.c.l.b16 %v3257
    %v3452 = vunpack.c.h.b16 %v3257
    %v3453 = vunpack.c.l.b16 %v3258
    %v3454 = vunpack.c.h.b16 %v3258
    %v3455 = vunpack.c.l.b16 %v3259
    %v3456 = vunpack.c.h.b16 %v3259
    %v3457 = vunpack.c.l.b16 %v3260
    %v3458 = vunpack.c.h.b16 %v3260
    %v3459 = vunpack.c.l.b16 %v3261
    %v3460 = vunpack.c.h.b16 %v3261
    %v3461 = vunpack.c.l.b16 %v3262
    %v3462 = vunpack.c.h.b16 %v3262
    %v3463 = vunpack.c.l.b16 %v3263
    %v3464 = vunpack.c.h.b16 %v3263
    %v3465 = vunpack.c.l.b16 %v3264
    %v3466 = vunpack.c.h.b16 %v3264
    %v3467 = vunpack.c.l.b16 %v3265
    %v3468 = vunpack.c.h.b16 %v3265
    %v3469 = vunpack.c.l.b16 %v3266
    %v3470 = vunpack.c.h.b16 %v3266
    %v3471 = vunpack.c.l.b16 %v3267
    %v3472 = vunpack.c.h.b16 %v3267
    %v3473 = vunpack.c.l.b16 %v3268
    %v3474 = vunpack.c.h.b16 %v3268
    %v3475 = vunpack.c.l.b16 %v3269
    %v3476 = vunpack.c.h.b16 %v3269
    %v3477 = vunpack.c.l.b16 %v3270
    %v3478 = vunpack.c.h.b16 %v3270
    %v3479 = vunpack.c.l.b16 %v3271
    %v3480 = vunpack.c.h.b16 %v3271
    %v3481 = vunpack.c.l.b16 %v3272
    %v3482 = vunpack.c.h.b16 %v3272
    %v3483 = vunpack.c.l.b16 %v3273
    %v3484 = vunpack.c.h.b16 %v3273
    %v3485 = vunpack.c.l.b16 %v3274
    %v3486 = vunpack.c.h.b16 %v3274
    %v3487 = vunpack.c.l.b16 %v3275
    %v3488 = vunpack.c.h.b16 %v3275
    %v3489 = vunpack.c.l.b16 %v3276
    %v3490 = vunpack.c.h.b16 %v3276
    %v3491 = vunpack.c.l.b16 %v3277
    %v3492 = vunpack.c.h.b16 %v3277
    %v3493 = vunpack.c.l.b16 %v3278
    %v3494 = vunpack.c.h.b16 %v3278
    %v3495 = vunpack.c.l.b16 %v3279
    %v3496 = vunpack.c.h.b16 %v3279
    %v3497 = vunpack.c.l.b16 %v3280
    %v3498 = vunpack.c.h.b16 %v3280
    %v3499 = vpack.c.b16 %v3375, %v3371
    %v3500 = vpack.c.b16 %v3376, %v3372
    %v3501 = vpack.c.b16 %v3377, %v3373
    %v3502 = vpack.c.b16 %v3378, %v3374
    %v3503 = vpack.c.b16 %v3383, %v3379
    %v3504 = vpack.c.b16 %v3384, %v3380
    %v3505 = vpack.c.b16 %v3385, %v3381
    %v3506 = vpack.c.b16 %v3386, %v3382
    %v3507 = vpack.c.b16 %v3391, %v3387
    %v3508 = vpack.c.b16 %v3392, %v3388
    %v3509 = vpack.c.b16 %v3393, %v3389
    %v3510 = vpack.c.b16 %v3394, %v3390
    %v3511 = vpack.c.b16 %v3399, %v3395
    %v3512 = vpack.c.b16 %v3400, %v3396
    %v3513 = vpack.c.b16 %v3401, %v3397
    %v3514 = vpack.c.b16 %v3402, %v3398
    %v3515 = vpack.c.b16 %v3407, %v3403
    %v3516 = vpack.c.b16 %v3408, %v3404
    %v3517 = vpack.c.b16 %v3409, %v3405
    %v3518 = vpack.c.b16 %v3410, %v3406
    %v3519 = vpack.c.b16 %v3415, %v3411
    %v3520 = vpack.c.b16 %v3416, %v3412
    %v3521 = vpack.c.b16 %v3417, %v3413
    %v3522 = vpack.c.b16 %v3418, %v3414
    %v3523 = vpack.c.b16 %v3423, %v3419
    %v3524 = vpack.c.b16 %v3424, %v3420
    %v3525 = vpack.c.b16 %v3425, %v3421
    %v3526 = vpack.c.b16 %v3426, %v3422
    %v3527 = vpack.c.b16 %v3431, %v3427
    %v3528 = vpack.c.b16 %v3432, %v3428
    %v3529 = vpack.c.b16 %v3433, %v3429
    %v3530 = vpack.c.b16 %v3434, %v3430
    %v3531 = vpack.c.b16 %v3439, %v3435
    %v3532 = vpack.c.b16 %v3440, %v3436
    %v3533 = vpack.c.b16 %v3441, %v3437
    %v3534 = vpack.c.b16 %v3442, %v3438
    %v3535 = vpack.c.b16 %v3447, %v3443
    %v3536 = vpack.c.b16 %v3448, %v3444
    %v3537 = vpack.c.b16 %v3449, %v3445
    %v3538 = vpack.c.b16 %v3450, %v3446
    %v3539 = vpack.c.b16 %v3455, %v3451
    %v3540 = vpack.c.b16 %v3456, %v3452
    %v3541 = vpack.c.b16 %v3457, %v3453
    %v3542 = vpack.c.b16 %v3458, %v3454
    %v3543 = vpack.c.b16 %v3463, %v3459
    %v3544 = vpack.c.b16 %v3464, %v3460
    %v3545 = vpack.c.b16 %v3465, %v3461
    %v3546 = vpack.c.b16 %v3466, %v3462
    %v3547 = vpack.c.b16 %v3471, %v3467
    %v3548 = vpack.c.b16 %v3472, %v3468
    %v3549 = vpack.c.b16 %v3473, %v3469
    %v3550 = vpack.c.b16 %v3474, %v3470
    %v3551 = vpack.c.b16 %v3479, %v3475
    %v3552 = vpack.c.b16 %v3480, %v3476
    %v3553 = vpack.c.b16 %v3481, %v3477
    %v3554 = vpack.c.b16 %v3482, %v3478
    %v3555 = vpack.c.b16 %v3487, %v3483
    %v3556 = vpack.c.b16 %v3488, %v3484
    %v3557 = vpack.c.b16 %v3489, %v3485
    %v3558 = vpack.c.b16 %v3490, %v3486
    %v3559 = vpack.c.b16 %v3495, %v3491
    %v3560 = vpack.c.b16 %v3496, %v3492
    %v3561 = vpack.c.b16 %v3497, %v3493
    %v3562 = vpack.c.b16 %v3498, %v3494
    %v3628 = vlaneseq
    %v3629 = vshrl.u32 %v3628, 7
    %v3630 = vsub.s32 0, %v3629
    %v3631 = vrot.slane %v3281, %v3630
    %v3632 = vlaneseq
    %v3633 = vshrl.u32 %v3632, 7
    %v3634 = vsub.s32 1, %v3633
    %v3635 = vrot.slane %v3281, %v3634
    %v3636 = vlaneseq
    %v3637 = vshrl.u32 %v3636, 7
    %v3638 = vsub.s32 2, %v3637
    %v3639 = vrot.slane %v3281, %v3638
    %v3640 = vlaneseq
    %v3641 = vshrl.u32 %v3640, 7
    %v3642 = vsub.s32 3, %v3641
    %v3643 = vrot.slane %v3281, %v3642
    %3648 = vmatprep.subr.bf16.mxu0 %v3500
    %3649 = vmatpush1.bf16.msra.mxu0 %v3499
    %3650 = vmatprep.subr.bf16.mxu0 %v3504
    %3651 = vmatpush1.bf16.msra.mxu0 %v3503
    %3652 = vmatprep.subr.bf16.mxu0 %v3508
    %3653 = vmatpush1.bf16.msra.mxu0 %v3507
    %3654 = vmatprep.subr.bf16.mxu0 %v3512
    %3655 = vmatpush1.bf16.msra.mxu0 %v3511
    %3656 = vmatprep.subr.bf16.mxu0 %v3516
    %3657 = vmatpush1.bf16.msra.mxu0 %v3515
    %3658 = vmatprep.subr.bf16.mxu0 %v3520
    %3659 = vmatpush1.bf16.msra.mxu0 %v3519
    %3660 = vmatprep.subr.bf16.mxu0 %v3524
    %3661 = vmatpush1.bf16.msra.mxu0 %v3523
    %3662 = vmatprep.subr.bf16.mxu0 %v3528
    %3663 = vmatpush1.bf16.msra.mxu0 %v3527
    %3664 = vmatprep.subr.bf16.mxu0 %v3532
    %3665 = vmatpush1.bf16.msra.mxu0 %v3531
    %3666 = vmatprep.subr.bf16.mxu0 %v3536
    %3667 = vmatpush1.bf16.msra.mxu0 %v3535
    %3668 = vmatprep.subr.bf16.mxu0 %v3540
    %3669 = vmatpush1.bf16.msra.mxu0 %v3539
    %3670 = vmatprep.subr.bf16.mxu0 %v3544
    %3671 = vmatpush1.bf16.msra.mxu0 %v3543
    %3672 = vmatprep.subr.bf16.mxu0 %v3548
    %3673 = vmatpush1.bf16.msra.mxu0 %v3547
    %3674 = vmatprep.subr.bf16.mxu0 %v3552
    %3675 = vmatpush1.bf16.msra.mxu0 %v3551
    %3676 = vmatprep.subr.bf16.mxu0 %v3556
    %3677 = vmatpush1.bf16.msra.mxu0 %v3555
    %3678 = vmatprep.subr.bf16.mxu0 %v3560
    %3679 = vmatpush1.bf16.msra.mxu0 %v3559
    %3680 = vmatprep.mubr.bf16.mxu0 %v3304
    %3681 = vmatmul.mubr.bf16.gmra.mrb[0].mxu0 %v3297
    %v3682 = vpop.f32.mrb[0].mxu0
    %v3683 = vadd.f32 %v3631, %v3682
    %v3684 = vpop.f32.mrb[0].mxu0
    %v3685 = vadd.f32 %v3635, %v3684
    %v3686 = vpop.f32.mrb[0].mxu0
    %v3687 = vpop.f32.mrb[0].mxu0
    %3688 = vdwg.mxu0
    %3689 = vmatprep.subr.bf16.mxu0 %v3502
    %3690 = vmatpush1.bf16.msra.mxu0 %v3501
    %3691 = vmatprep.subr.bf16.mxu0 %v3506
    %3692 = vmatpush1.bf16.msra.mxu0 %v3505
    %3693 = vmatprep.subr.bf16.mxu0 %v3510
    %3694 = vmatpush1.bf16.msra.mxu0 %v3509
    %3695 = vmatprep.subr.bf16.mxu0 %v3514
    %3696 = vmatpush1.bf16.msra.mxu0 %v3513
    %3697 = vmatprep.subr.bf16.mxu0 %v3518
    %3698 = vmatpush1.bf16.msra.mxu0 %v3517
    %3699 = vmatprep.subr.bf16.mxu0 %v3522
    %3700 = vmatpush1.bf16.msra.mxu0 %v3521
    %3701 = vmatprep.subr.bf16.mxu0 %v3526
    %3702 = vmatpush1.bf16.msra.mxu0 %v3525
    %3703 = vmatprep.subr.bf16.mxu0 %v3530
    %3704 = vmatpush1.bf16.msra.mxu0 %v3529
    %3705 = vmatprep.subr.bf16.mxu0 %v3534
    %3706 = vmatpush1.bf16.msra.mxu0 %v3533
    %3707 = vmatprep.subr.bf16.mxu0 %v3538
    %3708 = vmatpush1.bf16.msra.mxu0 %v3537
    %3709 = vmatprep.subr.bf16.mxu0 %v3542
    %3710 = vmatpush1.bf16.msra.mxu0 %v3541
    %3711 = vmatprep.subr.bf16.mxu0 %v3546
    %3712 = vmatpush1.bf16.msra.mxu0 %v3545
    %3713 = vmatprep.subr.bf16.mxu0 %v3550
    %3714 = vmatpush1.bf16.msra.mxu0 %v3549
    %3715 = vmatprep.subr.bf16.mxu0 %v3554
    %3716 = vmatpush1.bf16.msra.mxu0 %v3553
    %3717 = vmatprep.subr.bf16.mxu0 %v3558
    %3718 = vmatpush1.bf16.msra.mxu0 %v3557
    %3719 = vmatprep.subr.bf16.mxu0 %v3562
    %3720 = vmatpush1.bf16.msra.mxu0 %v3561
    %3721 = vmatprep.mubr.bf16.mxu0 %v3304
    %3722 = vmatmul.mubr.bf16.gmra.mrb[0].mxu0 %v3297
    %v3723 = vpop.f32.mrb[0].mxu0
    %v3724 = vadd.f32 %v3639, %v3723
    %v3725 = vpop.f32.mrb[0].mxu0
    %v3726 = vadd.f32 %v3643, %v3725
    %v3727 = vpop.f32.mrb[0].mxu0
    %v3728 = vpop.f32.mrb[0].mxu0
    %3729 = vdwg.mxu0
    %v3730 = vxor.u32 %v3683, 2147483648
    %v3731 = vxor.u32 %v3685, 2147483648
    %v3732 = vxor.u32 %v3724, 2147483648
    %v3733 = vmul.f32 %v3730, 1.442695
    %v3734 = vpow.pop %v3733
    %v3735 = vmul.f32 %v3731, 1.442695
    %v3736 = vpow.pop %v3735
    %v3737 = vmul.f32 %v3732, 1.442695
    %v3738 = vpow.pop %v3737
    %v3739 = vadd.f32 %v3734, 1.0
    %v3740 = vadd.f32 %v3736, 1.0
    %v3741 = vadd.f32 %v3738, 1.0
    %v3742 = vrcp.pop %v3739
    %v3743 = vmul.f32 1.0, %v3742
    %v3744 = vrcp.pop %v3740
    %v3745 = vmul.f32 1.0, %v3744
    %v3746 = vrcp.pop %v3741
    %v3747 = vmul.f32 1.0, %v3746
    %v3748 = vtanh.pop %v3726
    %v3749 = vmul.f32 %v3745, %v2879
    %v3750 = vmul.f32 %v3743, %v3748
    %v3751 = vadd.f32 %v3749, %v3750
    %v3752 = vtanh.pop %v3751
    %v3753 = vmul.f32 %v3747, %v3752
    %v3754 = vpack.c.bf16 %v3753, %v3753
    %v3755 = vld [vmem:[#allocation3 + $0x1] sm:$0x1]
    %v3756 = vsel %vm263, %v3754, %v3755
    %3757 = vst [vmem:[#allocation3 + $0x1] sm:$0x1] %v3756
    %s3758 = scalar_lea.vmem [#allocation2], 4
    %v3759 = vld [vmem:[%s3758] ss:$8 sm:$0xf]
    %v3760 = vld [vmem:[#allocation5] sm:$0xff]
    %v3761 = vld [vmem:[#allocation5 + $0x8] sm:$0xff]
    %v3762 = vld [vmem:[#allocation5 + $0x10] sm:$0xff]
    %v3763 = vld [vmem:[#allocation5 + $0x18] sm:$0xff]
    %v3764 = vld [vmem:[#allocation5 + $0x20] sm:$0xff]
    %v3765 = vld [vmem:[#allocation5 + $0x28] sm:$0xff]
    %v3766 = vld [vmem:[#allocation5 + $0x30] sm:$0xff]
    %v3767 = vld [vmem:[#allocation5 + $0x38] sm:$0xff]
    %v3768 = vld [vmem:[#allocation5 + $0x40] sm:$0xff]
    %v3769 = vld [vmem:[#allocation5 + $0x48] sm:$0xff]
    %v3770 = vld [vmem:[#allocation5 + $0x50] sm:$0xff]
    %v3771 = vld [vmem:[#allocation5 + $0x58] sm:$0xff]
    %v3772 = vld [vmem:[#allocation5 + $0x60] sm:$0xff]
    %v3773 = vld [vmem:[#allocation5 + $0x68] sm:$0xff]
    %v3774 = vld [vmem:[#allocation5 + $0x70] sm:$0xff]
    %v3775 = vld [vmem:[#allocation5 + $0x78] sm:$0xff]
    %v3776 = vld [vmem:[#allocation5 + $0x80] sm:$0xff]
    %v3777 = vld [vmem:[#allocation5 + $0x88] sm:$0xff]
    %v3778 = vld [vmem:[#allocation5 + $0x90] sm:$0xff]
    %v3779 = vld [vmem:[#allocation5 + $0x98] sm:$0xff]
    %v3780 = vld [vmem:[#allocation5 + $0xa0] sm:$0xff]
    %v3781 = vld [vmem:[#allocation5 + $0xa8] sm:$0xff]
    %v3782 = vld [vmem:[#allocation5 + $0xb0] sm:$0xff]
    %v3783 = vld [vmem:[#allocation5 + $0xb8] sm:$0xff]
    %v3784 = vld [vmem:[#allocation5 + $0xc0] sm:$0xff]
    %v3785 = vld [vmem:[#allocation5 + $0xc8] sm:$0xff]
    %v3786 = vld [vmem:[#allocation5 + $0xd0] sm:$0xff]
    %v3787 = vld [vmem:[#allocation5 + $0xd8] sm:$0xff]
    %v3788 = vld [vmem:[#allocation5 + $0xe0] sm:$0xff]
    %v3789 = vld [vmem:[#allocation5 + $0xe8] sm:$0xff]
    %v3790 = vld [vmem:[#allocation5 + $0xf0] sm:$0xff]
    %v3791 = vld [vmem:[#allocation5 + $0xf8] sm:$0xff]
    %v3824 = vunpack.c.l.b16 %v3760
    %v3825 = vunpack.c.h.b16 %v3760
    %v3826 = vunpack.c.l.b16 %v3761
    %v3827 = vunpack.c.h.b16 %v3761
    %v3828 = vunpack.c.l.b16 %v3762
    %v3829 = vunpack.c.h.b16 %v3762
    %v3830 = vunpack.c.l.b16 %v3763
    %v3831 = vunpack.c.h.b16 %v3763
    %v3832 = vunpack.c.l.b16 %v3764
    %v3833 = vunpack.c.h.b16 %v3764
    %v3834 = vunpack.c.l.b16 %v3765
    %v3835 = vunpack.c.h.b16 %v3765
    %v3836 = vunpack.c.l.b16 %v3766
    %v3837 = vunpack.c.h.b16 %v3766
    %v3838 = vunpack.c.l.b16 %v3767
    %v3839 = vunpack.c.h.b16 %v3767
    %v3840 = vunpack.c.l.b16 %v3768
    %v3841 = vunpack.c.h.b16 %v3768
    %v3842 = vunpack.c.l.b16 %v3769
    %v3843 = vunpack.c.h.b16 %v3769
    %v3844 = vunpack.c.l.b16 %v3770
    %v3845 = vunpack.c.h.b16 %v3770
    %v3846 = vunpack.c.l.b16 %v3771
    %v3847 = vunpack.c.h.b16 %v3771
    %v3848 = vunpack.c.l.b16 %v3772
    %v3849 = vunpack.c.h.b16 %v3772
    %v3850 = vunpack.c.l.b16 %v3773
    %v3851 = vunpack.c.h.b16 %v3773
    %v3852 = vunpack.c.l.b16 %v3774
    %v3853 = vunpack.c.h.b16 %v3774
    %v3854 = vunpack.c.l.b16 %v3775
    %v3855 = vunpack.c.h.b16 %v3775
    %v3856 = vunpack.c.l.b16 %v3776
    %v3857 = vunpack.c.h.b16 %v3776
    %v3858 = vunpack.c.l.b16 %v3777
    %v3859 = vunpack.c.h.b16 %v3777
    %v3860 = vunpack.c.l.b16 %v3778
    %v3861 = vunpack.c.h.b16 %v3778
    %v3862 = vunpack.c.l.b16 %v3779
    %v3863 = vunpack.c.h.b16 %v3779
    %v3864 = vunpack.c.l.b16 %v3780
    %v3865 = vunpack.c.h.b16 %v3780
    %v3866 = vunpack.c.l.b16 %v3781
    %v3867 = vunpack.c.h.b16 %v3781
    %v3868 = vunpack.c.l.b16 %v3782
    %v3869 = vunpack.c.h.b16 %v3782
    %v3870 = vunpack.c.l.b16 %v3783
    %v3871 = vunpack.c.h.b16 %v3783
    %v3872 = vunpack.c.l.b16 %v3784
    %v3873 = vunpack.c.h.b16 %v3784
    %v3874 = vunpack.c.l.b16 %v3785
    %v3875 = vunpack.c.h.b16 %v3785
    %v3876 = vunpack.c.l.b16 %v3786
    %v3877 = vunpack.c.h.b16 %v3786
    %v3878 = vunpack.c.l.b16 %v3787
    %v3879 = vunpack.c.h.b16 %v3787
    %v3880 = vunpack.c.l.b16 %v3788
    %v3881 = vunpack.c.h.b16 %v3788
    %v3882 = vunpack.c.l.b16 %v3789
    %v3883 = vunpack.c.h.b16 %v3789
    %v3884 = vunpack.c.l.b16 %v3790
    %v3885 = vunpack.c.h.b16 %v3790
    %v3886 = vunpack.c.l.b16 %v3791
    %v3887 = vunpack.c.h.b16 %v3791
    %v3888 = vpack.c.b16 %v3828, %v3824
    %v3889 = vpack.c.b16 %v3829, %v3825
    %v3890 = vpack.c.b16 %v3830, %v3826
    %v3891 = vpack.c.b16 %v3831, %v3827
    %v3892 = vpack.c.b16 %v3836, %v3832
    %v3893 = vpack.c.b16 %v3837, %v3833
    %v3894 = vpack.c.b16 %v3838, %v3834
    %v3895 = vpack.c.b16 %v3839, %v3835
    %v3896 = vpack.c.b16 %v3844, %v3840
    %v3897 = vpack.c.b16 %v3845, %v3841
    %v3898 = vpack.c.b16 %v3846, %v3842
    %v3899 = vpack.c.b16 %v3847, %v3843
    %v3900 = vpack.c.b16 %v3852, %v3848
    %v3901 = vpack.c.b16 %v3853, %v3849
    %v3902 = vpack.c.b16 %v3854, %v3850
    %v3903 = vpack.c.b16 %v3855, %v3851
    %v3904 = vpack.c.b16 %v3860, %v3856
    %v3905 = vpack.c.b16 %v3861, %v3857
    %v3906 = vpack.c.b16 %v3862, %v3858
    %v3907 = vpack.c.b16 %v3863, %v3859
    %v3908 = vpack.c.b16 %v3868, %v3864
    %v3909 = vpack.c.b16 %v3869, %v3865
    %v3910 = vpack.c.b16 %v3870, %v3866
    %v3911 = vpack.c.b16 %v3871, %v3867
    %v3912 = vpack.c.b16 %v3876, %v3872
    %v3913 = vpack.c.b16 %v3877, %v3873
    %v3914 = vpack.c.b16 %v3878, %v3874
    %v3915 = vpack.c.b16 %v3879, %v3875
    %v3916 = vpack.c.b16 %v3884, %v3880
    %v3917 = vpack.c.b16 %v3885, %v3881
    %v3918 = vpack.c.b16 %v3886, %v3882
    %v3919 = vpack.c.b16 %v3887, %v3883
    %3952 = vmatprep.subr.bf16.mxu0 %v3889
    %3953 = vmatpush1.bf16.msra.mxu0 %v3888
    %3954 = vmatprep.subr.bf16.mxu0 %v3893
    %3955 = vmatpush1.bf16.msra.mxu0 %v3892
    %3956 = vmatprep.subr.bf16.mxu0 %v3897
    %3957 = vmatpush1.bf16.msra.mxu0 %v3896
    %3958 = vmatprep.subr.bf16.mxu0 %v3901
    %3959 = vmatpush1.bf16.msra.mxu0 %v3900
    %3960 = vmatprep.subr.bf16.mxu0 %v3905
    %3961 = vmatpush1.bf16.msra.mxu0 %v3904
    %3962 = vmatprep.subr.bf16.mxu0 %v3909
    %3963 = vmatpush1.bf16.msra.mxu0 %v3908
    %3964 = vmatprep.subr.bf16.mxu0 %v3913
    %3965 = vmatpush1.bf16.msra.mxu0 %v3912
    %3966 = vmatprep.subr.bf16.mxu0 %v3917
    %3967 = vmatpush1.bf16.msra.mxu0 %v3916
    %3968 = vmatprep.subr.bf16.mxu0 0
    %3969 = vmatpush1.bf16.msra.mxu0 0
    %3970 = vmatprep.subr.bf16.mxu0 0
    %3971 = vmatpush1.bf16.msra.mxu0 0
    %3972 = vmatprep.subr.bf16.mxu0 0
    %3973 = vmatpush1.bf16.msra.mxu0 0
    %3974 = vmatprep.subr.bf16.mxu0 0
    %3975 = vmatpush1.bf16.msra.mxu0 0
    %3976 = vmatprep.subr.bf16.mxu0 0
    %3977 = vmatpush1.bf16.msra.mxu0 0
    %3978 = vmatprep.subr.bf16.mxu0 0
    %3979 = vmatpush1.bf16.msra.mxu0 0
    %3980 = vmatprep.subr.bf16.mxu0 0
    %3981 = vmatpush1.bf16.msra.mxu0 0
    %3982 = vmatprep.subr.bf16.mxu0 0
    %3983 = vmatpush1.bf16.msra.mxu0 0
    %3984 = vmatprep.mubr.bf16.mxu0 0
    %3985 = vmatmul.mubr.bf16.gmra.mrb[0].mxu0 %v3212
    %v3986 = vpop.f32.mrb[0].mxu0
    %v3987 = vadd.f32 0.0, %v3986
    %v3988 = vpop.f32.mrb[0].mxu0
    %v3989 = vadd.f32 0.0, %v3988
    %v3990 = vpop.f32.mrb[0].mxu0
    %v3991 = vpop.f32.mrb[0].mxu0
    %3992 = vdwg.mxu0
    %3993 = vmatprep.subr.bf16.mxu0 %v3891
    %3994 = vmatpush1.bf16.msra.mxu0 %v3890
    %3995 = vmatprep.subr.bf16.mxu0 %v3895
    %3996 = vmatpush1.bf16.msra.mxu0 %v3894
    %3997 = vmatprep.subr.bf16.mxu0 %v3899
    %3998 = vmatpush1.bf16.msra.mxu0 %v3898
    %3999 = vmatprep.subr.bf16.mxu0 %v3903
    %4000 = vmatpush1.bf16.msra.mxu0 %v3902
    %4001 = vmatprep.subr.bf16.mxu0 %v3907
    %4002 = vmatpush1.bf16.msra.mxu0 %v3906
    %4003 = vmatprep.subr.bf16.mxu0 %v3911
    %4004 = vmatpush1.bf16.msra.mxu0 %v3910
    %4005 = vmatprep.subr.bf16.mxu0 %v3915
    %4006 = vmatpush1.bf16.msra.mxu0 %v3914
    %4007 = vmatprep.subr.bf16.mxu0 %v3919
    %4008 = vmatpush1.bf16.msra.mxu0 %v3918
    %4009 = vmatprep.subr.bf16.mxu0 0
    %4010 = vmatpush1.bf16.msra.mxu0 0
    %4011 = vmatprep.subr.bf16.mxu0 0
    %4012 = vmatpush1.bf16.msra.mxu0 0
    %4013 = vmatprep.subr.bf16.mxu0 0
    %4014 = vmatpush1.bf16.msra.mxu0 0
    %4015 = vmatprep.subr.bf16.mxu0 0
    %4016 = vmatpush1.bf16.msra.mxu0 0
    %4017 = vmatprep.subr.bf16.mxu0 0
    %4018 = vmatpush1.bf16.msra.mxu0 0
    %4019 = vmatprep.subr.bf16.mxu0 0
    %4020 = vmatpush1.bf16.msra.mxu0 0
    %4021 = vmatprep.subr.bf16.mxu0 0
    %4022 = vmatpush1.bf16.msra.mxu0 0
    %4023 = vmatprep.subr.bf16.mxu0 0
    %4024 = vmatpush1.bf16.msra.mxu0 0
    %4025 = vmatprep.mubr.bf16.mxu0 0
    %4026 = vmatmul.mubr.bf16.gmra.mrb[0].mxu0 %v3212
    %v4027 = vpop.f32.mrb[0].mxu0
    %v4028 = vadd.f32 0.0, %v4027
    %v4029 = vpop.f32.mrb[0].mxu0
    %v4030 = vadd.f32 0.0, %v4029
    %v4031 = vpop.f32.mrb[0].mxu0
    %v4032 = vpop.f32.mrb[0].mxu0
    %4033 = vdwg.mxu0
    %v4038 = vcombine.low %v3987, %v3989
    %v4039 = vcombine.low %v4028, %v4030
    %v4041 = vunpack.c.l.s4 1966171168
    %v4042 = vunpack.c.0.s8 %v4041
    %v4043 = vlaneseq
    %v4044 = vshrl.u32 %v4043, 7
    %v4045 = vsub.s32 %v4042, %v4044
    %v4046 = vrot.slane %v4038, %v4045
    %v4048 = vunpack.c.l.s4 1966171168
    %v4049 = vunpack.c.0.s8 %v4048
    %v4050 = vlaneseq
    %v4051 = vshrl.u32 %v4050, 7
    %v4052 = vsub.s32 %v4049, %v4051
    %v4053 = vrot.slane %v4039, %v4052
    %v4054 = vcombine.low %v4046, %v4053
    %v4056 = vunpack.c.l.s4 1966171168
    %v4057 = vunpack.c.0.s8 %v4056
    %v4058 = vlaneseq
    %v4059 = vshrl.u32 %v4058, 7
    %v4060 = vsub.s32 %v4057, %v4059
    %v4061 = vrot.slane %v4054, %v4060
    %v4063 = vadd.f32 %v3759, %v4061
    %v4064 = vxor.u32 %v4063, 2147483648
    %v4065 = vmul.f32 %v4064, 1.442695
    %v4066 = vpow.pop %v4065
    %v4067 = vadd.f32 %v4066, 1.0
    %v4068 = vrcp.pop %v4067
    %v4069 = vmul.f32 1.0, %v4068
    %v4071 = vrot.slane %v4063, 3
    %v4073 = vtanh.pop %v4071
    %v4075 = vrot.slane %v4069, 1
    %v4077 = vmul.f32 %v4075, %v3207
    %v4078 = vmul.f32 %v4069, %v4073
    %v4079 = vadd.f32 %v4077, %v4078
    %v4080 = vtanh.pop %v4079
    %v4081 = vrot.slane %v4069, 2
    %v4083 = vmul.f32 %v4081, %v4080
    %v4084 = vpack.c.bf16 %v4083, %v4083
    %v4085 = vld [vmem:[#allocation3] sm:$0x1]
    %v4086 = vsel %vm263, %v4084, %v4085
    %4087 = vst [vmem:[#allocation3] sm:$0x1] %v4086
    %v4088 = vld [vmem:[#allocation3] sm:$0x3]
    %v4089 = vld [vmem:[#allocation8] sm:$0xff]
    %v4090 = vld [vmem:[#allocation8 + $0x8] sm:$0xff]
    %v4091 = vld [vmem:[#allocation8 + $0x10] sm:$0xff]
    %v4092 = vld [vmem:[#allocation8 + $0x18] sm:$0xff]
    %v4093 = vld [vmem:[#allocation8 + $0x20] sm:$0xff]
    %v4094 = vld [vmem:[#allocation8 + $0x28] sm:$0xff]
    %v4095 = vld [vmem:[#allocation8 + $0x30] sm:$0xff]
    %v4096 = vld [vmem:[#allocation8 + $0x38] sm:$0xff]
    %v4097 = vld [vmem:[#allocation8 + $0x40] sm:$0xff]
    %v4098 = vld [vmem:[#allocation8 + $0x48] sm:$0xff]
    %v4099 = vld [vmem:[#allocation8 + $0x50] sm:$0xff]
    %v4100 = vld [vmem:[#allocation8 + $0x58] sm:$0xff]
    %v4101 = vld [vmem:[#allocation8 + $0x60] sm:$0xff]
    %v4102 = vld [vmem:[#allocation8 + $0x68] sm:$0xff]
    %v4103 = vld [vmem:[#allocation8 + $0x70] sm:$0xff]
    %v4104 = vld [vmem:[#allocation8 + $0x78] sm:$0xff]
    %v4105 = vld [vmem:[#allocation8 + $0x80] sm:$0xff]
    %v4106 = vld [vmem:[#allocation8 + $0x88] sm:$0xff]
    %v4107 = vld [vmem:[#allocation8 + $0x90] sm:$0xff]
    %v4108 = vld [vmem:[#allocation8 + $0x98] sm:$0xff]
    %v4109 = vld [vmem:[#allocation8 + $0xa0] sm:$0xff]
    %v4110 = vld [vmem:[#allocation8 + $0xa8] sm:$0xff]
    %v4111 = vld [vmem:[#allocation8 + $0xb0] sm:$0xff]
    %v4112 = vld [vmem:[#allocation8 + $0xb8] sm:$0xff]
    %v4113 = vld [vmem:[#allocation8 + $0xc0] sm:$0xff]
    %v4114 = vld [vmem:[#allocation8 + $0xc8] sm:$0xff]
    %v4115 = vld [vmem:[#allocation8 + $0xd0] sm:$0xff]
    %v4116 = vld [vmem:[#allocation8 + $0xd8] sm:$0xff]
    %v4117 = vld [vmem:[#allocation8 + $0xe0] sm:$0xff]
    %v4118 = vld [vmem:[#allocation8 + $0xe8] sm:$0xff]
    %v4119 = vld [vmem:[#allocation8 + $0xf0] sm:$0xff]
    %v4120 = vld [vmem:[#allocation8 + $0xf8] sm:$0xff]
    %v4121 = vld [vmem:[#allocation8 + $0x100] sm:$0xff]
    %v4122 = vld [vmem:[#allocation8 + $0x108] sm:$0xff]
    %v4123 = vld [vmem:[#allocation8 + $0x110] sm:$0xff]
    %v4124 = vld [vmem:[#allocation8 + $0x118] sm:$0xff]
    %v4125 = vld [vmem:[#allocation8 + $0x120] sm:$0xff]
    %v4126 = vld [vmem:[#allocation8 + $0x128] sm:$0xff]
    %v4127 = vld [vmem:[#allocation8 + $0x130] sm:$0xff]
    %v4128 = vld [vmem:[#allocation8 + $0x138] sm:$0xff]
    %v4129 = vld [vmem:[#allocation8 + $0x140] sm:$0xff]
    %v4130 = vld [vmem:[#allocation8 + $0x148] sm:$0xff]
    %v4131 = vld [vmem:[#allocation8 + $0x150] sm:$0xff]
    %v4132 = vld [vmem:[#allocation8 + $0x158] sm:$0xff]
    %v4133 = vld [vmem:[#allocation8 + $0x160] sm:$0xff]
    %v4134 = vld [vmem:[#allocation8 + $0x168] sm:$0xff]
    %v4135 = vld [vmem:[#allocation8 + $0x170] sm:$0xff]
    %v4136 = vld [vmem:[#allocation8 + $0x178] sm:$0xff]
    %v4137 = vld [vmem:[#allocation8 + $0x180] sm:$0xff]
    %v4138 = vld [vmem:[#allocation8 + $0x188] sm:$0xff]
    %v4139 = vld [vmem:[#allocation8 + $0x190] sm:$0xff]
    %v4140 = vld [vmem:[#allocation8 + $0x198] sm:$0xff]
    %v4141 = vld [vmem:[#allocation8 + $0x1a0] sm:$0xff]
    %v4142 = vld [vmem:[#allocation8 + $0x1a8] sm:$0xff]
    %v4143 = vld [vmem:[#allocation8 + $0x1b0] sm:$0xff]
    %v4144 = vld [vmem:[#allocation8 + $0x1b8] sm:$0xff]
    %v4145 = vld [vmem:[#allocation8 + $0x1c0] sm:$0xff]
    %v4146 = vld [vmem:[#allocation8 + $0x1c8] sm:$0xff]
    %v4147 = vld [vmem:[#allocation8 + $0x1d0] sm:$0xff]
    %v4148 = vld [vmem:[#allocation8 + $0x1d8] sm:$0xff]
    %v4149 = vld [vmem:[#allocation8 + $0x1e0] sm:$0xff]
    %v4150 = vld [vmem:[#allocation8 + $0x1e8] sm:$0xff]
    %v4151 = vld [vmem:[#allocation8 + $0x1f0] sm:$0xff]
    %v4152 = vld [vmem:[#allocation8 + $0x1f8] sm:$0xff]
    %v4153 = vld [vmem:[%s5] sm:$0xf]
    %v4156 = vunpack.c.l.s4 1966171168
    %v4157 = vunpack.c.0.s8 %v4156
    %v4158 = vlaneseq
    %v4159 = vshrl.u32 %v4158, 7
    %v4160 = vsub.s32 %v4157, %v4159
    %v4161 = vrot.slane %v4088, %v4160
    %v4162 = vcombine.high %v4161, %v4161
    %v4164 = vunpack.c.l.s4 1966171168
    %v4165 = vunpack.c.0.s8 %v4164
    %v4166 = vlaneseq
    %v4167 = vshrl.u32 %v4166, 7
    %v4168 = vsub.s32 %v4165, %v4167
    %v4169 = vrot.slane %v4161, %v4168
    %v4171 = vunpack.c.l.s4 1966171168
    %v4172 = vunpack.c.0.s8 %v4171
    %v4173 = vlaneseq
    %v4174 = vshrl.u32 %v4173, 7
    %v4175 = vsub.s32 %v4172, %v4174
    %v4176 = vrot.slane %v4162, %v4175
    %v4243 = vunpack.c.l.b16 %v4089
    %v4244 = vunpack.c.h.b16 %v4089
    %v4245 = vunpack.c.l.b16 %v4090
    %v4246 = vunpack.c.h.b16 %v4090
    %v4247 = vunpack.c.l.b16 %v4091
    %v4248 = vunpack.c.h.b16 %v4091
    %v4249 = vunpack.c.l.b16 %v4092
    %v4250 = vunpack.c.h.b16 %v4092
    %v4251 = vunpack.c.l.b16 %v4093
    %v4252 = vunpack.c.h.b16 %v4093
    %v4253 = vunpack.c.l.b16 %v4094
    %v4254 = vunpack.c.h.b16 %v4094
    %v4255 = vunpack.c.l.b16 %v4095
    %v4256 = vunpack.c.h.b16 %v4095
    %v4257 = vunpack.c.l.b16 %v4096
    %v4258 = vunpack.c.h.b16 %v4096
    %v4259 = vunpack.c.l.b16 %v4097
    %v4260 = vunpack.c.h.b16 %v4097
    %v4261 = vunpack.c.l.b16 %v4098
    %v4262 = vunpack.c.h.b16 %v4098
    %v4263 = vunpack.c.l.b16 %v4099
    %v4264 = vunpack.c.h.b16 %v4099
    %v4265 = vunpack.c.l.b16 %v4100
    %v4266 = vunpack.c.h.b16 %v4100
    %v4267 = vunpack.c.l.b16 %v4101
    %v4268 = vunpack.c.h.b16 %v4101
    %v4269 = vunpack.c.l.b16 %v4102
    %v4270 = vunpack.c.h.b16 %v4102
    %v4271 = vunpack.c.l.b16 %v4103
    %v4272 = vunpack.c.h.b16 %v4103
    %v4273 = vunpack.c.l.b16 %v4104
    %v4274 = vunpack.c.h.b16 %v4104
    %v4275 = vunpack.c.l.b16 %v4105
    %v4276 = vunpack.c.h.b16 %v4105
    %v4277 = vunpack.c.l.b16 %v4106
    %v4278 = vunpack.c.h.b16 %v4106
    %v4279 = vunpack.c.l.b16 %v4107
    %v4280 = vunpack.c.h.b16 %v4107
    %v4281 = vunpack.c.l.b16 %v4108
    %v4282 = vunpack.c.h.b16 %v4108
    %v4283 = vunpack.c.l.b16 %v4109
    %v4284 = vunpack.c.h.b16 %v4109
    %v4285 = vunpack.c.l.b16 %v4110
    %v4286 = vunpack.c.h.b16 %v4110
    %v4287 = vunpack.c.l.b16 %v4111
    %v4288 = vunpack.c.h.b16 %v4111
    %v4289 = vunpack.c.l.b16 %v4112
    %v4290 = vunpack.c.h.b16 %v4112
    %v4291 = vunpack.c.l.b16 %v4113
    %v4292 = vunpack.c.h.b16 %v4113
    %v4293 = vunpack.c.l.b16 %v4114
    %v4294 = vunpack.c.h.b16 %v4114
    %v4295 = vunpack.c.l.b16 %v4115
    %v4296 = vunpack.c.h.b16 %v4115
    %v4297 = vunpack.c.l.b16 %v4116
    %v4298 = vunpack.c.h.b16 %v4116
    %v4299 = vunpack.c.l.b16 %v4117
    %v4300 = vunpack.c.h.b16 %v4117
    %v4301 = vunpack.c.l.b16 %v4118
    %v4302 = vunpack.c.h.b16 %v4118
    %v4303 = vunpack.c.l.b16 %v4119
    %v4304 = vunpack.c.h.b16 %v4119
    %v4305 = vunpack.c.l.b16 %v4120
    %v4306 = vunpack.c.h.b16 %v4120
    %v4307 = vunpack.c.l.b16 %v4121
    %v4308 = vunpack.c.h.b16 %v4121
    %v4309 = vunpack.c.l.b16 %v4122
    %v4310 = vunpack.c.h.b16 %v4122
    %v4311 = vunpack.c.l.b16 %v4123
    %v4312 = vunpack.c.h.b16 %v4123
    %v4313 = vunpack.c.l.b16 %v4124
    %v4314 = vunpack.c.h.b16 %v4124
    %v4315 = vunpack.c.l.b16 %v4125
    %v4316 = vunpack.c.h.b16 %v4125
    %v4317 = vunpack.c.l.b16 %v4126
    %v4318 = vunpack.c.h.b16 %v4126
    %v4319 = vunpack.c.l.b16 %v4127
    %v4320 = vunpack.c.h.b16 %v4127
    %v4321 = vunpack.c.l.b16 %v4128
    %v4322 = vunpack.c.h.b16 %v4128
    %v4323 = vunpack.c.l.b16 %v4129
    %v4324 = vunpack.c.h.b16 %v4129
    %v4325 = vunpack.c.l.b16 %v4130
    %v4326 = vunpack.c.h.b16 %v4130
    %v4327 = vunpack.c.l.b16 %v4131
    %v4328 = vunpack.c.h.b16 %v4131
    %v4329 = vunpack.c.l.b16 %v4132
    %v4330 = vunpack.c.h.b16 %v4132
    %v4331 = vunpack.c.l.b16 %v4133
    %v4332 = vunpack.c.h.b16 %v4133
    %v4333 = vunpack.c.l.b16 %v4134
    %v4334 = vunpack.c.h.b16 %v4134
    %v4335 = vunpack.c.l.b16 %v4135
    %v4336 = vunpack.c.h.b16 %v4135
    %v4337 = vunpack.c.l.b16 %v4136
    %v4338 = vunpack.c.h.b16 %v4136
    %v4339 = vunpack.c.l.b16 %v4137
    %v4340 = vunpack.c.h.b16 %v4137
    %v4341 = vunpack.c.l.b16 %v4138
    %v4342 = vunpack.c.h.b16 %v4138
    %v4343 = vunpack.c.l.b16 %v4139
    %v4344 = vunpack.c.h.b16 %v4139
    %v4345 = vunpack.c.l.b16 %v4140
    %v4346 = vunpack.c.h.b16 %v4140
    %v4347 = vunpack.c.l.b16 %v4141
    %v4348 = vunpack.c.h.b16 %v4141
    %v4349 = vunpack.c.l.b16 %v4142
    %v4350 = vunpack.c.h.b16 %v4142
    %v4351 = vunpack.c.l.b16 %v4143
    %v4352 = vunpack.c.h.b16 %v4143
    %v4353 = vunpack.c.l.b16 %v4144
    %v4354 = vunpack.c.h.b16 %v4144
    %v4355 = vunpack.c.l.b16 %v4145
    %v4356 = vunpack.c.h.b16 %v4145
    %v4357 = vunpack.c.l.b16 %v4146
    %v4358 = vunpack.c.h.b16 %v4146
    %v4359 = vunpack.c.l.b16 %v4147
    %v4360 = vunpack.c.h.b16 %v4147
    %v4361 = vunpack.c.l.b16 %v4148
    %v4362 = vunpack.c.h.b16 %v4148
    %v4363 = vunpack.c.l.b16 %v4149
    %v4364 = vunpack.c.h.b16 %v4149
    %v4365 = vunpack.c.l.b16 %v4150
    %v4366 = vunpack.c.h.b16 %v4150
    %v4367 = vunpack.c.l.b16 %v4151
    %v4368 = vunpack.c.h.b16 %v4151
    %v4369 = vunpack.c.l.b16 %v4152
    %v4370 = vunpack.c.h.b16 %v4152
    %v4371 = vpack.c.b16 %v4247, %v4243
    %v4372 = vpack.c.b16 %v4248, %v4244
    %v4373 = vpack.c.b16 %v4249, %v4245
    %v4374 = vpack.c.b16 %v4250, %v4246
    %v4375 = vpack.c.b16 %v4255, %v4251
    %v4376 = vpack.c.b16 %v4256, %v4252
    %v4377 = vpack.c.b16 %v4257, %v4253
    %v4378 = vpack.c.b16 %v4258, %v4254
    %v4379 = vpack.c.b16 %v4263, %v4259
    %v4380 = vpack.c.b16 %v4264, %v4260
    %v4381 = vpack.c.b16 %v4265, %v4261
    %v4382 = vpack.c.b16 %v4266, %v4262
    %v4383 = vpack.c.b16 %v4271, %v4267
    %v4384 = vpack.c.b16 %v4272, %v4268
    %v4385 = vpack.c.b16 %v4273, %v4269
    %v4386 = vpack.c.b16 %v4274, %v4270
    %v4387 = vpack.c.b16 %v4279, %v4275
    %v4388 = vpack.c.b16 %v4280, %v4276
    %v4389 = vpack.c.b16 %v4281, %v4277
    %v4390 = vpack.c.b16 %v4282, %v4278
    %v4391 = vpack.c.b16 %v4287, %v4283
    %v4392 = vpack.c.b16 %v4288, %v4284
    %v4393 = vpack.c.b16 %v4289, %v4285
    %v4394 = vpack.c.b16 %v4290, %v4286
    %v4395 = vpack.c.b16 %v4295, %v4291
    %v4396 = vpack.c.b16 %v4296, %v4292
    %v4397 = vpack.c.b16 %v4297, %v4293
    %v4398 = vpack.c.b16 %v4298, %v4294
    %v4399 = vpack.c.b16 %v4303, %v4299
    %v4400 = vpack.c.b16 %v4304, %v4300
    %v4401 = vpack.c.b16 %v4305, %v4301
    %v4402 = vpack.c.b16 %v4306, %v4302
    %v4403 = vpack.c.b16 %v4311, %v4307
    %v4404 = vpack.c.b16 %v4312, %v4308
    %v4405 = vpack.c.b16 %v4313, %v4309
    %v4406 = vpack.c.b16 %v4314, %v4310
    %v4407 = vpack.c.b16 %v4319, %v4315
    %v4408 = vpack.c.b16 %v4320, %v4316
    %v4409 = vpack.c.b16 %v4321, %v4317
    %v4410 = vpack.c.b16 %v4322, %v4318
    %v4411 = vpack.c.b16 %v4327, %v4323
    %v4412 = vpack.c.b16 %v4328, %v4324
    %v4413 = vpack.c.b16 %v4329, %v4325
    %v4414 = vpack.c.b16 %v4330, %v4326
    %v4415 = vpack.c.b16 %v4335, %v4331
    %v4416 = vpack.c.b16 %v4336, %v4332
    %v4417 = vpack.c.b16 %v4337, %v4333
    %v4418 = vpack.c.b16 %v4338, %v4334
    %v4419 = vpack.c.b16 %v4343, %v4339
    %v4420 = vpack.c.b16 %v4344, %v4340
    %v4421 = vpack.c.b16 %v4345, %v4341
    %v4422 = vpack.c.b16 %v4346, %v4342
    %v4423 = vpack.c.b16 %v4351, %v4347
    %v4424 = vpack.c.b16 %v4352, %v4348
    %v4425 = vpack.c.b16 %v4353, %v4349
    %v4426 = vpack.c.b16 %v4354, %v4350
    %v4427 = vpack.c.b16 %v4359, %v4355
    %v4428 = vpack.c.b16 %v4360, %v4356
    %v4429 = vpack.c.b16 %v4361, %v4357
    %v4430 = vpack.c.b16 %v4362, %v4358
    %v4431 = vpack.c.b16 %v4367, %v4363
    %v4432 = vpack.c.b16 %v4368, %v4364
    %v4433 = vpack.c.b16 %v4369, %v4365
    %v4434 = vpack.c.b16 %v4370, %v4366
    %v4500 = vlaneseq
    %v4501 = vshrl.u32 %v4500, 7
    %v4502 = vsub.s32 0, %v4501
    %v4503 = vrot.slane %v4153, %v4502
    %v4504 = vlaneseq
    %v4505 = vshrl.u32 %v4504, 7
    %v4506 = vsub.s32 1, %v4505
    %v4507 = vrot.slane %v4153, %v4506
    %v4508 = vlaneseq
    %v4509 = vshrl.u32 %v4508, 7
    %v4510 = vsub.s32 2, %v4509
    %v4511 = vrot.slane %v4153, %v4510
    %v4512 = vlaneseq
    %v4513 = vshrl.u32 %v4512, 7
    %v4514 = vsub.s32 3, %v4513
    %v4515 = vrot.slane %v4153, %v4514
    %4520 = vmatprep.subr.bf16.mxu0 %v4372
    %4521 = vmatpush1.bf16.msra.mxu0 %v4371
    %4522 = vmatprep.subr.bf16.mxu0 %v4376
    %4523 = vmatpush1.bf16.msra.mxu0 %v4375
    %4524 = vmatprep.subr.bf16.mxu0 %v4380
    %4525 = vmatpush1.bf16.msra.mxu0 %v4379
    %4526 = vmatprep.subr.bf16.mxu0 %v4384
    %4527 = vmatpush1.bf16.msra.mxu0 %v4383
    %4528 = vmatprep.subr.bf16.mxu0 %v4388
    %4529 = vmatpush1.bf16.msra.mxu0 %v4387
    %4530 = vmatprep.subr.bf16.mxu0 %v4392
    %4531 = vmatpush1.bf16.msra.mxu0 %v4391
    %4532 = vmatprep.subr.bf16.mxu0 %v4396
    %4533 = vmatpush1.bf16.msra.mxu0 %v4395
    %4534 = vmatprep.subr.bf16.mxu0 %v4400
    %4535 = vmatpush1.bf16.msra.mxu0 %v4399
    %4536 = vmatprep.subr.bf16.mxu0 %v4404
    %4537 = vmatpush1.bf16.msra.mxu0 %v4403
    %4538 = vmatprep.subr.bf16.mxu0 %v4408
    %4539 = vmatpush1.bf16.msra.mxu0 %v4407
    %4540 = vmatprep.subr.bf16.mxu0 %v4412
    %4541 = vmatpush1.bf16.msra.mxu0 %v4411
    %4542 = vmatprep.subr.bf16.mxu0 %v4416
    %4543 = vmatpush1.bf16.msra.mxu0 %v4415
    %4544 = vmatprep.subr.bf16.mxu0 %v4420
    %4545 = vmatpush1.bf16.msra.mxu0 %v4419
    %4546 = vmatprep.subr.bf16.mxu0 %v4424
    %4547 = vmatpush1.bf16.msra.mxu0 %v4423
    %4548 = vmatprep.subr.bf16.mxu0 %v4428
    %4549 = vmatpush1.bf16.msra.mxu0 %v4427
    %4550 = vmatprep.subr.bf16.mxu0 %v4432
    %4551 = vmatpush1.bf16.msra.mxu0 %v4431
    %4552 = vmatprep.mubr.bf16.mxu0 %v4176
    %4553 = vmatmul.mubr.bf16.gmra.mrb[0].mxu0 %v4169
    %v4554 = vpop.f32.mrb[0].mxu0
    %v4555 = vadd.f32 %v4503, %v4554
    %v4556 = vpop.f32.mrb[0].mxu0
    %v4557 = vadd.f32 %v4507, %v4556
    %v4558 = vpop.f32.mrb[0].mxu0
    %v4559 = vpop.f32.mrb[0].mxu0
    %4560 = vdwg.mxu0
    %4561 = vmatprep.subr.bf16.mxu0 %v4374
    %4562 = vmatpush1.bf16.msra.mxu0 %v4373
    %4563 = vmatprep.subr.bf16.mxu0 %v4378
    %4564 = vmatpush1.bf16.msra.mxu0 %v4377
    %4565 = vmatprep.subr.bf16.mxu0 %v4382
    %4566 = vmatpush1.bf16.msra.mxu0 %v4381
    %4567 = vmatprep.subr.bf16.mxu0 %v4386
    %4568 = vmatpush1.bf16.msra.mxu0 %v4385
    %4569 = vmatprep.subr.bf16.mxu0 %v4390
    %4570 = vmatpush1.bf16.msra.mxu0 %v4389
    %4571 = vmatprep.subr.bf16.mxu0 %v4394
    %4572 = vmatpush1.bf16.msra.mxu0 %v4393
    %4573 = vmatprep.subr.bf16.mxu0 %v4398
    %4574 = vmatpush1.bf16.msra.mxu0 %v4397
    %4575 = vmatprep.subr.bf16.mxu0 %v4402
    %4576 = vmatpush1.bf16.msra.mxu0 %v4401
    %4577 = vmatprep.subr.bf16.mxu0 %v4406
    %4578 = vmatpush1.bf16.msra.mxu0 %v4405
    %4579 = vmatprep.subr.bf16.mxu0 %v4410
    %4580 = vmatpush1.bf16.msra.mxu0 %v4409
    %4581 = vmatprep.subr.bf16.mxu0 %v4414
    %4582 = vmatpush1.bf16.msra.mxu0 %v4413
    %4583 = vmatprep.subr.bf16.mxu0 %v4418
    %4584 = vmatpush1.bf16.msra.mxu0 %v4417
    %4585 = vmatprep.subr.bf16.mxu0 %v4422
    %4586 = vmatpush1.bf16.msra.mxu0 %v4421
    %4587 = vmatprep.subr.bf16.mxu0 %v4426
    %4588 = vmatpush1.bf16.msra.mxu0 %v4425
    %4589 = vmatprep.subr.bf16.mxu0 %v4430
    %4590 = vmatpush1.bf16.msra.mxu0 %v4429
    %4591 = vmatprep.subr.bf16.mxu0 %v4434
    %4592 = vmatpush1.bf16.msra.mxu0 %v4433
    %4593 = vmatprep.mubr.bf16.mxu0 %v4176
    %4594 = vmatmul.mubr.bf16.gmra.mrb[0].mxu0 %v4169
    %v4595 = vpop.f32.mrb[0].mxu0
    %v4596 = vadd.f32 %v4511, %v4595
    %v4597 = vpop.f32.mrb[0].mxu0
    %v4598 = vadd.f32 %v4515, %v4597
    %v4599 = vpop.f32.mrb[0].mxu0
    %v4600 = vpop.f32.mrb[0].mxu0
    %4601 = vdwg.mxu0
    %v4602 = vxor.u32 %v4555, 2147483648
    %v4603 = vxor.u32 %v4557, 2147483648
    %v4604 = vxor.u32 %v4596, 2147483648
    %v4605 = vmul.f32 %v4602, 1.442695
    %v4606 = vpow.pop %v4605
    %v4607 = vmul.f32 %v4603, 1.442695
    %v4608 = vpow.pop %v4607
    %v4609 = vmul.f32 %v4604, 1.442695
    %v4610 = vpow.pop %v4609
    %v4611 = vadd.f32 %v4606, 1.0
    %v4612 = vadd.f32 %v4608, 1.0
    %v4613 = vadd.f32 %v4610, 1.0
    %v4614 = vrcp.pop %v4611
    %v4615 = vmul.f32 1.0, %v4614
    %v4616 = vrcp.pop %v4612
    %v4617 = vmul.f32 1.0, %v4616
    %v4618 = vrcp.pop %v4613
    %v4619 = vmul.f32 1.0, %v4618
    %v4620 = vtanh.pop %v4598
    %v4621 = vmul.f32 %v4617, %v3751
    %v4622 = vmul.f32 %v4615, %v4620
    %v4623 = vadd.f32 %v4621, %v4622
    %v4624 = vtanh.pop %v4623
    %v4625 = vmul.f32 %v4619, %v4624
    %v4626 = vpack.c.bf16 %v4625, %v4625
    %v4627 = vld [vmem:[#allocation3 + $0x1] sm:$0x1]
    %v4628 = vsel %vm263, %v4626, %v4627
    %4629 = vst [vmem:[#allocation3 + $0x1] sm:$0x1] %v4628
    %s4630 = scalar_lea.vmem [#allocation2], 5
    %v4631 = vld [vmem:[%s4630] ss:$8 sm:$0xf]
    %v4632 = vld [vmem:[#allocation5] sm:$0xff]
    %v4633 = vld [vmem:[#allocation5 + $0x8] sm:$0xff]
    %v4634 = vld [vmem:[#allocation5 + $0x10] sm:$0xff]
    %v4635 = vld [vmem:[#allocation5 + $0x18] sm:$0xff]
    %v4636 = vld [vmem:[#allocation5 + $0x20] sm:$0xff]
    %v4637 = vld [vmem:[#allocation5 + $0x28] sm:$0xff]
    %v4638 = vld [vmem:[#allocation5 + $0x30] sm:$0xff]
    %v4639 = vld [vmem:[#allocation5 + $0x38] sm:$0xff]
    %v4640 = vld [vmem:[#allocation5 + $0x40] sm:$0xff]
    %v4641 = vld [vmem:[#allocation5 + $0x48] sm:$0xff]
    %v4642 = vld [vmem:[#allocation5 + $0x50] sm:$0xff]
    %v4643 = vld [vmem:[#allocation5 + $0x58] sm:$0xff]
    %v4644 = vld [vmem:[#allocation5 + $0x60] sm:$0xff]
    %v4645 = vld [vmem:[#allocation5 + $0x68] sm:$0xff]
    %v4646 = vld [vmem:[#allocation5 + $0x70] sm:$0xff]
    %v4647 = vld [vmem:[#allocation5 + $0x78] sm:$0xff]
    %v4648 = vld [vmem:[#allocation5 + $0x80] sm:$0xff]
    %v4649 = vld [vmem:[#allocation5 + $0x88] sm:$0xff]
    %v4650 = vld [vmem:[#allocation5 + $0x90] sm:$0xff]
    %v4651 = vld [vmem:[#allocation5 + $0x98] sm:$0xff]
    %v4652 = vld [vmem:[#allocation5 + $0xa0] sm:$0xff]
    %v4653 = vld [vmem:[#allocation5 + $0xa8] sm:$0xff]
    %v4654 = vld [vmem:[#allocation5 + $0xb0] sm:$0xff]
    %v4655 = vld [vmem:[#allocation5 + $0xb8] sm:$0xff]
    %v4656 = vld [vmem:[#allocation5 + $0xc0] sm:$0xff]
    %v4657 = vld [vmem:[#allocation5 + $0xc8] sm:$0xff]
    %v4658 = vld [vmem:[#allocation5 + $0xd0] sm:$0xff]
    %v4659 = vld [vmem:[#allocation5 + $0xd8] sm:$0xff]
    %v4660 = vld [vmem:[#allocation5 + $0xe0] sm:$0xff]
    %v4661 = vld [vmem:[#allocation5 + $0xe8] sm:$0xff]
    %v4662 = vld [vmem:[#allocation5 + $0xf0] sm:$0xff]
    %v4663 = vld [vmem:[#allocation5 + $0xf8] sm:$0xff]
    %v4696 = vunpack.c.l.b16 %v4632
    %v4697 = vunpack.c.h.b16 %v4632
    %v4698 = vunpack.c.l.b16 %v4633
    %v4699 = vunpack.c.h.b16 %v4633
    %v4700 = vunpack.c.l.b16 %v4634
    %v4701 = vunpack.c.h.b16 %v4634
    %v4702 = vunpack.c.l.b16 %v4635
    %v4703 = vunpack.c.h.b16 %v4635
    %v4704 = vunpack.c.l.b16 %v4636
    %v4705 = vunpack.c.h.b16 %v4636
    %v4706 = vunpack.c.l.b16 %v4637
    %v4707 = vunpack.c.h.b16 %v4637
    %v4708 = vunpack.c.l.b16 %v4638
    %v4709 = vunpack.c.h.b16 %v4638
    %v4710 = vunpack.c.l.b16 %v4639
    %v4711 = vunpack.c.h.b16 %v4639
    %v4712 = vunpack.c.l.b16 %v4640
    %v4713 = vunpack.c.h.b16 %v4640
    %v4714 = vunpack.c.l.b16 %v4641
    %v4715 = vunpack.c.h.b16 %v4641
    %v4716 = vunpack.c.l.b16 %v4642
    %v4717 = vunpack.c.h.b16 %v4642
    %v4718 = vunpack.c.l.b16 %v4643
    %v4719 = vunpack.c.h.b16 %v4643
    %v4720 = vunpack.c.l.b16 %v4644
    %v4721 = vunpack.c.h.b16 %v4644
    %v4722 = vunpack.c.l.b16 %v4645
    %v4723 = vunpack.c.h.b16 %v4645
    %v4724 = vunpack.c.l.b16 %v4646
    %v4725 = vunpack.c.h.b16 %v4646
    %v4726 = vunpack.c.l.b16 %v4647
    %v4727 = vunpack.c.h.b16 %v4647
    %v4728 = vunpack.c.l.b16 %v4648
    %v4729 = vunpack.c.h.b16 %v4648
    %v4730 = vunpack.c.l.b16 %v4649
    %v4731 = vunpack.c.h.b16 %v4649
    %v4732 = vunpack.c.l.b16 %v4650
    %v4733 = vunpack.c.h.b16 %v4650
    %v4734 = vunpack.c.l.b16 %v4651
    %v4735 = vunpack.c.h.b16 %v4651
    %v4736 = vunpack.c.l.b16 %v4652
    %v4737 = vunpack.c.h.b16 %v4652
    %v4738 = vunpack.c.l.b16 %v4653
    %v4739 = vunpack.c.h.b16 %v4653
    %v4740 = vunpack.c.l.b16 %v4654
    %v4741 = vunpack.c.h.b16 %v4654
    %v4742 = vunpack.c.l.b16 %v4655
    %v4743 = vunpack.c.h.b16 %v4655
    %v4744 = vunpack.c.l.b16 %v4656
    %v4745 = vunpack.c.h.b16 %v4656
    %v4746 = vunpack.c.l.b16 %v4657
    %v4747 = vunpack.c.h.b16 %v4657
    %v4748 = vunpack.c.l.b16 %v4658
    %v4749 = vunpack.c.h.b16 %v4658
    %v4750 = vunpack.c.l.b16 %v4659
    %v4751 = vunpack.c.h.b16 %v4659
    %v4752 = vunpack.c.l.b16 %v4660
    %v4753 = vunpack.c.h.b16 %v4660
    %v4754 = vunpack.c.l.b16 %v4661
    %v4755 = vunpack.c.h.b16 %v4661
    %v4756 = vunpack.c.l.b16 %v4662
    %v4757 = vunpack.c.h.b16 %v4662
    %v4758 = vunpack.c.l.b16 %v4663
    %v4759 = vunpack.c.h.b16 %v4663
    %v4760 = vpack.c.b16 %v4700, %v4696
    %v4761 = vpack.c.b16 %v4701, %v4697
    %v4762 = vpack.c.b16 %v4702, %v4698
    %v4763 = vpack.c.b16 %v4703, %v4699
    %v4764 = vpack.c.b16 %v4708, %v4704
    %v4765 = vpack.c.b16 %v4709, %v4705
    %v4766 = vpack.c.b16 %v4710, %v4706
    %v4767 = vpack.c.b16 %v4711, %v4707
    %v4768 = vpack.c.b16 %v4716, %v4712
    %v4769 = vpack.c.b16 %v4717, %v4713
    %v4770 = vpack.c.b16 %v4718, %v4714
    %v4771 = vpack.c.b16 %v4719, %v4715
    %v4772 = vpack.c.b16 %v4724, %v4720
    %v4773 = vpack.c.b16 %v4725, %v4721
    %v4774 = vpack.c.b16 %v4726, %v4722
    %v4775 = vpack.c.b16 %v4727, %v4723
    %v4776 = vpack.c.b16 %v4732, %v4728
    %v4777 = vpack.c.b16 %v4733, %v4729
    %v4778 = vpack.c.b16 %v4734, %v4730
    %v4779 = vpack.c.b16 %v4735, %v4731
    %v4780 = vpack.c.b16 %v4740, %v4736
    %v4781 = vpack.c.b16 %v4741, %v4737
    %v4782 = vpack.c.b16 %v4742, %v4738
    %v4783 = vpack.c.b16 %v4743, %v4739
    %v4784 = vpack.c.b16 %v4748, %v4744
    %v4785 = vpack.c.b16 %v4749, %v4745
    %v4786 = vpack.c.b16 %v4750, %v4746
    %v4787 = vpack.c.b16 %v4751, %v4747
    %v4788 = vpack.c.b16 %v4756, %v4752
    %v4789 = vpack.c.b16 %v4757, %v4753
    %v4790 = vpack.c.b16 %v4758, %v4754
    %v4791 = vpack.c.b16 %v4759, %v4755
    %4824 = vmatprep.subr.bf16.mxu0 %v4761
    %4825 = vmatpush1.bf16.msra.mxu0 %v4760
    %4826 = vmatprep.subr.bf16.mxu0 %v4765
    %4827 = vmatpush1.bf16.msra.mxu0 %v4764
    %4828 = vmatprep.subr.bf16.mxu0 %v4769
    %4829 = vmatpush1.bf16.msra.mxu0 %v4768
    %4830 = vmatprep.subr.bf16.mxu0 %v4773
    %4831 = vmatpush1.bf16.msra.mxu0 %v4772
    %4832 = vmatprep.subr.bf16.mxu0 %v4777
    %4833 = vmatpush1.bf16.msra.mxu0 %v4776
    %4834 = vmatprep.subr.bf16.mxu0 %v4781
    %4835 = vmatpush1.bf16.msra.mxu0 %v4780
    %4836 = vmatprep.subr.bf16.mxu0 %v4785
    %4837 = vmatpush1.bf16.msra.mxu0 %v4784
    %4838 = vmatprep.subr.bf16.mxu0 %v4789
    %4839 = vmatpush1.bf16.msra.mxu0 %v4788
    %4840 = vmatprep.subr.bf16.mxu0 0
    %4841 = vmatpush1.bf16.msra.mxu0 0
    %4842 = vmatprep.subr.bf16.mxu0 0
    %4843 = vmatpush1.bf16.msra.mxu0 0
    %4844 = vmatprep.subr.bf16.mxu0 0
    %4845 = vmatpush1.bf16.msra.mxu0 0
    %4846 = vmatprep.subr.bf16.mxu0 0
    %4847 = vmatpush1.bf16.msra.mxu0 0
    %4848 = vmatprep.subr.bf16.mxu0 0
    %4849 = vmatpush1.bf16.msra.mxu0 0
    %4850 = vmatprep.subr.bf16.mxu0 0
    %4851 = vmatpush1.bf16.msra.mxu0 0
    %4852 = vmatprep.subr.bf16.mxu0 0
    %4853 = vmatpush1.bf16.msra.mxu0 0
    %4854 = vmatprep.subr.bf16.mxu0 0
    %4855 = vmatpush1.bf16.msra.mxu0 0
    %4856 = vmatprep.mubr.bf16.mxu0 0
    %4857 = vmatmul.mubr.bf16.gmra.mrb[0].mxu0 %v4084
    %v4858 = vpop.f32.mrb[0].mxu0
    %v4859 = vadd.f32 0.0, %v4858
    %v4860 = vpop.f32.mrb[0].mxu0
    %v4861 = vadd.f32 0.0, %v4860
    %v4862 = vpop.f32.mrb[0].mxu0
    %v4863 = vpop.f32.mrb[0].mxu0
    %4864 = vdwg.mxu0
    %4865 = vmatprep.subr.bf16.mxu0 %v4763
    %4866 = vmatpush1.bf16.msra.mxu0 %v4762
    %4867 = vmatprep.subr.bf16.mxu0 %v4767
    %4868 = vmatpush1.bf16.msra.mxu0 %v4766
    %4869 = vmatprep.subr.bf16.mxu0 %v4771
    %4870 = vmatpush1.bf16.msra.mxu0 %v4770
    %4871 = vmatprep.subr.bf16.mxu0 %v4775
    %4872 = vmatpush1.bf16.msra.mxu0 %v4774
    %4873 = vmatprep.subr.bf16.mxu0 %v4779
    %4874 = vmatpush1.bf16.msra.mxu0 %v4778
    %4875 = vmatprep.subr.bf16.mxu0 %v4783
    %4876 = vmatpush1.bf16.msra.mxu0 %v4782
    %4877 = vmatprep.subr.bf16.mxu0 %v4787
    %4878 = vmatpush1.bf16.msra.mxu0 %v4786
    %4879 = vmatprep.subr.bf16.mxu0 %v4791
    %4880 = vmatpush1.bf16.msra.mxu0 %v4790
    %4881 = vmatprep.subr.bf16.mxu0 0
    %4882 = vmatpush1.bf16.msra.mxu0 0
    %4883 = vmatprep.subr.bf16.mxu0 0
    %4884 = vmatpush1.bf16.msra.mxu0 0
    %4885 = vmatprep.subr.bf16.mxu0 0
    %4886 = vmatpush1.bf16.msra.mxu0 0
    %4887 = vmatprep.subr.bf16.mxu0 0
    %4888 = vmatpush1.bf16.msra.mxu0 0
    %4889 = vmatprep.subr.bf16.mxu0 0
    %4890 = vmatpush1.bf16.msra.mxu0 0
    %4891 = vmatprep.subr.bf16.mxu0 0
    %4892 = vmatpush1.bf16.msra.mxu0 0
    %4893 = vmatprep.subr.bf16.mxu0 0
    %4894 = vmatpush1.bf16.msra.mxu0 0
    %4895 = vmatprep.subr.bf16.mxu0 0
    %4896 = vmatpush1.bf16.msra.mxu0 0
    %4897 = vmatprep.mubr.bf16.mxu0 0
    %4898 = vmatmul.mubr.bf16.gmra.mrb[0].mxu0 %v4084
    %v4899 = vpop.f32.mrb[0].mxu0
    %v4900 = vadd.f32 0.0, %v4899
    %v4901 = vpop.f32.mrb[0].mxu0
    %v4902 = vadd.f32 0.0, %v4901
    %v4903 = vpop.f32.mrb[0].mxu0
    %v4904 = vpop.f32.mrb[0].mxu0
    %4905 = vdwg.mxu0
    %v4910 = vcombine.low %v4859, %v4861
    %v4911 = vcombine.low %v4900, %v4902
    %v4913 = vunpack.c.l.s4 1966171168
    %v4914 = vunpack.c.0.s8 %v4913
    %v4915 = vlaneseq
    %v4916 = vshrl.u32 %v4915, 7
    %v4917 = vsub.s32 %v4914, %v4916
    %v4918 = vrot.slane %v4910, %v4917
    %v4920 = vunpack.c.l.s4 1966171168
    %v4921 = vunpack.c.0.s8 %v4920
    %v4922 = vlaneseq
    %v4923 = vshrl.u32 %v4922, 7
    %v4924 = vsub.s32 %v4921, %v4923
    %v4925 = vrot.slane %v4911, %v4924
    %v4926 = vcombine.low %v4918, %v4925
    %v4928 = vunpack.c.l.s4 1966171168
    %v4929 = vunpack.c.0.s8 %v4928
    %v4930 = vlaneseq
    %v4931 = vshrl.u32 %v4930, 7
    %v4932 = vsub.s32 %v4929, %v4931
    %v4933 = vrot.slane %v4926, %v4932
    %v4935 = vadd.f32 %v4631, %v4933
    %v4936 = vxor.u32 %v4935, 2147483648
    %v4937 = vmul.f32 %v4936, 1.442695
    %v4938 = vpow.pop %v4937
    %v4939 = vadd.f32 %v4938, 1.0
    %v4940 = vrcp.pop %v4939
    %v4941 = vmul.f32 1.0, %v4940
    %v4943 = vrot.slane %v4935, 3
    %v4945 = vtanh.pop %v4943
    %v4947 = vrot.slane %v4941, 1
    %v4949 = vmul.f32 %v4947, %v4079
    %v4950 = vmul.f32 %v4941, %v4945
    %v4951 = vadd.f32 %v4949, %v4950
    %v4952 = vtanh.pop %v4951
    %v4953 = vrot.slane %v4941, 2
    %v4955 = vmul.f32 %v4953, %v4952
    %v4956 = vpack.c.bf16 %v4955, %v4955
    %v4957 = vld [vmem:[#allocation3] sm:$0x1]
    %v4958 = vsel %vm263, %v4956, %v4957
    %4959 = vst [vmem:[#allocation3] sm:$0x1] %v4958
    %v4960 = vld [vmem:[#allocation3] sm:$0x3]
    %v4961 = vld [vmem:[#allocation8] sm:$0xff]
    %v4962 = vld [vmem:[#allocation8 + $0x8] sm:$0xff]
    %v4963 = vld [vmem:[#allocation8 + $0x10] sm:$0xff]
    %v4964 = vld [vmem:[#allocation8 + $0x18] sm:$0xff]
    %v4965 = vld [vmem:[#allocation8 + $0x20] sm:$0xff]
    %v4966 = vld [vmem:[#allocation8 + $0x28] sm:$0xff]
    %v4967 = vld [vmem:[#allocation8 + $0x30] sm:$0xff]
    %v4968 = vld [vmem:[#allocation8 + $0x38] sm:$0xff]
    %v4969 = vld [vmem:[#allocation8 + $0x40] sm:$0xff]
    %v4970 = vld [vmem:[#allocation8 + $0x48] sm:$0xff]
    %v4971 = vld [vmem:[#allocation8 + $0x50] sm:$0xff]
    %v4972 = vld [vmem:[#allocation8 + $0x58] sm:$0xff]
    %v4973 = vld [vmem:[#allocation8 + $0x60] sm:$0xff]
    %v4974 = vld [vmem:[#allocation8 + $0x68] sm:$0xff]
    %v4975 = vld [vmem:[#allocation8 + $0x70] sm:$0xff]
    %v4976 = vld [vmem:[#allocation8 + $0x78] sm:$0xff]
    %v4977 = vld [vmem:[#allocation8 + $0x80] sm:$0xff]
    %v4978 = vld [vmem:[#allocation8 + $0x88] sm:$0xff]
    %v4979 = vld [vmem:[#allocation8 + $0x90] sm:$0xff]
    %v4980 = vld [vmem:[#allocation8 + $0x98] sm:$0xff]
    %v4981 = vld [vmem:[#allocation8 + $0xa0] sm:$0xff]
    %v4982 = vld [vmem:[#allocation8 + $0xa8] sm:$0xff]
    %v4983 = vld [vmem:[#allocation8 + $0xb0] sm:$0xff]
    %v4984 = vld [vmem:[#allocation8 + $0xb8] sm:$0xff]
    %v4985 = vld [vmem:[#allocation8 + $0xc0] sm:$0xff]
    %v4986 = vld [vmem:[#allocation8 + $0xc8] sm:$0xff]
    %v4987 = vld [vmem:[#allocation8 + $0xd0] sm:$0xff]
    %v4988 = vld [vmem:[#allocation8 + $0xd8] sm:$0xff]
    %v4989 = vld [vmem:[#allocation8 + $0xe0] sm:$0xff]
    %v4990 = vld [vmem:[#allocation8 + $0xe8] sm:$0xff]
    %v4991 = vld [vmem:[#allocation8 + $0xf0] sm:$0xff]
    %v4992 = vld [vmem:[#allocation8 + $0xf8] sm:$0xff]
    %v4993 = vld [vmem:[#allocation8 + $0x100] sm:$0xff]
    %v4994 = vld [vmem:[#allocation8 + $0x108] sm:$0xff]
    %v4995 = vld [vmem:[#allocation8 + $0x110] sm:$0xff]
    %v4996 = vld [vmem:[#allocation8 + $0x118] sm:$0xff]
    %v4997 = vld [vmem:[#allocation8 + $0x120] sm:$0xff]
    %v4998 = vld [vmem:[#allocation8 + $0x128] sm:$0xff]
    %v4999 = vld [vmem:[#allocation8 + $0x130] sm:$0xff]
    %v5000 = vld [vmem:[#allocation8 + $0x138] sm:$0xff]
    %v5001 = vld [vmem:[#allocation8 + $0x140] sm:$0xff]
    %v5002 = vld [vmem:[#allocation8 + $0x148] sm:$0xff]
    %v5003 = vld [vmem:[#allocation8 + $0x150] sm:$0xff]
    %v5004 = vld [vmem:[#allocation8 + $0x158] sm:$0xff]
    %v5005 = vld [vmem:[#allocation8 + $0x160] sm:$0xff]
    %v5006 = vld [vmem:[#allocation8 + $0x168] sm:$0xff]
    %v5007 = vld [vmem:[#allocation8 + $0x170] sm:$0xff]
    %v5008 = vld [vmem:[#allocation8 + $0x178] sm:$0xff]
    %v5009 = vld [vmem:[#allocation8 + $0x180] sm:$0xff]
    %v5010 = vld [vmem:[#allocation8 + $0x188] sm:$0xff]
    %v5011 = vld [vmem:[#allocation8 + $0x190] sm:$0xff]
    %v5012 = vld [vmem:[#allocation8 + $0x198] sm:$0xff]
    %v5013 = vld [vmem:[#allocation8 + $0x1a0] sm:$0xff]
    %v5014 = vld [vmem:[#allocation8 + $0x1a8] sm:$0xff]
    %v5015 = vld [vmem:[#allocation8 + $0x1b0] sm:$0xff]
    %v5016 = vld [vmem:[#allocation8 + $0x1b8] sm:$0xff]
    %v5017 = vld [vmem:[#allocation8 + $0x1c0] sm:$0xff]
    %v5018 = vld [vmem:[#allocation8 + $0x1c8] sm:$0xff]
    %v5019 = vld [vmem:[#allocation8 + $0x1d0] sm:$0xff]
    %v5020 = vld [vmem:[#allocation8 + $0x1d8] sm:$0xff]
    %v5021 = vld [vmem:[#allocation8 + $0x1e0] sm:$0xff]
    %v5022 = vld [vmem:[#allocation8 + $0x1e8] sm:$0xff]
    %v5023 = vld [vmem:[#allocation8 + $0x1f0] sm:$0xff]
    %v5024 = vld [vmem:[#allocation8 + $0x1f8] sm:$0xff]
    %v5025 = vld [vmem:[%s5] sm:$0xf]
    %v5028 = vunpack.c.l.s4 1966171168
    %v5029 = vunpack.c.0.s8 %v5028
    %v5030 = vlaneseq
    %v5031 = vshrl.u32 %v5030, 7
    %v5032 = vsub.s32 %v5029, %v5031
    %v5033 = vrot.slane %v4960, %v5032
    %v5034 = vcombine.high %v5033, %v5033
    %v5036 = vunpack.c.l.s4 1966171168
    %v5037 = vunpack.c.0.s8 %v5036
    %v5038 = vlaneseq
    %v5039 = vshrl.u32 %v5038, 7
    %v5040 = vsub.s32 %v5037, %v5039
    %v5041 = vrot.slane %v5033, %v5040
    %v5043 = vunpack.c.l.s4 1966171168
    %v5044 = vunpack.c.0.s8 %v5043
    %v5045 = vlaneseq
    %v5046 = vshrl.u32 %v5045, 7
    %v5047 = vsub.s32 %v5044, %v5046
    %v5048 = vrot.slane %v5034, %v5047
    %v5115 = vunpack.c.l.b16 %v4961
    %v5116 = vunpack.c.h.b16 %v4961
    %v5117 = vunpack.c.l.b16 %v4962
    %v5118 = vunpack.c.h.b16 %v4962
    %v5119 = vunpack.c.l.b16 %v4963
    %v5120 = vunpack.c.h.b16 %v4963
    %v5121 = vunpack.c.l.b16 %v4964
    %v5122 = vunpack.c.h.b16 %v4964
    %v5123 = vunpack.c.l.b16 %v4965
    %v5124 = vunpack.c.h.b16 %v4965
    %v5125 = vunpack.c.l.b16 %v4966
    %v5126 = vunpack.c.h.b16 %v4966
    %v5127 = vunpack.c.l.b16 %v4967
    %v5128 = vunpack.c.h.b16 %v4967
    %v5129 = vunpack.c.l.b16 %v4968
    %v5130 = vunpack.c.h.b16 %v4968
    %v5131 = vunpack.c.l.b16 %v4969
    %v5132 = vunpack.c.h.b16 %v4969
    %v5133 = vunpack.c.l.b16 %v4970
    %v5134 = vunpack.c.h.b16 %v4970
    %v5135 = vunpack.c.l.b16 %v4971
    %v5136 = vunpack.c.h.b16 %v4971
    %v5137 = vunpack.c.l.b16 %v4972
    %v5138 = vunpack.c.h.b16 %v4972
    %v5139 = vunpack.c.l.b16 %v4973
    %v5140 = vunpack.c.h.b16 %v4973
    %v5141 = vunpack.c.l.b16 %v4974
    %v5142 = vunpack.c.h.b16 %v4974
    %v5143 = vunpack.c.l.b16 %v4975
    %v5144 = vunpack.c.h.b16 %v4975
    %v5145 = vunpack.c.l.b16 %v4976
    %v5146 = vunpack.c.h.b16 %v4976
    %v5147 = vunpack.c.l.b16 %v4977
    %v5148 = vunpack.c.h.b16 %v4977
    %v5149 = vunpack.c.l.b16 %v4978
    %v5150 = vunpack.c.h.b16 %v4978
    %v5151 = vunpack.c.l.b16 %v4979
    %v5152 = vunpack.c.h.b16 %v4979
    %v5153 = vunpack.c.l.b16 %v4980
    %v5154 = vunpack.c.h.b16 %v4980
    %v5155 = vunpack.c.l.b16 %v4981
    %v5156 = vunpack.c.h.b16 %v4981
    %v5157 = vunpack.c.l.b16 %v4982
    %v5158 = vunpack.c.h.b16 %v4982
    %v5159 = vunpack.c.l.b16 %v4983
    %v5160 = vunpack.c.h.b16 %v4983
    %v5161 = vunpack.c.l.b16 %v4984
    %v5162 = vunpack.c.h.b16 %v4984
    %v5163 = vunpack.c.l.b16 %v4985
    %v5164 = vunpack.c.h.b16 %v4985
    %v5165 = vunpack.c.l.b16 %v4986
    %v5166 = vunpack.c.h.b16 %v4986
    %v5167 = vunpack.c.l.b16 %v4987
    %v5168 = vunpack.c.h.b16 %v4987
    %v5169 = vunpack.c.l.b16 %v4988
    %v5170 = vunpack.c.h.b16 %v4988
    %v5171 = vunpack.c.l.b16 %v4989
    %v5172 = vunpack.c.h.b16 %v4989
    %v5173 = vunpack.c.l.b16 %v4990
    %v5174 = vunpack.c.h.b16 %v4990
    %v5175 = vunpack.c.l.b16 %v4991
    %v5176 = vunpack.c.h.b16 %v4991
    %v5177 = vunpack.c.l.b16 %v4992
    %v5178 = vunpack.c.h.b16 %v4992
    %v5179 = vunpack.c.l.b16 %v4993
    %v5180 = vunpack.c.h.b16 %v4993
    %v5181 = vunpack.c.l.b16 %v4994
    %v5182 = vunpack.c.h.b16 %v4994
    %v5183 = vunpack.c.l.b16 %v4995
    %v5184 = vunpack.c.h.b16 %v4995
    %v5185 = vunpack.c.l.b16 %v4996
    %v5186 = vunpack.c.h.b16 %v4996
    %v5187 = vunpack.c.l.b16 %v4997
    %v5188 = vunpack.c.h.b16 %v4997
    %v5189 = vunpack.c.l.b16 %v4998
    %v5190 = vunpack.c.h.b16 %v4998
    %v5191 = vunpack.c.l.b16 %v4999
    %v5192 = vunpack.c.h.b16 %v4999
    %v5193 = vunpack.c.l.b16 %v5000
    %v5194 = vunpack.c.h.b16 %v5000
    %v5195 = vunpack.c.l.b16 %v5001
    %v5196 = vunpack.c.h.b16 %v5001
    %v5197 = vunpack.c.l.b16 %v5002
    %v5198 = vunpack.c.h.b16 %v5002
    %v5199 = vunpack.c.l.b16 %v5003
    %v5200 = vunpack.c.h.b16 %v5003
    %v5201 = vunpack.c.l.b16 %v5004
    %v5202 = vunpack.c.h.b16 %v5004
    %v5203 = vunpack.c.l.b16 %v5005
    %v5204 = vunpack.c.h.b16 %v5005
    %v5205 = vunpack.c.l.b16 %v5006
    %v5206 = vunpack.c.h.b16 %v5006
    %v5207 = vunpack.c.l.b16 %v5007
    %v5208 = vunpack.c.h.b16 %v5007
    %v5209 = vunpack.c.l.b16 %v5008
    %v5210 = vunpack.c.h.b16 %v5008
    %v5211 = vunpack.c.l.b16 %v5009
    %v5212 = vunpack.c.h.b16 %v5009
    %v5213 = vunpack.c.l.b16 %v5010
    %v5214 = vunpack.c.h.b16 %v5010
    %v5215 = vunpack.c.l.b16 %v5011
    %v5216 = vunpack.c.h.b16 %v5011
    %v5217 = vunpack.c.l.b16 %v5012
    %v5218 = vunpack.c.h.b16 %v5012
    %v5219 = vunpack.c.l.b16 %v5013
    %v5220 = vunpack.c.h.b16 %v5013
    %v5221 = vunpack.c.l.b16 %v5014
    %v5222 = vunpack.c.h.b16 %v5014
    %v5223 = vunpack.c.l.b16 %v5015
    %v5224 = vunpack.c.h.b16 %v5015
    %v5225 = vunpack.c.l.b16 %v5016
    %v5226 = vunpack.c.h.b16 %v5016
    %v5227 = vunpack.c.l.b16 %v5017
    %v5228 = vunpack.c.h.b16 %v5017
    %v5229 = vunpack.c.l.b16 %v5018
    %v5230 = vunpack.c.h.b16 %v5018
    %v5231 = vunpack.c.l.b16 %v5019
    %v5232 = vunpack.c.h.b16 %v5019
    %v5233 = vunpack.c.l.b16 %v5020
    %v5234 = vunpack.c.h.b16 %v5020
    %v5235 = vunpack.c.l.b16 %v5021
    %v5236 = vunpack.c.h.b16 %v5021
    %v5237 = vunpack.c.l.b16 %v5022
    %v5238 = vunpack.c.h.b16 %v5022
    %v5239 = vunpack.c.l.b16 %v5023
    %v5240 = vunpack.c.h.b16 %v5023
    %v5241 = vunpack.c.l.b16 %v5024
    %v5242 = vunpack.c.h.b16 %v5024
    %v5243 = vpack.c.b16 %v5119, %v5115
    %v5244 = vpack.c.b16 %v5120, %v5116
    %v5245 = vpack.c.b16 %v5121, %v5117
    %v5246 = vpack.c.b16 %v5122, %v5118
    %v5247 = vpack.c.b16 %v5127, %v5123
    %v5248 = vpack.c.b16 %v5128, %v5124
    %v5249 = vpack.c.b16 %v5129, %v5125
    %v5250 = vpack.c.b16 %v5130, %v5126
    %v5251 = vpack.c.b16 %v5135, %v5131
    %v5252 = vpack.c.b16 %v5136, %v5132
    %v5253 = vpack.c.b16 %v5137, %v5133
    %v5254 = vpack.c.b16 %v5138, %v5134
    %v5255 = vpack.c.b16 %v5143, %v5139
    %v5256 = vpack.c.b16 %v5144, %v5140
    %v5257 = vpack.c.b16 %v5145, %v5141
    %v5258 = vpack.c.b16 %v5146, %v5142
    %v5259 = vpack.c.b16 %v5151, %v5147
    %v5260 = vpack.c.b16 %v5152, %v5148
    %v5261 = vpack.c.b16 %v5153, %v5149
    %v5262 = vpack.c.b16 %v5154, %v5150
    %v5263 = vpack.c.b16 %v5159, %v5155
    %v5264 = vpack.c.b16 %v5160, %v5156
    %v5265 = vpack.c.b16 %v5161, %v5157
    %v5266 = vpack.c.b16 %v5162, %v5158
    %v5267 = vpack.c.b16 %v5167, %v5163
    %v5268 = vpack.c.b16 %v5168, %v5164
    %v5269 = vpack.c.b16 %v5169, %v5165
    %v5270 = vpack.c.b16 %v5170, %v5166
    %v5271 = vpack.c.b16 %v5175, %v5171
    %v5272 = vpack.c.b16 %v5176, %v5172
    %v5273 = vpack.c.b16 %v5177, %v5173
    %v5274 = vpack.c.b16 %v5178, %v5174
    %v5275 = vpack.c.b16 %v5183, %v5179
    %v5276 = vpack.c.b16 %v5184, %v5180
    %v5277 = vpack.c.b16 %v5185, %v5181
    %v5278 = vpack.c.b16 %v5186, %v5182
    %v5279 = vpack.c.b16 %v5191, %v5187
    %v5280 = vpack.c.b16 %v5192, %v5188
    %v5281 = vpack.c.b16 %v5193, %v5189
    %v5282 = vpack.c.b16 %v5194, %v5190
    %v5283 = vpack.c.b16 %v5199, %v5195
    %v5284 = vpack.c.b16 %v5200, %v5196
    %v5285 = vpack.c.b16 %v5201, %v5197
    %v5286 = vpack.c.b16 %v5202, %v5198
    %v5287 = vpack.c.b16 %v5207, %v5203
    %v5288 = vpack.c.b16 %v5208, %v5204
    %v5289 = vpack.c.b16 %v5209, %v5205
    %v5290 = vpack.c.b16 %v5210, %v5206
    %v5291 = vpack.c.b16 %v5215, %v5211
    %v5292 = vpack.c.b16 %v5216, %v5212
    %v5293 = vpack.c.b16 %v5217, %v5213
    %v5294 = vpack.c.b16 %v5218, %v5214
    %v5295 = vpack.c.b16 %v5223, %v5219
    %v5296 = vpack.c.b16 %v5224, %v5220
    %v5297 = vpack.c.b16 %v5225, %v5221
    %v5298 = vpack.c.b16 %v5226, %v5222
    %v5299 = vpack.c.b16 %v5231, %v5227
    %v5300 = vpack.c.b16 %v5232, %v5228
    %v5301 = vpack.c.b16 %v5233, %v5229
    %v5302 = vpack.c.b16 %v5234, %v5230
    %v5303 = vpack.c.b16 %v5239, %v5235
    %v5304 = vpack.c.b16 %v5240, %v5236
    %v5305 = vpack.c.b16 %v5241, %v5237
    %v5306 = vpack.c.b16 %v5242, %v5238
    %v5372 = vlaneseq
    %v5373 = vshrl.u32 %v5372, 7
    %v5374 = vsub.s32 0, %v5373
    %v5375 = vrot.slane %v5025, %v5374
    %v5376 = vlaneseq
    %v5377 = vshrl.u32 %v5376, 7
    %v5378 = vsub.s32 1, %v5377
    %v5379 = vrot.slane %v5025, %v5378
    %v5380 = vlaneseq
    %v5381 = vshrl.u32 %v5380, 7
    %v5382 = vsub.s32 2, %v5381
    %v5383 = vrot.slane %v5025, %v5382
    %v5384 = vlaneseq
    %v5385 = vshrl.u32 %v5384, 7
    %v5386 = vsub.s32 3, %v5385
    %v5387 = vrot.slane %v5025, %v5386
    %5392 = vmatprep.subr.bf16.mxu0 %v5244
    %5393 = vmatpush1.bf16.msra.mxu0 %v5243
    %5394 = vmatprep.subr.bf16.mxu0 %v5248
    %5395 = vmatpush1.bf16.msra.mxu0 %v5247
    %5396 = vmatprep.subr.bf16.mxu0 %v5252
    %5397 = vmatpush1.bf16.msra.mxu0 %v5251
    %5398 = vmatprep.subr.bf16.mxu0 %v5256
    %5399 = vmatpush1.bf16.msra.mxu0 %v5255
    %5400 = vmatprep.subr.bf16.mxu0 %v5260
    %5401 = vmatpush1.bf16.msra.mxu0 %v5259
    %5402 = vmatprep.subr.bf16.mxu0 %v5264
    %5403 = vmatpush1.bf16.msra.mxu0 %v5263
    %5404 = vmatprep.subr.bf16.mxu0 %v5268
    %5405 = vmatpush1.bf16.msra.mxu0 %v5267
    %5406 = vmatprep.subr.bf16.mxu0 %v5272
    %5407 = vmatpush1.bf16.msra.mxu0 %v5271
    %5408 = vmatprep.subr.bf16.mxu0 %v5276
    %5409 = vmatpush1.bf16.msra.mxu0 %v5275
    %5410 = vmatprep.subr.bf16.mxu0 %v5280
    %5411 = vmatpush1.bf16.msra.mxu0 %v5279
    %5412 = vmatprep.subr.bf16.mxu0 %v5284
    %5413 = vmatpush1.bf16.msra.mxu0 %v5283
    %5414 = vmatprep.subr.bf16.mxu0 %v5288
    %5415 = vmatpush1.bf16.msra.mxu0 %v5287
    %5416 = vmatprep.subr.bf16.mxu0 %v5292
    %5417 = vmatpush1.bf16.msra.mxu0 %v5291
    %5418 = vmatprep.subr.bf16.mxu0 %v5296
    %5419 = vmatpush1.bf16.msra.mxu0 %v5295
    %5420 = vmatprep.subr.bf16.mxu0 %v5300
    %5421 = vmatpush1.bf16.msra.mxu0 %v5299
    %5422 = vmatprep.subr.bf16.mxu0 %v5304
    %5423 = vmatpush1.bf16.msra.mxu0 %v5303
    %5424 = vmatprep.mubr.bf16.mxu0 %v5048
    %5425 = vmatmul.mubr.bf16.gmra.mrb[0].mxu0 %v5041
    %v5426 = vpop.f32.mrb[0].mxu0
    %v5427 = vadd.f32 %v5375, %v5426
    %v5428 = vpop.f32.mrb[0].mxu0
    %v5429 = vadd.f32 %v5379, %v5428
    %v5430 = vpop.f32.mrb[0].mxu0
    %v5431 = vpop.f32.mrb[0].mxu0
    %5432 = vdwg.mxu0
    %5433 = vmatprep.subr.bf16.mxu0 %v5246
    %5434 = vmatpush1.bf16.msra.mxu0 %v5245
    %5435 = vmatprep.subr.bf16.mxu0 %v5250
    %5436 = vmatpush1.bf16.msra.mxu0 %v5249
    %5437 = vmatprep.subr.bf16.mxu0 %v5254
    %5438 = vmatpush1.bf16.msra.mxu0 %v5253
    %5439 = vmatprep.subr.bf16.mxu0 %v5258
    %5440 = vmatpush1.bf16.msra.mxu0 %v5257
    %5441 = vmatprep.subr.bf16.mxu0 %v5262
    %5442 = vmatpush1.bf16.msra.mxu0 %v5261
    %5443 = vmatprep.subr.bf16.mxu0 %v5266
    %5444 = vmatpush1.bf16.msra.mxu0 %v5265
    %5445 = vmatprep.subr.bf16.mxu0 %v5270
    %5446 = vmatpush1.bf16.msra.mxu0 %v5269
    %5447 = vmatprep.subr.bf16.mxu0 %v5274
    %5448 = vmatpush1.bf16.msra.mxu0 %v5273
    %5449 = vmatprep.subr.bf16.mxu0 %v5278
    %5450 = vmatpush1.bf16.msra.mxu0 %v5277
    %5451 = vmatprep.subr.bf16.mxu0 %v5282
    %5452 = vmatpush1.bf16.msra.mxu0 %v5281
    %5453 = vmatprep.subr.bf16.mxu0 %v5286
    %5454 = vmatpush1.bf16.msra.mxu0 %v5285
    %5455 = vmatprep.subr.bf16.mxu0 %v5290
    %5456 = vmatpush1.bf16.msra.mxu0 %v5289
    %5457 = vmatprep.subr.bf16.mxu0 %v5294
    %5458 = vmatpush1.bf16.msra.mxu0 %v5293
    %5459 = vmatprep.subr.bf16.mxu0 %v5298
    %5460 = vmatpush1.bf16.msra.mxu0 %v5297
    %5461 = vmatprep.subr.bf16.mxu0 %v5302
    %5462 = vmatpush1.bf16.msra.mxu0 %v5301
    %5463 = vmatprep.subr.bf16.mxu0 %v5306
    %5464 = vmatpush1.bf16.msra.mxu0 %v5305
    %5465 = vmatprep.mubr.bf16.mxu0 %v5048
    %5466 = vmatmul.mubr.bf16.gmra.mrb[0].mxu0 %v5041
    %v5467 = vpop.f32.mrb[0].mxu0
    %v5468 = vadd.f32 %v5383, %v5467
    %v5469 = vpop.f32.mrb[0].mxu0
    %v5470 = vadd.f32 %v5387, %v5469
    %v5471 = vpop.f32.mrb[0].mxu0
    %v5472 = vpop.f32.mrb[0].mxu0
    %5473 = vdwg.mxu0
    %v5474 = vxor.u32 %v5427, 2147483648
    %v5475 = vxor.u32 %v5429, 2147483648
    %v5476 = vxor.u32 %v5468, 2147483648
    %v5477 = vmul.f32 %v5474, 1.442695
    %v5478 = vpow.pop %v5477
    %v5479 = vmul.f32 %v5475, 1.442695
    %v5480 = vpow.pop %v5479
    %v5481 = vmul.f32 %v5476, 1.442695
    %v5482 = vpow.pop %v5481
    %v5483 = vadd.f32 %v5478, 1.0
    %v5484 = vadd.f32 %v5480, 1.0
    %v5485 = vadd.f32 %v5482, 1.0
    %v5486 = vrcp.pop %v5483
    %v5487 = vmul.f32 1.0, %v5486
    %v5488 = vrcp.pop %v5484
    %v5489 = vmul.f32 1.0, %v5488
    %v5490 = vrcp.pop %v5485
    %v5491 = vmul.f32 1.0, %v5490
    %v5492 = vtanh.pop %v5470
    %v5493 = vmul.f32 %v5489, %v4623
    %v5494 = vmul.f32 %v5487, %v5492
    %v5495 = vadd.f32 %v5493, %v5494
    %v5496 = vtanh.pop %v5495
    %v5497 = vmul.f32 %v5491, %v5496
    %v5498 = vpack.c.bf16 %v5497, %v5497
    %v5499 = vld [vmem:[#allocation3 + $0x1] sm:$0x1]
    %v5500 = vsel %vm263, %v5498, %v5499
    %5501 = vst [vmem:[#allocation3 + $0x1] sm:$0x1] %v5500
    %s5502 = scalar_lea.vmem [#allocation2], 6
    %v5503 = vld [vmem:[%s5502] ss:$8 sm:$0xf]
    %v5504 = vld [vmem:[#allocation5] sm:$0xff]
    %v5505 = vld [vmem:[#allocation5 + $0x8] sm:$0xff]
    %v5506 = vld [vmem:[#allocation5 + $0x10] sm:$0xff]
    %v5507 = vld [vmem:[#allocation5 + $0x18] sm:$0xff]
    %v5508 = vld [vmem:[#allocation5 + $0x20] sm:$0xff]
    %v5509 = vld [vmem:[#allocation5 + $0x28] sm:$0xff]
    %v5510 = vld [vmem:[#allocation5 + $0x30] sm:$0xff]
    %v5511 = vld [vmem:[#allocation5 + $0x38] sm:$0xff]
    %v5512 = vld [vmem:[#allocation5 + $0x40] sm:$0xff]
    %v5513 = vld [vmem:[#allocation5 + $0x48] sm:$0xff]
    %v5514 = vld [vmem:[#allocation5 + $0x50] sm:$0xff]
    %v5515 = vld [vmem:[#allocation5 + $0x58] sm:$0xff]
    %v5516 = vld [vmem:[#allocation5 + $0x60] sm:$0xff]
    %v5517 = vld [vmem:[#allocation5 + $0x68] sm:$0xff]
    %v5518 = vld [vmem:[#allocation5 + $0x70] sm:$0xff]
    %v5519 = vld [vmem:[#allocation5 + $0x78] sm:$0xff]
    %v5520 = vld [vmem:[#allocation5 + $0x80] sm:$0xff]
    %v5521 = vld [vmem:[#allocation5 + $0x88] sm:$0xff]
    %v5522 = vld [vmem:[#allocation5 + $0x90] sm:$0xff]
    %v5523 = vld [vmem:[#allocation5 + $0x98] sm:$0xff]
    %v5524 = vld [vmem:[#allocation5 + $0xa0] sm:$0xff]
    %v5525 = vld [vmem:[#allocation5 + $0xa8] sm:$0xff]
    %v5526 = vld [vmem:[#allocation5 + $0xb0] sm:$0xff]
    %v5527 = vld [vmem:[#allocation5 + $0xb8] sm:$0xff]
    %v5528 = vld [vmem:[#allocation5 + $0xc0] sm:$0xff]
    %v5529 = vld [vmem:[#allocation5 + $0xc8] sm:$0xff]
    %v5530 = vld [vmem:[#allocation5 + $0xd0] sm:$0xff]
    %v5531 = vld [vmem:[#allocation5 + $0xd8] sm:$0xff]
    %v5532 = vld [vmem:[#allocation5 + $0xe0] sm:$0xff]
    %v5533 = vld [vmem:[#allocation5 + $0xe8] sm:$0xff]
    %v5534 = vld [vmem:[#allocation5 + $0xf0] sm:$0xff]
    %v5535 = vld [vmem:[#allocation5 + $0xf8] sm:$0xff]
    %v5568 = vunpack.c.l.b16 %v5504
    %v5569 = vunpack.c.h.b16 %v5504
    %v5570 = vunpack.c.l.b16 %v5505
    %v5571 = vunpack.c.h.b16 %v5505
    %v5572 = vunpack.c.l.b16 %v5506
    %v5573 = vunpack.c.h.b16 %v5506
    %v5574 = vunpack.c.l.b16 %v5507
    %v5575 = vunpack.c.h.b16 %v5507
    %v5576 = vunpack.c.l.b16 %v5508
    %v5577 = vunpack.c.h.b16 %v5508
    %v5578 = vunpack.c.l.b16 %v5509
    %v5579 = vunpack.c.h.b16 %v5509
    %v5580 = vunpack.c.l.b16 %v5510
    %v5581 = vunpack.c.h.b16 %v5510
    %v5582 = vunpack.c.l.b16 %v5511
    %v5583 = vunpack.c.h.b16 %v5511
    %v5584 = vunpack.c.l.b16 %v5512
    %v5585 = vunpack.c.h.b16 %v5512
    %v5586 = vunpack.c.l.b16 %v5513
    %v5587 = vunpack.c.h.b16 %v5513
    %v5588 = vunpack.c.l.b16 %v5514
    %v5589 = vunpack.c.h.b16 %v5514
    %v5590 = vunpack.c.l.b16 %v5515
    %v5591 = vunpack.c.h.b16 %v5515
    %v5592 = vunpack.c.l.b16 %v5516
    %v5593 = vunpack.c.h.b16 %v5516
    %v5594 = vunpack.c.l.b16 %v5517
    %v5595 = vunpack.c.h.b16 %v5517
    %v5596 = vunpack.c.l.b16 %v5518
    %v5597 = vunpack.c.h.b16 %v5518
    %v5598 = vunpack.c.l.b16 %v5519
    %v5599 = vunpack.c.h.b16 %v5519
    %v5600 = vunpack.c.l.b16 %v5520
    %v5601 = vunpack.c.h.b16 %v5520
    %v5602 = vunpack.c.l.b16 %v5521
    %v5603 = vunpack.c.h.b16 %v5521
    %v5604 = vunpack.c.l.b16 %v5522
    %v5605 = vunpack.c.h.b16 %v5522
    %v5606 = vunpack.c.l.b16 %v5523
    %v5607 = vunpack.c.h.b16 %v5523
    %v5608 = vunpack.c.l.b16 %v5524
    %v5609 = vunpack.c.h.b16 %v5524
    %v5610 = vunpack.c.l.b16 %v5525
    %v5611 = vunpack.c.h.b16 %v5525
    %v5612 = vunpack.c.l.b16 %v5526
    %v5613 = vunpack.c.h.b16 %v5526
    %v5614 = vunpack.c.l.b16 %v5527
    %v5615 = vunpack.c.h.b16 %v5527
    %v5616 = vunpack.c.l.b16 %v5528
    %v5617 = vunpack.c.h.b16 %v5528
    %v5618 = vunpack.c.l.b16 %v5529
    %v5619 = vunpack.c.h.b16 %v5529
    %v5620 = vunpack.c.l.b16 %v5530
    %v5621 = vunpack.c.h.b16 %v5530
    %v5622 = vunpack.c.l.b16 %v5531
    %v5623 = vunpack.c.h.b16 %v5531
    %v5624 = vunpack.c.l.b16 %v5532
    %v5625 = vunpack.c.h.b16 %v5532
    %v5626 = vunpack.c.l.b16 %v5533
    %v5627 = vunpack.c.h.b16 %v5533
    %v5628 = vunpack.c.l.b16 %v5534
    %v5629 = vunpack.c.h.b16 %v5534
    %v5630 = vunpack.c.l.b16 %v5535
    %v5631 = vunpack.c.h.b16 %v5535
    %v5632 = vpack.c.b16 %v5572, %v5568
    %v5633 = vpack.c.b16 %v5573, %v5569
    %v5634 = vpack.c.b16 %v5574, %v5570
    %v5635 = vpack.c.b16 %v5575, %v5571
    %v5636 = vpack.c.b16 %v5580, %v5576
    %v5637 = vpack.c.b16 %v5581, %v5577
    %v5638 = vpack.c.b16 %v5582, %v5578
    %v5639 = vpack.c.b16 %v5583, %v5579
    %v5640 = vpack.c.b16 %v5588, %v5584
    %v5641 = vpack.c.b16 %v5589, %v5585
    %v5642 = vpack.c.b16 %v5590, %v5586
    %v5643 = vpack.c.b16 %v5591, %v5587
    %v5644 = vpack.c.b16 %v5596, %v5592
    %v5645 = vpack.c.b16 %v5597, %v5593
    %v5646 = vpack.c.b16 %v5598, %v5594
    %v5647 = vpack.c.b16 %v5599, %v5595
    %v5648 = vpack.c.b16 %v5604, %v5600
    %v5649 = vpack.c.b16 %v5605, %v5601
    %v5650 = vpack.c.b16 %v5606, %v5602
    %v5651 = vpack.c.b16 %v5607, %v5603
    %v5652 = vpack.c.b16 %v5612, %v5608
    %v5653 = vpack.c.b16 %v5613, %v5609
    %v5654 = vpack.c.b16 %v5614, %v5610
    %v5655 = vpack.c.b16 %v5615, %v5611
    %v5656 = vpack.c.b16 %v5620, %v5616
    %v5657 = vpack.c.b16 %v5621, %v5617
    %v5658 = vpack.c.b16 %v5622, %v5618
    %v5659 = vpack.c.b16 %v5623, %v5619
    %v5660 = vpack.c.b16 %v5628, %v5624
    %v5661 = vpack.c.b16 %v5629, %v5625
    %v5662 = vpack.c.b16 %v5630, %v5626
    %v5663 = vpack.c.b16 %v5631, %v5627
    %5696 = vmatprep.subr.bf16.mxu0 %v5633
    %5697 = vmatpush1.bf16.msra.mxu0 %v5632
    %5698 = vmatprep.subr.bf16.mxu0 %v5637
    %5699 = vmatpush1.bf16.msra.mxu0 %v5636
    %5700 = vmatprep.subr.bf16.mxu0 %v5641
    %5701 = vmatpush1.bf16.msra.mxu0 %v5640
    %5702 = vmatprep.subr.bf16.mxu0 %v5645
    %5703 = vmatpush1.bf16.msra.mxu0 %v5644
    %5704 = vmatprep.subr.bf16.mxu0 %v5649
    %5705 = vmatpush1.bf16.msra.mxu0 %v5648
    %5706 = vmatprep.subr.bf16.mxu0 %v5653
    %5707 = vmatpush1.bf16.msra.mxu0 %v5652
    %5708 = vmatprep.subr.bf16.mxu0 %v5657
    %5709 = vmatpush1.bf16.msra.mxu0 %v5656
    %5710 = vmatprep.subr.bf16.mxu0 %v5661
    %5711 = vmatpush1.bf16.msra.mxu0 %v5660
    %5712 = vmatprep.subr.bf16.mxu0 0
    %5713 = vmatpush1.bf16.msra.mxu0 0
    %5714 = vmatprep.subr.bf16.mxu0 0
    %5715 = vmatpush1.bf16.msra.mxu0 0
    %5716 = vmatprep.subr.bf16.mxu0 0
    %5717 = vmatpush1.bf16.msra.mxu0 0
    %5718 = vmatprep.subr.bf16.mxu0 0
    %5719 = vmatpush1.bf16.msra.mxu0 0
    %5720 = vmatprep.subr.bf16.mxu0 0
    %5721 = vmatpush1.bf16.msra.mxu0 0
    %5722 = vmatprep.subr.bf16.mxu0 0
    %5723 = vmatpush1.bf16.msra.mxu0 0
    %5724 = vmatprep.subr.bf16.mxu0 0
    %5725 = vmatpush1.bf16.msra.mxu0 0
    %5726 = vmatprep.subr.bf16.mxu0 0
    %5727 = vmatpush1.bf16.msra.mxu0 0
    %5728 = vmatprep.mubr.bf16.mxu0 0
    %5729 = vmatmul.mubr.bf16.gmra.mrb[0].mxu0 %v4956
    %v5730 = vpop.f32.mrb[0].mxu0
    %v5731 = vadd.f32 0.0, %v5730
    %v5732 = vpop.f32.mrb[0].mxu0
    %v5733 = vadd.f32 0.0, %v5732
    %v5734 = vpop.f32.mrb[0].mxu0
    %v5735 = vpop.f32.mrb[0].mxu0
    %5736 = vdwg.mxu0
    %5737 = vmatprep.subr.bf16.mxu0 %v5635
    %5738 = vmatpush1.bf16.msra.mxu0 %v5634
    %5739 = vmatprep.subr.bf16.mxu0 %v5639
    %5740 = vmatpush1.bf16.msra.mxu0 %v5638
    %5741 = vmatprep.subr.bf16.mxu0 %v5643
    %5742 = vmatpush1.bf16.msra.mxu0 %v5642
    %5743 = vmatprep.subr.bf16.mxu0 %v5647
    %5744 = vmatpush1.bf16.msra.mxu0 %v5646
    %5745 = vmatprep.subr.bf16.mxu0 %v5651
    %5746 = vmatpush1.bf16.msra.mxu0 %v5650
    %5747 = vmatprep.subr.bf16.mxu0 %v5655
    %5748 = vmatpush1.bf16.msra.mxu0 %v5654
    %5749 = vmatprep.subr.bf16.mxu0 %v5659
    %5750 = vmatpush1.bf16.msra.mxu0 %v5658
    %5751 = vmatprep.subr.bf16.mxu0 %v5663
    %5752 = vmatpush1.bf16.msra.mxu0 %v5662
    %5753 = vmatprep.subr.bf16.mxu0 0
    %5754 = vmatpush1.bf16.msra.mxu0 0
    %5755 = vmatprep.subr.bf16.mxu0 0
    %5756 = vmatpush1.bf16.msra.mxu0 0
    %5757 = vmatprep.subr.bf16.mxu0 0
    %5758 = vmatpush1.bf16.msra.mxu0 0
    %5759 = vmatprep.subr.bf16.mxu0 0
    %5760 = vmatpush1.bf16.msra.mxu0 0
    %5761 = vmatprep.subr.bf16.mxu0 0
    %5762 = vmatpush1.bf16.msra.mxu0 0
    %5763 = vmatprep.subr.bf16.mxu0 0
    %5764 = vmatpush1.bf16.msra.mxu0 0
    %5765 = vmatprep.subr.bf16.mxu0 0
    %5766 = vmatpush1.bf16.msra.mxu0 0
    %5767 = vmatprep.subr.bf16.mxu0 0
    %5768 = vmatpush1.bf16.msra.mxu0 0
    %5769 = vmatprep.mubr.bf16.mxu0 0
    %5770 = vmatmul.mubr.bf16.gmra.mrb[0].mxu0 %v4956
    %v5771 = vpop.f32.mrb[0].mxu0
    %v5772 = vadd.f32 0.0, %v5771
    %v5773 = vpop.f32.mrb[0].mxu0
    %v5774 = vadd.f32 0.0, %v5773
    %v5775 = vpop.f32.mrb[0].mxu0
    %v5776 = vpop.f32.mrb[0].mxu0
    %5777 = vdwg.mxu0
    %v5782 = vcombine.low %v5731, %v5733
    %v5783 = vcombine.low %v5772, %v5774
    %v5785 = vunpack.c.l.s4 1966171168
    %v5786 = vunpack.c.0.s8 %v5785
    %v5787 = vlaneseq
    %v5788 = vshrl.u32 %v5787, 7
    %v5789 = vsub.s32 %v5786, %v5788
    %v5790 = vrot.slane %v5782, %v5789
    %v5792 = vunpack.c.l.s4 1966171168
    %v5793 = vunpack.c.0.s8 %v5792
    %v5794 = vlaneseq
    %v5795 = vshrl.u32 %v5794, 7
    %v5796 = vsub.s32 %v5793, %v5795
    %v5797 = vrot.slane %v5783, %v5796
    %v5798 = vcombine.low %v5790, %v5797
    %v5800 = vunpack.c.l.s4 1966171168
    %v5801 = vunpack.c.0.s8 %v5800
    %v5802 = vlaneseq
    %v5803 = vshrl.u32 %v5802, 7
    %v5804 = vsub.s32 %v5801, %v5803
    %v5805 = vrot.slane %v5798, %v5804
    %v5807 = vadd.f32 %v5503, %v5805
    %v5808 = vxor.u32 %v5807, 2147483648
    %v5809 = vmul.f32 %v5808, 1.442695
    %v5810 = vpow.pop %v5809
    %v5811 = vadd.f32 %v5810, 1.0
    %v5812 = vrcp.pop %v5811
    %v5813 = vmul.f32 1.0, %v5812
    %v5815 = vrot.slane %v5807, 3
    %v5817 = vtanh.pop %v5815
    %v5819 = vrot.slane %v5813, 1
    %v5821 = vmul.f32 %v5819, %v4951
    %v5822 = vmul.f32 %v5813, %v5817
    %v5823 = vadd.f32 %v5821, %v5822
    %v5824 = vtanh.pop %v5823
    %v5825 = vrot.slane %v5813, 2
    %v5827 = vmul.f32 %v5825, %v5824
    %v5828 = vpack.c.bf16 %v5827, %v5827
    %v5829 = vld [vmem:[#allocation3] sm:$0x1]
    %v5830 = vsel %vm263, %v5828, %v5829
    %5831 = vst [vmem:[#allocation3] sm:$0x1] %v5830
    %v5832 = vld [vmem:[#allocation3] sm:$0x3]
    %v5833 = vld [vmem:[#allocation8] sm:$0xff]
    %v5834 = vld [vmem:[#allocation8 + $0x8] sm:$0xff]
    %v5835 = vld [vmem:[#allocation8 + $0x10] sm:$0xff]
    %v5836 = vld [vmem:[#allocation8 + $0x18] sm:$0xff]
    %v5837 = vld [vmem:[#allocation8 + $0x20] sm:$0xff]
    %v5838 = vld [vmem:[#allocation8 + $0x28] sm:$0xff]
    %v5839 = vld [vmem:[#allocation8 + $0x30] sm:$0xff]
    %v5840 = vld [vmem:[#allocation8 + $0x38] sm:$0xff]
    %v5841 = vld [vmem:[#allocation8 + $0x40] sm:$0xff]
    %v5842 = vld [vmem:[#allocation8 + $0x48] sm:$0xff]
    %v5843 = vld [vmem:[#allocation8 + $0x50] sm:$0xff]
    %v5844 = vld [vmem:[#allocation8 + $0x58] sm:$0xff]
    %v5845 = vld [vmem:[#allocation8 + $0x60] sm:$0xff]
    %v5846 = vld [vmem:[#allocation8 + $0x68] sm:$0xff]
    %v5847 = vld [vmem:[#allocation8 + $0x70] sm:$0xff]
    %v5848 = vld [vmem:[#allocation8 + $0x78] sm:$0xff]
    %v5849 = vld [vmem:[#allocation8 + $0x80] sm:$0xff]
    %v5850 = vld [vmem:[#allocation8 + $0x88] sm:$0xff]
    %v5851 = vld [vmem:[#allocation8 + $0x90] sm:$0xff]
    %v5852 = vld [vmem:[#allocation8 + $0x98] sm:$0xff]
    %v5853 = vld [vmem:[#allocation8 + $0xa0] sm:$0xff]
    %v5854 = vld [vmem:[#allocation8 + $0xa8] sm:$0xff]
    %v5855 = vld [vmem:[#allocation8 + $0xb0] sm:$0xff]
    %v5856 = vld [vmem:[#allocation8 + $0xb8] sm:$0xff]
    %v5857 = vld [vmem:[#allocation8 + $0xc0] sm:$0xff]
    %v5858 = vld [vmem:[#allocation8 + $0xc8] sm:$0xff]
    %v5859 = vld [vmem:[#allocation8 + $0xd0] sm:$0xff]
    %v5860 = vld [vmem:[#allocation8 + $0xd8] sm:$0xff]
    %v5861 = vld [vmem:[#allocation8 + $0xe0] sm:$0xff]
    %v5862 = vld [vmem:[#allocation8 + $0xe8] sm:$0xff]
    %v5863 = vld [vmem:[#allocation8 + $0xf0] sm:$0xff]
    %v5864 = vld [vmem:[#allocation8 + $0xf8] sm:$0xff]
    %v5865 = vld [vmem:[#allocation8 + $0x100] sm:$0xff]
    %v5866 = vld [vmem:[#allocation8 + $0x108] sm:$0xff]
    %v5867 = vld [vmem:[#allocation8 + $0x110] sm:$0xff]
    %v5868 = vld [vmem:[#allocation8 + $0x118] sm:$0xff]
    %v5869 = vld [vmem:[#allocation8 + $0x120] sm:$0xff]
    %v5870 = vld [vmem:[#allocation8 + $0x128] sm:$0xff]
    %v5871 = vld [vmem:[#allocation8 + $0x130] sm:$0xff]
    %v5872 = vld [vmem:[#allocation8 + $0x138] sm:$0xff]
    %v5873 = vld [vmem:[#allocation8 + $0x140] sm:$0xff]
    %v5874 = vld [vmem:[#allocation8 + $0x148] sm:$0xff]
    %v5875 = vld [vmem:[#allocation8 + $0x150] sm:$0xff]
    %v5876 = vld [vmem:[#allocation8 + $0x158] sm:$0xff]
    %v5877 = vld [vmem:[#allocation8 + $0x160] sm:$0xff]
    %v5878 = vld [vmem:[#allocation8 + $0x168] sm:$0xff]
    %v5879 = vld [vmem:[#allocation8 + $0x170] sm:$0xff]
    %v5880 = vld [vmem:[#allocation8 + $0x178] sm:$0xff]
    %v5881 = vld [vmem:[#allocation8 + $0x180] sm:$0xff]
    %v5882 = vld [vmem:[#allocation8 + $0x188] sm:$0xff]
    %v5883 = vld [vmem:[#allocation8 + $0x190] sm:$0xff]
    %v5884 = vld [vmem:[#allocation8 + $0x198] sm:$0xff]
    %v5885 = vld [vmem:[#allocation8 + $0x1a0] sm:$0xff]
    %v5886 = vld [vmem:[#allocation8 + $0x1a8] sm:$0xff]
    %v5887 = vld [vmem:[#allocation8 + $0x1b0] sm:$0xff]
    %v5888 = vld [vmem:[#allocation8 + $0x1b8] sm:$0xff]
    %v5889 = vld [vmem:[#allocation8 + $0x1c0] sm:$0xff]
    %v5890 = vld [vmem:[#allocation8 + $0x1c8] sm:$0xff]
    %v5891 = vld [vmem:[#allocation8 + $0x1d0] sm:$0xff]
    %v5892 = vld [vmem:[#allocation8 + $0x1d8] sm:$0xff]
    %v5893 = vld [vmem:[#allocation8 + $0x1e0] sm:$0xff]
    %v5894 = vld [vmem:[#allocation8 + $0x1e8] sm:$0xff]
    %v5895 = vld [vmem:[#allocation8 + $0x1f0] sm:$0xff]
    %v5896 = vld [vmem:[#allocation8 + $0x1f8] sm:$0xff]
    %v5897 = vld [vmem:[%s5] sm:$0xf]
    %v5900 = vunpack.c.l.s4 1966171168
    %v5901 = vunpack.c.0.s8 %v5900
    %v5902 = vlaneseq
    %v5903 = vshrl.u32 %v5902, 7
    %v5904 = vsub.s32 %v5901, %v5903
    %v5905 = vrot.slane %v5832, %v5904
    %v5906 = vcombine.high %v5905, %v5905
    %v5908 = vunpack.c.l.s4 1966171168
    %v5909 = vunpack.c.0.s8 %v5908
    %v5910 = vlaneseq
    %v5911 = vshrl.u32 %v5910, 7
    %v5912 = vsub.s32 %v5909, %v5911
    %v5913 = vrot.slane %v5905, %v5912
    %v5915 = vunpack.c.l.s4 1966171168
    %v5916 = vunpack.c.0.s8 %v5915
    %v5917 = vlaneseq
    %v5918 = vshrl.u32 %v5917, 7
    %v5919 = vsub.s32 %v5916, %v5918
    %v5920 = vrot.slane %v5906, %v5919
    %v5987 = vunpack.c.l.b16 %v5833
    %v5988 = vunpack.c.h.b16 %v5833
    %v5989 = vunpack.c.l.b16 %v5834
    %v5990 = vunpack.c.h.b16 %v5834
    %v5991 = vunpack.c.l.b16 %v5835
    %v5992 = vunpack.c.h.b16 %v5835
    %v5993 = vunpack.c.l.b16 %v5836
    %v5994 = vunpack.c.h.b16 %v5836
    %v5995 = vunpack.c.l.b16 %v5837
    %v5996 = vunpack.c.h.b16 %v5837
    %v5997 = vunpack.c.l.b16 %v5838
    %v5998 = vunpack.c.h.b16 %v5838
    %v5999 = vunpack.c.l.b16 %v5839
    %v6000 = vunpack.c.h.b16 %v5839
    %v6001 = vunpack.c.l.b16 %v5840
    %v6002 = vunpack.c.h.b16 %v5840
    %v6003 = vunpack.c.l.b16 %v5841
    %v6004 = vunpack.c.h.b16 %v5841
    %v6005 = vunpack.c.l.b16 %v5842
    %v6006 = vunpack.c.h.b16 %v5842
    %v6007 = vunpack.c.l.b16 %v5843
    %v6008 = vunpack.c.h.b16 %v5843
    %v6009 = vunpack.c.l.b16 %v5844
    %v6010 = vunpack.c.h.b16 %v5844
    %v6011 = vunpack.c.l.b16 %v5845
    %v6012 = vunpack.c.h.b16 %v5845
    %v6013 = vunpack.c.l.b16 %v5846
    %v6014 = vunpack.c.h.b16 %v5846
    %v6015 = vunpack.c.l.b16 %v5847
    %v6016 = vunpack.c.h.b16 %v5847
    %v6017 = vunpack.c.l.b16 %v5848
    %v6018 = vunpack.c.h.b16 %v5848
    %v6019 = vunpack.c.l.b16 %v5849
    %v6020 = vunpack.c.h.b16 %v5849
    %v6021 = vunpack.c.l.b16 %v5850
    %v6022 = vunpack.c.h.b16 %v5850
    %v6023 = vunpack.c.l.b16 %v5851
    %v6024 = vunpack.c.h.b16 %v5851
    %v6025 = vunpack.c.l.b16 %v5852
    %v6026 = vunpack.c.h.b16 %v5852
    %v6027 = vunpack.c.l.b16 %v5853
    %v6028 = vunpack.c.h.b16 %v5853
    %v6029 = vunpack.c.l.b16 %v5854
    %v6030 = vunpack.c.h.b16 %v5854
    %v6031 = vunpack.c.l.b16 %v5855
    %v6032 = vunpack.c.h.b16 %v5855
    %v6033 = vunpack.c.l.b16 %v5856
    %v6034 = vunpack.c.h.b16 %v5856
    %v6035 = vunpack.c.l.b16 %v5857
    %v6036 = vunpack.c.h.b16 %v5857
    %v6037 = vunpack.c.l.b16 %v5858
    %v6038 = vunpack.c.h.b16 %v5858
    %v6039 = vunpack.c.l.b16 %v5859
    %v6040 = vunpack.c.h.b16 %v5859
    %v6041 = vunpack.c.l.b16 %v5860
    %v6042 = vunpack.c.h.b16 %v5860
    %v6043 = vunpack.c.l.b16 %v5861
    %v6044 = vunpack.c.h.b16 %v5861
    %v6045 = vunpack.c.l.b16 %v5862
    %v6046 = vunpack.c.h.b16 %v5862
    %v6047 = vunpack.c.l.b16 %v5863
    %v6048 = vunpack.c.h.b16 %v5863
    %v6049 = vunpack.c.l.b16 %v5864
    %v6050 = vunpack.c.h.b16 %v5864
    %v6051 = vunpack.c.l.b16 %v5865
    %v6052 = vunpack.c.h.b16 %v5865
    %v6053 = vunpack.c.l.b16 %v5866
    %v6054 = vunpack.c.h.b16 %v5866
    %v6055 = vunpack.c.l.b16 %v5867
    %v6056 = vunpack.c.h.b16 %v5867
    %v6057 = vunpack.c.l.b16 %v5868
    %v6058 = vunpack.c.h.b16 %v5868
    %v6059 = vunpack.c.l.b16 %v5869
    %v6060 = vunpack.c.h.b16 %v5869
    %v6061 = vunpack.c.l.b16 %v5870
    %v6062 = vunpack.c.h.b16 %v5870
    %v6063 = vunpack.c.l.b16 %v5871
    %v6064 = vunpack.c.h.b16 %v5871
    %v6065 = vunpack.c.l.b16 %v5872
    %v6066 = vunpack.c.h.b16 %v5872
    %v6067 = vunpack.c.l.b16 %v5873
    %v6068 = vunpack.c.h.b16 %v5873
    %v6069 = vunpack.c.l.b16 %v5874
    %v6070 = vunpack.c.h.b16 %v5874
    %v6071 = vunpack.c.l.b16 %v5875
    %v6072 = vunpack.c.h.b16 %v5875
    %v6073 = vunpack.c.l.b16 %v5876
    %v6074 = vunpack.c.h.b16 %v5876
    %v6075 = vunpack.c.l.b16 %v5877
    %v6076 = vunpack.c.h.b16 %v5877
    %v6077 = vunpack.c.l.b16 %v5878
    %v6078 = vunpack.c.h.b16 %v5878
    %v6079 = vunpack.c.l.b16 %v5879
    %v6080 = vunpack.c.h.b16 %v5879
    %v6081 = vunpack.c.l.b16 %v5880
    %v6082 = vunpack.c.h.b16 %v5880
    %v6083 = vunpack.c.l.b16 %v5881
    %v6084 = vunpack.c.h.b16 %v5881
    %v6085 = vunpack.c.l.b16 %v5882
    %v6086 = vunpack.c.h.b16 %v5882
    %v6087 = vunpack.c.l.b16 %v5883
    %v6088 = vunpack.c.h.b16 %v5883
    %v6089 = vunpack.c.l.b16 %v5884
    %v6090 = vunpack.c.h.b16 %v5884
    %v6091 = vunpack.c.l.b16 %v5885
    %v6092 = vunpack.c.h.b16 %v5885
    %v6093 = vunpack.c.l.b16 %v5886
    %v6094 = vunpack.c.h.b16 %v5886
    %v6095 = vunpack.c.l.b16 %v5887
    %v6096 = vunpack.c.h.b16 %v5887
    %v6097 = vunpack.c.l.b16 %v5888
    %v6098 = vunpack.c.h.b16 %v5888
    %v6099 = vunpack.c.l.b16 %v5889
    %v6100 = vunpack.c.h.b16 %v5889
    %v6101 = vunpack.c.l.b16 %v5890
    %v6102 = vunpack.c.h.b16 %v5890
    %v6103 = vunpack.c.l.b16 %v5891
    %v6104 = vunpack.c.h.b16 %v5891
    %v6105 = vunpack.c.l.b16 %v5892
    %v6106 = vunpack.c.h.b16 %v5892
    %v6107 = vunpack.c.l.b16 %v5893
    %v6108 = vunpack.c.h.b16 %v5893
    %v6109 = vunpack.c.l.b16 %v5894
    %v6110 = vunpack.c.h.b16 %v5894
    %v6111 = vunpack.c.l.b16 %v5895
    %v6112 = vunpack.c.h.b16 %v5895
    %v6113 = vunpack.c.l.b16 %v5896
    %v6114 = vunpack.c.h.b16 %v5896
    %v6115 = vpack.c.b16 %v5991, %v5987
    %v6116 = vpack.c.b16 %v5992, %v5988
    %v6117 = vpack.c.b16 %v5993, %v5989
    %v6118 = vpack.c.b16 %v5994, %v5990
    %v6119 = vpack.c.b16 %v5999, %v5995
    %v6120 = vpack.c.b16 %v6000, %v5996
    %v6121 = vpack.c.b16 %v6001, %v5997
    %v6122 = vpack.c.b16 %v6002, %v5998
    %v6123 = vpack.c.b16 %v6007, %v6003
    %v6124 = vpack.c.b16 %v6008, %v6004
    %v6125 = vpack.c.b16 %v6009, %v6005
    %v6126 = vpack.c.b16 %v6010, %v6006
    %v6127 = vpack.c.b16 %v6015, %v6011
    %v6128 = vpack.c.b16 %v6016, %v6012
    %v6129 = vpack.c.b16 %v6017, %v6013
    %v6130 = vpack.c.b16 %v6018, %v6014
    %v6131 = vpack.c.b16 %v6023, %v6019
    %v6132 = vpack.c.b16 %v6024, %v6020
    %v6133 = vpack.c.b16 %v6025, %v6021
    %v6134 = vpack.c.b16 %v6026, %v6022
    %v6135 = vpack.c.b16 %v6031, %v6027
    %v6136 = vpack.c.b16 %v6032, %v6028
    %v6137 = vpack.c.b16 %v6033, %v6029
    %v6138 = vpack.c.b16 %v6034, %v6030
    %v6139 = vpack.c.b16 %v6039, %v6035
    %v6140 = vpack.c.b16 %v6040, %v6036
    %v6141 = vpack.c.b16 %v6041, %v6037
    %v6142 = vpack.c.b16 %v6042, %v6038
    %v6143 = vpack.c.b16 %v6047, %v6043
    %v6144 = vpack.c.b16 %v6048, %v6044
    %v6145 = vpack.c.b16 %v6049, %v6045
    %v6146 = vpack.c.b16 %v6050, %v6046
    %v6147 = vpack.c.b16 %v6055, %v6051
    %v6148 = vpack.c.b16 %v6056, %v6052
    %v6149 = vpack.c.b16 %v6057, %v6053
    %v6150 = vpack.c.b16 %v6058, %v6054
    %v6151 = vpack.c.b16 %v6063, %v6059
    %v6152 = vpack.c.b16 %v6064, %v6060
    %v6153 = vpack.c.b16 %v6065, %v6061
    %v6154 = vpack.c.b16 %v6066, %v6062
    %v6155 = vpack.c.b16 %v6071, %v6067
    %v6156 = vpack.c.b16 %v6072, %v6068
    %v6157 = vpack.c.b16 %v6073, %v6069
    %v6158 = vpack.c.b16 %v6074, %v6070
    %v6159 = vpack.c.b16 %v6079, %v6075
    %v6160 = vpack.c.b16 %v6080, %v6076
    %v6161 = vpack.c.b16 %v6081, %v6077
    %v6162 = vpack.c.b16 %v6082, %v6078
    %v6163 = vpack.c.b16 %v6087, %v6083
    %v6164 = vpack.c.b16 %v6088, %v6084
    %v6165 = vpack.c.b16 %v6089, %v6085
    %v6166 = vpack.c.b16 %v6090, %v6086
    %v6167 = vpack.c.b16 %v6095, %v6091
    %v6168 = vpack.c.b16 %v6096, %v6092
    %v6169 = vpack.c.b16 %v6097, %v6093
    %v6170 = vpack.c.b16 %v6098, %v6094
    %v6171 = vpack.c.b16 %v6103, %v6099
    %v6172 = vpack.c.b16 %v6104, %v6100
    %v6173 = vpack.c.b16 %v6105, %v6101
    %v6174 = vpack.c.b16 %v6106, %v6102
    %v6175 = vpack.c.b16 %v6111, %v6107
    %v6176 = vpack.c.b16 %v6112, %v6108
    %v6177 = vpack.c.b16 %v6113, %v6109
    %v6178 = vpack.c.b16 %v6114, %v6110
    %v6244 = vlaneseq
    %v6245 = vshrl.u32 %v6244, 7
    %v6246 = vsub.s32 0, %v6245
    %v6247 = vrot.slane %v5897, %v6246
    %v6248 = vlaneseq
    %v6249 = vshrl.u32 %v6248, 7
    %v6250 = vsub.s32 1, %v6249
    %v6251 = vrot.slane %v5897, %v6250
    %v6252 = vlaneseq
    %v6253 = vshrl.u32 %v6252, 7
    %v6254 = vsub.s32 2, %v6253
    %v6255 = vrot.slane %v5897, %v6254
    %v6256 = vlaneseq
    %v6257 = vshrl.u32 %v6256, 7
    %v6258 = vsub.s32 3, %v6257
    %v6259 = vrot.slane %v5897, %v6258
    %6264 = vmatprep.subr.bf16.mxu0 %v6116
    %6265 = vmatpush1.bf16.msra.mxu0 %v6115
    %6266 = vmatprep.subr.bf16.mxu0 %v6120
    %6267 = vmatpush1.bf16.msra.mxu0 %v6119
    %6268 = vmatprep.subr.bf16.mxu0 %v6124
    %6269 = vmatpush1.bf16.msra.mxu0 %v6123
    %6270 = vmatprep.subr.bf16.mxu0 %v6128
    %6271 = vmatpush1.bf16.msra.mxu0 %v6127
    %6272 = vmatprep.subr.bf16.mxu0 %v6132
    %6273 = vmatpush1.bf16.msra.mxu0 %v6131
    %6274 = vmatprep.subr.bf16.mxu0 %v6136
    %6275 = vmatpush1.bf16.msra.mxu0 %v6135
    %6276 = vmatprep.subr.bf16.mxu0 %v6140
    %6277 = vmatpush1.bf16.msra.mxu0 %v6139
    %6278 = vmatprep.subr.bf16.mxu0 %v6144
    %6279 = vmatpush1.bf16.msra.mxu0 %v6143
    %6280 = vmatprep.subr.bf16.mxu0 %v6148
    %6281 = vmatpush1.bf16.msra.mxu0 %v6147
    %6282 = vmatprep.subr.bf16.mxu0 %v6152
    %6283 = vmatpush1.bf16.msra.mxu0 %v6151
    %6284 = vmatprep.subr.bf16.mxu0 %v6156
    %6285 = vmatpush1.bf16.msra.mxu0 %v6155
    %6286 = vmatprep.subr.bf16.mxu0 %v6160
    %6287 = vmatpush1.bf16.msra.mxu0 %v6159
    %6288 = vmatprep.subr.bf16.mxu0 %v6164
    %6289 = vmatpush1.bf16.msra.mxu0 %v6163
    %6290 = vmatprep.subr.bf16.mxu0 %v6168
    %6291 = vmatpush1.bf16.msra.mxu0 %v6167
    %6292 = vmatprep.subr.bf16.mxu0 %v6172
    %6293 = vmatpush1.bf16.msra.mxu0 %v6171
    %6294 = vmatprep.subr.bf16.mxu0 %v6176
    %6295 = vmatpush1.bf16.msra.mxu0 %v6175
    %6296 = vmatprep.mubr.bf16.mxu0 %v5920
    %6297 = vmatmul.mubr.bf16.gmra.mrb[0].mxu0 %v5913
    %v6298 = vpop.f32.mrb[0].mxu0
    %v6299 = vadd.f32 %v6247, %v6298
    %v6300 = vpop.f32.mrb[0].mxu0
    %v6301 = vadd.f32 %v6251, %v6300
    %v6302 = vpop.f32.mrb[0].mxu0
    %v6303 = vpop.f32.mrb[0].mxu0
    %6304 = vdwg.mxu0
    %6305 = vmatprep.subr.bf16.mxu0 %v6118
    %6306 = vmatpush1.bf16.msra.mxu0 %v6117
    %6307 = vmatprep.subr.bf16.mxu0 %v6122
    %6308 = vmatpush1.bf16.msra.mxu0 %v6121
    %6309 = vmatprep.subr.bf16.mxu0 %v6126
    %6310 = vmatpush1.bf16.msra.mxu0 %v6125
    %6311 = vmatprep.subr.bf16.mxu0 %v6130
    %6312 = vmatpush1.bf16.msra.mxu0 %v6129
    %6313 = vmatprep.subr.bf16.mxu0 %v6134
    %6314 = vmatpush1.bf16.msra.mxu0 %v6133
    %6315 = vmatprep.subr.bf16.mxu0 %v6138
    %6316 = vmatpush1.bf16.msra.mxu0 %v6137
    %6317 = vmatprep.subr.bf16.mxu0 %v6142
    %6318 = vmatpush1.bf16.msra.mxu0 %v6141
    %6319 = vmatprep.subr.bf16.mxu0 %v6146
    %6320 = vmatpush1.bf16.msra.mxu0 %v6145
    %6321 = vmatprep.subr.bf16.mxu0 %v6150
    %6322 = vmatpush1.bf16.msra.mxu0 %v6149
    %6323 = vmatprep.subr.bf16.mxu0 %v6154
    %6324 = vmatpush1.bf16.msra.mxu0 %v6153
    %6325 = vmatprep.subr.bf16.mxu0 %v6158
    %6326 = vmatpush1.bf16.msra.mxu0 %v6157
    %6327 = vmatprep.subr.bf16.mxu0 %v6162
    %6328 = vmatpush1.bf16.msra.mxu0 %v6161
    %6329 = vmatprep.subr.bf16.mxu0 %v6166
    %6330 = vmatpush1.bf16.msra.mxu0 %v6165
    %6331 = vmatprep.subr.bf16.mxu0 %v6170
    %6332 = vmatpush1.bf16.msra.mxu0 %v6169
    %6333 = vmatprep.subr.bf16.mxu0 %v6174
    %6334 = vmatpush1.bf16.msra.mxu0 %v6173
    %6335 = vmatprep.subr.bf16.mxu0 %v6178
    %6336 = vmatpush1.bf16.msra.mxu0 %v6177
    %6337 = vmatprep.mubr.bf16.mxu0 %v5920
    %6338 = vmatmul.mubr.bf16.gmra.mrb[0].mxu0 %v5913
    %v6339 = vpop.f32.mrb[0].mxu0
    %v6340 = vadd.f32 %v6255, %v6339
    %v6341 = vpop.f32.mrb[0].mxu0
    %v6342 = vadd.f32 %v6259, %v6341
    %v6343 = vpop.f32.mrb[0].mxu0
    %v6344 = vpop.f32.mrb[0].mxu0
    %6345 = vdwg.mxu0
    %v6346 = vxor.u32 %v6299, 2147483648
    %v6347 = vxor.u32 %v6301, 2147483648
    %v6348 = vxor.u32 %v6340, 2147483648
    %v6349 = vmul.f32 %v6346, 1.442695
    %v6350 = vpow.pop %v6349
    %v6351 = vmul.f32 %v6347, 1.442695
    %v6352 = vpow.pop %v6351
    %v6353 = vmul.f32 %v6348, 1.442695
    %v6354 = vpow.pop %v6353
    %v6355 = vadd.f32 %v6350, 1.0
    %v6356 = vadd.f32 %v6352, 1.0
    %v6357 = vadd.f32 %v6354, 1.0
    %v6358 = vrcp.pop %v6355
    %v6359 = vmul.f32 1.0, %v6358
    %v6360 = vrcp.pop %v6356
    %v6361 = vmul.f32 1.0, %v6360
    %v6362 = vrcp.pop %v6357
    %v6363 = vmul.f32 1.0, %v6362
    %v6364 = vtanh.pop %v6342
    %v6365 = vmul.f32 %v6361, %v5495
    %v6366 = vmul.f32 %v6359, %v6364
    %v6367 = vadd.f32 %v6365, %v6366
    %v6368 = vtanh.pop %v6367
    %v6369 = vmul.f32 %v6363, %v6368
    %v6370 = vpack.c.bf16 %v6369, %v6369
    %v6371 = vld [vmem:[#allocation3 + $0x1] sm:$0x1]
    %v6372 = vsel %vm263, %v6370, %v6371
    %6373 = vst [vmem:[#allocation3 + $0x1] sm:$0x1] %v6372
    %s6374 = scalar_lea.vmem [#allocation2], 7
    %v6375 = vld [vmem:[%s6374] ss:$8 sm:$0xf]
    %v6376 = vld [vmem:[#allocation5] sm:$0xff]
    %v6377 = vld [vmem:[#allocation5 + $0x8] sm:$0xff]
    %v6378 = vld [vmem:[#allocation5 + $0x10] sm:$0xff]
    %v6379 = vld [vmem:[#allocation5 + $0x18] sm:$0xff]
    %v6380 = vld [vmem:[#allocation5 + $0x20] sm:$0xff]
    %v6381 = vld [vmem:[#allocation5 + $0x28] sm:$0xff]
    %v6382 = vld [vmem:[#allocation5 + $0x30] sm:$0xff]
    %v6383 = vld [vmem:[#allocation5 + $0x38] sm:$0xff]
    %v6384 = vld [vmem:[#allocation5 + $0x40] sm:$0xff]
    %v6385 = vld [vmem:[#allocation5 + $0x48] sm:$0xff]
    %v6386 = vld [vmem:[#allocation5 + $0x50] sm:$0xff]
    %v6387 = vld [vmem:[#allocation5 + $0x58] sm:$0xff]
    %v6388 = vld [vmem:[#allocation5 + $0x60] sm:$0xff]
    %v6389 = vld [vmem:[#allocation5 + $0x68] sm:$0xff]
    %v6390 = vld [vmem:[#allocation5 + $0x70] sm:$0xff]
    %v6391 = vld [vmem:[#allocation5 + $0x78] sm:$0xff]
    %v6392 = vld [vmem:[#allocation5 + $0x80] sm:$0xff]
    %v6393 = vld [vmem:[#allocation5 + $0x88] sm:$0xff]
    %v6394 = vld [vmem:[#allocation5 + $0x90] sm:$0xff]
    %v6395 = vld [vmem:[#allocation5 + $0x98] sm:$0xff]
    %v6396 = vld [vmem:[#allocation5 + $0xa0] sm:$0xff]
    %v6397 = vld [vmem:[#allocation5 + $0xa8] sm:$0xff]
    %v6398 = vld [vmem:[#allocation5 + $0xb0] sm:$0xff]
    %v6399 = vld [vmem:[#allocation5 + $0xb8] sm:$0xff]
    %v6400 = vld [vmem:[#allocation5 + $0xc0] sm:$0xff]
    %v6401 = vld [vmem:[#allocation5 + $0xc8] sm:$0xff]
    %v6402 = vld [vmem:[#allocation5 + $0xd0] sm:$0xff]
    %v6403 = vld [vmem:[#allocation5 + $0xd8] sm:$0xff]
    %v6404 = vld [vmem:[#allocation5 + $0xe0] sm:$0xff]
    %v6405 = vld [vmem:[#allocation5 + $0xe8] sm:$0xff]
    %v6406 = vld [vmem:[#allocation5 + $0xf0] sm:$0xff]
    %v6407 = vld [vmem:[#allocation5 + $0xf8] sm:$0xff]
    %v6440 = vunpack.c.l.b16 %v6376
    %v6441 = vunpack.c.h.b16 %v6376
    %v6442 = vunpack.c.l.b16 %v6377
    %v6443 = vunpack.c.h.b16 %v6377
    %v6444 = vunpack.c.l.b16 %v6378
    %v6445 = vunpack.c.h.b16 %v6378
    %v6446 = vunpack.c.l.b16 %v6379
    %v6447 = vunpack.c.h.b16 %v6379
    %v6448 = vunpack.c.l.b16 %v6380
    %v6449 = vunpack.c.h.b16 %v6380
    %v6450 = vunpack.c.l.b16 %v6381
    %v6451 = vunpack.c.h.b16 %v6381
    %v6452 = vunpack.c.l.b16 %v6382
    %v6453 = vunpack.c.h.b16 %v6382
    %v6454 = vunpack.c.l.b16 %v6383
    %v6455 = vunpack.c.h.b16 %v6383
    %v6456 = vunpack.c.l.b16 %v6384
    %v6457 = vunpack.c.h.b16 %v6384
    %v6458 = vunpack.c.l.b16 %v6385
    %v6459 = vunpack.c.h.b16 %v6385
    %v6460 = vunpack.c.l.b16 %v6386
    %v6461 = vunpack.c.h.b16 %v6386
    %v6462 = vunpack.c.l.b16 %v6387
    %v6463 = vunpack.c.h.b16 %v6387
    %v6464 = vunpack.c.l.b16 %v6388
    %v6465 = vunpack.c.h.b16 %v6388
    %v6466 = vunpack.c.l.b16 %v6389
    %v6467 = vunpack.c.h.b16 %v6389
    %v6468 = vunpack.c.l.b16 %v6390
    %v6469 = vunpack.c.h.b16 %v6390
    %v6470 = vunpack.c.l.b16 %v6391
    %v6471 = vunpack.c.h.b16 %v6391
    %v6472 = vunpack.c.l.b16 %v6392
    %v6473 = vunpack.c.h.b16 %v6392
    %v6474 = vunpack.c.l.b16 %v6393
    %v6475 = vunpack.c.h.b16 %v6393
    %v6476 = vunpack.c.l.b16 %v6394
    %v6477 = vunpack.c.h.b16 %v6394
    %v6478 = vunpack.c.l.b16 %v6395
    %v6479 = vunpack.c.h.b16 %v6395
    %v6480 = vunpack.c.l.b16 %v6396
    %v6481 = vunpack.c.h.b16 %v6396
    %v6482 = vunpack.c.l.b16 %v6397
    %v6483 = vunpack.c.h.b16 %v6397
    %v6484 = vunpack.c.l.b16 %v6398
    %v6485 = vunpack.c.h.b16 %v6398
    %v6486 = vunpack.c.l.b16 %v6399
    %v6487 = vunpack.c.h.b16 %v6399
    %v6488 = vunpack.c.l.b16 %v6400
    %v6489 = vunpack.c.h.b16 %v6400
    %v6490 = vunpack.c.l.b16 %v6401
    %v6491 = vunpack.c.h.b16 %v6401
    %v6492 = vunpack.c.l.b16 %v6402
    %v6493 = vunpack.c.h.b16 %v6402
    %v6494 = vunpack.c.l.b16 %v6403
    %v6495 = vunpack.c.h.b16 %v6403
    %v6496 = vunpack.c.l.b16 %v6404
    %v6497 = vunpack.c.h.b16 %v6404
    %v6498 = vunpack.c.l.b16 %v6405
    %v6499 = vunpack.c.h.b16 %v6405
    %v6500 = vunpack.c.l.b16 %v6406
    %v6501 = vunpack.c.h.b16 %v6406
    %v6502 = vunpack.c.l.b16 %v6407
    %v6503 = vunpack.c.h.b16 %v6407
    %v6504 = vpack.c.b16 %v6444, %v6440
    %v6505 = vpack.c.b16 %v6445, %v6441
    %v6506 = vpack.c.b16 %v6446, %v6442
    %v6507 = vpack.c.b16 %v6447, %v6443
    %v6508 = vpack.c.b16 %v6452, %v6448
    %v6509 = vpack.c.b16 %v6453, %v6449
    %v6510 = vpack.c.b16 %v6454, %v6450
    %v6511 = vpack.c.b16 %v6455, %v6451
    %v6512 = vpack.c.b16 %v6460, %v6456
    %v6513 = vpack.c.b16 %v6461, %v6457
    %v6514 = vpack.c.b16 %v6462, %v6458
    %v6515 = vpack.c.b16 %v6463, %v6459
    %v6516 = vpack.c.b16 %v6468, %v6464
    %v6517 = vpack.c.b16 %v6469, %v6465
    %v6518 = vpack.c.b16 %v6470, %v6466
    %v6519 = vpack.c.b16 %v6471, %v6467
    %v6520 = vpack.c.b16 %v6476, %v6472
    %v6521 = vpack.c.b16 %v6477, %v6473
    %v6522 = vpack.c.b16 %v6478, %v6474
    %v6523 = vpack.c.b16 %v6479, %v6475
    %v6524 = vpack.c.b16 %v6484, %v6480
    %v6525 = vpack.c.b16 %v6485, %v6481
    %v6526 = vpack.c.b16 %v6486, %v6482
    %v6527 = vpack.c.b16 %v6487, %v6483
    %v6528 = vpack.c.b16 %v6492, %v6488
    %v6529 = vpack.c.b16 %v6493, %v6489
    %v6530 = vpack.c.b16 %v6494, %v6490
    %v6531 = vpack.c.b16 %v6495, %v6491
    %v6532 = vpack.c.b16 %v6500, %v6496
    %v6533 = vpack.c.b16 %v6501, %v6497
    %v6534 = vpack.c.b16 %v6502, %v6498
    %v6535 = vpack.c.b16 %v6503, %v6499
    %6568 = vmatprep.subr.bf16.mxu0 %v6505
    %6569 = vmatpush1.bf16.msra.mxu0 %v6504
    %6570 = vmatprep.subr.bf16.mxu0 %v6509
    %6571 = vmatpush1.bf16.msra.mxu0 %v6508
    %6572 = vmatprep.subr.bf16.mxu0 %v6513
    %6573 = vmatpush1.bf16.msra.mxu0 %v6512
    %6574 = vmatprep.subr.bf16.mxu0 %v6517
    %6575 = vmatpush1.bf16.msra.mxu0 %v6516
    %6576 = vmatprep.subr.bf16.mxu0 %v6521
    %6577 = vmatpush1.bf16.msra.mxu0 %v6520
    %6578 = vmatprep.subr.bf16.mxu0 %v6525
    %6579 = vmatpush1.bf16.msra.mxu0 %v6524
    %6580 = vmatprep.subr.bf16.mxu0 %v6529
    %6581 = vmatpush1.bf16.msra.mxu0 %v6528
    %6582 = vmatprep.subr.bf16.mxu0 %v6533
    %6583 = vmatpush1.bf16.msra.mxu0 %v6532
    %6584 = vmatprep.subr.bf16.mxu0 0
    %6585 = vmatpush1.bf16.msra.mxu0 0
    %6586 = vmatprep.subr.bf16.mxu0 0
    %6587 = vmatpush1.bf16.msra.mxu0 0
    %6588 = vmatprep.subr.bf16.mxu0 0
    %6589 = vmatpush1.bf16.msra.mxu0 0
    %6590 = vmatprep.subr.bf16.mxu0 0
    %6591 = vmatpush1.bf16.msra.mxu0 0
    %6592 = vmatprep.subr.bf16.mxu0 0
    %6593 = vmatpush1.bf16.msra.mxu0 0
    %6594 = vmatprep.subr.bf16.mxu0 0
    %6595 = vmatpush1.bf16.msra.mxu0 0
    %6596 = vmatprep.subr.bf16.mxu0 0
    %6597 = vmatpush1.bf16.msra.mxu0 0
    %6598 = vmatprep.subr.bf16.mxu0 0
    %6599 = vmatpush1.bf16.msra.mxu0 0
    %6600 = vmatprep.mubr.bf16.mxu0 0
    %6601 = vmatmul.mubr.bf16.gmra.mrb[0].mxu0 %v5828
    %v6602 = vpop.f32.mrb[0].mxu0
    %v6603 = vadd.f32 0.0, %v6602
    %v6604 = vpop.f32.mrb[0].mxu0
    %v6605 = vadd.f32 0.0, %v6604
    %v6606 = vpop.f32.mrb[0].mxu0
    %v6607 = vpop.f32.mrb[0].mxu0
    %6608 = vdwg.mxu0
    %6609 = vmatprep.subr.bf16.mxu0 %v6507
    %6610 = vmatpush1.bf16.msra.mxu0 %v6506
    %6611 = vmatprep.subr.bf16.mxu0 %v6511
    %6612 = vmatpush1.bf16.msra.mxu0 %v6510
    %6613 = vmatprep.subr.bf16.mxu0 %v6515
    %6614 = vmatpush1.bf16.msra.mxu0 %v6514
    %6615 = vmatprep.subr.bf16.mxu0 %v6519
    %6616 = vmatpush1.bf16.msra.mxu0 %v6518
    %6617 = vmatprep.subr.bf16.mxu0 %v6523
    %6618 = vmatpush1.bf16.msra.mxu0 %v6522
    %6619 = vmatprep.subr.bf16.mxu0 %v6527
    %6620 = vmatpush1.bf16.msra.mxu0 %v6526
    %6621 = vmatprep.subr.bf16.mxu0 %v6531
    %6622 = vmatpush1.bf16.msra.mxu0 %v6530
    %6623 = vmatprep.subr.bf16.mxu0 %v6535
    %6624 = vmatpush1.bf16.msra.mxu0 %v6534
    %6625 = vmatprep.subr.bf16.mxu0 0
    %6626 = vmatpush1.bf16.msra.mxu0 0
    %6627 = vmatprep.subr.bf16.mxu0 0
    %6628 = vmatpush1.bf16.msra.mxu0 0
    %6629 = vmatprep.subr.bf16.mxu0 0
    %6630 = vmatpush1.bf16.msra.mxu0 0
    %6631 = vmatprep.subr.bf16.mxu0 0
    %6632 = vmatpush1.bf16.msra.mxu0 0
    %6633 = vmatprep.subr.bf16.mxu0 0
    %6634 = vmatpush1.bf16.msra.mxu0 0
    %6635 = vmatprep.subr.bf16.mxu0 0
    %6636 = vmatpush1.bf16.msra.mxu0 0
    %6637 = vmatprep.subr.bf16.mxu0 0
    %6638 = vmatpush1.bf16.msra.mxu0 0
    %6639 = vmatprep.subr.bf16.mxu0 0
    %6640 = vmatpush1.bf16.msra.mxu0 0
    %6641 = vmatprep.mubr.bf16.mxu0 0
    %6642 = vmatmul.mubr.bf16.gmra.mrb[0].mxu0 %v5828
    %v6643 = vpop.f32.mrb[0].mxu0
    %v6644 = vadd.f32 0.0, %v6643
    %v6645 = vpop.f32.mrb[0].mxu0
    %v6646 = vadd.f32 0.0, %v6645
    %v6647 = vpop.f32.mrb[0].mxu0
    %v6648 = vpop.f32.mrb[0].mxu0
    %6649 = vdwg.mxu0
    %v6654 = vcombine.low %v6603, %v6605
    %v6655 = vcombine.low %v6644, %v6646
    %v6657 = vunpack.c.l.s4 1966171168
    %v6658 = vunpack.c.0.s8 %v6657
    %v6659 = vlaneseq
    %v6660 = vshrl.u32 %v6659, 7
    %v6661 = vsub.s32 %v6658, %v6660
    %v6662 = vrot.slane %v6654, %v6661
    %v6664 = vunpack.c.l.s4 1966171168
    %v6665 = vunpack.c.0.s8 %v6664
    %v6666 = vlaneseq
    %v6667 = vshrl.u32 %v6666, 7
    %v6668 = vsub.s32 %v6665, %v6667
    %v6669 = vrot.slane %v6655, %v6668
    %v6670 = vcombine.low %v6662, %v6669
    %v6672 = vunpack.c.l.s4 1966171168
    %v6673 = vunpack.c.0.s8 %v6672
    %v6674 = vlaneseq
    %v6675 = vshrl.u32 %v6674, 7
    %v6676 = vsub.s32 %v6673, %v6675
    %v6677 = vrot.slane %v6670, %v6676
    %v6679 = vadd.f32 %v6375, %v6677
    %v6680 = vxor.u32 %v6679, 2147483648
    %v6681 = vmul.f32 %v6680, 1.442695
    %v6682 = vpow.pop %v6681
    %v6683 = vadd.f32 %v6682, 1.0
    %v6684 = vrcp.pop %v6683
    %v6685 = vmul.f32 1.0, %v6684
    %v6687 = vrot.slane %v6679, 3
    %v6689 = vtanh.pop %v6687
    %v6691 = vrot.slane %v6685, 1
    %v6693 = vmul.f32 %v6691, %v5823
    %v6694 = vmul.f32 %v6685, %v6689
    %v6695 = vadd.f32 %v6693, %v6694
    %v6696 = vtanh.pop %v6695
    %v6697 = vrot.slane %v6685, 2
    %v6699 = vmul.f32 %v6697, %v6696
    %v6700 = vpack.c.bf16 %v6699, %v6699
    %v6701 = vld [vmem:[#allocation3] sm:$0x1]
    %v6702 = vsel %vm263, %v6700, %v6701
    %6703 = vst [vmem:[#allocation3] sm:$0x1] %v6702
    %v6704 = vld [vmem:[#allocation3] sm:$0x3]
    %v6705 = vld [vmem:[#allocation8] sm:$0xff]
    %v6706 = vld [vmem:[#allocation8 + $0x8] sm:$0xff]
    %v6707 = vld [vmem:[#allocation8 + $0x10] sm:$0xff]
    %v6708 = vld [vmem:[#allocation8 + $0x18] sm:$0xff]
    %v6709 = vld [vmem:[#allocation8 + $0x20] sm:$0xff]
    %v6710 = vld [vmem:[#allocation8 + $0x28] sm:$0xff]
    %v6711 = vld [vmem:[#allocation8 + $0x30] sm:$0xff]
    %v6712 = vld [vmem:[#allocation8 + $0x38] sm:$0xff]
    %v6713 = vld [vmem:[#allocation8 + $0x40] sm:$0xff]
    %v6714 = vld [vmem:[#allocation8 + $0x48] sm:$0xff]
    %v6715 = vld [vmem:[#allocation8 + $0x50] sm:$0xff]
    %v6716 = vld [vmem:[#allocation8 + $0x58] sm:$0xff]
    %v6717 = vld [vmem:[#allocation8 + $0x60] sm:$0xff]
    %v6718 = vld [vmem:[#allocation8 + $0x68] sm:$0xff]
    %v6719 = vld [vmem:[#allocation8 + $0x70] sm:$0xff]
    %v6720 = vld [vmem:[#allocation8 + $0x78] sm:$0xff]
    %v6721 = vld [vmem:[#allocation8 + $0x80] sm:$0xff]
    %v6722 = vld [vmem:[#allocation8 + $0x88] sm:$0xff]
    %v6723 = vld [vmem:[#allocation8 + $0x90] sm:$0xff]
    %v6724 = vld [vmem:[#allocation8 + $0x98] sm:$0xff]
    %v6725 = vld [vmem:[#allocation8 + $0xa0] sm:$0xff]
    %v6726 = vld [vmem:[#allocation8 + $0xa8] sm:$0xff]
    %v6727 = vld [vmem:[#allocation8 + $0xb0] sm:$0xff]
    %v6728 = vld [vmem:[#allocation8 + $0xb8] sm:$0xff]
    %v6729 = vld [vmem:[#allocation8 + $0xc0] sm:$0xff]
    %v6730 = vld [vmem:[#allocation8 + $0xc8] sm:$0xff]
    %v6731 = vld [vmem:[#allocation8 + $0xd0] sm:$0xff]
    %v6732 = vld [vmem:[#allocation8 + $0xd8] sm:$0xff]
    %v6733 = vld [vmem:[#allocation8 + $0xe0] sm:$0xff]
    %v6734 = vld [vmem:[#allocation8 + $0xe8] sm:$0xff]
    %v6735 = vld [vmem:[#allocation8 + $0xf0] sm:$0xff]
    %v6736 = vld [vmem:[#allocation8 + $0xf8] sm:$0xff]
    %v6737 = vld [vmem:[#allocation8 + $0x100] sm:$0xff]
    %v6738 = vld [vmem:[#allocation8 + $0x108] sm:$0xff]
    %v6739 = vld [vmem:[#allocation8 + $0x110] sm:$0xff]
    %v6740 = vld [vmem:[#allocation8 + $0x118] sm:$0xff]
    %v6741 = vld [vmem:[#allocation8 + $0x120] sm:$0xff]
    %v6742 = vld [vmem:[#allocation8 + $0x128] sm:$0xff]
    %v6743 = vld [vmem:[#allocation8 + $0x130] sm:$0xff]
    %v6744 = vld [vmem:[#allocation8 + $0x138] sm:$0xff]
    %v6745 = vld [vmem:[#allocation8 + $0x140] sm:$0xff]
    %v6746 = vld [vmem:[#allocation8 + $0x148] sm:$0xff]
    %v6747 = vld [vmem:[#allocation8 + $0x150] sm:$0xff]
    %v6748 = vld [vmem:[#allocation8 + $0x158] sm:$0xff]
    %v6749 = vld [vmem:[#allocation8 + $0x160] sm:$0xff]
    %v6750 = vld [vmem:[#allocation8 + $0x168] sm:$0xff]
    %v6751 = vld [vmem:[#allocation8 + $0x170] sm:$0xff]
    %v6752 = vld [vmem:[#allocation8 + $0x178] sm:$0xff]
    %v6753 = vld [vmem:[#allocation8 + $0x180] sm:$0xff]
    %v6754 = vld [vmem:[#allocation8 + $0x188] sm:$0xff]
    %v6755 = vld [vmem:[#allocation8 + $0x190] sm:$0xff]
    %v6756 = vld [vmem:[#allocation8 + $0x198] sm:$0xff]
    %v6757 = vld [vmem:[#allocation8 + $0x1a0] sm:$0xff]
    %v6758 = vld [vmem:[#allocation8 + $0x1a8] sm:$0xff]
    %v6759 = vld [vmem:[#allocation8 + $0x1b0] sm:$0xff]
    %v6760 = vld [vmem:[#allocation8 + $0x1b8] sm:$0xff]
    %v6761 = vld [vmem:[#allocation8 + $0x1c0] sm:$0xff]
    %v6762 = vld [vmem:[#allocation8 + $0x1c8] sm:$0xff]
    %v6763 = vld [vmem:[#allocation8 + $0x1d0] sm:$0xff]
    %v6764 = vld [vmem:[#allocation8 + $0x1d8] sm:$0xff]
    %v6765 = vld [vmem:[#allocation8 + $0x1e0] sm:$0xff]
    %v6766 = vld [vmem:[#allocation8 + $0x1e8] sm:$0xff]
    %v6767 = vld [vmem:[#allocation8 + $0x1f0] sm:$0xff]
    %v6768 = vld [vmem:[#allocation8 + $0x1f8] sm:$0xff]
    %v6769 = vld [vmem:[%s5] sm:$0xf]
    %v6772 = vunpack.c.l.s4 1966171168
    %v6773 = vunpack.c.0.s8 %v6772
    %v6774 = vlaneseq
    %v6775 = vshrl.u32 %v6774, 7
    %v6776 = vsub.s32 %v6773, %v6775
    %v6777 = vrot.slane %v6704, %v6776
    %v6778 = vcombine.high %v6777, %v6777
    %v6780 = vunpack.c.l.s4 1966171168
    %v6781 = vunpack.c.0.s8 %v6780
    %v6782 = vlaneseq
    %v6783 = vshrl.u32 %v6782, 7
    %v6784 = vsub.s32 %v6781, %v6783
    %v6785 = vrot.slane %v6777, %v6784
    %v6787 = vunpack.c.l.s4 1966171168
    %v6788 = vunpack.c.0.s8 %v6787
    %v6789 = vlaneseq
    %v6790 = vshrl.u32 %v6789, 7
    %v6791 = vsub.s32 %v6788, %v6790
    %v6792 = vrot.slane %v6778, %v6791
    %v6859 = vunpack.c.l.b16 %v6705
    %v6860 = vunpack.c.h.b16 %v6705
    %v6861 = vunpack.c.l.b16 %v6706
    %v6862 = vunpack.c.h.b16 %v6706
    %v6863 = vunpack.c.l.b16 %v6707
    %v6864 = vunpack.c.h.b16 %v6707
    %v6865 = vunpack.c.l.b16 %v6708
    %v6866 = vunpack.c.h.b16 %v6708
    %v6867 = vunpack.c.l.b16 %v6709
    %v6868 = vunpack.c.h.b16 %v6709
    %v6869 = vunpack.c.l.b16 %v6710
    %v6870 = vunpack.c.h.b16 %v6710
    %v6871 = vunpack.c.l.b16 %v6711
    %v6872 = vunpack.c.h.b16 %v6711
    %v6873 = vunpack.c.l.b16 %v6712
    %v6874 = vunpack.c.h.b16 %v6712
    %v6875 = vunpack.c.l.b16 %v6713
    %v6876 = vunpack.c.h.b16 %v6713
    %v6877 = vunpack.c.l.b16 %v6714
    %v6878 = vunpack.c.h.b16 %v6714
    %v6879 = vunpack.c.l.b16 %v6715
    %v6880 = vunpack.c.h.b16 %v6715
    %v6881 = vunpack.c.l.b16 %v6716
    %v6882 = vunpack.c.h.b16 %v6716
    %v6883 = vunpack.c.l.b16 %v6717
    %v6884 = vunpack.c.h.b16 %v6717
    %v6885 = vunpack.c.l.b16 %v6718
    %v6886 = vunpack.c.h.b16 %v6718
    %v6887 = vunpack.c.l.b16 %v6719
    %v6888 = vunpack.c.h.b16 %v6719
    %v6889 = vunpack.c.l.b16 %v6720
    %v6890 = vunpack.c.h.b16 %v6720
    %v6891 = vunpack.c.l.b16 %v6721
    %v6892 = vunpack.c.h.b16 %v6721
    %v6893 = vunpack.c.l.b16 %v6722
    %v6894 = vunpack.c.h.b16 %v6722
    %v6895 = vunpack.c.l.b16 %v6723
    %v6896 = vunpack.c.h.b16 %v6723
    %v6897 = vunpack.c.l.b16 %v6724
    %v6898 = vunpack.c.h.b16 %v6724
    %v6899 = vunpack.c.l.b16 %v6725
    %v6900 = vunpack.c.h.b16 %v6725
    %v6901 = vunpack.c.l.b16 %v6726
    %v6902 = vunpack.c.h.b16 %v6726
    %v6903 = vunpack.c.l.b16 %v6727
    %v6904 = vunpack.c.h.b16 %v6727
    %v6905 = vunpack.c.l.b16 %v6728
    %v6906 = vunpack.c.h.b16 %v6728
    %v6907 = vunpack.c.l.b16 %v6729
    %v6908 = vunpack.c.h.b16 %v6729
    %v6909 = vunpack.c.l.b16 %v6730
    %v6910 = vunpack.c.h.b16 %v6730
    %v6911 = vunpack.c.l.b16 %v6731
    %v6912 = vunpack.c.h.b16 %v6731
    %v6913 = vunpack.c.l.b16 %v6732
    %v6914 = vunpack.c.h.b16 %v6732
    %v6915 = vunpack.c.l.b16 %v6733
    %v6916 = vunpack.c.h.b16 %v6733
    %v6917 = vunpack.c.l.b16 %v6734
    %v6918 = vunpack.c.h.b16 %v6734
    %v6919 = vunpack.c.l.b16 %v6735
    %v6920 = vunpack.c.h.b16 %v6735
    %v6921 = vunpack.c.l.b16 %v6736
    %v6922 = vunpack.c.h.b16 %v6736
    %v6923 = vunpack.c.l.b16 %v6737
    %v6924 = vunpack.c.h.b16 %v6737
    %v6925 = vunpack.c.l.b16 %v6738
    %v6926 = vunpack.c.h.b16 %v6738
    %v6927 = vunpack.c.l.b16 %v6739
    %v6928 = vunpack.c.h.b16 %v6739
    %v6929 = vunpack.c.l.b16 %v6740
    %v6930 = vunpack.c.h.b16 %v6740
    %v6931 = vunpack.c.l.b16 %v6741
    %v6932 = vunpack.c.h.b16 %v6741
    %v6933 = vunpack.c.l.b16 %v6742
    %v6934 = vunpack.c.h.b16 %v6742
    %v6935 = vunpack.c.l.b16 %v6743
    %v6936 = vunpack.c.h.b16 %v6743
    %v6937 = vunpack.c.l.b16 %v6744
    %v6938 = vunpack.c.h.b16 %v6744
    %v6939 = vunpack.c.l.b16 %v6745
    %v6940 = vunpack.c.h.b16 %v6745
    %v6941 = vunpack.c.l.b16 %v6746
    %v6942 = vunpack.c.h.b16 %v6746
    %v6943 = vunpack.c.l.b16 %v6747
    %v6944 = vunpack.c.h.b16 %v6747
    %v6945 = vunpack.c.l.b16 %v6748
    %v6946 = vunpack.c.h.b16 %v6748
    %v6947 = vunpack.c.l.b16 %v6749
    %v6948 = vunpack.c.h.b16 %v6749
    %v6949 = vunpack.c.l.b16 %v6750
    %v6950 = vunpack.c.h.b16 %v6750
    %v6951 = vunpack.c.l.b16 %v6751
    %v6952 = vunpack.c.h.b16 %v6751
    %v6953 = vunpack.c.l.b16 %v6752
    %v6954 = vunpack.c.h.b16 %v6752
    %v6955 = vunpack.c.l.b16 %v6753
    %v6956 = vunpack.c.h.b16 %v6753
    %v6957 = vunpack.c.l.b16 %v6754
    %v6958 = vunpack.c.h.b16 %v6754
    %v6959 = vunpack.c.l.b16 %v6755
    %v6960 = vunpack.c.h.b16 %v6755
    %v6961 = vunpack.c.l.b16 %v6756
    %v6962 = vunpack.c.h.b16 %v6756
    %v6963 = vunpack.c.l.b16 %v6757
    %v6964 = vunpack.c.h.b16 %v6757
    %v6965 = vunpack.c.l.b16 %v6758
    %v6966 = vunpack.c.h.b16 %v6758
    %v6967 = vunpack.c.l.b16 %v6759
    %v6968 = vunpack.c.h.b16 %v6759
    %v6969 = vunpack.c.l.b16 %v6760
    %v6970 = vunpack.c.h.b16 %v6760
    %v6971 = vunpack.c.l.b16 %v6761
    %v6972 = vunpack.c.h.b16 %v6761
    %v6973 = vunpack.c.l.b16 %v6762
    %v6974 = vunpack.c.h.b16 %v6762
    %v6975 = vunpack.c.l.b16 %v6763
    %v6976 = vunpack.c.h.b16 %v6763
    %v6977 = vunpack.c.l.b16 %v6764
    %v6978 = vunpack.c.h.b16 %v6764
    %v6979 = vunpack.c.l.b16 %v6765
    %v6980 = vunpack.c.h.b16 %v6765
    %v6981 = vunpack.c.l.b16 %v6766
    %v6982 = vunpack.c.h.b16 %v6766
    %v6983 = vunpack.c.l.b16 %v6767
    %v6984 = vunpack.c.h.b16 %v6767
    %v6985 = vunpack.c.l.b16 %v6768
    %v6986 = vunpack.c.h.b16 %v6768
    %v6987 = vpack.c.b16 %v6863, %v6859
    %v6988 = vpack.c.b16 %v6864, %v6860
    %v6989 = vpack.c.b16 %v6865, %v6861
    %v6990 = vpack.c.b16 %v6866, %v6862
    %v6991 = vpack.c.b16 %v6871, %v6867
    %v6992 = vpack.c.b16 %v6872, %v6868
    %v6993 = vpack.c.b16 %v6873, %v6869
    %v6994 = vpack.c.b16 %v6874, %v6870
    %v6995 = vpack.c.b16 %v6879, %v6875
    %v6996 = vpack.c.b16 %v6880, %v6876
    %v6997 = vpack.c.b16 %v6881, %v6877
    %v6998 = vpack.c.b16 %v6882, %v6878
    %v6999 = vpack.c.b16 %v6887, %v6883
    %v7000 = vpack.c.b16 %v6888, %v6884
    %v7001 = vpack.c.b16 %v6889, %v6885
    %v7002 = vpack.c.b16 %v6890, %v6886
    %v7003 = vpack.c.b16 %v6895, %v6891
    %v7004 = vpack.c.b16 %v6896, %v6892
    %v7005 = vpack.c.b16 %v6897, %v6893
    %v7006 = vpack.c.b16 %v6898, %v6894
    %v7007 = vpack.c.b16 %v6903, %v6899
    %v7008 = vpack.c.b16 %v6904, %v6900
    %v7009 = vpack.c.b16 %v6905, %v6901
    %v7010 = vpack.c.b16 %v6906, %v6902
    %v7011 = vpack.c.b16 %v6911, %v6907
    %v7012 = vpack.c.b16 %v6912, %v6908
    %v7013 = vpack.c.b16 %v6913, %v6909
    %v7014 = vpack.c.b16 %v6914, %v6910
    %v7015 = vpack.c.b16 %v6919, %v6915
    %v7016 = vpack.c.b16 %v6920, %v6916
    %v7017 = vpack.c.b16 %v6921, %v6917
    %v7018 = vpack.c.b16 %v6922, %v6918
    %v7019 = vpack.c.b16 %v6927, %v6923
    %v7020 = vpack.c.b16 %v6928, %v6924
    %v7021 = vpack.c.b16 %v6929, %v6925
    %v7022 = vpack.c.b16 %v6930, %v6926
    %v7023 = vpack.c.b16 %v6935, %v6931
    %v7024 = vpack.c.b16 %v6936, %v6932
    %v7025 = vpack.c.b16 %v6937, %v6933
    %v7026 = vpack.c.b16 %v6938, %v6934
    %v7027 = vpack.c.b16 %v6943, %v6939
    %v7028 = vpack.c.b16 %v6944, %v6940
    %v7029 = vpack.c.b16 %v6945, %v6941
    %v7030 = vpack.c.b16 %v6946, %v6942
    %v7031 = vpack.c.b16 %v6951, %v6947
    %v7032 = vpack.c.b16 %v6952, %v6948
    %v7033 = vpack.c.b16 %v6953, %v6949
    %v7034 = vpack.c.b16 %v6954, %v6950
    %v7035 = vpack.c.b16 %v6959, %v6955
    %v7036 = vpack.c.b16 %v6960, %v6956
    %v7037 = vpack.c.b16 %v6961, %v6957
    %v7038 = vpack.c.b16 %v6962, %v6958
    %v7039 = vpack.c.b16 %v6967, %v6963
    %v7040 = vpack.c.b16 %v6968, %v6964
    %v7041 = vpack.c.b16 %v6969, %v6965
    %v7042 = vpack.c.b16 %v6970, %v6966
    %v7043 = vpack.c.b16 %v6975, %v6971
    %v7044 = vpack.c.b16 %v6976, %v6972
    %v7045 = vpack.c.b16 %v6977, %v6973
    %v7046 = vpack.c.b16 %v6978, %v6974
    %v7047 = vpack.c.b16 %v6983, %v6979
    %v7048 = vpack.c.b16 %v6984, %v6980
    %v7049 = vpack.c.b16 %v6985, %v6981
    %v7050 = vpack.c.b16 %v6986, %v6982
    %v7116 = vlaneseq
    %v7117 = vshrl.u32 %v7116, 7
    %v7118 = vsub.s32 0, %v7117
    %v7119 = vrot.slane %v6769, %v7118
    %v7120 = vlaneseq
    %v7121 = vshrl.u32 %v7120, 7
    %v7122 = vsub.s32 1, %v7121
    %v7123 = vrot.slane %v6769, %v7122
    %v7124 = vlaneseq
    %v7125 = vshrl.u32 %v7124, 7
    %v7126 = vsub.s32 2, %v7125
    %v7127 = vrot.slane %v6769, %v7126
    %v7128 = vlaneseq
    %v7129 = vshrl.u32 %v7128, 7
    %v7130 = vsub.s32 3, %v7129
    %v7131 = vrot.slane %v6769, %v7130
    %7136 = vmatprep.subr.bf16.mxu0 %v6988
    %7137 = vmatpush1.bf16.msra.mxu0 %v6987
    %7138 = vmatprep.subr.bf16.mxu0 %v6992
    %7139 = vmatpush1.bf16.msra.mxu0 %v6991
    %7140 = vmatprep.subr.bf16.mxu0 %v6996
    %7141 = vmatpush1.bf16.msra.mxu0 %v6995
    %7142 = vmatprep.subr.bf16.mxu0 %v7000
    %7143 = vmatpush1.bf16.msra.mxu0 %v6999
    %7144 = vmatprep.subr.bf16.mxu0 %v7004
    %7145 = vmatpush1.bf16.msra.mxu0 %v7003
    %7146 = vmatprep.subr.bf16.mxu0 %v7008
    %7147 = vmatpush1.bf16.msra.mxu0 %v7007
    %7148 = vmatprep.subr.bf16.mxu0 %v7012
    %7149 = vmatpush1.bf16.msra.mxu0 %v7011
    %7150 = vmatprep.subr.bf16.mxu0 %v7016
    %7151 = vmatpush1.bf16.msra.mxu0 %v7015
    %7152 = vmatprep.subr.bf16.mxu0 %v7020
    %7153 = vmatpush1.bf16.msra.mxu0 %v7019
    %7154 = vmatprep.subr.bf16.mxu0 %v7024
    %7155 = vmatpush1.bf16.msra.mxu0 %v7023
    %7156 = vmatprep.subr.bf16.mxu0 %v7028
    %7157 = vmatpush1.bf16.msra.mxu0 %v7027
    %7158 = vmatprep.subr.bf16.mxu0 %v7032
    %7159 = vmatpush1.bf16.msra.mxu0 %v7031
    %7160 = vmatprep.subr.bf16.mxu0 %v7036
    %7161 = vmatpush1.bf16.msra.mxu0 %v7035
    %7162 = vmatprep.subr.bf16.mxu0 %v7040
    %7163 = vmatpush1.bf16.msra.mxu0 %v7039
    %7164 = vmatprep.subr.bf16.mxu0 %v7044
    %7165 = vmatpush1.bf16.msra.mxu0 %v7043
    %7166 = vmatprep.subr.bf16.mxu0 %v7048
    %7167 = vmatpush1.bf16.msra.mxu0 %v7047
    %7168 = vmatprep.mubr.bf16.mxu0 %v6792
    %7169 = vmatmul.mubr.bf16.gmra.mrb[0].mxu0 %v6785
    %v7170 = vpop.f32.mrb[0].mxu0
    %v7171 = vadd.f32 %v7119, %v7170
    %v7172 = vpop.f32.mrb[0].mxu0
    %v7173 = vadd.f32 %v7123, %v7172
    %v7174 = vpop.f32.mrb[0].mxu0
    %v7175 = vpop.f32.mrb[0].mxu0
    %7176 = vdwg.mxu0
    %7177 = vmatprep.subr.bf16.mxu0 %v6990
    %7178 = vmatpush1.bf16.msra.mxu0 %v6989
    %7179 = vmatprep.subr.bf16.mxu0 %v6994
    %7180 = vmatpush1.bf16.msra.mxu0 %v6993
    %7181 = vmatprep.subr.bf16.mxu0 %v6998
    %7182 = vmatpush1.bf16.msra.mxu0 %v6997
    %7183 = vmatprep.subr.bf16.mxu0 %v7002
    %7184 = vmatpush1.bf16.msra.mxu0 %v7001
    %7185 = vmatprep.subr.bf16.mxu0 %v7006
    %7186 = vmatpush1.bf16.msra.mxu0 %v7005
    %7187 = vmatprep.subr.bf16.mxu0 %v7010
    %7188 = vmatpush1.bf16.msra.mxu0 %v7009
    %7189 = vmatprep.subr.bf16.mxu0 %v7014
    %7190 = vmatpush1.bf16.msra.mxu0 %v7013
    %7191 = vmatprep.subr.bf16.mxu0 %v7018
    %7192 = vmatpush1.bf16.msra.mxu0 %v7017
    %7193 = vmatprep.subr.bf16.mxu0 %v7022
    %7194 = vmatpush1.bf16.msra.mxu0 %v7021
    %7195 = vmatprep.subr.bf16.mxu0 %v7026
    %7196 = vmatpush1.bf16.msra.mxu0 %v7025
    %7197 = vmatprep.subr.bf16.mxu0 %v7030
    %7198 = vmatpush1.bf16.msra.mxu0 %v7029
    %7199 = vmatprep.subr.bf16.mxu0 %v7034
    %7200 = vmatpush1.bf16.msra.mxu0 %v7033
    %7201 = vmatprep.subr.bf16.mxu0 %v7038
    %7202 = vmatpush1.bf16.msra.mxu0 %v7037
    %7203 = vmatprep.subr.bf16.mxu0 %v7042
    %7204 = vmatpush1.bf16.msra.mxu0 %v7041
    %7205 = vmatprep.subr.bf16.mxu0 %v7046
    %7206 = vmatpush1.bf16.msra.mxu0 %v7045
    %7207 = vmatprep.subr.bf16.mxu0 %v7050
    %7208 = vmatpush1.bf16.msra.mxu0 %v7049
    %7209 = vmatprep.mubr.bf16.mxu0 %v6792
    %7210 = vmatmul.mubr.bf16.gmra.mrb[0].mxu0 %v6785
    %v7211 = vpop.f32.mrb[0].mxu0
    %v7212 = vadd.f32 %v7127, %v7211
    %v7213 = vpop.f32.mrb[0].mxu0
    %v7214 = vadd.f32 %v7131, %v7213
    %v7215 = vpop.f32.mrb[0].mxu0
    %v7216 = vpop.f32.mrb[0].mxu0
    %7217 = vdwg.mxu0
    %v7218 = vxor.u32 %v7171, 2147483648
    %v7219 = vxor.u32 %v7173, 2147483648
    %v7220 = vxor.u32 %v7212, 2147483648
    %v7221 = vmul.f32 %v7218, 1.442695
    %v7222 = vpow.pop %v7221
    %v7223 = vmul.f32 %v7219, 1.442695
    %v7224 = vpow.pop %v7223
    %v7225 = vmul.f32 %v7220, 1.442695
    %v7226 = vpow.pop %v7225
    %v7227 = vadd.f32 %v7222, 1.0
    %v7228 = vadd.f32 %v7224, 1.0
    %v7229 = vadd.f32 %v7226, 1.0
    %v7230 = vrcp.pop %v7227
    %v7231 = vmul.f32 1.0, %v7230
    %v7232 = vrcp.pop %v7228
    %v7233 = vmul.f32 1.0, %v7232
    %v7234 = vrcp.pop %v7229
    %v7235 = vmul.f32 1.0, %v7234
    %v7236 = vtanh.pop %v7214
    %v7237 = vmul.f32 %v7233, %v6367
    %v7238 = vmul.f32 %v7231, %v7236
    %v7239 = vadd.f32 %v7237, %v7238
    %v7240 = vtanh.pop %v7239
    %v7241 = vmul.f32 %v7235, %v7240
    %v7242 = vpack.c.bf16 %v7241, %v7241
    %v7243 = vld [vmem:[#allocation3 + $0x1] sm:$0x1]
    %v7244 = vsel %vm263, %v7242, %v7243
    %7245 = vst [vmem:[#allocation3 + $0x1] sm:$0x1] %v7244
    %v7246 = vld [vmem:[%s6] sm:$0xff]
    %v7247 = vld [vmem:[%s6 + $0x8] sm:$0xff]
    %v7248 = vld [vmem:[%s6 + $0x10] sm:$0xff]
    %v7249 = vld [vmem:[%s6 + $0x18] sm:$0xff]
    %v7250 = vld [vmem:[%s6 + $0x20] sm:$0xff]
    %v7251 = vld [vmem:[%s6 + $0x28] sm:$0xff]
    %v7252 = vld [vmem:[%s6 + $0x30] sm:$0xff]
    %v7253 = vld [vmem:[%s6 + $0x38] sm:$0xff]
    %v7254 = vld [vmem:[%s6 + $0x40] sm:$0xff]
    %v7255 = vld [vmem:[%s6 + $0x48] sm:$0xff]
    %v7256 = vld [vmem:[%s6 + $0x50] sm:$0xff]
    %v7257 = vld [vmem:[%s6 + $0x58] sm:$0xff]
    %v7258 = vld [vmem:[%s6 + $0x60] sm:$0xff]
    %v7259 = vld [vmem:[%s6 + $0x68] sm:$0xff]
    %v7260 = vld [vmem:[%s6 + $0x70] sm:$0xff]
    %v7261 = vld [vmem:[%s6 + $0x78] sm:$0xff]
    %v7262 = vld [vmem:[#allocation4] sm:$0x1]
    %7263 = vmatprep.subr.mxu0 0.0
    %7264 = vmatpush1.msra.mxu0 %v7246
    %7265 = vmatprep.subr.mxu0 0.0
    %7266 = vmatpush1.msra.mxu0 %v7247
    %7267 = vmatprep.subr.mxu0 0.0
    %7268 = vmatpush1.msra.mxu0 %v7248
    %7269 = vmatprep.subr.mxu0 0.0
    %7270 = vmatpush1.msra.mxu0 %v7249
    %7271 = vmatprep.subr.mxu0 0.0
    %7272 = vmatpush1.msra.mxu0 %v7250
    %7273 = vmatprep.subr.mxu0 0.0
    %7274 = vmatpush1.msra.mxu0 %v7251
    %7275 = vmatprep.subr.mxu0 0.0
    %7276 = vmatpush1.msra.mxu0 %v7252
    %7277 = vmatprep.subr.mxu0 0.0
    %7278 = vmatpush1.msra.mxu0 %v7253
    %7279 = vmatprep.subr.mxu0 0.0
    %7280 = vmatpush1.msra.mxu0 %v7254
    %7281 = vmatprep.subr.mxu0 0.0
    %7282 = vmatpush1.msra.mxu0 %v7255
    %7283 = vmatprep.subr.mxu0 0.0
    %7284 = vmatpush1.msra.mxu0 %v7256
    %7285 = vmatprep.subr.mxu0 0.0
    %7286 = vmatpush1.msra.mxu0 %v7257
    %7287 = vmatprep.subr.mxu0 0.0
    %7288 = vmatpush1.msra.mxu0 %v7258
    %7289 = vmatprep.subr.mxu0 0.0
    %7290 = vmatpush1.msra.mxu0 %v7259
    %7291 = vmatprep.subr.mxu0 0.0
    %7292 = vmatpush1.msra.mxu0 %v7260
    %7293 = vmatprep.subr.mxu0 0.0
    %7294 = vmatpush1.msra.mxu0 %v7261
    %7295 = vmatprep.subr.mxu0 0.0
    %7296 = vmatpush1.msra.mxu0 0.0
    %7297 = vmatprep.subr.mxu0 0.0
    %7298 = vmatpush1.msra.mxu0 0.0
    %7299 = vmatprep.subr.mxu0 0.0
    %7300 = vmatpush1.msra.mxu0 0.0
    %7301 = vmatprep.subr.mxu0 0.0
    %7302 = vmatpush1.msra.mxu0 0.0
    %7303 = vmatprep.subr.mxu0 0.0
    %7304 = vmatpush1.msra.mxu0 0.0
    %7305 = vmatprep.subr.mxu0 0.0
    %7306 = vmatpush1.msra.mxu0 0.0
    %7307 = vmatprep.subr.mxu0 0.0
    %7308 = vmatpush1.msra.mxu0 0.0
    %7309 = vmatprep.subr.mxu0 0.0
    %7310 = vmatpush1.msra.mxu0 0.0
    %7311 = vmatprep.subr.mxu0 0.0
    %7312 = vmatpush1.msra.mxu0 0.0
    %7313 = vmatprep.subr.mxu0 0.0
    %7314 = vmatpush1.msra.mxu0 0.0
    %7315 = vmatprep.subr.mxu0 0.0
    %7316 = vmatpush1.msra.mxu0 0.0
    %7317 = vmatprep.subr.mxu0 0.0
    %7318 = vmatpush1.msra.mxu0 0.0
    %7319 = vmatprep.subr.mxu0 0.0
    %7320 = vmatpush1.msra.mxu0 0.0
    %7321 = vmatprep.subr.mxu0 0.0
    %7322 = vmatpush1.msra.mxu0 0.0
    %7323 = vmatprep.subr.mxu0 0.0
    %7324 = vmatpush1.msra.mxu0 0.0
    %7325 = vmatprep.subr.mxu0 0.0
    %7326 = vmatpush1.msra.mxu0 0.0
    %7327 = vmatprep.mubr.f32.mxu0 0.0
    %7328 = vmatmul.mubr.f32.gmra.mrb[0].mxu0 %v7241
    %v7329 = vpop.f32.mrb[0].mxu0
    %v7330 = vadd.f32 %v7262, %v7329
    %v7331 = vpop.f32.mrb[0].mxu0
    %7332 = vdwg.mxu0
    %vm7333 = vcmask 0
    %7334 = vst.msk [vmem:[#allocation10] sm:$0x1] %vm7333, %v7330
    // Predicated region
    $region42: #{tpu_custom_call.1} parent=1 // pred_check
      _
    $region43: #{tpu_custom_call.1} parent=1 // pred_check_branch
      %7336 = sbr.rel (0) target = $region45
    $region44: #{tpu_custom_call.1} parent=1 // pred_region
      %s7338 = ssub.s32 16, 16
      %7339 = vsyncadd [#allocation7], %s7338
      %s7341 = sshll.u32 [#allocation10], 4
      %s7342 = int_to_ptr.vmem [resolvable:$true] %s7341
      %7344 = dma.vmem_to_hbm [thread:$0]  %s7342, 16, %s8, [#allocation7]
    $region45: #{tpu_custom_call.1} parent=1 // pred_fallthru
      _
    // Predicated region
    $region46: #{tpu_custom_call.1} parent=1 // pred_check
      _
    $region47: #{tpu_custom_call.1} parent=1 // pred_check_branch
      %7346 = sbr.rel (0) target = $region49
    $region48: #{tpu_custom_call.1} parent=1 // pred_region
      %7347 = dma.done [#allocation7], 16
    $region49: #{tpu_custom_call.1} parent=1 // pred_fallthru
      _
    %7348 = vsyncpa [#allocation6], 1
    %7349 = vsyncpa [#allocation9], 1
    %7350 = vsyncpa [#allocation7], 1

</llo_original>
